<compile_context>
chip_gen: v7x
topology: tpu7x:2x2x1
jax: 0.10.0
libtpu: 0.0.40
codegen_flags: <defaults>
</compile_context>

<pallas_src>
import functools
import math

import jax
import jax.numpy as jnp
from jax.experimental import pallas as pl
from jax.experimental.pallas import tpu as pltpu

NF = 64          # nf in the PyTorch module
COND_C = 32      # SFT condition channels

_CompilerParams = getattr(pltpu, "CompilerParams", None) or getattr(
    pltpu, "TPUCompilerParams")


def _cparams(n_axes):
    return _CompilerParams(dimension_semantics=("parallel",) * n_axes)


def _const_spec(shape):
    n = len(shape)
    return pl.BlockSpec(shape, lambda *args, _n=n: (0,) * _n)


# ----------------------------------------------------------------------------
# in-kernel building blocks (operate on VMEM values / refs)
# ----------------------------------------------------------------------------
def _apply_act(v, act):
    if act == "relu":
        return jnp.maximum(v, 0.0)
    if act == "lrelu":
        return jnp.where(v >= 0, v, 0.1 * v)
    if act == "prelu":               # nn.PReLU() default init = 0.25
        return jnp.where(v >= 0, v, 0.25 * v)
    if act == "sigmoid":
        return jax.nn.sigmoid(v)
    return v


def _fill_pad(pad_ref, x):
    """Zero-fill the padded VMEM scratch and write x into its interior."""
    H, W, C = x.shape
    pad_ref[...] = jnp.zeros(pad_ref.shape, pad_ref.dtype)
    pad_ref[1:H + 1, 1:W + 1, :C] = x


def _conv3x3_r(x, w_ref, b_ref, act, pad_ref):
    """3x3 'same' conv on a VMEM-resident (H, W, Cin) value.

    bf16 MXU inputs, f32 accumulation.  Padding lives in the VMEM scratch
    pad_ref (shape (H+2, W+2, >=Cin) f32), so no HBM-side jnp.pad is needed.
    """
    H, W, Cin = x.shape
    Cout = w_ref.shape[-1]
    _fill_pad(pad_ref, x.astype(jnp.float32))
    acc = jnp.zeros((H * W, Cout), jnp.float32)
    for kh in range(3):
        for kw in range(3):
            patch = pad_ref[kh:kh + H, kw:kw + W, :Cin]
            acc = acc + jnp.dot(
                patch.reshape(H * W, Cin).astype(jnp.bfloat16),
                w_ref[kh, kw], preferred_element_type=jnp.float32)
    if b_ref is not None:
        acc = acc + b_ref[...]
    return _apply_act(acc, act).reshape(H, W, Cout)


def _conv1x1_r(x, w_ref, b_ref, act):
    H, W, Cin = x.shape
    Cout = w_ref.shape[-1]
    y = jnp.dot(x.reshape(H * W, Cin).astype(jnp.bfloat16), w_ref[0, 0],
                preferred_element_type=jnp.float32)
    if b_ref is not None:
        y = y + b_ref[...]
    return _apply_act(y, act).reshape(H, W, Cout)


def _sft_r(fea, cond, ws0, bs0, ws1, bs1, wh0, bh0, wh1, bh1):
    """arch_util.SFTLayer: out = fea * (scale + 1) + shift."""
    H, W, Cf = fea.shape
    Cc = cond.shape[-1]
    c2 = cond.reshape(H * W, Cc).astype(jnp.bfloat16)
    t = jnp.dot(c2, ws0[...], preferred_element_type=jnp.float32) + bs0[...]
    t = jnp.where(t >= 0, t, 0.1 * t)
    scale = jnp.dot(t.astype(jnp.bfloat16), ws1[...],
                    preferred_element_type=jnp.float32) + bs1[...]
    u = jnp.dot(c2, wh0[...], preferred_element_type=jnp.float32) + bh0[...]
    u = jnp.where(u >= 0, u, 0.1 * u)
    shift = jnp.dot(u.astype(jnp.bfloat16), wh1[...],
                    preferred_element_type=jnp.float32) + bh1[...]
    f2 = fea.reshape(H * W, Cf)
    return (f2 * (scale + 1.0) + shift).reshape(H, W, Cf)


def _sft_mat_specs(Cc, Cf):
    return [_const_spec((Cc, Cc)), _const_spec((1, Cc)),
            _const_spec((Cc, Cf)), _const_spec((1, Cf)),
            _const_spec((Cc, Cc)), _const_spec((1, Cc)),
            _const_spec((Cc, Cf)), _const_spec((1, Cf))]


# ----------------------------------------------------------------------------
# generic single stride-1 conv (K = 1 or 3) with optional Cout tiling
# ----------------------------------------------------------------------------
def _conv_kernel(x_ref, w_ref, b_ref, o_ref, pad_ref, *, K, act):
    x = x_ref[0]
    if K == 1:
        o_ref[0] = _conv1x1_r(x, w_ref, b_ref, act)
    else:
        o_ref[0] = _conv3x3_r(x, w_ref, b_ref, act, pad_ref)


@functools.lru_cache(maxsize=None)
def _conv_call(B, H, W, Cin, Cout, K, act, ct):
    n_co = Cout // ct
    kern = functools.partial(_conv_kernel, K=K, act=act)
    fn = pl.pallas_call(
        kern,
        grid=(B, n_co),
        in_specs=[
            pl.BlockSpec((1, H, W, Cin), lambda b, c: (b, 0, 0, 0)),
            pl.BlockSpec((K, K, Cin, ct), lambda b, c: (0, 0, 0, c)),
            pl.BlockSpec((1, ct), lambda b, c: (0, c)),
        ],
        out_specs=pl.BlockSpec((1, H, W, ct), lambda b, c: (b, 0, 0, c)),
        out_shape=jax.ShapeDtypeStruct((B, H, W, Cout), jnp.float32),
        scratch_shapes=[pltpu.VMEM((H + 2, W + 2, Cin), jnp.float32)],
        compiler_params=_cparams(2),
    )
    return jax.jit(fn)


def conv2d(x, p, *, act="none", cout_tile=None):
    B, H, W, Cin = x.shape
    K, Cout = p["w"].shape[0], p["w"].shape[-1]
    ct = Cout
    if cout_tile is not None and Cout % cout_tile == 0:
        ct = min(cout_tile, Cout)
    return _conv_call(B, H, W, Cin, Cout, K, act, ct)(x, p["w"], p["b"])


# ----------------------------------------------------------------------------
# native stride-2 3x3 conv: phase-decomposed input, stride-1 taps in kernel
# ----------------------------------------------------------------------------
def _conv_s2_kernel(p00_ref, p01_ref, p10_ref, p11_ref, w_ref, b_ref, o_ref,
                    *, act):
    phases = (p00_ref[0], p01_ref[0], p10_ref[0], p11_ref[0])
    Hp, Wp, Cin = phases[0].shape
    Ho, Wo = Hp - 1, Wp - 1
    Cout = w_ref.shape[-1]
    acc = jnp.zeros((Ho * Wo, Cout), jnp.float32)
    for kh in range(3):
        for kw in range(3):
            ph = phases[(kh % 2) * 2 + (kw % 2)]
            oi, oj = kh // 2, kw // 2
            patch = ph[oi:oi + Ho, oj:oj + Wo, :].reshape(Ho * Wo, Cin)
            acc = acc + jnp.dot(patch.astype(jnp.bfloat16), w_ref[kh, kw],
                                preferred_element_type=jnp.float32)
    acc = acc + b_ref[...]
    o_ref[0] = _apply_act(acc, act).reshape(Ho, Wo, Cout)


@functools.lru_cache(maxsize=None)
def _conv_s2_call(B, Ho, Wo, Cin, Cout, act):
    kern = functools.partial(_conv_s2_kernel, act=act)
    ph_spec = pl.BlockSpec((1, Ho + 1, Wo + 1, Cin), lambda b: (b, 0, 0, 0))
    fn = pl.pallas_call(
        kern,
        grid=(B,),
        in_specs=[ph_spec, ph_spec, ph_spec, ph_spec,
                  _const_spec((3, 3, Cin, Cout)),
                  _const_spec((1, Cout))],
        out_specs=pl.BlockSpec((1, Ho, Wo, Cout), lambda b: (b, 0, 0, 0)),
        out_shape=jax.ShapeDtypeStruct((B, Ho, Wo, Cout), jnp.float32),
        compiler_params=_cparams(1),
    )
    return jax.jit(fn)


def conv2d_s2(x, p, act):
    """3x3 stride-2 pad-1 conv (nn.Conv2d(..., 3, 2, 1)), even H and W."""
    B, H, W, Cin = x.shape
    assert H % 2 == 0 and W % 2 == 0
    Ho, Wo = H // 2, W // 2
    xp = jnp.pad(x, ((0, 0), (1, 1), (1, 1), (0, 0)))
    p00 = xp[:, 0::2, 0::2, :]
    p01 = xp[:, 0::2, 1::2, :]
    p10 = xp[:, 1::2, 0::2, :]
    p11 = xp[:, 1::2, 1::2, :]
    Cout = p["w"].shape[-1]
    return _conv_s2_call(B, Ho, Wo, Cin, Cout, act)(
        p00, p01, p10, p11, p["w"], p["b"])


# ----------------------------------------------------------------------------
# fused stride-1 conv chain (mask_est / cond_first / CondNet1 ...)
# ----------------------------------------------------------------------------
def _chain_kernel(*refs, specs):
    nl = len(specs)
    x_ref = refs[0]
    o_ref = refs[1 + 2 * nl]
    pad_ref = refs[2 + 2 * nl]
    h = x_ref[0]
    for i, (K, act) in enumerate(specs):
        w_ref = refs[1 + 2 * i]
        b_ref = refs[2 + 2 * i]
        if K == 1:
            h = _conv1x1_r(h, w_ref, b_ref, act)
        else:
            h = _conv3x3_r(h, w_ref, b_ref, act, pad_ref)
    o_ref[0] = h


@functools.lru_cache(maxsize=None)
def _chain_call(B, H, W, Cin, sig):
    # sig: tuple of (K, cin, cout, act)
    specs = tuple((K, act) for (K, _, _, act) in sig)
    kern = functools.partial(_chain_kernel, specs=specs)
    in_specs = [pl.BlockSpec((1, H, W, Cin), lambda b: (b, 0, 0, 0))]
    for (K, ci, co, _) in sig:
        in_specs.append(_const_spec((K, K, ci, co)))
        in_specs.append(_const_spec((1, co)))
    Cout = sig[-1][2]
    cmax = max([Cin] + [ci for (_, ci, _, _) in sig])
    fn = pl.pallas_call(
        kern,
        grid=(B,),
        in_specs=in_specs,
        out_specs=pl.BlockSpec((1, H, W, Cout), lambda b: (b, 0, 0, 0)),
        out_shape=jax.ShapeDtypeStruct((B, H, W, Cout), jnp.float32),
        scratch_shapes=[pltpu.VMEM((H + 2, W + 2, cmax), jnp.float32)],
        compiler_params=_cparams(1),
    )
    return jax.jit(fn)


def conv_chain(x, layers):
    """layers: list of (params, K, act); applied sequentially inside one kernel."""
    B, H, W, Cin = x.shape
    sig = tuple((K, int(p["w"].shape[2]), int(p["w"].shape[3]), act)
                for (p, K, act) in layers)
    args = [x]
    for (p, _, _) in layers:
        args += [p["w"], p["b"]]
    return _chain_call(B, H, W, Cin, sig)(*args)


# ----------------------------------------------------------------------------
# fused SFTLayer + 3x3 conv (+act)   (SFT_layer1+HR_conv1, SFT_layer2+HR_conv2)
# ----------------------------------------------------------------------------
def _sft_conv_kernel(fea_ref, cond_ref,
                     ws0, bs0, ws1, bs1, wh0, bh0, wh1, bh1,
                     w_ref, b_ref, o_ref, pad_ref, *, act):
    mod = _sft_r(fea_ref[0], cond_ref[0],
                 ws0, bs0, ws1, bs1, wh0, bh0, wh1, bh1)
    o_ref[0] = _conv3x3_r(mod, w_ref, b_ref, act, pad_ref)


@functools.lru_cache(maxsize=None)
def _sft_conv_call(B, H, W, Cc, Cf, act):
    kern = functools.partial(_sft_conv_kernel, act=act)
    in_specs = ([pl.BlockSpec((1, H, W, Cf), lambda b: (b, 0, 0, 0)),
                 pl.BlockSpec((1, H, W, Cc), lambda b: (b, 0, 0, 0))]
                + _sft_mat_specs(Cc, Cf)
                + [_const_spec((3, 3, Cf, Cf)), _const_spec((1, Cf))])
    fn = pl.pallas_call(
        kern,
        grid=(B,),
        in_specs=in_specs,
        out_specs=pl.BlockSpec((1, H, W, Cf), lambda b: (b, 0, 0, 0)),
        out_shape=jax.ShapeDtypeStruct((B, H, W, Cf), jnp.float32),
        scratch_shapes=[pltpu.VMEM((H + 2, W + 2, Cf), jnp.float32)],
        compiler_params=_cparams(1),
    )
    return jax.jit(fn)


def _sft_args(sp):
    return (sp["ws0"], sp["bs0"], sp["ws1"], sp["bs1"],
            sp["wh0"], sp["bh0"], sp["wh1"], sp["bh1"])


def sft_conv(fea, cond, sp, cp, act):
    B, H, W, Cf = fea.shape
    Cc = cond.shape[-1]
    return _sft_conv_call(B, H, W, Cc, Cf, act)(
        fea, cond, *_sft_args(sp), cp["w"], cp["b"])


# ----------------------------------------------------------------------------
# fused ResBlock_with_SFT
# ----------------------------------------------------------------------------
def _resblock_kernel(fea_ref, cond_ref,
                     a0, a1, a2, a3, a4, a5, a6, a7,
                     w1_ref, b1_ref,
                     c0, c1, c2, c3, c4, c5, c6, c7,
                     w2_ref, b2_ref,
                     o_ref, pad_ref):
    fea = fea_ref[0]
    cond = cond_ref[0]
    t = _sft_r(fea, cond, a0, a1, a2, a3, a4, a5, a6, a7)
    t = _conv3x3_r(t, w1_ref, b1_ref, "relu", pad_ref)
    t = _sft_r(t, cond, c0, c1, c2, c3, c4, c5, c6, c7)
    t = _conv3x3_r(t, w2_ref, b2_ref, "none", pad_ref)
    o_ref[0] = fea + t


@functools.lru_cache(maxsize=None)
def _resblock_call(B, H, W, Cc, Cf):
    conv_specs = [_const_spec((3, 3, Cf, Cf)), _const_spec((1, Cf))]
    in_specs = ([pl.BlockSpec((1, H, W, Cf), lambda b: (b, 0, 0, 0)),
                 pl.BlockSpec((1, H, W, Cc), lambda b: (b, 0, 0, 0))]
                + _sft_mat_specs(Cc, Cf) + conv_specs
                + _sft_mat_specs(Cc, Cf) + conv_specs)
    fn = pl.pallas_call(
        _resblock_kernel,
        grid=(B,),
        in_specs=in_specs,
        out_specs=pl.BlockSpec((1, H, W, Cf), lambda b: (b, 0, 0, 0)),
        out_shape=jax.ShapeDtypeStruct((B, H, W, Cf), jnp.float32),
        scratch_shapes=[pltpu.VMEM((H + 2, W + 2, Cf), jnp.float32)],
        compiler_params=_cparams(1),
    )
    return jax.jit(fn)


def resblock_sft(fea, cond, p):
    B, H, W, Cf = fea.shape
    Cc = cond.shape[-1]
    return _resblock_call(B, H, W, Cc, Cf)(
        fea, cond,
        *_sft_args(p["sft1"]), p["conv1"]["w"], p["conv1"]["b"],
        *_sft_args(p["sft2"]), p["conv2"]["w"], p["conv2"]["b"])


# ----------------------------------------------------------------------------
# fused SDFN block
# ----------------------------------------------------------------------------
def _sdfn_kernel(x_ref, wcf, bcf, wm1a, wm1b, bm1, wm2, bm2, wcl, bcl,
                 o_ref, pad_ref):
    x = x_ref[0]
    feat1 = _conv3x3_r(x, wcf, bcf, "relu", pad_ref)
    H, W, C = feat1.shape

    # 3x3 stride-1 max & avg pools from ONE padded copy / 9 shared slices.
    # feat1 >= 0 (post-ReLU) so zero padding gives the same max as PyTorch's
    # MaxPool2d; AvgPool2d(count_include_pad=True) always divides by 9.
    _fill_pad(pad_ref, feat1)
    mx = None
    sm = None
    for kh in range(3):
        for kw in range(3):
            patch = pad_ref[kh:kh + H, kw:kw + W, :C]
            mx = patch if mx is None else jnp.maximum(mx, patch)
            sm = patch if sm is None else sm + patch
    av = sm * (1.0 / 9.0)

    # conv_mid[0](concat(max, avg)) == conv(max, W[:,:, :C]) + conv(avg, W[:,:, C:])
    pre = _conv3x3_r(mx, wm1a, bm1, "none", pad_ref)
    pre = pre + _conv3x3_r(av, wm1b, None, "none", pad_ref)
    attn = jnp.maximum(pre, 0.0)
    attn = _conv3x3_r(attn, wm2, bm2, "sigmoid", pad_ref)

    feat2 = feat1 * attn
    feat2 = _conv3x3_r(feat2, wcl, bcl, "none", pad_ref)
    o_ref[0] = feat1 + feat2 + x


@functools.lru_cache(maxsize=None)
def _sdfn_call(B, H, W, C):
    in_specs = [pl.BlockSpec((1, H, W, C), lambda b: (b, 0, 0, 0)),
                _const_spec((3, 3, C, C)), _const_spec((1, C)),
                _const_spec((3, 3, C, C)), _const_spec((3, 3, C, C)),
                _const_spec((1, C)),
                _const_spec((3, 3, C, C)), _const_spec((1, C)),
                _const_spec((3, 3, C, C)), _const_spec((1, C))]
    fn = pl.pallas_call(
        _sdfn_kernel,
        grid=(B,),
        in_specs=in_specs,
        out_specs=pl.BlockSpec((1, H, W, C), lambda b: (b, 0, 0, 0)),
        out_shape=jax.ShapeDtypeStruct((B, H, W, C), jnp.float32),
        scratch_shapes=[pltpu.VMEM((H + 2, W + 2, C), jnp.float32)],
        compiler_params=_cparams(1),
    )
    return jax.jit(fn)


def sdfn(x, p):
    B, H, W, C = x.shape
    return _sdfn_call(B, H, W, C)(
        x, p["cf"]["w"], p["cf"]["b"], p["m1a_w"], p["m1b_w"], p["m1_b"],
        p["m2"]["w"], p["m2"]["b"], p["cl"]["w"], p["cl"]["b"])


# ----------------------------------------------------------------------------
# fused CABlock (conv+PReLU -> conv -> channel attention -> +x)
# ----------------------------------------------------------------------------
def _cab_kernel(x_ref, w1_ref, w2_ref, cw1_ref, cw2_ref, o_ref, pad_ref):
    x = x_ref[0]
    r = _conv3x3_r(x, w1_ref, None, "prelu", pad_ref)
    r = _conv3x3_r(r, w2_ref, None, "none", pad_ref)
    H, W, C = r.shape
    y = jnp.sum(r.reshape(H * W, C), axis=0, keepdims=True) * (1.0 / (H * W))
    y = jnp.maximum(jnp.dot(y.astype(jnp.bfloat16), cw1_ref[...],
                            preferred_element_type=jnp.float32), 0.0)
    y = jax.nn.sigmoid(jnp.dot(y.astype(jnp.bfloat16), cw2_ref[...],
                               preferred_element_type=jnp.float32))
    o_ref[0] = r * y.reshape(1, 1, C) + x


@functools.lru_cache(maxsize=None)
def _cab_call(B, H, W, C, Cr):
    in_specs = [pl.BlockSpec((1, H, W, C), lambda b: (b, 0, 0, 0)),
                _const_spec((3, 3, C, C)), _const_spec((3, 3, C, C)),
                _const_spec((C, Cr)), _const_spec((Cr, C))]
    fn = pl.pallas_call(
        _cab_kernel,
        grid=(B,),
        in_specs=in_specs,
        out_specs=pl.BlockSpec((1, H, W, C), lambda b: (b, 0, 0, 0)),
        out_shape=jax.ShapeDtypeStruct((B, H, W, C), jnp.float32),
        scratch_shapes=[pltpu.VMEM((H + 2, W + 2, C), jnp.float32)],
        compiler_params=_cparams(1),
    )
    return jax.jit(fn)


def cablock(x, p):
    B, H, W, C = x.shape
    return _cab_call(B, H, W, C, int(p["ca_w1"].shape[-1]))(
        x, p["w1"], p["w2"], p["ca_w1"], p["ca_w2"])


# ----------------------------------------------------------------------------
# glue ops (plain JAX: pure data movement)
# ----------------------------------------------------------------------------
def pixel_shuffle(x, r):
    """NHWC pixel shuffle matching torch.nn.functional.pixel_shuffle."""
    B, H, W, C = x.shape
    c = C // (r * r)
    x = x.reshape(B, H, W, c, r, r)
    x = jnp.transpose(x, (0, 1, 4, 2, 5, 3))
    return x.reshape(B, H * r, W * r, c)


# ----------------------------------------------------------------------------
# deterministic parameter construction (HWIO conv weights, bf16 for the MXU)
# ----------------------------------------------------------------------------
_key = [jax.random.PRNGKey(0)]


def _nk():
    _key[0], sub = jax.random.split(_key[0])
    return sub


def conv_p(cin, cout, k, bias=True):
    std = 1.0 / math.sqrt(cin * k * k)
    w = (jax.random.normal(_nk(), (k, k, cin, cout), jnp.float32) * std
         ).astype(jnp.bfloat16)
    if bias:
        b = jax.random.uniform(_nk(), (1, cout), jnp.float32, -std, std)
    else:
        b = jnp.zeros((1, cout), jnp.float32)
    return {"w": w, "b": b}


def sft_p():
    def mat(ci, co):
        std = 1.0 / math.sqrt(ci)
        w = (jax.random.normal(_nk(), (ci, co), jnp.float32) * std
             ).astype(jnp.bfloat16)
        b = jax.random.uniform(_nk(), (1, co), jnp.float32, -std, std)
        return w, b
    ws0, bs0 = mat(COND_C, COND_C)
    ws1, bs1 = mat(COND_C, NF)
    wh0, bh0 = mat(COND_C, COND_C)
    wh1, bh1 = mat(COND_C, NF)
    return {"ws0": ws0, "bs0": bs0, "ws1": ws1, "bs1": bs1,
            "wh0": wh0, "bh0": bh0, "wh1": wh1, "bh1": bh1}


def resblock_p():
    return {"sft1": sft_p(), "conv1": conv_p(NF, NF, 3),
            "sft2": sft_p(), "conv2": conv_p(NF, NF, 3)}


def sdfn_p():
    m1 = conv_p(2 * NF, NF, 3)
    return {"cf": conv_p(NF, NF, 3),
            "m1a_w": m1["w"][:, :, :NF, :],
            "m1b_w": m1["w"][:, :, NF:, :],
            "m1_b": m1["b"],
            "m2": conv_p(NF, NF, 3),
            "cl": conv_p(NF, NF, 3)}


def cablock_p():
    return {"w1": conv_p(NF, NF, 3, bias=False)["w"],
            "w2": conv_p(NF, NF, 3, bias=False)["w"],
            "ca_w1": (jax.random.normal(_nk(), (NF, NF // 4), jnp.float32)
                      / math.sqrt(NF)).astype(jnp.bfloat16),
            "ca_w2": (jax.random.normal(_nk(), (NF // 4, NF), jnp.float32)
                      / math.sqrt(NF // 4)).astype(jnp.bfloat16)}


def build_params():
    return {
        "conv_first": conv_p(3, NF, 3),
        "sft1": sft_p(),
        "hr1": conv_p(NF, NF, 3),
        "down1": conv_p(NF, NF, 3),
        "down2": conv_p(NF, NF, 3),
        "down3": [conv_p(NF, NF, 3), conv_p(NF, NF, 3)],
        "upsample": conv_p(NF, NF * 16, 3),
        "trunk1": [resblock_p() for _ in range(2)],
        "trunk2": [resblock_p() for _ in range(8)],
        "trunk3": [resblock_p() for _ in range(2)],
        "up1": conv_p(NF, NF * 4, 3),
        "up2": conv_p(NF, NF * 4, 3),
        "sft2": sft_p(),
        "hr2": conv_p(NF, NF, 3),
        "conv_last": conv_p(NF, 3, 3),
        "cond_first": [conv_p(3, NF, 3), conv_p(NF, NF, 1), conv_p(NF, NF, 1)],
        "condnet1": [conv_p(NF, NF, 1), conv_p(NF, COND_C, 1)],
        "condnet2": [conv_p(NF, NF, 3), conv_p(NF, COND_C, 1)],
        "condnet3": [conv_p(NF, NF, 3), conv_p(NF, COND_C, 3)],
        "mask_est": [conv_p(3, NF, 3), conv_p(NF, NF, 3),
                     conv_p(NF, NF, 1), conv_p(NF, 3, 1)],
        "enh1": cablock_p(),
        "sdfn1": sdfn_p(),
        "sdfn2": sdfn_p(),
    }


# ----------------------------------------------------------------------------
# full forward pass (matches HDRUNet_mimo_ehance_sft.forward)
# ----------------------------------------------------------------------------
def hdrunet_forward(x_nchw, P):
    x0 = jnp.transpose(x_nchw, (0, 2, 3, 1)).astype(jnp.float32)   # NHWC

    # mask estimation branch (fused into one kernel)
    mask = conv_chain(x0, [(P["mask_est"][0], 3, "relu"),
                           (P["mask_est"][1], 3, "relu"),
                           (P["mask_est"][2], 1, "relu"),
                           (P["mask_est"][3], 1, "none")])

    # condition branch
    cond = conv_chain(x0, [(P["cond_first"][0], 3, "lrelu"),
                           (P["cond_first"][1], 1, "lrelu"),
                           (P["cond_first"][2], 1, "lrelu")])
    cond1 = conv_chain(cond, [(P["condnet1"][0], 1, "lrelu"),
                              (P["condnet1"][1], 1, "none")])
    cond2 = conv2d_s2(cond, P["condnet2"][0], "lrelu")
    cond2 = conv2d(cond2, P["condnet2"][1], act="none")
    cond3 = conv2d_s2(cond, P["condnet3"][0], "lrelu")
    cond3 = conv2d_s2(cond3, P["condnet3"][1], "none")

    # main branch
    fea0 = conv2d(x0, P["conv_first"], act="relu")
    fea0 = sft_conv(fea0, cond1, P["sft1"], P["hr1"], "relu")

    fea0_down = conv2d_s2(fea0, P["down3"][0], "relu")
    fea0_down = conv2d_s2(fea0_down, P["down3"][1], "none")

    fea1 = conv2d_s2(fea0, P["down1"], "relu")
    for rp in P["trunk1"]:
        fea1 = resblock_sft(fea1, cond2, rp)

    fea2 = conv2d_s2(fea1, P["down2"], "relu")
    out = fea2
    for rp in P["trunk2"]:
        out = resblock_sft(out, cond3, rp)
    out = out + fea2 + fea0_down

    out = sdfn(out, P["sdfn1"])
    out = cablock(out, P["enh1"])

    out_upsample = pixel_shuffle(
        conv2d(out, P["upsample"], act="none", cout_tile=256), 4)

    out = pixel_shuffle(conv2d(out, P["up1"], act="relu", cout_tile=256), 2) + fea1
    for rp in P["trunk3"]:
        out = resblock_sft(out, cond2, rp)
    out = (pixel_shuffle(conv2d(out, P["up2"], act="relu", cout_tile=256), 2)
           + fea0 + out_upsample)

    out = sdfn(out, P["sdfn2"])
    feat_virtual = sft_conv(out, cond1, P["sft2"], P["hr2"], "relu")
    out = conv2d(feat_virtual, P["conv_last"], act="none")
    out = mask * x0 + out

    return (jnp.transpose(out, (0, 3, 1, 2)),
            jnp.transpose(feat_virtual, (0, 3, 1, 2)))


# ----------------------------------------------------------------------------
if __name__ == "__main__":
    B, C, H, W = 2, 3, 16, 16                      # H, W multiples of 4
    x = jax.random.uniform(jax.random.PRNGKey(0), (B, C, H, W), jnp.float32)
    params = build_params()

    out, feat_virtual = hdrunet_forward(x, params)
    jax.block_until_ready(out)
    jax.block_until_ready(feat_virtual)

    assert out.shape == (B, 3, H, W)
    assert feat_virtual.shape == (B, NF, H, W)
    assert bool(jnp.all(jnp.isfinite(out)))
    assert bool(jnp.all(jnp.isfinite(feat_virtual)))
    print("KERNEL_OK")
</pallas_src>

<mosaic_0001>
module attributes {stable_mosaic.version = 11 : i64} {
  func.func @_chain_kernel(%arg0: i32, %arg1: memref<1x16x16x3xf32, #tpu.memory_space<vmem>>, %arg2: memref<3x3x3x64xbf16, #tpu.memory_space<vmem>>, %arg3: memref<1x64xf32, #tpu.memory_space<vmem>>, %arg4: memref<3x3x64x64xbf16, #tpu.memory_space<vmem>>, %arg5: memref<1x64xf32, #tpu.memory_space<vmem>>, %arg6: memref<1x1x64x64xbf16, #tpu.memory_space<vmem>>, %arg7: memref<1x64xf32, #tpu.memory_space<vmem>>, %arg8: memref<1x1x64x3xbf16, #tpu.memory_space<vmem>>, %arg9: memref<1x3xf32, #tpu.memory_space<vmem>>, %arg10: memref<1x16x16x3xf32, #tpu.memory_space<vmem>>, %arg11: memref<18x18x64xf32, #tpu.memory_space<vmem>>) attributes {dimension_semantics = [#tpu.dimension_semantics<parallel>], iteration_bounds = array<i64: 2>, scalar_prefetch = 0 : i64, scratch_operands = 1 : i64, tpu.core_type = #tpu.core_type<tc>, window_params = [{transform_indices = @transform_0, window_bounds = array<i64: 1, 16, 16, 3>}, {pipeline_mode = #tpu.pipeline_mode<synchronous>, transform_indices = @transform_1, window_bounds = array<i64: 3, 3, 3, 64>}, {pipeline_mode = #tpu.pipeline_mode<synchronous>, transform_indices = @transform_2, window_bounds = array<i64: 1, 64>}, {pipeline_mode = #tpu.pipeline_mode<synchronous>, transform_indices = @transform_3, window_bounds = array<i64: 3, 3, 64, 64>}, {pipeline_mode = #tpu.pipeline_mode<synchronous>, transform_indices = @transform_4, window_bounds = array<i64: 1, 64>}, {pipeline_mode = #tpu.pipeline_mode<synchronous>, transform_indices = @transform_5, window_bounds = array<i64: 1, 1, 64, 64>}, {pipeline_mode = #tpu.pipeline_mode<synchronous>, transform_indices = @transform_6, window_bounds = array<i64: 1, 64>}, {pipeline_mode = #tpu.pipeline_mode<synchronous>, transform_indices = @transform_7, window_bounds = array<i64: 1, 1, 64, 3>}, {pipeline_mode = #tpu.pipeline_mode<synchronous>, transform_indices = @transform_8, window_bounds = array<i64: 1, 3>}, {transform_indices = @transform_9, window_bounds = array<i64: 1, 16, 16, 3>}]} {
    %c0 = arith.constant 0 : index
    %c0_0 = arith.constant 0 : index
    %c0_1 = arith.constant 0 : index
    %c0_2 = arith.constant 0 : index
    %0 = vector.load %arg1[%c0, %c0_0, %c0_1, %c0_2] : memref<1x16x16x3xf32, #tpu.memory_space<vmem>>, vector<1x16x16x3xf32>
    %1 = vector.shape_cast %0 : vector<1x16x16x3xf32> to vector<16x16x3xf32>
    %cst = arith.constant 0.000000e+00 : f32
    %2 = vector.broadcast %cst : f32 to vector<18x18x64xf32>
    %c0_3 = arith.constant 0 : index
    %c0_4 = arith.constant 0 : index
    %c0_5 = arith.constant 0 : index
    %3 = vector.load %arg11[%c0_3, %c0_4, %c0_5] : memref<18x18x64xf32, #tpu.memory_space<vmem>>, vector<18x18x64xf32>
    tpu.vector_store %arg11[%c0_3, %c0_4, %c0_5], %2 {strides = array<i32>} : memref<18x18x64xf32, #tpu.memory_space<vmem>>, vector<18x18x64xf32>,
    %c1 = arith.constant 1 : index
    %c1_6 = arith.constant 1 : index
    %c0_7 = arith.constant 0 : index
    %4 = vector.load %arg11[%c1, %c1_6, %c0_7] : memref<18x18x64xf32, #tpu.memory_space<vmem>>, vector<16x16x3xf32>
    tpu.vector_store %arg11[%c1, %c1_6, %c0_7], %1 {strides = array<i32>} : memref<18x18x64xf32, #tpu.memory_space<vmem>>, vector<16x16x3xf32>,
    %cst_8 = arith.constant 0.000000e+00 : f32
    %5 = vector.broadcast %cst_8 : f32 to vector<256x64xf32>
    %c0_9 = arith.constant 0 : index
    %c0_10 = arith.constant 0 : index
    %c0_11 = arith.constant 0 : index
    %6 = vector.load %arg11[%c0_9, %c0_10, %c0_11] : memref<18x18x64xf32, #tpu.memory_space<vmem>>, vector<16x16x3xf32>
    %7 = vector.shape_cast %6 : vector<16x16x3xf32> to vector<256x3xf32>
    %8 = arith.truncf %7 : vector<256x3xf32> to vector<256x3xbf16>
    %c0_12 = arith.constant 0 : index
    %c0_13 = arith.constant 0 : index
    %c0_14 = arith.constant 0 : index
    %c0_15 = arith.constant 0 : index
    %9 = vector.load %arg2[%c0_12, %c0_13, %c0_14, %c0_15] : memref<3x3x3x64xbf16, #tpu.memory_space<vmem>>, vector<1x1x3x64xbf16>
    %10 = vector.shape_cast %9 : vector<1x1x3x64xbf16> to vector<3x64xbf16>
    %cst_16 = arith.constant dense<0.000000e+00> : vector<256x64xf32>
    %11 = tpu.matmul %8, %10, %cst_16 {dimension_numbers = #tpu.dot_dimension_numbers<[1], [0], [0], [1], [0, 0, 1, 1], [], []>} : vector<256x3xbf16>, vector<3x64xbf16>, vector<256x64xf32> -> vector<256x64xf32>
    %12 = arith.addf %5, %11 : vector<256x64xf32>
    %c0_17 = arith.constant 0 : index
    %c1_18 = arith.constant 1 : index
    %c0_19 = arith.constant 0 : index
    %13 = vector.load %arg11[%c0_17, %c1_18, %c0_19] : memref<18x18x64xf32, #tpu.memory_space<vmem>>, vector<16x16x3xf32>
    %14 = vector.shape_cast %13 : vector<16x16x3xf32> to vector<256x3xf32>
    %15 = arith.truncf %14 : vector<256x3xf32> to vector<256x3xbf16>
    %c0_20 = arith.constant 0 : index
    %c1_21 = arith.constant 1 : index
    %c0_22 = arith.constant 0 : index
    %c0_23 = arith.constant 0 : index
    %16 = vector.load %arg2[%c0_20, %c1_21, %c0_22, %c0_23] : memref<3x3x3x64xbf16, #tpu.memory_space<vmem>>, vector<1x1x3x64xbf16>
    %17 = vector.shape_cast %16 : vector<1x1x3x64xbf16> to vector<3x64xbf16>
    %cst_24 = arith.constant dense<0.000000e+00> : vector<256x64xf32>
    %18 = tpu.matmul %15, %17, %cst_24 {dimension_numbers = #tpu.dot_dimension_numbers<[1], [0], [0], [1], [0, 0, 1, 1], [], []>} : vector<256x3xbf16>, vector<3x64xbf16>, vector<256x64xf32> -> vector<256x64xf32>
    %19 = arith.addf %12, %18 : vector<256x64xf32>
    %c0_25 = arith.constant 0 : index
    %c2 = arith.constant 2 : index
    %c0_26 = arith.constant 0 : index
    %20 = vector.load %arg11[%c0_25, %c2, %c0_26] : memref<18x18x64xf32, #tpu.memory_space<vmem>>, vector<16x16x3xf32>
    %21 = vector.shape_cast %20 : vector<16x16x3xf32> to vector<256x3xf32>
    %22 = arith.truncf %21 : vector<256x3xf32> to vector<256x3xbf16>
    %c0_27 = arith.constant 0 : index
    %c2_28 = arith.constant 2 : index
    %c0_29 = arith.constant 0 : index
    %c0_30 = arith.constant 0 : index
    %23 = vector.load %arg2[%c0_27, %c2_28, %c0_29, %c0_30] : memref<3x3x3x64xbf16, #tpu.memory_space<vmem>>, vector<1x1x3x64xbf16>
    %24 = vector.shape_cast %23 : vector<1x1x3x64xbf16> to vector<3x64xbf16>
    %cst_31 = arith.constant dense<0.000000e+00> : vector<256x64xf32>
    %25 = tpu.matmul %22, %24, %cst_31 {dimension_numbers = #tpu.dot_dimension_numbers<[1], [0], [0], [1], [0, 0, 1, 1], [], []>} : vector<256x3xbf16>, vector<3x64xbf16>, vector<256x64xf32> -> vector<256x64xf32>
    %26 = arith.addf %19, %25 : vector<256x64xf32>
    %c1_32 = arith.constant 1 : index
    %c0_33 = arith.constant 0 : index
    %c0_34 = arith.constant 0 : index
    %27 = vector.load %arg11[%c1_32, %c0_33, %c0_34] : memref<18x18x64xf32, #tpu.memory_space<vmem>>, vector<16x16x3xf32>
    %28 = vector.shape_cast %27 : vector<16x16x3xf32> to vector<256x3xf32>
    %29 = arith.truncf %28 : vector<256x3xf32> to vector<256x3xbf16>
    %c1_35 = arith.constant 1 : index
    %c0_36 = arith.constant 0 : index
    %c0_37 = arith.constant 0 : index
    %c0_38 = arith.constant 0 : index
    %30 = vector.load %arg2[%c1_35, %c0_36, %c0_37, %c0_38] : memref<3x3x3x64xbf16, #tpu.memory_space<vmem>>, vector<1x1x3x64xbf16>
    %31 = vector.shape_cast %30 : vector<1x1x3x64xbf16> to vector<3x64xbf16>
    %cst_39 = arith.constant dense<0.000000e+00> : vector<256x64xf32>
    %32 = tpu.matmul %29, %31, %cst_39 {dimension_numbers = #tpu.dot_dimension_numbers<[1], [0], [0], [1], [0, 0, 1, 1], [], []>} : vector<256x3xbf16>, vector<3x64xbf16>, vector<256x64xf32> -> vector<256x64xf32>
    %33 = arith.addf %26, %32 : vector<256x64xf32>
    %c1_40 = arith.constant 1 : index
    %c1_41 = arith.constant 1 : index
    %c0_42 = arith.constant 0 : index
    %34 = vector.load %arg11[%c1_40, %c1_41, %c0_42] : memref<18x18x64xf32, #tpu.memory_space<vmem>>, vector<16x16x3xf32>
    %35 = vector.shape_cast %34 : vector<16x16x3xf32> to vector<256x3xf32>
    %36 = arith.truncf %35 : vector<256x3xf32> to vector<256x3xbf16>
    %c1_43 = arith.constant 1 : index
    %c1_44 = arith.constant 1 : index
    %c0_45 = arith.constant 0 : index
    %c0_46 = arith.constant 0 : index
    %37 = vector.load %arg2[%c1_43, %c1_44, %c0_45, %c0_46] : memref<3x3x3x64xbf16, #tpu.memory_space<vmem>>, vector<1x1x3x64xbf16>
    %38 = vector.shape_cast %37 : vector<1x1x3x64xbf16> to vector<3x64xbf16>
    %cst_47 = arith.constant dense<0.000000e+00> : vector<256x64xf32>
    %39 = tpu.matmul %36, %38, %cst_47 {dimension_numbers = #tpu.dot_dimension_numbers<[1], [0], [0], [1], [0, 0, 1, 1], [], []>} : vector<256x3xbf16>, vector<3x64xbf16>, vector<256x64xf32> -> vector<256x64xf32>
    %40 = arith.addf %33, %39 : vector<256x64xf32>
    %c1_48 = arith.constant 1 : index
    %c2_49 = arith.constant 2 : index
    %c0_50 = arith.constant 0 : index
    %41 = vector.load %arg11[%c1_48, %c2_49, %c0_50] : memref<18x18x64xf32, #tpu.memory_space<vmem>>, vector<16x16x3xf32>
    %42 = vector.shape_cast %41 : vector<16x16x3xf32> to vector<256x3xf32>
    %43 = arith.truncf %42 : vector<256x3xf32> to vector<256x3xbf16>
    %c1_51 = arith.constant 1 : index
    %c2_52 = arith.constant 2 : index
    %c0_53 = arith.constant 0 : index
    %c0_54 = arith.constant 0 : index
    %44 = vector.load %arg2[%c1_51, %c2_52, %c0_53, %c0_54] : memref<3x3x3x64xbf16, #tpu.memory_space<vmem>>, vector<1x1x3x64xbf16>
    %45 = vector.shape_cast %44 : vector<1x1x3x64xbf16> to vector<3x64xbf16>
    %cst_55 = arith.constant dense<0.000000e+00> : vector<256x64xf32>
    %46 = tpu.matmul %43, %45, %cst_55 {dimension_numbers = #tpu.dot_dimension_numbers<[1], [0], [0], [1], [0, 0, 1, 1], [], []>} : vector<256x3xbf16>, vector<3x64xbf16>, vector<256x64xf32> -> vector<256x64xf32>
    %47 = arith.addf %40, %46 : vector<256x64xf32>
    %c2_56 = arith.constant 2 : index
    %c0_57 = arith.constant 0 : index
    %c0_58 = arith.constant 0 : index
    %48 = vector.load %arg11[%c2_56, %c0_57, %c0_58] : memref<18x18x64xf32, #tpu.memory_space<vmem>>, vector<16x16x3xf32>
    %49 = vector.shape_cast %48 : vector<16x16x3xf32> to vector<256x3xf32>
    %50 = arith.truncf %49 : vector<256x3xf32> to vector<256x3xbf16>
    %c2_59 = arith.constant 2 : index
    %c0_60 = arith.constant 0 : index
    %c0_61 = arith.constant 0 : index
    %c0_62 = arith.constant 0 : index
    %51 = vector.load %arg2[%c2_59, %c0_60, %c0_61, %c0_62] : memref<3x3x3x64xbf16, #tpu.memory_space<vmem>>, vector<1x1x3x64xbf16>
    %52 = vector.shape_cast %51 : vector<1x1x3x64xbf16> to vector<3x64xbf16>
    %cst_63 = arith.constant dense<0.000000e+00> : vector<256x64xf32>
    %53 = tpu.matmul %50, %52, %cst_63 {dimension_numbers = #tpu.dot_dimension_numbers<[1], [0], [0], [1], [0, 0, 1, 1], [], []>} : vector<256x3xbf16>, vector<3x64xbf16>, vector<256x64xf32> -> vector<256x64xf32>
    %54 = arith.addf %47, %53 : vector<256x64xf32>
    %c2_64 = arith.constant 2 : index
    %c1_65 = arith.constant 1 : index
    %c0_66 = arith.constant 0 : index
    %55 = vector.load %arg11[%c2_64, %c1_65, %c0_66] : memref<18x18x64xf32, #tpu.memory_space<vmem>>, vector<16x16x3xf32>
    %56 = vector.shape_cast %55 : vector<16x16x3xf32> to vector<256x3xf32>
    %57 = arith.truncf %56 : vector<256x3xf32> to vector<256x3xbf16>
    %c2_67 = arith.constant 2 : index
    %c1_68 = arith.constant 1 : index
    %c0_69 = arith.constant 0 : index
    %c0_70 = arith.constant 0 : index
    %58 = vector.load %arg2[%c2_67, %c1_68, %c0_69, %c0_70] : memref<3x3x3x64xbf16, #tpu.memory_space<vmem>>, vector<1x1x3x64xbf16>
    %59 = vector.shape_cast %58 : vector<1x1x3x64xbf16> to vector<3x64xbf16>
    %cst_71 = arith.constant dense<0.000000e+00> : vector<256x64xf32>
    %60 = tpu.matmul %57, %59, %cst_71 {dimension_numbers = #tpu.dot_dimension_numbers<[1], [0], [0], [1], [0, 0, 1, 1], [], []>} : vector<256x3xbf16>, vector<3x64xbf16>, vector<256x64xf32> -> vector<256x64xf32>
    %61 = arith.addf %54, %60 : vector<256x64xf32>
    %c2_72 = arith.constant 2 : index
    %c2_73 = arith.constant 2 : index
    %c0_74 = arith.constant 0 : index
    %62 = vector.load %arg11[%c2_72, %c2_73, %c0_74] : memref<18x18x64xf32, #tpu.memory_space<vmem>>, vector<16x16x3xf32>
    %63 = vector.shape_cast %62 : vector<16x16x3xf32> to vector<256x3xf32>
    %64 = arith.truncf %63 : vector<256x3xf32> to vector<256x3xbf16>
    %c2_75 = arith.constant 2 : index
    %c2_76 = arith.constant 2 : index
    %c0_77 = arith.constant 0 : index
    %c0_78 = arith.constant 0 : index
    %65 = vector.load %arg2[%c2_75, %c2_76, %c0_77, %c0_78] : memref<3x3x3x64xbf16, #tpu.memory_space<vmem>>, vector<1x1x3x64xbf16>
    %66 = vector.shape_cast %65 : vector<1x1x3x64xbf16> to vector<3x64xbf16>
    %cst_79 = arith.constant dense<0.000000e+00> : vector<256x64xf32>
    %67 = tpu.matmul %64, %66, %cst_79 {dimension_numbers = #tpu.dot_dimension_numbers<[1], [0], [0], [1], [0, 0, 1, 1], [], []>} : vector<256x3xbf16>, vector<3x64xbf16>, vector<256x64xf32> -> vector<256x64xf32>
    %68 = arith.addf %61, %67 : vector<256x64xf32>
    %c0_80 = arith.constant 0 : index
    %c0_81 = arith.constant 0 : index
    %69 = vector.load %arg3[%c0_80, %c0_81] : memref<1x64xf32, #tpu.memory_space<vmem>>, vector<1x64xf32>
    %70 = vector.broadcast %69 : vector<1x64xf32> to vector<256x64xf32>
    %71 = arith.addf %68, %70 : vector<256x64xf32>
    %cst_82 = arith.constant 0.000000e+00 : f32
    %72 = vector.broadcast %cst_82 : f32 to vector<256x64xf32>
    %73 = arith.maximumf %71, %72 : vector<256x64xf32>
    %74 = vector.shape_cast %73 : vector<256x64xf32> to vector<16x16x64xf32>
    %cst_83 = arith.constant 0.000000e+00 : f32
    %75 = vector.broadcast %cst_83 : f32 to vector<18x18x64xf32>
    %c0_84 = arith.constant 0 : index
    %c0_85 = arith.constant 0 : index
    %c0_86 = arith.constant 0 : index
    %76 = vector.load %arg11[%c0_84, %c0_85, %c0_86] : memref<18x18x64xf32, #tpu.memory_space<vmem>>, vector<18x18x64xf32>
    tpu.vector_store %arg11[%c0_84, %c0_85, %c0_86], %75 {strides = array<i32>} : memref<18x18x64xf32, #tpu.memory_space<vmem>>, vector<18x18x64xf32>,
    %c1_87 = arith.constant 1 : index
    %c1_88 = arith.constant 1 : index
    %c0_89 = arith.constant 0 : index
    %77 = vector.load %arg11[%c1_87, %c1_88, %c0_89] : memref<18x18x64xf32, #tpu.memory_space<vmem>>, vector<16x16x64xf32>
    tpu.vector_store %arg11[%c1_87, %c1_88, %c0_89], %74 {strides = array<i32>} : memref<18x18x64xf32, #tpu.memory_space<vmem>>, vector<16x16x64xf32>,
    %cst_90 = arith.constant 0.000000e+00 : f32
    %78 = vector.broadcast %cst_90 : f32 to vector<256x64xf32>
    %c0_91 = arith.constant 0 : index
    %c0_92 = arith.constant 0 : index
    %c0_93 = arith.constant 0 : index
    %79 = vector.load %arg11[%c0_91, %c0_92, %c0_93] : memref<18x18x64xf32, #tpu.memory_space<vmem>>, vector<16x16x64xf32>
    %80 = vector.shape_cast %79 : vector<16x16x64xf32> to vector<256x64xf32>
    %81 = arith.truncf %80 : vector<256x64xf32> to vector<256x64xbf16>
    %c0_94 = arith.constant 0 : index
    %c0_95 = arith.constant 0 : index
    %c0_96 = arith.constant 0 : index
    %c0_97 = arith.constant 0 : index
    %82 = vector.load %arg4[%c0_94, %c0_95, %c0_96, %c0_97] : memref<3x3x64x64xbf16, #tpu.memory_space<vmem>>, vector<1x1x64x64xbf16>
    %83 = vector.shape_cast %82 : vector<1x1x64x64xbf16> to vector<64x64xbf16>
    %cst_98 = arith.constant dense<0.000000e+00> : vector<256x64xf32>
    %84 = tpu.matmul %81, %83, %cst_98 {dimension_numbers = #tpu.dot_dimension_numbers<[1], [0], [0], [1], [0, 0, 1, 1], [], []>} : vector<256x64xbf16>, vector<64x64xbf16>, vector<256x64xf32> -> vector<256x64xf32>
    %85 = arith.addf %78, %84 : vector<256x64xf32>
    %c0_99 = arith.constant 0 : index
    %c1_100 = arith.constant 1 : index
    %c0_101 = arith.constant 0 : index
    %86 = vector.load %arg11[%c0_99, %c1_100, %c0_101] : memref<18x18x64xf32, #tpu.memory_space<vmem>>, vector<16x16x64xf32>
    %87 = vector.shape_cast %86 : vector<16x16x64xf32> to vector<256x64xf32>
    %88 = arith.truncf %87 : vector<256x64xf32> to vector<256x64xbf16>
    %c0_102 = arith.constant 0 : index
    %c1_103 = arith.constant 1 : index
    %c0_104 = arith.constant 0 : index
    %c0_105 = arith.constant 0 : index
    %89 = vector.load %arg4[%c0_102, %c1_103, %c0_104, %c0_105] : memref<3x3x64x64xbf16, #tpu.memory_space<vmem>>, vector<1x1x64x64xbf16>
    %90 = vector.shape_cast %89 : vector<1x1x64x64xbf16> to vector<64x64xbf16>
    %cst_106 = arith.constant dense<0.000000e+00> : vector<256x64xf32>
    %91 = tpu.matmul %88, %90, %cst_106 {dimension_numbers = #tpu.dot_dimension_numbers<[1], [0], [0], [1], [0, 0, 1, 1], [], []>} : vector<256x64xbf16>, vector<64x64xbf16>, vector<256x64xf32> -> vector<256x64xf32>
    %92 = arith.addf %85, %91 : vector<256x64xf32>
    %c0_107 = arith.constant 0 : index
    %c2_108 = arith.constant 2 : index
    %c0_109 = arith.constant 0 : index
    %93 = vector.load %arg11[%c0_107, %c2_108, %c0_109] : memref<18x18x64xf32, #tpu.memory_space<vmem>>, vector<16x16x64xf32>
    %94 = vector.shape_cast %93 : vector<16x16x64xf32> to vector<256x64xf32>
    %95 = arith.truncf %94 : vector<256x64xf32> to vector<256x64xbf16>
    %c0_110 = arith.constant 0 : index
    %c2_111 = arith.constant 2 : index
    %c0_112 = arith.constant 0 : index
    %c0_113 = arith.constant 0 : index
    %96 = vector.load %arg4[%c0_110, %c2_111, %c0_112, %c0_113] : memref<3x3x64x64xbf16, #tpu.memory_space<vmem>>, vector<1x1x64x64xbf16>
    %97 = vector.shape_cast %96 : vector<1x1x64x64xbf16> to vector<64x64xbf16>
    %cst_114 = arith.constant dense<0.000000e+00> : vector<256x64xf32>
    %98 = tpu.matmul %95, %97, %cst_114 {dimension_numbers = #tpu.dot_dimension_numbers<[1], [0], [0], [1], [0, 0, 1, 1], [], []>} : vector<256x64xbf16>, vector<64x64xbf16>, vector<256x64xf32> -> vector<256x64xf32>
    %99 = arith.addf %92, %98 : vector<256x64xf32>
    %c1_115 = arith.constant 1 : index
    %c0_116 = arith.constant 0 : index
    %c0_117 = arith.constant 0 : index
    %100 = vector.load %arg11[%c1_115, %c0_116, %c0_117] : memref<18x18x64xf32, #tpu.memory_space<vmem>>, vector<16x16x64xf32>
    %101 = vector.shape_cast %100 : vector<16x16x64xf32> to vector<256x64xf32>
    %102 = arith.truncf %101 : vector<256x64xf32> to vector<256x64xbf16>
    %c1_118 = arith.constant 1 : index
    %c0_119 = arith.constant 0 : index
    %c0_120 = arith.constant 0 : index
    %c0_121 = arith.constant 0 : index
    %103 = vector.load %arg4[%c1_118, %c0_119, %c0_120, %c0_121] : memref<3x3x64x64xbf16, #tpu.memory_space<vmem>>, vector<1x1x64x64xbf16>
    %104 = vector.shape_cast %103 : vector<1x1x64x64xbf16> to vector<64x64xbf16>
    %cst_122 = arith.constant dense<0.000000e+00> : vector<256x64xf32>
    %105 = tpu.matmul %102, %104, %cst_122 {dimension_numbers = #tpu.dot_dimension_numbers<[1], [0], [0], [1], [0, 0, 1, 1], [], []>} : vector<256x64xbf16>, vector<64x64xbf16>, vector<256x64xf32> -> vector<256x64xf32>
    %106 = arith.addf %99, %105 : vector<256x64xf32>
    %c1_123 = arith.constant 1 : index
    %c1_124 = arith.constant 1 : index
    %c0_125 = arith.constant 0 : index
    %107 = vector.load %arg11[%c1_123, %c1_124, %c0_125] : memref<18x18x64xf32, #tpu.memory_space<vmem>>, vector<16x16x64xf32>
    %108 = vector.shape_cast %107 : vector<16x16x64xf32> to vector<256x64xf32>
    %109 = arith.truncf %108 : vector<256x64xf32> to vector<256x64xbf16>
    %c1_126 = arith.constant 1 : index
    %c1_127 = arith.constant 1 : index
    %c0_128 = arith.constant 0 : index
    %c0_129 = arith.constant 0 : index
    %110 = vector.load %arg4[%c1_126, %c1_127, %c0_128, %c0_129] : memref<3x3x64x64xbf16, #tpu.memory_space<vmem>>, vector<1x1x64x64xbf16>
    %111 = vector.shape_cast %110 : vector<1x1x64x64xbf16> to vector<64x64xbf16>
    %cst_130 = arith.constant dense<0.000000e+00> : vector<256x64xf32>
    %112 = tpu.matmul %109, %111, %cst_130 {dimension_numbers = #tpu.dot_dimension_numbers<[1], [0], [0], [1], [0, 0, 1, 1], [], []>} : vector<256x64xbf16>, vector<64x64xbf16>, vector<256x64xf32> -> vector<256x64xf32>
    %113 = arith.addf %106, %112 : vector<256x64xf32>
    %c1_131 = arith.constant 1 : index
    %c2_132 = arith.constant 2 : index
    %c0_133 = arith.constant 0 : index
    %114 = vector.load %arg11[%c1_131, %c2_132, %c0_133] : memref<18x18x64xf32, #tpu.memory_space<vmem>>, vector<16x16x64xf32>
    %115 = vector.shape_cast %114 : vector<16x16x64xf32> to vector<256x64xf32>
    %116 = arith.truncf %115 : vector<256x64xf32> to vector<256x64xbf16>
    %c1_134 = arith.constant 1 : index
    %c2_135 = arith.constant 2 : index
    %c0_136 = arith.constant 0 : index
    %c0_137 = arith.constant 0 : index
    %117 = vector.load %arg4[%c1_134, %c2_135, %c0_136, %c0_137] : memref<3x3x64x64xbf16, #tpu.memory_space<vmem>>, vector<1x1x64x64xbf16>
    %118 = vector.shape_cast %117 : vector<1x1x64x64xbf16> to vector<64x64xbf16>
    %cst_138 = arith.constant dense<0.000000e+00> : vector<256x64xf32>
    %119 = tpu.matmul %116, %118, %cst_138 {dimension_numbers = #tpu.dot_dimension_numbers<[1], [0], [0], [1], [0, 0, 1, 1], [], []>} : vector<256x64xbf16>, vector<64x64xbf16>, vector<256x64xf32> -> vector<256x64xf32>
    %120 = arith.addf %113, %119 : vector<256x64xf32>
    %c2_139 = arith.constant 2 : index
    %c0_140 = arith.constant 0 : index
    %c0_141 = arith.constant 0 : index
    %121 = vector.load %arg11[%c2_139, %c0_140, %c0_141] : memref<18x18x64xf32, #tpu.memory_space<vmem>>, vector<16x16x64xf32>
    %122 = vector.shape_cast %121 : vector<16x16x64xf32> to vector<256x64xf32>
    %123 = arith.truncf %122 : vector<256x64xf32> to vector<256x64xbf16>
    %c2_142 = arith.constant 2 : index
    %c0_143 = arith.constant 0 : index
    %c0_144 = arith.constant 0 : index
    %c0_145 = arith.constant 0 : index
    %124 = vector.load %arg4[%c2_142, %c0_143, %c0_144, %c0_145] : memref<3x3x64x64xbf16, #tpu.memory_space<vmem>>, vector<1x1x64x64xbf16>
    %125 = vector.shape_cast %124 : vector<1x1x64x64xbf16> to vector<64x64xbf16>
    %cst_146 = arith.constant dense<0.000000e+00> : vector<256x64xf32>
    %126 = tpu.matmul %123, %125, %cst_146 {dimension_numbers = #tpu.dot_dimension_numbers<[1], [0], [0], [1], [0, 0, 1, 1], [], []>} : vector<256x64xbf16>, vector<64x64xbf16>, vector<256x64xf32> -> vector<256x64xf32>
    %127 = arith.addf %120, %126 : vector<256x64xf32>
    %c2_147 = arith.constant 2 : index
    %c1_148 = arith.constant 1 : index
    %c0_149 = arith.constant 0 : index
    %128 = vector.load %arg11[%c2_147, %c1_148, %c0_149] : memref<18x18x64xf32, #tpu.memory_space<vmem>>, vector<16x16x64xf32>
    %129 = vector.shape_cast %128 : vector<16x16x64xf32> to vector<256x64xf32>
    %130 = arith.truncf %129 : vector<256x64xf32> to vector<256x64xbf16>
    %c2_150 = arith.constant 2 : index
    %c1_151 = arith.constant 1 : index
    %c0_152 = arith.constant 0 : index
    %c0_153 = arith.constant 0 : index
    %131 = vector.load %arg4[%c2_150, %c1_151, %c0_152, %c0_153] : memref<3x3x64x64xbf16, #tpu.memory_space<vmem>>, vector<1x1x64x64xbf16>
    %132 = vector.shape_cast %131 : vector<1x1x64x64xbf16> to vector<64x64xbf16>
    %cst_154 = arith.constant dense<0.000000e+00> : vector<256x64xf32>
    %133 = tpu.matmul %130, %132, %cst_154 {dimension_numbers = #tpu.dot_dimension_numbers<[1], [0], [0], [1], [0, 0, 1, 1], [], []>} : vector<256x64xbf16>, vector<64x64xbf16>, vector<256x64xf32> -> vector<256x64xf32>
    %134 = arith.addf %127, %133 : vector<256x64xf32>
    %c2_155 = arith.constant 2 : index
    %c2_156 = arith.constant 2 : index
    %c0_157 = arith.constant 0 : index
    %135 = vector.load %arg11[%c2_155, %c2_156, %c0_157] : memref<18x18x64xf32, #tpu.memory_space<vmem>>, vector<16x16x64xf32>
    %136 = vector.shape_cast %135 : vector<16x16x64xf32> to vector<256x64xf32>
    %137 = arith.truncf %136 : vector<256x64xf32> to vector<256x64xbf16>
    %c2_158 = arith.constant 2 : index
    %c2_159 = arith.constant 2 : index
    %c0_160 = arith.constant 0 : index
    %c0_161 = arith.constant 0 : index
    %138 = vector.load %arg4[%c2_158, %c2_159, %c0_160, %c0_161] : memref<3x3x64x64xbf16, #tpu.memory_space<vmem>>, vector<1x1x64x64xbf16>
    %139 = vector.shape_cast %138 : vector<1x1x64x64xbf16> to vector<64x64xbf16>
    %cst_162 = arith.constant dense<0.000000e+00> : vector<256x64xf32>
    %140 = tpu.matmul %137, %139, %cst_162 {dimension_numbers = #tpu.dot_dimension_numbers<[1], [0], [0], [1], [0, 0, 1, 1], [], []>} : vector<256x64xbf16>, vector<64x64xbf16>, vector<256x64xf32> -> vector<256x64xf32>
    %141 = arith.addf %134, %140 : vector<256x64xf32>
    %c0_163 = arith.constant 0 : index
    %c0_164 = arith.constant 0 : index
    %142 = vector.load %arg5[%c0_163, %c0_164] : memref<1x64xf32, #tpu.memory_space<vmem>>, vector<1x64xf32>
    %143 = vector.broadcast %142 : vector<1x64xf32> to vector<256x64xf32>
    %144 = arith.addf %141, %143 : vector<256x64xf32>
    %cst_165 = arith.constant 0.000000e+00 : f32
    %145 = vector.broadcast %cst_165 : f32 to vector<256x64xf32>
    %146 = arith.maximumf %144, %145 : vector<256x64xf32>
    %147 = vector.shape_cast %146 : vector<256x64xf32> to vector<16x16x64xf32>
    %148 = vector.shape_cast %147 : vector<16x16x64xf32> to vector<256x64xf32>
    %149 = arith.truncf %148 : vector<256x64xf32> to vector<256x64xbf16>
    %c0_166 = arith.constant 0 : index
    %c0_167 = arith.constant 0 : index
    %c0_168 = arith.constant 0 : index
    %c0_169 = arith.constant 0 : index
    %150 = vector.load %arg6[%c0_166, %c0_167, %c0_168, %c0_169] : memref<1x1x64x64xbf16, #tpu.memory_space<vmem>>, vector<1x1x64x64xbf16>
    %151 = vector.shape_cast %150 : vector<1x1x64x64xbf16> to vector<64x64xbf16>
    %cst_170 = arith.constant dense<0.000000e+00> : vector<256x64xf32>
    %152 = tpu.matmul %149, %151, %cst_170 {dimension_numbers = #tpu.dot_dimension_numbers<[1], [0], [0], [1], [0, 0, 1, 1], [], []>} : vector<256x64xbf16>, vector<64x64xbf16>, vector<256x64xf32> -> vector<256x64xf32>
    %c0_171 = arith.constant 0 : index
    %c0_172 = arith.constant 0 : index
    %153 = vector.load %arg7[%c0_171, %c0_172] : memref<1x64xf32, #tpu.memory_space<vmem>>, vector<1x64xf32>
    %154 = vector.broadcast %153 : vector<1x64xf32> to vector<256x64xf32>
    %155 = arith.addf %152, %154 : vector<256x64xf32>
    %cst_173 = arith.constant 0.000000e+00 : f32
    %156 = vector.broadcast %cst_173 : f32 to vector<256x64xf32>
    %157 = arith.maximumf %155, %156 : vector<256x64xf32>
    %158 = vector.shape_cast %157 : vector<256x64xf32> to vector<16x16x64xf32>
    %159 = vector.shape_cast %158 : vector<16x16x64xf32> to vector<256x64xf32>
    %160 = arith.truncf %159 : vector<256x64xf32> to vector<256x64xbf16>
    %c0_174 = arith.constant 0 : index
    %c0_175 = arith.constant 0 : index
    %c0_176 = arith.constant 0 : index
    %c0_177 = arith.constant 0 : index
    %161 = vector.load %arg8[%c0_174, %c0_175, %c0_176, %c0_177] : memref<1x1x64x3xbf16, #tpu.memory_space<vmem>>, vector<1x1x64x3xbf16>
    %162 = vector.shape_cast %161 : vector<1x1x64x3xbf16> to vector<64x3xbf16>
    %cst_178 = arith.constant dense<0.000000e+00> : vector<256x3xf32>
    %163 = tpu.matmul %160, %162, %cst_178 {dimension_numbers = #tpu.dot_dimension_numbers<[1], [0], [0], [1], [0, 0, 1, 1], [], []>} : vector<256x64xbf16>, vector<64x3xbf16>, vector<256x3xf32> -> vector<256x3xf32>
    %c0_179 = arith.constant 0 : index
    %c0_180 = arith.constant 0 : index
    %164 = vector.load %arg9[%c0_179, %c0_180] : memref<1x3xf32, #tpu.memory_space<vmem>>, vector<1x3xf32>
    %165 = vector.broadcast %164 : vector<1x3xf32> to vector<256x3xf32>
    %166 = arith.addf %163, %165 : vector<256x3xf32>
    %167 = vector.shape_cast %166 : vector<256x3xf32> to vector<16x16x3xf32>
    %c0_181 = arith.constant 0 : index
    %c0_182 = arith.constant 0 : index
    %c0_183 = arith.constant 0 : index
    %c0_184 = arith.constant 0 : index
    %168 = vector.load %arg10[%c0_181, %c0_182, %c0_183, %c0_184] : memref<1x16x16x3xf32, #tpu.memory_space<vmem>>, vector<1x16x16x3xf32>
    %169 = vector.shape_cast %168 : vector<1x16x16x3xf32> to vector<16x16x3xf32>
    %170 = vector.shape_cast %167 : vector<16x16x3xf32> to vector<1x16x16x3xf32>
    tpu.vector_store %arg10[%c0_181, %c0_182, %c0_183, %c0_184], %170 {strides = array<i32>} : memref<1x16x16x3xf32, #tpu.memory_space<vmem>>, vector<1x16x16x3xf32>,
    return
  }
  func.func @transform_0(%arg0: i32) -> (i32, i32, i32, i32) {
    %c0_i32 = arith.constant 0 : i32
    %c0_i32_0 = arith.constant 0 : i32
    %c0_i32_1 = arith.constant 0 : i32
    %c0_i32_2 = arith.constant 0 : i32
    return %arg0, %c0_i32, %c0_i32_0, %c0_i32_1 : i32, i32, i32, i32
  }
  func.func @transform_1(%arg0: i32) -> (i32, i32, i32, i32) {
    %c0_i32 = arith.constant 0 : i32
    %c0_i32_0 = arith.constant 0 : i32
    %c0_i32_1 = arith.constant 0 : i32
    %c0_i32_2 = arith.constant 0 : i32
    %c0_i32_3 = arith.constant 0 : i32
    return %c0_i32, %c0_i32_0, %c0_i32_1, %c0_i32_2 : i32, i32, i32, i32
  }
  func.func @transform_2(%arg0: i32) -> (i32, i32) {
    %c0_i32 = arith.constant 0 : i32
    %c0_i32_0 = arith.constant 0 : i32
    %c0_i32_1 = arith.constant 0 : i32
    return %c0_i32, %c0_i32_0 : i32, i32
  }
  func.func @transform_3(%arg0: i32) -> (i32, i32, i32, i32) {
    %c0_i32 = arith.constant 0 : i32
    %c0_i32_0 = arith.constant 0 : i32
    %c0_i32_1 = arith.constant 0 : i32
    %c0_i32_2 = arith.constant 0 : i32
    %c0_i32_3 = arith.constant 0 : i32
    return %c0_i32, %c0_i32_0, %c0_i32_1, %c0_i32_2 : i32, i32, i32, i32
  }
  func.func @transform_4(%arg0: i32) -> (i32, i32) {
    %c0_i32 = arith.constant 0 : i32
    %c0_i32_0 = arith.constant 0 : i32
    %c0_i32_1 = arith.constant 0 : i32
    return %c0_i32, %c0_i32_0 : i32, i32
  }
  func.func @transform_5(%arg0: i32) -> (i32, i32, i32, i32) {
    %c0_i32 = arith.constant 0 : i32
    %c0_i32_0 = arith.constant 0 : i32
    %c0_i32_1 = arith.constant 0 : i32
    %c0_i32_2 = arith.constant 0 : i32
    %c0_i32_3 = arith.constant 0 : i32
    return %c0_i32, %c0_i32_0, %c0_i32_1, %c0_i32_2 : i32, i32, i32, i32
  }
  func.func @transform_6(%arg0: i32) -> (i32, i32) {
    %c0_i32 = arith.constant 0 : i32
    %c0_i32_0 = arith.constant 0 : i32
    %c0_i32_1 = arith.constant 0 : i32
    return %c0_i32, %c0_i32_0 : i32, i32
  }
  func.func @transform_7(%arg0: i32) -> (i32, i32, i32, i32) {
    %c0_i32 = arith.constant 0 : i32
    %c0_i32_0 = arith.constant 0 : i32
    %c0_i32_1 = arith.constant 0 : i32
    %c0_i32_2 = arith.constant 0 : i32
    %c0_i32_3 = arith.constant 0 : i32
    return %c0_i32, %c0_i32_0, %c0_i32_1, %c0_i32_2 : i32, i32, i32, i32
  }
  func.func @transform_8(%arg0: i32) -> (i32, i32) {
    %c0_i32 = arith.constant 0 : i32
    %c0_i32_0 = arith.constant 0 : i32
    %c0_i32_1 = arith.constant 0 : i32
    return %c0_i32, %c0_i32_0 : i32, i32
  }
  func.func @transform_9(%arg0: i32) -> (i32, i32, i32, i32) {
    %c0_i32 = arith.constant 0 : i32
    %c0_i32_0 = arith.constant 0 : i32
    %c0_i32_1 = arith.constant 0 : i32
    %c0_i32_2 = arith.constant 0 : i32
    return %arg0, %c0_i32, %c0_i32_0, %c0_i32_1 : i32, i32, i32, i32
  }
}

</mosaic_0001>

<llo_original>
// kernel: tpu_custom_call.1
$region0: #{tpu_custom_call.1}
  #allocation0 [shape = 'u32[]', space=smem, size = 0x4, offset = 0x4, fixed_abs, tag = 'smem constant byte address 0x4 - core index']
  #allocation1 [shape = 'u32[144,128]{1,0:T(1,128)}', space=vmem, size = 0x12000, scoped, tag = 'internal scratch']
  #allocation2 [shape = 'f32[18,18,64]{2,1,0:T(8,128)}', space=vmem, size = 0x36000, scoped, tag = 'scratch operand']
  %s0 = inlined_call_operand.vmem [shape: f32[2,16,16,3], index: 0, kind: input, shape index: {}]
  %s1 = inlined_call_operand.vmem [shape: bf16[3,3,3,64], index: 1, kind: input, shape index: {}]
  %s2 = inlined_call_operand.vmem [shape: f32[1,64], index: 2, kind: input, shape index: {}]
  %s3 = inlined_call_operand.vmem [shape: bf16[3,3,64,64], index: 3, kind: input, shape index: {}]
  %s4 = inlined_call_operand.vmem [shape: f32[1,64], index: 4, kind: input, shape index: {}]
  %s5 = inlined_call_operand.vmem [shape: bf16[1,1,64,64], index: 5, kind: input, shape index: {}]
  %s6 = inlined_call_operand.vmem [shape: f32[1,64], index: 6, kind: input, shape index: {}]
  %s7 = inlined_call_operand.vmem [shape: bf16[1,1,64,3], index: 7, kind: input, shape index: {}]
  %s8 = inlined_call_operand.vmem [shape: f32[1,3], index: 8, kind: input, shape index: {}]
  %s9 = inlined_call_operand.vmem [shape: f32[2,16,16,3], index: 9, kind: output, shape index: {}]
  %s10 = sld [smem:[#allocation0]]
  $region69: #{tpu_custom_call.1} parent=0
    _
  %s12 = ssub.s32 1, %s10
  %s13 = scalar_select 0, %s12, %s10
  loop: start=0, step=1, limit=4
  $region2: #{tpu_custom_call.1} parent=0 // loop_pre_header
    _
  $region3: #{tpu_custom_call.1} parent=0 // loop_header
    %s15 = sphi 0, %s19
    %p16 = scmp.ge.s32.totalorder %s15, 4
    %s25 = sphi 0, %s27
    %s28 = sphi 0, %s25
    %s29 = sphi 0, %s28
    %s45 = sphi 0, %s29
    %s49 = sphi 0, %s49
    %s51 = sphi 0, %s49
    %s52 = sphi 0, %s51
    %s66 = sphi 0, %s52
    %s70 = sphi 0, %s70
    %s72 = sphi 0, %s70
    %s73 = sphi 0, %s72
    %s87 = sphi 0, %s73
    %s91 = sphi 0, %s91
    %s93 = sphi 0, %s91
    %s94 = sphi 0, %s93
    %s108 = sphi 0, %s94
    %s112 = sphi 0, %s112
    %s114 = sphi 0, %s112
    %s115 = sphi 0, %s114
    %s129 = sphi 0, %s115
    %s133 = sphi 0, %s133
    %s135 = sphi 0, %s133
    %s136 = sphi 0, %s135
    %s150 = sphi 0, %s136
    %s154 = sphi 0, %s154
    %s156 = sphi 0, %s154
    %s157 = sphi 0, %s156
    %s171 = sphi 0, %s157
    %s175 = sphi 0, %s175
    %s177 = sphi 0, %s175
    %s178 = sphi 0, %s177
    %s192 = sphi 0, %s178
    %s196 = sphi 0, %s196
    %s198 = sphi 0, %s196
    %s199 = sphi 0, %s198
    %s213 = sphi 0, %s199
    %s219 = sphi 0, %s221
    %s222 = sphi 0, %s219
    %s223 = sphi 0, %s222
    %s239 = sphi 0, %s223
  $region4: #{tpu_custom_call.1} parent=0 // loop_header_branch
    %18 = sbr.rel (%p16) target = $region8
  $region5: #{tpu_custom_call.1} parent=0 // loop_body
    %s20 = ssub.s32 %s15, 1
    %s21 = ssub.s32 %s15, 2
    %s22 = sadd.s32 %s15, 1
    %s23 = ssub.s32 %s15, %s22
    %p24 = scmp.eq.s32.totalorder %s23, 0
    %s26 = sadd.s32 %s25, 1
    %s27 = scalar_select %p24, %s25, %s26
    %p30 = pneg %p24
    %p31 = scmp.eq.s32.totalorder %s15, 1
    %p32 = por %p30, %p31
    %p33 = scmp.ne.s32.totalorder %s25, %s28
    %p34 = scmp.eq.s32.totalorder %s15, 0
    %p35 = por %p33, %p34
    %p36 = scmp.ne.s32.totalorder %s25, %s28
    %p37 = scmp.eq.s32.totalorder %s20, 1
    %p38 = por %p36, %p37
    %p39 = scmp.ne.s32.totalorder %s28, %s29
    %p40 = scmp.eq.s32.totalorder %s20, 0
    %p41 = por %p39, %p40
    %p42 = scmp.ne.s32.totalorder %s28, %s29
    %p43 = scmp.eq.s32.totalorder %s21, 1
    %p44 = por %p42, %p43
    %p46 = scmp.ne.s32.totalorder %s29, %s45
    %p47 = scmp.eq.s32.totalorder %s21, 0
    %p48 = por %p46, %p47
    %s50 = sadd.s32 %s49, 1
    %p53 = scmp.eq.s32.totalorder %s15, 1
    %p54 = scmp.ne.s32.totalorder %s49, %s51
    %p55 = scmp.eq.s32.totalorder %s15, 0
    %p56 = por %p54, %p55
    %p57 = scmp.ne.s32.totalorder %s49, %s51
    %p58 = scmp.eq.s32.totalorder %s20, 1
    %p59 = por %p57, %p58
    %p60 = scmp.ne.s32.totalorder %s51, %s52
    %p61 = scmp.eq.s32.totalorder %s20, 0
    %p62 = por %p60, %p61
    %p63 = scmp.ne.s32.totalorder %s51, %s52
    %p64 = scmp.eq.s32.totalorder %s21, 1
    %p65 = por %p63, %p64
    %p67 = scmp.ne.s32.totalorder %s52, %s66
    %p68 = scmp.eq.s32.totalorder %s21, 0
    %p69 = por %p67, %p68
    %s71 = sadd.s32 %s70, 1
    %p74 = scmp.eq.s32.totalorder %s15, 1
    %p75 = scmp.ne.s32.totalorder %s70, %s72
    %p76 = scmp.eq.s32.totalorder %s15, 0
    %p77 = por %p75, %p76
    %p78 = scmp.ne.s32.totalorder %s70, %s72
    %p79 = scmp.eq.s32.totalorder %s20, 1
    %p80 = por %p78, %p79
    %p81 = scmp.ne.s32.totalorder %s72, %s73
    %p82 = scmp.eq.s32.totalorder %s20, 0
    %p83 = por %p81, %p82
    %p84 = scmp.ne.s32.totalorder %s72, %s73
    %p85 = scmp.eq.s32.totalorder %s21, 1
    %p86 = por %p84, %p85
    %p88 = scmp.ne.s32.totalorder %s73, %s87
    %p89 = scmp.eq.s32.totalorder %s21, 0
    %p90 = por %p88, %p89
    %s92 = sadd.s32 %s91, 1
    %p95 = scmp.eq.s32.totalorder %s15, 1
    %p96 = scmp.ne.s32.totalorder %s91, %s93
    %p97 = scmp.eq.s32.totalorder %s15, 0
    %p98 = por %p96, %p97
    %p99 = scmp.ne.s32.totalorder %s91, %s93
    %p100 = scmp.eq.s32.totalorder %s20, 1
    %p101 = por %p99, %p100
    %p102 = scmp.ne.s32.totalorder %s93, %s94
    %p103 = scmp.eq.s32.totalorder %s20, 0
    %p104 = por %p102, %p103
    %p105 = scmp.ne.s32.totalorder %s93, %s94
    %p106 = scmp.eq.s32.totalorder %s21, 1
    %p107 = por %p105, %p106
    %p109 = scmp.ne.s32.totalorder %s94, %s108
    %p110 = scmp.eq.s32.totalorder %s21, 0
    %p111 = por %p109, %p110
    %s113 = sadd.s32 %s112, 1
    %p116 = scmp.eq.s32.totalorder %s15, 1
    %p117 = scmp.ne.s32.totalorder %s112, %s114
    %p118 = scmp.eq.s32.totalorder %s15, 0
    %p119 = por %p117, %p118
    %p120 = scmp.ne.s32.totalorder %s112, %s114
    %p121 = scmp.eq.s32.totalorder %s20, 1
    %p122 = por %p120, %p121
    %p123 = scmp.ne.s32.totalorder %s114, %s115
    %p124 = scmp.eq.s32.totalorder %s20, 0
    %p125 = por %p123, %p124
    %p126 = scmp.ne.s32.totalorder %s114, %s115
    %p127 = scmp.eq.s32.totalorder %s21, 1
    %p128 = por %p126, %p127
    %p130 = scmp.ne.s32.totalorder %s115, %s129
    %p131 = scmp.eq.s32.totalorder %s21, 0
    %p132 = por %p130, %p131
    %s134 = sadd.s32 %s133, 1
    %p137 = scmp.eq.s32.totalorder %s15, 1
    %p138 = scmp.ne.s32.totalorder %s133, %s135
    %p139 = scmp.eq.s32.totalorder %s15, 0
    %p140 = por %p138, %p139
    %p141 = scmp.ne.s32.totalorder %s133, %s135
    %p142 = scmp.eq.s32.totalorder %s20, 1
    %p143 = por %p141, %p142
    %p144 = scmp.ne.s32.totalorder %s135, %s136
    %p145 = scmp.eq.s32.totalorder %s20, 0
    %p146 = por %p144, %p145
    %p147 = scmp.ne.s32.totalorder %s135, %s136
    %p148 = scmp.eq.s32.totalorder %s21, 1
    %p149 = por %p147, %p148
    %p151 = scmp.ne.s32.totalorder %s136, %s150
    %p152 = scmp.eq.s32.totalorder %s21, 0
    %p153 = por %p151, %p152
    %s155 = sadd.s32 %s154, 1
    %p158 = scmp.eq.s32.totalorder %s15, 1
    %p159 = scmp.ne.s32.totalorder %s154, %s156
    %p160 = scmp.eq.s32.totalorder %s15, 0
    %p161 = por %p159, %p160
    %p162 = scmp.ne.s32.totalorder %s154, %s156
    %p163 = scmp.eq.s32.totalorder %s20, 1
    %p164 = por %p162, %p163
    %p165 = scmp.ne.s32.totalorder %s156, %s157
    %p166 = scmp.eq.s32.totalorder %s20, 0
    %p167 = por %p165, %p166
    %p168 = scmp.ne.s32.totalorder %s156, %s157
    %p169 = scmp.eq.s32.totalorder %s21, 1
    %p170 = por %p168, %p169
    %p172 = scmp.ne.s32.totalorder %s157, %s171
    %p173 = scmp.eq.s32.totalorder %s21, 0
    %p174 = por %p172, %p173
    %s176 = sadd.s32 %s175, 1
    %p179 = scmp.eq.s32.totalorder %s15, 1
    %p180 = scmp.ne.s32.totalorder %s175, %s177
    %p181 = scmp.eq.s32.totalorder %s15, 0
    %p182 = por %p180, %p181
    %p183 = scmp.ne.s32.totalorder %s175, %s177
    %p184 = scmp.eq.s32.totalorder %s20, 1
    %p185 = por %p183, %p184
    %p186 = scmp.ne.s32.totalorder %s177, %s178
    %p187 = scmp.eq.s32.totalorder %s20, 0
    %p188 = por %p186, %p187
    %p189 = scmp.ne.s32.totalorder %s177, %s178
    %p190 = scmp.eq.s32.totalorder %s21, 1
    %p191 = por %p189, %p190
    %p193 = scmp.ne.s32.totalorder %s178, %s192
    %p194 = scmp.eq.s32.totalorder %s21, 0
    %p195 = por %p193, %p194
    %s197 = sadd.s32 %s196, 1
    %p200 = scmp.eq.s32.totalorder %s15, 1
    %p201 = scmp.ne.s32.totalorder %s196, %s198
    %p202 = scmp.eq.s32.totalorder %s15, 0
    %p203 = por %p201, %p202
    %p204 = scmp.ne.s32.totalorder %s196, %s198
    %p205 = scmp.eq.s32.totalorder %s20, 1
    %p206 = por %p204, %p205
    %p207 = scmp.ne.s32.totalorder %s198, %s199
    %p208 = scmp.eq.s32.totalorder %s20, 0
    %p209 = por %p207, %p208
    %p210 = scmp.ne.s32.totalorder %s198, %s199
    %p211 = scmp.eq.s32.totalorder %s21, 1
    %p212 = por %p210, %p211
    %p214 = scmp.ne.s32.totalorder %s199, %s213
    %p215 = scmp.eq.s32.totalorder %s21, 0
    %p216 = por %p214, %p215
    %s217 = ssub.s32 %s15, %s22
    %p218 = scmp.eq.s32.totalorder %s217, 0
    %s220 = sadd.s32 %s219, 1
    %s221 = scalar_select %p218, %s219, %s220
    %p224 = pneg %p218
    %p225 = scmp.eq.s32.totalorder %s15, 1
    %p226 = por %p224, %p225
    %p227 = scmp.ne.s32.totalorder %s219, %s222
    %p228 = scmp.eq.s32.totalorder %s15, 0
    %p229 = por %p227, %p228
    %p230 = scmp.ne.s32.totalorder %s219, %s222
    %p231 = scmp.eq.s32.totalorder %s20, 1
    %p232 = por %p230, %p231
    %p233 = scmp.ne.s32.totalorder %s222, %s223
    %p234 = scmp.eq.s32.totalorder %s20, 0
    %p235 = por %p233, %p234
    %p236 = scmp.ne.s32.totalorder %s222, %s223
    %p237 = scmp.eq.s32.totalorder %s21, 1
    %p238 = por %p236, %p237
    %p240 = scmp.ne.s32.totalorder %s223, %s239
    %p241 = scmp.eq.s32.totalorder %s21, 0
    %p242 = por %p240, %p241
    %p243 = scmp.le.s32.totalorder 1, %s15
    %p244 = scmp.lt.s32.totalorder %s15, 3
    %p245 = pnand %p243, %p244
    %p246 = pneg %p245
    // Predicated region
    $region9: #{tpu_custom_call.1} parent=5 // pred_check
      _
    $region10: #{tpu_custom_call.1} parent=5 // pred_check_branch
      %248 = sbr.rel (%p245) target = $region12
    $region11: #{tpu_custom_call.1} parent=5 // pred_region
      %s249 = ssub.s32 %s15, 1
      // Predicated region
      $region13: #{tpu_custom_call.1} parent=11 // pred_check
        %p250 = pneg %p62
      $region14: #{tpu_custom_call.1} parent=11 // pred_check_branch
        %252 = sbr.rel (%p250) target = $region16
      $region15: #{tpu_custom_call.1} parent=11 // pred_region
        _
      $region16: #{tpu_custom_call.1} parent=11 // pred_fallthru
        _
      // Predicated region
      $region17: #{tpu_custom_call.1} parent=11 // pred_check
        %p253 = pneg %p83
      $region18: #{tpu_custom_call.1} parent=11 // pred_check_branch
        %255 = sbr.rel (%p253) target = $region20
      $region19: #{tpu_custom_call.1} parent=11 // pred_region
        _
      $region20: #{tpu_custom_call.1} parent=11 // pred_fallthru
        _
      // Predicated region
      $region21: #{tpu_custom_call.1} parent=11 // pred_check
        %p256 = pneg %p104
      $region22: #{tpu_custom_call.1} parent=11 // pred_check_branch
        %258 = sbr.rel (%p256) target = $region24
      $region23: #{tpu_custom_call.1} parent=11 // pred_region
        _
      $region24: #{tpu_custom_call.1} parent=11 // pred_fallthru
        _
      // Predicated region
      $region25: #{tpu_custom_call.1} parent=11 // pred_check
        %p259 = pneg %p125
      $region26: #{tpu_custom_call.1} parent=11 // pred_check_branch
        %261 = sbr.rel (%p259) target = $region28
      $region27: #{tpu_custom_call.1} parent=11 // pred_region
        _
      $region28: #{tpu_custom_call.1} parent=11 // pred_fallthru
        _
      // Predicated region
      $region29: #{tpu_custom_call.1} parent=11 // pred_check
        %p262 = pneg %p146
      $region30: #{tpu_custom_call.1} parent=11 // pred_check_branch
        %264 = sbr.rel (%p262) target = $region32
      $region31: #{tpu_custom_call.1} parent=11 // pred_region
        _
      $region32: #{tpu_custom_call.1} parent=11 // pred_fallthru
        _
      // Predicated region
      $region33: #{tpu_custom_call.1} parent=11 // pred_check
        %p265 = pneg %p167
      $region34: #{tpu_custom_call.1} parent=11 // pred_check_branch
        %267 = sbr.rel (%p265) target = $region36
      $region35: #{tpu_custom_call.1} parent=11 // pred_region
        _
      $region36: #{tpu_custom_call.1} parent=11 // pred_fallthru
        _
      // Predicated region
      $region37: #{tpu_custom_call.1} parent=11 // pred_check
        %p268 = pneg %p188
      $region38: #{tpu_custom_call.1} parent=11 // pred_check_branch
        %270 = sbr.rel (%p268) target = $region40
      $region39: #{tpu_custom_call.1} parent=11 // pred_region
        _
      $region40: #{tpu_custom_call.1} parent=11 // pred_fallthru
        _
      // Predicated region
      $region41: #{tpu_custom_call.1} parent=11 // pred_check
        %p271 = pneg %p209
      $region42: #{tpu_custom_call.1} parent=11 // pred_check_branch
        %273 = sbr.rel (%p271) target = $region44
      $region43: #{tpu_custom_call.1} parent=11 // pred_region
        _
      $region44: #{tpu_custom_call.1} parent=11 // pred_fallthru
        _
    $region12: #{tpu_custom_call.1} parent=5 // pred_fallthru
      _
    %p274 = scmp.lt.s32.totalorder %s15, 2
    // Predicated region
    $region45: #{tpu_custom_call.1} parent=5 // pred_check
      %p275 = pneg %p274
    $region46: #{tpu_custom_call.1} parent=5 // pred_check_branch
      %277 = sbr.rel (%p275) target = $region48
    $region47: #{tpu_custom_call.1} parent=5 // pred_region
      // Predicated region
      $region49: #{tpu_custom_call.1} parent=47 // pred_check
        %p278 = pneg %p35
      $region50: #{tpu_custom_call.1} parent=47 // pred_check_branch
        %280 = sbr.rel (%p278) target = $region52
      $region51: #{tpu_custom_call.1} parent=47 // pred_region
        %p281 = scmp.lt.s32.totalorder %s15, 1
        %s282 = scalar_select %p281, %s15, 1
        %s283 = smul.addr %s282, 32
        %s284 = smul.addr %s283, 8
        %s285 = scalar_lea.vmem %s0, %s284
      $region52: #{tpu_custom_call.1} parent=47 // pred_fallthru
        _
    $region48: #{tpu_custom_call.1} parent=5 // pred_fallthru
      _
    %p286 = scmp.le.s32.totalorder 1, %s15
    %p287 = scmp.lt.s32.totalorder %s15, 3
    %p288 = pnand %p286, %p287
    %p289 = pneg %p288
    // Predicated region
    $region53: #{tpu_custom_call.1} parent=5 // pred_check
      _
    $region54: #{tpu_custom_call.1} parent=5 // pred_check_branch
      %291 = sbr.rel (%p288) target = $region56
    $region55: #{tpu_custom_call.1} parent=5 // pred_region
      %s292 = ssub.s32 %s15, 1
      %p293 = scmp.lt.s32.totalorder %s20, 1
      %s294 = scalar_select %p293, %s20, 1
      %s295 = smul.addr %s294, 32
      %s296 = smul.addr %s295, 8
      %s297 = scalar_lea.vmem %s0, %s296
      %p298 = pneg %p41
      %p299 = pneg %p38
      %p300 = pneg %p62
      %p301 = pneg %p59
      %p302 = pneg %p83
      %p303 = pneg %p80
      %p304 = pneg %p104
      %p305 = pneg %p101
      %p306 = pneg %p125
      %p307 = pneg %p122
      %p308 = pneg %p146
      %p309 = pneg %p143
      %p310 = pneg %p167
      %p311 = pneg %p164
      %p312 = pneg %p188
      %p313 = pneg %p185
      %p314 = pneg %p209
      %p315 = pneg %p206
      %p316 = pneg %p235
      %p317 = pneg %p232
      %p318 = scmp.lt.s32.totalorder %s20, 1
      %s319 = scalar_select %p318, %s20, 1
      %s320 = smul.addr %s319, 32
      %s321 = smul.addr %s320, 8
      %s322 = scalar_lea.vmem %s9, %s321
      %p323 = scmp.lt.s32.totalorder %s20, 1
      %s324 = scalar_select %p323, %s20, 1
      %s325 = smul.addr %s324, 32
      %s326 = smul.addr %s325, 8
      %s327 = scalar_lea.vmem %s0, %s326
      %p328 = scmp.lt.s32.totalorder %s20, 1
      %s329 = scalar_select %p328, %s20, 1
      %s330 = smul.addr %s329, 32
      %s331 = smul.addr %s330, 8
      %s332 = scalar_lea.vmem %s9, %s331
      %v334 = vld [vmem:[%s327] sm:$0xff]
      %v335 = vld [vmem:[%s327 + $0x8] sm:$0xff]
      %v336 = vld [vmem:[%s327 + $0x10] sm:$0xff]
      %v337 = vld [vmem:[%s327 + $0x18] sm:$0xff]
      %v338 = vld [vmem:[%s327 + $0x20] sm:$0xff]
      %v339 = vld [vmem:[%s327 + $0x28] sm:$0xff]
      %v340 = vld [vmem:[%s327 + $0x30] sm:$0xff]
      %v341 = vld [vmem:[%s327 + $0x38] sm:$0xff]
      %v342 = vld [vmem:[%s327 + $0x40] sm:$0xff]
      %v343 = vld [vmem:[%s327 + $0x48] sm:$0xff]
      %v344 = vld [vmem:[%s327 + $0x50] sm:$0xff]
      %v345 = vld [vmem:[%s327 + $0x58] sm:$0xff]
      %v346 = vld [vmem:[%s327 + $0x60] sm:$0xff]
      %v347 = vld [vmem:[%s327 + $0x68] sm:$0xff]
      %v348 = vld [vmem:[%s327 + $0x70] sm:$0xff]
      %v349 = vld [vmem:[%s327 + $0x78] sm:$0xff]
      %v350 = vld [vmem:[%s327 + $0x80] sm:$0xff]
      %v351 = vld [vmem:[%s327 + $0x88] sm:$0xff]
      %v352 = vld [vmem:[%s327 + $0x90] sm:$0xff]
      %v353 = vld [vmem:[%s327 + $0x98] sm:$0xff]
      %v354 = vld [vmem:[%s327 + $0xa0] sm:$0xff]
      %v355 = vld [vmem:[%s327 + $0xa8] sm:$0xff]
      %v356 = vld [vmem:[%s327 + $0xb0] sm:$0xff]
      %v357 = vld [vmem:[%s327 + $0xb8] sm:$0xff]
      %v358 = vld [vmem:[%s327 + $0xc0] sm:$0xff]
      %v359 = vld [vmem:[%s327 + $0xc8] sm:$0xff]
      %v360 = vld [vmem:[%s327 + $0xd0] sm:$0xff]
      %v361 = vld [vmem:[%s327 + $0xd8] sm:$0xff]
      %v362 = vld [vmem:[%s327 + $0xe0] sm:$0xff]
      %v363 = vld [vmem:[%s327 + $0xe8] sm:$0xff]
      %v364 = vld [vmem:[%s327 + $0xf0] sm:$0xff]
      %v365 = vld [vmem:[%s327 + $0xf8] sm:$0xff]
      %vm366 = vcmask 523264
      %367 = vst.msk [vmem:[#allocation2] sm:$0xff] %vm366, 0.0
      %368 = vst.msk [vmem:[#allocation2 + $0x8] sm:$0xff] %vm366, 0.0
      %vm369 = vcmask 517120
      %370 = vst.msk [vmem:[#allocation2 + $0x10] sm:$0x3] %vm369, 0.0
      %371 = vst.msk [vmem:[#allocation2 + $0x18] sm:$0xff] %vm366, 0.0
      %372 = vst.msk [vmem:[#allocation2 + $0x20] sm:$0xff] %vm366, 0.0
      %373 = vst.msk [vmem:[#allocation2 + $0x28] sm:$0x3] %vm369, 0.0
      %374 = vst.msk [vmem:[#allocation2 + $0x30] sm:$0xff] %vm366, 0.0
      %375 = vst.msk [vmem:[#allocation2 + $0x38] sm:$0xff] %vm366, 0.0
      %376 = vst.msk [vmem:[#allocation2 + $0x40] sm:$0x3] %vm369, 0.0
      %377 = vst.msk [vmem:[#allocation2 + $0x48] sm:$0xff] %vm366, 0.0
      %378 = vst.msk [vmem:[#allocation2 + $0x50] sm:$0xff] %vm366, 0.0
      %379 = vst.msk [vmem:[#allocation2 + $0x58] sm:$0x3] %vm369, 0.0
      %380 = vst.msk [vmem:[#allocation2 + $0x60] sm:$0xff] %vm366, 0.0
      %381 = vst.msk [vmem:[#allocation2 + $0x68] sm:$0xff] %vm366, 0.0
      %382 = vst.msk [vmem:[#allocation2 + $0x70] sm:$0x3] %vm369, 0.0
      %383 = vst.msk [vmem:[#allocation2 + $0x78] sm:$0xff] %vm366, 0.0
      %384 = vst.msk [vmem:[#allocation2 + $0x80] sm:$0xff] %vm366, 0.0
      %385 = vst.msk [vmem:[#allocation2 + $0x88] sm:$0x3] %vm369, 0.0
      %386 = vst.msk [vmem:[#allocation2 + $0x90] sm:$0xff] %vm366, 0.0
      %387 = vst.msk [vmem:[#allocation2 + $0x98] sm:$0xff] %vm366, 0.0
      %388 = vst.msk [vmem:[#allocation2 + $0xa0] sm:$0x3] %vm369, 0.0
      %389 = vst.msk [vmem:[#allocation2 + $0xa8] sm:$0xff] %vm366, 0.0
      %390 = vst.msk [vmem:[#allocation2 + $0xb0] sm:$0xff] %vm366, 0.0
      %391 = vst.msk [vmem:[#allocation2 + $0xb8] sm:$0x3] %vm369, 0.0
      %392 = vst.msk [vmem:[#allocation2 + $0xc0] sm:$0xff] %vm366, 0.0
      %393 = vst.msk [vmem:[#allocation2 + $0xc8] sm:$0xff] %vm366, 0.0
      %394 = vst.msk [vmem:[#allocation2 + $0xd0] sm:$0x3] %vm369, 0.0
      %395 = vst.msk [vmem:[#allocation2 + $0xd8] sm:$0xff] %vm366, 0.0
      %396 = vst.msk [vmem:[#allocation2 + $0xe0] sm:$0xff] %vm366, 0.0
      %397 = vst.msk [vmem:[#allocation2 + $0xe8] sm:$0x3] %vm369, 0.0
      %398 = vst.msk [vmem:[#allocation2 + $0xf0] sm:$0xff] %vm366, 0.0
      %399 = vst.msk [vmem:[#allocation2 + $0xf8] sm:$0xff] %vm366, 0.0
      %400 = vst.msk [vmem:[#allocation2 + $0x100] sm:$0x3] %vm369, 0.0
      %401 = vst.msk [vmem:[#allocation2 + $0x108] sm:$0xff] %vm366, 0.0
      %402 = vst.msk [vmem:[#allocation2 + $0x110] sm:$0xff] %vm366, 0.0
      %403 = vst.msk [vmem:[#allocation2 + $0x118] sm:$0x3] %vm369, 0.0
      %404 = vst.msk [vmem:[#allocation2 + $0x120] sm:$0xff] %vm366, 0.0
      %405 = vst.msk [vmem:[#allocation2 + $0x128] sm:$0xff] %vm366, 0.0
      %406 = vst.msk [vmem:[#allocation2 + $0x130] sm:$0x3] %vm369, 0.0
      %407 = vst.msk [vmem:[#allocation2 + $0x138] sm:$0xff] %vm366, 0.0
      %408 = vst.msk [vmem:[#allocation2 + $0x140] sm:$0xff] %vm366, 0.0
      %409 = vst.msk [vmem:[#allocation2 + $0x148] sm:$0x3] %vm369, 0.0
      %410 = vst.msk [vmem:[#allocation2 + $0x150] sm:$0xff] %vm366, 0.0
      %411 = vst.msk [vmem:[#allocation2 + $0x158] sm:$0xff] %vm366, 0.0
      %412 = vst.msk [vmem:[#allocation2 + $0x160] sm:$0x3] %vm369, 0.0
      %413 = vst.msk [vmem:[#allocation2 + $0x168] sm:$0xff] %vm366, 0.0
      %414 = vst.msk [vmem:[#allocation2 + $0x170] sm:$0xff] %vm366, 0.0
      %415 = vst.msk [vmem:[#allocation2 + $0x178] sm:$0x3] %vm369, 0.0
      %416 = vst.msk [vmem:[#allocation2 + $0x180] sm:$0xff] %vm366, 0.0
      %417 = vst.msk [vmem:[#allocation2 + $0x188] sm:$0xff] %vm366, 0.0
      %418 = vst.msk [vmem:[#allocation2 + $0x190] sm:$0x3] %vm369, 0.0
      %419 = vst.msk [vmem:[#allocation2 + $0x198] sm:$0xff] %vm366, 0.0
      %420 = vst.msk [vmem:[#allocation2 + $0x1a0] sm:$0xff] %vm366, 0.0
      %421 = vst.msk [vmem:[#allocation2 + $0x1a8] sm:$0x3] %vm369, 0.0
      %s422 = scalar_lea.vmem [#allocation2], 24
      %vm423 = vcmask 23552
      %424 = vst.msk [vmem:[%s422 + $0x1] sm:$0xff] %vm423, %v334
      %425 = vst.msk [vmem:[%s422 + $0x9] sm:$0xff] %vm423, %v335
      %426 = vst.msk [vmem:[%s422 + $0x19] sm:$0xff] %vm423, %v336
      %427 = vst.msk [vmem:[%s422 + $0x21] sm:$0xff] %vm423, %v337
      %428 = vst.msk [vmem:[%s422 + $0x31] sm:$0xff] %vm423, %v338
      %429 = vst.msk [vmem:[%s422 + $0x39] sm:$0xff] %vm423, %v339
      %430 = vst.msk [vmem:[%s422 + $0x49] sm:$0xff] %vm423, %v340
      %431 = vst.msk [vmem:[%s422 + $0x51] sm:$0xff] %vm423, %v341
      %432 = vst.msk [vmem:[%s422 + $0x61] sm:$0xff] %vm423, %v342
      %433 = vst.msk [vmem:[%s422 + $0x69] sm:$0xff] %vm423, %v343
      %434 = vst.msk [vmem:[%s422 + $0x79] sm:$0xff] %vm423, %v344
      %435 = vst.msk [vmem:[%s422 + $0x81] sm:$0xff] %vm423, %v345
      %436 = vst.msk [vmem:[%s422 + $0x91] sm:$0xff] %vm423, %v346
      %437 = vst.msk [vmem:[%s422 + $0x99] sm:$0xff] %vm423, %v347
      %438 = vst.msk [vmem:[%s422 + $0xa9] sm:$0xff] %vm423, %v348
      %439 = vst.msk [vmem:[%s422 + $0xb1] sm:$0xff] %vm423, %v349
      %440 = vst.msk [vmem:[%s422 + $0xc1] sm:$0xff] %vm423, %v350
      %441 = vst.msk [vmem:[%s422 + $0xc9] sm:$0xff] %vm423, %v351
      %442 = vst.msk [vmem:[%s422 + $0xd9] sm:$0xff] %vm423, %v352
      %443 = vst.msk [vmem:[%s422 + $0xe1] sm:$0xff] %vm423, %v353
      %444 = vst.msk [vmem:[%s422 + $0xf1] sm:$0xff] %vm423, %v354
      %445 = vst.msk [vmem:[%s422 + $0xf9] sm:$0xff] %vm423, %v355
      %446 = vst.msk [vmem:[%s422 + $0x109] sm:$0xff] %vm423, %v356
      %447 = vst.msk [vmem:[%s422 + $0x111] sm:$0xff] %vm423, %v357
      %448 = vst.msk [vmem:[%s422 + $0x121] sm:$0xff] %vm423, %v358
      %449 = vst.msk [vmem:[%s422 + $0x129] sm:$0xff] %vm423, %v359
      %450 = vst.msk [vmem:[%s422 + $0x139] sm:$0xff] %vm423, %v360
      %451 = vst.msk [vmem:[%s422 + $0x141] sm:$0xff] %vm423, %v361
      %452 = vst.msk [vmem:[%s422 + $0x151] sm:$0xff] %vm423, %v362
      %453 = vst.msk [vmem:[%s422 + $0x159] sm:$0xff] %vm423, %v363
      %454 = vst.msk [vmem:[%s422 + $0x169] sm:$0xff] %vm423, %v364
      %455 = vst.msk [vmem:[%s422 + $0x171] sm:$0xff] %vm423, %v365
      %v456 = vld [vmem:[#allocation2] sm:$0xff]
      %v457 = vld [vmem:[#allocation2 + $0x8] sm:$0xff]
      %v458 = vld [vmem:[#allocation2 + $0x18] sm:$0xff]
      %v459 = vld [vmem:[#allocation2 + $0x20] sm:$0xff]
      %v460 = vld [vmem:[#allocation2 + $0x30] sm:$0xff]
      %v461 = vld [vmem:[#allocation2 + $0x38] sm:$0xff]
      %v462 = vld [vmem:[#allocation2 + $0x48] sm:$0xff]
      %v463 = vld [vmem:[#allocation2 + $0x50] sm:$0xff]
      %v464 = vld [vmem:[#allocation2 + $0x60] sm:$0xff]
      %v465 = vld [vmem:[#allocation2 + $0x68] sm:$0xff]
      %v466 = vld [vmem:[#allocation2 + $0x78] sm:$0xff]
      %v467 = vld [vmem:[#allocation2 + $0x80] sm:$0xff]
      %v468 = vld [vmem:[#allocation2 + $0x90] sm:$0xff]
      %v469 = vld [vmem:[#allocation2 + $0x98] sm:$0xff]
      %v470 = vld [vmem:[#allocation2 + $0xa8] sm:$0xff]
      %v471 = vld [vmem:[#allocation2 + $0xb0] sm:$0xff]
      %v472 = vld [vmem:[#allocation2 + $0xc0] sm:$0xff]
      %v473 = vld [vmem:[#allocation2 + $0xc8] sm:$0xff]
      %v474 = vld [vmem:[#allocation2 + $0xd8] sm:$0xff]
      %v475 = vld [vmem:[#allocation2 + $0xe0] sm:$0xff]
      %v476 = vld [vmem:[#allocation2 + $0xf0] sm:$0xff]
      %v477 = vld [vmem:[#allocation2 + $0xf8] sm:$0xff]
      %v478 = vld [vmem:[#allocation2 + $0x108] sm:$0xff]
      %v479 = vld [vmem:[#allocation2 + $0x110] sm:$0xff]
      %v480 = vld [vmem:[#allocation2 + $0x120] sm:$0xff]
      %v481 = vld [vmem:[#allocation2 + $0x128] sm:$0xff]
      %v482 = vld [vmem:[#allocation2 + $0x138] sm:$0xff]
      %v483 = vld [vmem:[#allocation2 + $0x140] sm:$0xff]
      %v484 = vld [vmem:[#allocation2 + $0x150] sm:$0xff]
      %v485 = vld [vmem:[#allocation2 + $0x158] sm:$0xff]
      %v486 = vld [vmem:[#allocation2 + $0x168] sm:$0xff]
      %v487 = vld [vmem:[#allocation2 + $0x170] sm:$0xff]
      %v488 = vpack.c.bf16 %v457, %v456
      %v489 = vpack.c.bf16 %v459, %v458
      %v490 = vpack.c.bf16 %v461, %v460
      %v491 = vpack.c.bf16 %v463, %v462
      %v492 = vpack.c.bf16 %v465, %v464
      %v493 = vpack.c.bf16 %v467, %v466
      %v494 = vpack.c.bf16 %v469, %v468
      %v495 = vpack.c.bf16 %v471, %v470
      %v496 = vpack.c.bf16 %v473, %v472
      %v497 = vpack.c.bf16 %v475, %v474
      %v498 = vpack.c.bf16 %v477, %v476
      %v499 = vpack.c.bf16 %v479, %v478
      %v500 = vpack.c.bf16 %v481, %v480
      %v501 = vpack.c.bf16 %v483, %v482
      %v502 = vpack.c.bf16 %v485, %v484
      %v503 = vpack.c.bf16 %v487, %v486
      %v504 = vld [vmem:[%s1] sm:$0x3]
      %v505 = vld [vmem:[#allocation2 + $0x1] sm:$0xff]
      %v506 = vld [vmem:[#allocation2 + $0x9] sm:$0xff]
      %v507 = vld [vmem:[#allocation2 + $0x19] sm:$0xff]
      %v508 = vld [vmem:[#allocation2 + $0x21] sm:$0xff]
      %v509 = vld [vmem:[#allocation2 + $0x31] sm:$0xff]
      %v510 = vld [vmem:[#allocation2 + $0x39] sm:$0xff]
      %v511 = vld [vmem:[#allocation2 + $0x49] sm:$0xff]
      %v512 = vld [vmem:[#allocation2 + $0x51] sm:$0xff]
      %v513 = vld [vmem:[#allocation2 + $0x61] sm:$0xff]
      %v514 = vld [vmem:[#allocation2 + $0x69] sm:$0xff]
      %v515 = vld [vmem:[#allocation2 + $0x79] sm:$0xff]
      %v516 = vld [vmem:[#allocation2 + $0x81] sm:$0xff]
      %v517 = vld [vmem:[#allocation2 + $0x91] sm:$0xff]
      %v518 = vld [vmem:[#allocation2 + $0x99] sm:$0xff]
      %v519 = vld [vmem:[#allocation2 + $0xa9] sm:$0xff]
      %v520 = vld [vmem:[#allocation2 + $0xb1] sm:$0xff]
      %v521 = vld [vmem:[#allocation2 + $0xc1] sm:$0xff]
      %v522 = vld [vmem:[#allocation2 + $0xc9] sm:$0xff]
      %v523 = vld [vmem:[#allocation2 + $0xd9] sm:$0xff]
      %v524 = vld [vmem:[#allocation2 + $0xe1] sm:$0xff]
      %v525 = vld [vmem:[#allocation2 + $0xf1] sm:$0xff]
      %v526 = vld [vmem:[#allocation2 + $0xf9] sm:$0xff]
      %v527 = vld [vmem:[#allocation2 + $0x109] sm:$0xff]
      %v528 = vld [vmem:[#allocation2 + $0x111] sm:$0xff]
      %v529 = vld [vmem:[#allocation2 + $0x121] sm:$0xff]
      %v530 = vld [vmem:[#allocation2 + $0x129] sm:$0xff]
      %v531 = vld [vmem:[#allocation2 + $0x139] sm:$0xff]
      %v532 = vld [vmem:[#allocation2 + $0x141] sm:$0xff]
      %v533 = vld [vmem:[#allocation2 + $0x151] sm:$0xff]
      %v534 = vld [vmem:[#allocation2 + $0x159] sm:$0xff]
      %v535 = vld [vmem:[#allocation2 + $0x169] sm:$0xff]
      %v536 = vld [vmem:[#allocation2 + $0x171] sm:$0xff]
      %v537 = vpack.c.bf16 %v506, %v505
      %v538 = vpack.c.bf16 %v508, %v507
      %v539 = vpack.c.bf16 %v510, %v509
      %v540 = vpack.c.bf16 %v512, %v511
      %v541 = vpack.c.bf16 %v514, %v513
      %v542 = vpack.c.bf16 %v516, %v515
      %v543 = vpack.c.bf16 %v518, %v517
      %v544 = vpack.c.bf16 %v520, %v519
      %v545 = vpack.c.bf16 %v522, %v521
      %v546 = vpack.c.bf16 %v524, %v523
      %v547 = vpack.c.bf16 %v526, %v525
      %v548 = vpack.c.bf16 %v528, %v527
      %v549 = vpack.c.bf16 %v530, %v529
      %v550 = vpack.c.bf16 %v532, %v531
      %v551 = vpack.c.bf16 %v534, %v533
      %v552 = vpack.c.bf16 %v536, %v535
      %s553 = scalar_lea.vmem %s1, 2
      %v554 = vld [vmem:[%s553] sm:$0x3]
      %v556 = vsel %vm423, %v537, 0
      %v559 = vsel %vm423, %v538, 0
      %v562 = vsel %vm423, %v539, 0
      %v565 = vsel %vm423, %v540, 0
      %v568 = vsel %vm423, %v541, 0
      %v571 = vsel %vm423, %v542, 0
      %v574 = vsel %vm423, %v543, 0
      %v577 = vsel %vm423, %v544, 0
      %v580 = vsel %vm423, %v545, 0
      %v583 = vsel %vm423, %v546, 0
      %v586 = vsel %vm423, %v547, 0
      %v589 = vsel %vm423, %v548, 0
      %v592 = vsel %vm423, %v549, 0
      %v595 = vsel %vm423, %v550, 0
      %v598 = vsel %vm423, %v551, 0
      %v601 = vsel %vm423, %v552, 0
      %vm603 = vcmask 1040384
      %vm604 = vcmask 1041408
      %v605 = vsel %vm603, 4294967295, 65535
      %v606 = vsel %vm604, %v605, 0
      %v608 = vand.u32 %v554, %v606
      %610 = vmatprep.subr.bf16.mxu0 0
      %611 = vmatpush1.bf16.msra.mxu0 %v608
      %612 = vmatprep.subr.bf16.mxu0 0
      %613 = vmatpush1.bf16.msra.mxu0 0
      %614 = vmatprep.subr.bf16.mxu0 0
      %615 = vmatpush1.bf16.msra.mxu0 0
      %616 = vmatprep.subr.bf16.mxu0 0
      %617 = vmatpush1.bf16.msra.mxu0 0
      %618 = vmatprep.subr.bf16.mxu0 0
      %619 = vmatpush1.bf16.msra.mxu0 0
      %620 = vmatprep.subr.bf16.mxu0 0
      %621 = vmatpush1.bf16.msra.mxu0 0
      %622 = vmatprep.subr.bf16.mxu0 0
      %623 = vmatpush1.bf16.msra.mxu0 0
      %624 = vmatprep.subr.bf16.mxu0 0
      %625 = vmatpush1.bf16.msra.mxu0 0
      %626 = vmatprep.subr.bf16.mxu0 0
      %627 = vmatpush1.bf16.msra.mxu0 0
      %628 = vmatprep.subr.bf16.mxu0 0
      %629 = vmatpush1.bf16.msra.mxu0 0
      %630 = vmatprep.subr.bf16.mxu0 0
      %631 = vmatpush1.bf16.msra.mxu0 0
      %632 = vmatprep.subr.bf16.mxu0 0
      %633 = vmatpush1.bf16.msra.mxu0 0
      %634 = vmatprep.subr.bf16.mxu0 0
      %635 = vmatpush1.bf16.msra.mxu0 0
      %636 = vmatprep.subr.bf16.mxu0 0
      %637 = vmatpush1.bf16.msra.mxu0 0
      %638 = vmatprep.subr.bf16.mxu0 0
      %639 = vmatpush1.bf16.msra.mxu0 0
      %640 = vmatprep.subr.bf16.mxu0 0
      %641 = vmatpush1.bf16.msra.mxu0 0
      %642 = vmatprep.mubr.bf16.mxu0 0
      %643 = vmatmul.mubr.bf16.gmra.mrb[0].mxu0 %v556
      %v644 = vpop.f32.mrb[0].mxu0
      %v645 = vadd.f32 0.0, %v644
      %v646 = vpop.f32.mrb[0].mxu0
      %v647 = vpop.f32.mrb[0].mxu0
      %v648 = vadd.f32 0.0, %v647
      %v649 = vpop.f32.mrb[0].mxu0
      %650 = vmatprep.mubr.bf16.mxu0 0
      %651 = vmatmul.mubr.bf16.gmra.mrb[0].mxu0 %v559
      %v652 = vpop.f32.mrb[0].mxu0
      %v653 = vadd.f32 0.0, %v652
      %v654 = vpop.f32.mrb[0].mxu0
      %v655 = vpop.f32.mrb[0].mxu0
      %v656 = vadd.f32 0.0, %v655
      %v657 = vpop.f32.mrb[0].mxu0
      %658 = vmatprep.mubr.bf16.mxu0 0
      %659 = vmatmul.mubr.bf16.gmra.mrb[0].mxu0 %v562
      %v660 = vpop.f32.mrb[0].mxu0
      %v661 = vadd.f32 0.0, %v660
      %v662 = vpop.f32.mrb[0].mxu0
      %v663 = vpop.f32.mrb[0].mxu0
      %v664 = vadd.f32 0.0, %v663
      %v665 = vpop.f32.mrb[0].mxu0
      %666 = vmatprep.mubr.bf16.mxu0 0
      %667 = vmatmul.mubr.bf16.gmra.mrb[0].mxu0 %v565
      %v668 = vpop.f32.mrb[0].mxu0
      %v669 = vadd.f32 0.0, %v668
      %v670 = vpop.f32.mrb[0].mxu0
      %v671 = vpop.f32.mrb[0].mxu0
      %v672 = vadd.f32 0.0, %v671
      %v673 = vpop.f32.mrb[0].mxu0
      %674 = vmatprep.mubr.bf16.mxu0 0
      %675 = vmatmul.mubr.bf16.gmra.mrb[0].mxu0 %v568
      %v676 = vpop.f32.mrb[0].mxu0
      %v677 = vadd.f32 0.0, %v676
      %v678 = vpop.f32.mrb[0].mxu0
      %v679 = vpop.f32.mrb[0].mxu0
      %v680 = vadd.f32 0.0, %v679
      %v681 = vpop.f32.mrb[0].mxu0
      %682 = vmatprep.mubr.bf16.mxu0 0
      %683 = vmatmul.mubr.bf16.gmra.mrb[0].mxu0 %v571
      %v684 = vpop.f32.mrb[0].mxu0
      %v685 = vadd.f32 0.0, %v684
      %v686 = vpop.f32.mrb[0].mxu0
      %v687 = vpop.f32.mrb[0].mxu0
      %v688 = vadd.f32 0.0, %v687
      %v689 = vpop.f32.mrb[0].mxu0
      %690 = vmatprep.mubr.bf16.mxu0 0
      %691 = vmatmul.mubr.bf16.gmra.mrb[0].mxu0 %v574
      %v692 = vpop.f32.mrb[0].mxu0
      %v693 = vadd.f32 0.0, %v692
      %v694 = vpop.f32.mrb[0].mxu0
      %v695 = vpop.f32.mrb[0].mxu0
      %v696 = vadd.f32 0.0, %v695
      %v697 = vpop.f32.mrb[0].mxu0
      %698 = vmatprep.mubr.bf16.mxu0 0
      %699 = vmatmul.mubr.bf16.gmra.mrb[0].mxu0 %v577
      %v700 = vpop.f32.mrb[0].mxu0
      %v701 = vadd.f32 0.0, %v700
      %v702 = vpop.f32.mrb[0].mxu0
      %v703 = vpop.f32.mrb[0].mxu0
      %v704 = vadd.f32 0.0, %v703
      %v705 = vpop.f32.mrb[0].mxu0
      %706 = vmatprep.mubr.bf16.mxu0 0
      %707 = vmatmul.mubr.bf16.gmra.mrb[0].mxu0 %v580
      %v708 = vpop.f32.mrb[0].mxu0
      %v709 = vadd.f32 0.0, %v708
      %v710 = vpop.f32.mrb[0].mxu0
      %v711 = vpop.f32.mrb[0].mxu0
      %v712 = vadd.f32 0.0, %v711
      %v713 = vpop.f32.mrb[0].mxu0
      %714 = vmatprep.mubr.bf16.mxu0 0
      %715 = vmatmul.mubr.bf16.gmra.mrb[0].mxu0 %v583
      %v716 = vpop.f32.mrb[0].mxu0
      %v717 = vadd.f32 0.0, %v716
      %v718 = vpop.f32.mrb[0].mxu0
      %v719 = vpop.f32.mrb[0].mxu0
      %v720 = vadd.f32 0.0, %v719
      %v721 = vpop.f32.mrb[0].mxu0
      %722 = vmatprep.mubr.bf16.mxu0 0
      %723 = vmatmul.mubr.bf16.gmra.mrb[0].mxu0 %v586
      %v724 = vpop.f32.mrb[0].mxu0
      %v725 = vadd.f32 0.0, %v724
      %v726 = vpop.f32.mrb[0].mxu0
      %v727 = vpop.f32.mrb[0].mxu0
      %v728 = vadd.f32 0.0, %v727
      %v729 = vpop.f32.mrb[0].mxu0
      %730 = vmatprep.mubr.bf16.mxu0 0
      %731 = vmatmul.mubr.bf16.gmra.mrb[0].mxu0 %v589
      %v732 = vpop.f32.mrb[0].mxu0
      %v733 = vadd.f32 0.0, %v732
      %v734 = vpop.f32.mrb[0].mxu0
      %v735 = vpop.f32.mrb[0].mxu0
      %v736 = vadd.f32 0.0, %v735
      %v737 = vpop.f32.mrb[0].mxu0
      %738 = vmatprep.mubr.bf16.mxu0 0
      %739 = vmatmul.mubr.bf16.gmra.mrb[0].mxu0 %v592
      %v740 = vpop.f32.mrb[0].mxu0
      %v741 = vadd.f32 0.0, %v740
      %v742 = vpop.f32.mrb[0].mxu0
      %v743 = vpop.f32.mrb[0].mxu0
      %v744 = vadd.f32 0.0, %v743
      %v745 = vpop.f32.mrb[0].mxu0
      %746 = vmatprep.mubr.bf16.mxu0 0
      %747 = vmatmul.mubr.bf16.gmra.mrb[0].mxu0 %v595
      %v748 = vpop.f32.mrb[0].mxu0
      %v749 = vadd.f32 0.0, %v748
      %v750 = vpop.f32.mrb[0].mxu0
      %v751 = vpop.f32.mrb[0].mxu0
      %v752 = vadd.f32 0.0, %v751
      %v753 = vpop.f32.mrb[0].mxu0
      %754 = vmatprep.mubr.bf16.mxu0 0
      %755 = vmatmul.mubr.bf16.gmra.mrb[0].mxu0 %v598
      %v756 = vpop.f32.mrb[0].mxu0
      %v757 = vadd.f32 0.0, %v756
      %v758 = vpop.f32.mrb[0].mxu0
      %v759 = vpop.f32.mrb[0].mxu0
      %v760 = vadd.f32 0.0, %v759
      %v761 = vpop.f32.mrb[0].mxu0
      %762 = vmatprep.mubr.bf16.mxu0 0
      %763 = vmatmul.mubr.bf16.gmra.mrb[0].mxu0 %v601
      %v764 = vpop.f32.mrb[0].mxu0
      %v765 = vadd.f32 0.0, %v764
      %v766 = vpop.f32.mrb[0].mxu0
      %v767 = vpop.f32.mrb[0].mxu0
      %v768 = vadd.f32 0.0, %v767
      %v769 = vpop.f32.mrb[0].mxu0
      %770 = vdwg.mxu0
      %v772 = vsel %vm423, %v488, 0
      %v775 = vsel %vm423, %v489, 0
      %v778 = vsel %vm423, %v490, 0
      %v781 = vsel %vm423, %v491, 0
      %v784 = vsel %vm423, %v492, 0
      %v787 = vsel %vm423, %v493, 0
      %v790 = vsel %vm423, %v494, 0
      %v793 = vsel %vm423, %v495, 0
      %v796 = vsel %vm423, %v496, 0
      %v799 = vsel %vm423, %v497, 0
      %v802 = vsel %vm423, %v498, 0
      %v805 = vsel %vm423, %v499, 0
      %v808 = vsel %vm423, %v500, 0
      %v811 = vsel %vm423, %v501, 0
      %v814 = vsel %vm423, %v502, 0
      %v817 = vsel %vm423, %v503, 0
      %v820 = vand.u32 %v504, %v606
      %822 = vmatprep.subr.bf16.mxu0 0
      %823 = vmatpush1.bf16.msra.mxu0 %v820
      %824 = vmatprep.subr.bf16.mxu0 0
      %825 = vmatpush1.bf16.msra.mxu0 0
      %826 = vmatprep.subr.bf16.mxu0 0
      %827 = vmatpush1.bf16.msra.mxu0 0
      %828 = vmatprep.subr.bf16.mxu0 0
      %829 = vmatpush1.bf16.msra.mxu0 0
      %830 = vmatprep.subr.bf16.mxu0 0
      %831 = vmatpush1.bf16.msra.mxu0 0
      %832 = vmatprep.subr.bf16.mxu0 0
      %833 = vmatpush1.bf16.msra.mxu0 0
      %834 = vmatprep.subr.bf16.mxu0 0
      %835 = vmatpush1.bf16.msra.mxu0 0
      %836 = vmatprep.subr.bf16.mxu0 0
      %837 = vmatpush1.bf16.msra.mxu0 0
      %838 = vmatprep.subr.bf16.mxu0 0
      %839 = vmatpush1.bf16.msra.mxu0 0
      %840 = vmatprep.subr.bf16.mxu0 0
      %841 = vmatpush1.bf16.msra.mxu0 0
      %842 = vmatprep.subr.bf16.mxu0 0
      %843 = vmatpush1.bf16.msra.mxu0 0
      %844 = vmatprep.subr.bf16.mxu0 0
      %845 = vmatpush1.bf16.msra.mxu0 0
      %846 = vmatprep.subr.bf16.mxu0 0
      %847 = vmatpush1.bf16.msra.mxu0 0
      %848 = vmatprep.subr.bf16.mxu0 0
      %849 = vmatpush1.bf16.msra.mxu0 0
      %850 = vmatprep.subr.bf16.mxu0 0
      %851 = vmatpush1.bf16.msra.mxu0 0
      %852 = vmatprep.subr.bf16.mxu0 0
      %853 = vmatpush1.bf16.msra.mxu0 0
      %854 = vmatprep.mubr.bf16.mxu0 0
      %855 = vmatmul.mubr.bf16.gmra.mrb[0].mxu0 %v772
      %v856 = vpop.f32.mrb[0].mxu0
      %v857 = vadd.f32 %v645, %v856
      %v858 = vpop.f32.mrb[0].mxu0
      %v859 = vpop.f32.mrb[0].mxu0
      %v860 = vadd.f32 %v648, %v859
      %v861 = vpop.f32.mrb[0].mxu0
      %862 = vmatprep.mubr.bf16.mxu0 0
      %863 = vmatmul.mubr.bf16.gmra.mrb[0].mxu0 %v775
      %v864 = vpop.f32.mrb[0].mxu0
      %v865 = vadd.f32 %v653, %v864
      %v866 = vpop.f32.mrb[0].mxu0
      %v867 = vpop.f32.mrb[0].mxu0
      %v868 = vadd.f32 %v656, %v867
      %v869 = vpop.f32.mrb[0].mxu0
      %870 = vmatprep.mubr.bf16.mxu0 0
      %871 = vmatmul.mubr.bf16.gmra.mrb[0].mxu0 %v778
      %v872 = vpop.f32.mrb[0].mxu0
      %v873 = vadd.f32 %v661, %v872
      %v874 = vpop.f32.mrb[0].mxu0
      %v875 = vpop.f32.mrb[0].mxu0
      %v876 = vadd.f32 %v664, %v875
      %v877 = vpop.f32.mrb[0].mxu0
      %878 = vmatprep.mubr.bf16.mxu0 0
      %879 = vmatmul.mubr.bf16.gmra.mrb[0].mxu0 %v781
      %v880 = vpop.f32.mrb[0].mxu0
      %v881 = vadd.f32 %v669, %v880
      %v882 = vpop.f32.mrb[0].mxu0
      %v883 = vpop.f32.mrb[0].mxu0
      %v884 = vadd.f32 %v672, %v883
      %v885 = vpop.f32.mrb[0].mxu0
      %886 = vmatprep.mubr.bf16.mxu0 0
      %887 = vmatmul.mubr.bf16.gmra.mrb[0].mxu0 %v784
      %v888 = vpop.f32.mrb[0].mxu0
      %v889 = vadd.f32 %v677, %v888
      %v890 = vpop.f32.mrb[0].mxu0
      %v891 = vpop.f32.mrb[0].mxu0
      %v892 = vadd.f32 %v680, %v891
      %v893 = vpop.f32.mrb[0].mxu0
      %894 = vmatprep.mubr.bf16.mxu0 0
      %895 = vmatmul.mubr.bf16.gmra.mrb[0].mxu0 %v787
      %v896 = vpop.f32.mrb[0].mxu0
      %v897 = vadd.f32 %v685, %v896
      %v898 = vpop.f32.mrb[0].mxu0
      %v899 = vpop.f32.mrb[0].mxu0
      %v900 = vadd.f32 %v688, %v899
      %v901 = vpop.f32.mrb[0].mxu0
      %902 = vmatprep.mubr.bf16.mxu0 0
      %903 = vmatmul.mubr.bf16.gmra.mrb[0].mxu0 %v790
      %v904 = vpop.f32.mrb[0].mxu0
      %v905 = vadd.f32 %v693, %v904
      %v906 = vpop.f32.mrb[0].mxu0
      %v907 = vpop.f32.mrb[0].mxu0
      %v908 = vadd.f32 %v696, %v907
      %v909 = vpop.f32.mrb[0].mxu0
      %910 = vmatprep.mubr.bf16.mxu0 0
      %911 = vmatmul.mubr.bf16.gmra.mrb[0].mxu0 %v793
      %v912 = vpop.f32.mrb[0].mxu0
      %v913 = vadd.f32 %v701, %v912
      %v914 = vpop.f32.mrb[0].mxu0
      %v915 = vpop.f32.mrb[0].mxu0
      %v916 = vadd.f32 %v704, %v915
      %v917 = vpop.f32.mrb[0].mxu0
      %918 = vmatprep.mubr.bf16.mxu0 0
      %919 = vmatmul.mubr.bf16.gmra.mrb[0].mxu0 %v796
      %v920 = vpop.f32.mrb[0].mxu0
      %v921 = vadd.f32 %v709, %v920
      %v922 = vpop.f32.mrb[0].mxu0
      %v923 = vpop.f32.mrb[0].mxu0
      %v924 = vadd.f32 %v712, %v923
      %v925 = vpop.f32.mrb[0].mxu0
      %926 = vmatprep.mubr.bf16.mxu0 0
      %927 = vmatmul.mubr.bf16.gmra.mrb[0].mxu0 %v799
      %v928 = vpop.f32.mrb[0].mxu0
      %v929 = vadd.f32 %v717, %v928
      %v930 = vpop.f32.mrb[0].mxu0
      %v931 = vpop.f32.mrb[0].mxu0
      %v932 = vadd.f32 %v720, %v931
      %v933 = vpop.f32.mrb[0].mxu0
      %934 = vmatprep.mubr.bf16.mxu0 0
      %935 = vmatmul.mubr.bf16.gmra.mrb[0].mxu0 %v802
      %v936 = vpop.f32.mrb[0].mxu0
      %v937 = vadd.f32 %v725, %v936
      %v938 = vpop.f32.mrb[0].mxu0
      %v939 = vpop.f32.mrb[0].mxu0
      %v940 = vadd.f32 %v728, %v939
      %v941 = vpop.f32.mrb[0].mxu0
      %942 = vmatprep.mubr.bf16.mxu0 0
      %943 = vmatmul.mubr.bf16.gmra.mrb[0].mxu0 %v805
      %v944 = vpop.f32.mrb[0].mxu0
      %v945 = vadd.f32 %v733, %v944
      %v946 = vpop.f32.mrb[0].mxu0
      %v947 = vpop.f32.mrb[0].mxu0
      %v948 = vadd.f32 %v736, %v947
      %v949 = vpop.f32.mrb[0].mxu0
      %950 = vmatprep.mubr.bf16.mxu0 0
      %951 = vmatmul.mubr.bf16.gmra.mrb[0].mxu0 %v808
      %v952 = vpop.f32.mrb[0].mxu0
      %v953 = vadd.f32 %v741, %v952
      %v954 = vpop.f32.mrb[0].mxu0
      %v955 = vpop.f32.mrb[0].mxu0
      %v956 = vadd.f32 %v744, %v955
      %v957 = vpop.f32.mrb[0].mxu0
      %958 = vmatprep.mubr.bf16.mxu0 0
      %959 = vmatmul.mubr.bf16.gmra.mrb[0].mxu0 %v811
      %v960 = vpop.f32.mrb[0].mxu0
      %v961 = vadd.f32 %v749, %v960
      %v962 = vpop.f32.mrb[0].mxu0
      %v963 = vpop.f32.mrb[0].mxu0
      %v964 = vadd.f32 %v752, %v963
      %v965 = vpop.f32.mrb[0].mxu0
      %966 = vmatprep.mubr.bf16.mxu0 0
      %967 = vmatmul.mubr.bf16.gmra.mrb[0].mxu0 %v814
      %v968 = vpop.f32.mrb[0].mxu0
      %v969 = vadd.f32 %v757, %v968
      %v970 = vpop.f32.mrb[0].mxu0
      %v971 = vpop.f32.mrb[0].mxu0
      %v972 = vadd.f32 %v760, %v971
      %v973 = vpop.f32.mrb[0].mxu0
      %974 = vmatprep.mubr.bf16.mxu0 0
      %975 = vmatmul.mubr.bf16.gmra.mrb[0].mxu0 %v817
      %v976 = vpop.f32.mrb[0].mxu0
      %v977 = vadd.f32 %v765, %v976
      %v978 = vpop.f32.mrb[0].mxu0
      %v979 = vpop.f32.mrb[0].mxu0
      %v980 = vadd.f32 %v768, %v979
      %v981 = vpop.f32.mrb[0].mxu0
      %982 = vdwg.mxu0
      %v983 = vld [vmem:[#allocation2 + $0x2] sm:$0xff]
      %v984 = vld [vmem:[#allocation2 + $0xa] sm:$0xff]
      %v985 = vld [vmem:[#allocation2 + $0x1a] sm:$0xff]
      %v986 = vld [vmem:[#allocation2 + $0x22] sm:$0xff]
      %v987 = vld [vmem:[#allocation2 + $0x32] sm:$0xff]
      %v988 = vld [vmem:[#allocation2 + $0x3a] sm:$0xff]
      %v989 = vld [vmem:[#allocation2 + $0x4a] sm:$0xff]
      %v990 = vld [vmem:[#allocation2 + $0x52] sm:$0xff]
      %v991 = vld [vmem:[#allocation2 + $0x62] sm:$0xff]
      %v992 = vld [vmem:[#allocation2 + $0x6a] sm:$0xff]
      %v993 = vld [vmem:[#allocation2 + $0x7a] sm:$0xff]
      %v994 = vld [vmem:[#allocation2 + $0x82] sm:$0xff]
      %v995 = vld [vmem:[#allocation2 + $0x92] sm:$0xff]
      %v996 = vld [vmem:[#allocation2 + $0x9a] sm:$0xff]
      %v997 = vld [vmem:[#allocation2 + $0xaa] sm:$0xff]
      %v998 = vld [vmem:[#allocation2 + $0xb2] sm:$0xff]
      %v999 = vld [vmem:[#allocation2 + $0xc2] sm:$0xff]
      %v1000 = vld [vmem:[#allocation2 + $0xca] sm:$0xff]
      %v1001 = vld [vmem:[#allocation2 + $0xda] sm:$0xff]
      %v1002 = vld [vmem:[#allocation2 + $0xe2] sm:$0xff]
      %v1003 = vld [vmem:[#allocation2 + $0xf2] sm:$0xff]
      %v1004 = vld [vmem:[#allocation2 + $0xfa] sm:$0xff]
      %v1005 = vld [vmem:[#allocation2 + $0x10a] sm:$0xff]
      %v1006 = vld [vmem:[#allocation2 + $0x112] sm:$0xff]
      %v1007 = vld [vmem:[#allocation2 + $0x122] sm:$0xff]
      %v1008 = vld [vmem:[#allocation2 + $0x12a] sm:$0xff]
      %v1009 = vld [vmem:[#allocation2 + $0x13a] sm:$0xff]
      %v1010 = vld [vmem:[#allocation2 + $0x142] sm:$0xff]
      %v1011 = vld [vmem:[#allocation2 + $0x152] sm:$0xff]
      %v1012 = vld [vmem:[#allocation2 + $0x15a] sm:$0xff]
      %v1013 = vld [vmem:[#allocation2 + $0x16a] sm:$0xff]
      %v1014 = vld [vmem:[#allocation2 + $0x172] sm:$0xff]
      %v1015 = vpack.c.bf16 %v984, %v983
      %v1016 = vpack.c.bf16 %v986, %v985
      %v1017 = vpack.c.bf16 %v988, %v987
      %v1018 = vpack.c.bf16 %v990, %v989
      %v1019 = vpack.c.bf16 %v992, %v991
      %v1020 = vpack.c.bf16 %v994, %v993
      %v1021 = vpack.c.bf16 %v996, %v995
      %v1022 = vpack.c.bf16 %v998, %v997
      %v1023 = vpack.c.bf16 %v1000, %v999
      %v1024 = vpack.c.bf16 %v1002, %v1001
      %v1025 = vpack.c.bf16 %v1004, %v1003
      %v1026 = vpack.c.bf16 %v1006, %v1005
      %v1027 = vpack.c.bf16 %v1008, %v1007
      %v1028 = vpack.c.bf16 %v1010, %v1009
      %v1029 = vpack.c.bf16 %v1012, %v1011
      %v1030 = vpack.c.bf16 %v1014, %v1013
      %s1031 = scalar_lea.vmem %s1, 4
      %v1032 = vld [vmem:[%s1031] sm:$0x3]
      %v1034 = vsel %vm423, %v1015, 0
      %v1037 = vsel %vm423, %v1016, 0
      %v1040 = vsel %vm423, %v1017, 0
      %v1043 = vsel %vm423, %v1018, 0
      %v1046 = vsel %vm423, %v1019, 0
      %v1049 = vsel %vm423, %v1020, 0
      %v1052 = vsel %vm423, %v1021, 0
      %v1055 = vsel %vm423, %v1022, 0
      %v1058 = vsel %vm423, %v1023, 0
      %v1061 = vsel %vm423, %v1024, 0
      %v1064 = vsel %vm423, %v1025, 0
      %v1067 = vsel %vm423, %v1026, 0
      %v1070 = vsel %vm423, %v1027, 0
      %v1073 = vsel %vm423, %v1028, 0
      %v1076 = vsel %vm423, %v1029, 0
      %v1079 = vsel %vm423, %v1030, 0
      %v1082 = vand.u32 %v1032, %v606
      %1084 = vmatprep.subr.bf16.mxu0 0
      %1085 = vmatpush1.bf16.msra.mxu0 %v1082
      %1086 = vmatprep.subr.bf16.mxu0 0
      %1087 = vmatpush1.bf16.msra.mxu0 0
      %1088 = vmatprep.subr.bf16.mxu0 0
      %1089 = vmatpush1.bf16.msra.mxu0 0
      %1090 = vmatprep.subr.bf16.mxu0 0
      %1091 = vmatpush1.bf16.msra.mxu0 0
      %1092 = vmatprep.subr.bf16.mxu0 0
      %1093 = vmatpush1.bf16.msra.mxu0 0
      %1094 = vmatprep.subr.bf16.mxu0 0
      %1095 = vmatpush1.bf16.msra.mxu0 0
      %1096 = vmatprep.subr.bf16.mxu0 0
      %1097 = vmatpush1.bf16.msra.mxu0 0
      %1098 = vmatprep.subr.bf16.mxu0 0
      %1099 = vmatpush1.bf16.msra.mxu0 0
      %1100 = vmatprep.subr.bf16.mxu0 0
      %1101 = vmatpush1.bf16.msra.mxu0 0
      %1102 = vmatprep.subr.bf16.mxu0 0
      %1103 = vmatpush1.bf16.msra.mxu0 0
      %1104 = vmatprep.subr.bf16.mxu0 0
      %1105 = vmatpush1.bf16.msra.mxu0 0
      %1106 = vmatprep.subr.bf16.mxu0 0
      %1107 = vmatpush1.bf16.msra.mxu0 0
      %1108 = vmatprep.subr.bf16.mxu0 0
      %1109 = vmatpush1.bf16.msra.mxu0 0
      %1110 = vmatprep.subr.bf16.mxu0 0
      %1111 = vmatpush1.bf16.msra.mxu0 0
      %1112 = vmatprep.subr.bf16.mxu0 0
      %1113 = vmatpush1.bf16.msra.mxu0 0
      %1114 = vmatprep.subr.bf16.mxu0 0
      %1115 = vmatpush1.bf16.msra.mxu0 0
      %1116 = vmatprep.mubr.bf16.mxu0 0
      %1117 = vmatmul.mubr.bf16.gmra.mrb[0].mxu0 %v1034
      %v1118 = vpop.f32.mrb[0].mxu0
      %v1119 = vadd.f32 0.0, %v1118
      %v1120 = vpop.f32.mrb[0].mxu0
      %v1121 = vpop.f32.mrb[0].mxu0
      %v1122 = vadd.f32 0.0, %v1121
      %v1123 = vpop.f32.mrb[0].mxu0
      %1124 = vmatprep.mubr.bf16.mxu0 0
      %1125 = vmatmul.mubr.bf16.gmra.mrb[0].mxu0 %v1037
      %v1126 = vpop.f32.mrb[0].mxu0
      %v1127 = vadd.f32 0.0, %v1126
      %v1128 = vpop.f32.mrb[0].mxu0
      %v1129 = vpop.f32.mrb[0].mxu0
      %v1130 = vadd.f32 0.0, %v1129
      %v1131 = vpop.f32.mrb[0].mxu0
      %1132 = vmatprep.mubr.bf16.mxu0 0
      %1133 = vmatmul.mubr.bf16.gmra.mrb[0].mxu0 %v1040
      %v1134 = vpop.f32.mrb[0].mxu0
      %v1135 = vadd.f32 0.0, %v1134
      %v1136 = vpop.f32.mrb[0].mxu0
      %v1137 = vpop.f32.mrb[0].mxu0
      %v1138 = vadd.f32 0.0, %v1137
      %v1139 = vpop.f32.mrb[0].mxu0
      %1140 = vmatprep.mubr.bf16.mxu0 0
      %1141 = vmatmul.mubr.bf16.gmra.mrb[0].mxu0 %v1043
      %v1142 = vpop.f32.mrb[0].mxu0
      %v1143 = vadd.f32 0.0, %v1142
      %v1144 = vpop.f32.mrb[0].mxu0
      %v1145 = vpop.f32.mrb[0].mxu0
      %v1146 = vadd.f32 0.0, %v1145
      %v1147 = vpop.f32.mrb[0].mxu0
      %1148 = vmatprep.mubr.bf16.mxu0 0
      %1149 = vmatmul.mubr.bf16.gmra.mrb[0].mxu0 %v1046
      %v1150 = vpop.f32.mrb[0].mxu0
      %v1151 = vadd.f32 0.0, %v1150
      %v1152 = vpop.f32.mrb[0].mxu0
      %v1153 = vpop.f32.mrb[0].mxu0
      %v1154 = vadd.f32 0.0, %v1153
      %v1155 = vpop.f32.mrb[0].mxu0
      %1156 = vmatprep.mubr.bf16.mxu0 0
      %1157 = vmatmul.mubr.bf16.gmra.mrb[0].mxu0 %v1049
      %v1158 = vpop.f32.mrb[0].mxu0
      %v1159 = vadd.f32 0.0, %v1158
      %v1160 = vpop.f32.mrb[0].mxu0
      %v1161 = vpop.f32.mrb[0].mxu0
      %v1162 = vadd.f32 0.0, %v1161
      %v1163 = vpop.f32.mrb[0].mxu0
      %1164 = vmatprep.mubr.bf16.mxu0 0
      %1165 = vmatmul.mubr.bf16.gmra.mrb[0].mxu0 %v1052
      %v1166 = vpop.f32.mrb[0].mxu0
      %v1167 = vadd.f32 0.0, %v1166
      %v1168 = vpop.f32.mrb[0].mxu0
      %v1169 = vpop.f32.mrb[0].mxu0
      %v1170 = vadd.f32 0.0, %v1169
      %v1171 = vpop.f32.mrb[0].mxu0
      %1172 = vmatprep.mubr.bf16.mxu0 0
      %1173 = vmatmul.mubr.bf16.gmra.mrb[0].mxu0 %v1055
      %v1174 = vpop.f32.mrb[0].mxu0
      %v1175 = vadd.f32 0.0, %v1174
      %v1176 = vpop.f32.mrb[0].mxu0
      %v1177 = vpop.f32.mrb[0].mxu0
      %v1178 = vadd.f32 0.0, %v1177
      %v1179 = vpop.f32.mrb[0].mxu0
      %1180 = vmatprep.mubr.bf16.mxu0 0
      %1181 = vmatmul.mubr.bf16.gmra.mrb[0].mxu0 %v1058
      %v1182 = vpop.f32.mrb[0].mxu0
      %v1183 = vadd.f32 0.0, %v1182
      %v1184 = vpop.f32.mrb[0].mxu0
      %v1185 = vpop.f32.mrb[0].mxu0
      %v1186 = vadd.f32 0.0, %v1185
      %v1187 = vpop.f32.mrb[0].mxu0
      %1188 = vmatprep.mubr.bf16.mxu0 0
      %1189 = vmatmul.mubr.bf16.gmra.mrb[0].mxu0 %v1061
      %v1190 = vpop.f32.mrb[0].mxu0
      %v1191 = vadd.f32 0.0, %v1190
      %v1192 = vpop.f32.mrb[0].mxu0
      %v1193 = vpop.f32.mrb[0].mxu0
      %v1194 = vadd.f32 0.0, %v1193
      %v1195 = vpop.f32.mrb[0].mxu0
      %1196 = vmatprep.mubr.bf16.mxu0 0
      %1197 = vmatmul.mubr.bf16.gmra.mrb[0].mxu0 %v1064
      %v1198 = vpop.f32.mrb[0].mxu0
      %v1199 = vadd.f32 0.0, %v1198
      %v1200 = vpop.f32.mrb[0].mxu0
      %v1201 = vpop.f32.mrb[0].mxu0
      %v1202 = vadd.f32 0.0, %v1201
      %v1203 = vpop.f32.mrb[0].mxu0
      %1204 = vmatprep.mubr.bf16.mxu0 0
      %1205 = vmatmul.mubr.bf16.gmra.mrb[0].mxu0 %v1067
      %v1206 = vpop.f32.mrb[0].mxu0
      %v1207 = vadd.f32 0.0, %v1206
      %v1208 = vpop.f32.mrb[0].mxu0
      %v1209 = vpop.f32.mrb[0].mxu0
      %v1210 = vadd.f32 0.0, %v1209
      %v1211 = vpop.f32.mrb[0].mxu0
      %1212 = vmatprep.mubr.bf16.mxu0 0
      %1213 = vmatmul.mubr.bf16.gmra.mrb[0].mxu0 %v1070
      %v1214 = vpop.f32.mrb[0].mxu0
      %v1215 = vadd.f32 0.0, %v1214
      %v1216 = vpop.f32.mrb[0].mxu0
      %v1217 = vpop.f32.mrb[0].mxu0
      %v1218 = vadd.f32 0.0, %v1217
      %v1219 = vpop.f32.mrb[0].mxu0
      %1220 = vmatprep.mubr.bf16.mxu0 0
      %1221 = vmatmul.mubr.bf16.gmra.mrb[0].mxu0 %v1073
      %v1222 = vpop.f32.mrb[0].mxu0
      %v1223 = vadd.f32 0.0, %v1222
      %v1224 = vpop.f32.mrb[0].mxu0
      %v1225 = vpop.f32.mrb[0].mxu0
      %v1226 = vadd.f32 0.0, %v1225
      %v1227 = vpop.f32.mrb[0].mxu0
      %1228 = vmatprep.mubr.bf16.mxu0 0
      %1229 = vmatmul.mubr.bf16.gmra.mrb[0].mxu0 %v1076
      %v1230 = vpop.f32.mrb[0].mxu0
      %v1231 = vadd.f32 0.0, %v1230
      %v1232 = vpop.f32.mrb[0].mxu0
      %v1233 = vpop.f32.mrb[0].mxu0
      %v1234 = vadd.f32 0.0, %v1233
      %v1235 = vpop.f32.mrb[0].mxu0
      %1236 = vmatprep.mubr.bf16.mxu0 0
      %1237 = vmatmul.mubr.bf16.gmra.mrb[0].mxu0 %v1079
      %v1238 = vpop.f32.mrb[0].mxu0
      %v1239 = vadd.f32 0.0, %v1238
      %v1240 = vpop.f32.mrb[0].mxu0
      %v1241 = vpop.f32.mrb[0].mxu0
      %v1242 = vadd.f32 0.0, %v1241
      %v1243 = vpop.f32.mrb[0].mxu0
      %1244 = vdwg.mxu0
      %v1245 = vadd.f32 %v857, %v1119
      %v1246 = vadd.f32 %v860, %v1122
      %v1247 = vadd.f32 %v865, %v1127
      %v1248 = vadd.f32 %v868, %v1130
      %v1249 = vadd.f32 %v873, %v1135
      %v1250 = vadd.f32 %v876, %v1138
      %v1251 = vadd.f32 %v881, %v1143
      %v1252 = vadd.f32 %v884, %v1146
      %v1253 = vadd.f32 %v889, %v1151
      %v1254 = vadd.f32 %v892, %v1154
      %v1255 = vadd.f32 %v897, %v1159
      %v1256 = vadd.f32 %v900, %v1162
      %v1257 = vadd.f32 %v905, %v1167
      %v1258 = vadd.f32 %v908, %v1170
      %v1259 = vadd.f32 %v913, %v1175
      %v1260 = vadd.f32 %v916, %v1178
      %v1261 = vadd.f32 %v921, %v1183
      %v1262 = vadd.f32 %v924, %v1186
      %v1263 = vadd.f32 %v929, %v1191
      %v1264 = vadd.f32 %v932, %v1194
      %v1265 = vadd.f32 %v937, %v1199
      %v1266 = vadd.f32 %v940, %v1202
      %v1267 = vadd.f32 %v945, %v1207
      %v1268 = vadd.f32 %v948, %v1210
      %v1269 = vadd.f32 %v953, %v1215
      %v1270 = vadd.f32 %v956, %v1218
      %v1271 = vadd.f32 %v961, %v1223
      %v1272 = vadd.f32 %v964, %v1226
      %v1273 = vadd.f32 %v969, %v1231
      %v1274 = vadd.f32 %v972, %v1234
      %v1275 = vadd.f32 %v977, %v1239
      %v1276 = vadd.f32 %v980, %v1242
      %v1277 = vld [vmem:[%s422] sm:$0xff]
      %v1278 = vld [vmem:[%s422 + $0x8] sm:$0xff]
      %v1279 = vld [vmem:[%s422 + $0x18] sm:$0xff]
      %v1280 = vld [vmem:[%s422 + $0x20] sm:$0xff]
      %v1281 = vld [vmem:[%s422 + $0x30] sm:$0xff]
      %v1282 = vld [vmem:[%s422 + $0x38] sm:$0xff]
      %v1283 = vld [vmem:[%s422 + $0x48] sm:$0xff]
      %v1284 = vld [vmem:[%s422 + $0x50] sm:$0xff]
      %v1285 = vld [vmem:[%s422 + $0x60] sm:$0xff]
      %v1286 = vld [vmem:[%s422 + $0x68] sm:$0xff]
      %v1287 = vld [vmem:[%s422 + $0x78] sm:$0xff]
      %v1288 = vld [vmem:[%s422 + $0x80] sm:$0xff]
      %v1289 = vld [vmem:[%s422 + $0x90] sm:$0xff]
      %v1290 = vld [vmem:[%s422 + $0x98] sm:$0xff]
      %v1291 = vld [vmem:[%s422 + $0xa8] sm:$0xff]
      %v1292 = vld [vmem:[%s422 + $0xb0] sm:$0xff]
      %v1293 = vld [vmem:[%s422 + $0xc0] sm:$0xff]
      %v1294 = vld [vmem:[%s422 + $0xc8] sm:$0xff]
      %v1295 = vld [vmem:[%s422 + $0xd8] sm:$0xff]
      %v1296 = vld [vmem:[%s422 + $0xe0] sm:$0xff]
      %v1297 = vld [vmem:[%s422 + $0xf0] sm:$0xff]
      %v1298 = vld [vmem:[%s422 + $0xf8] sm:$0xff]
      %v1299 = vld [vmem:[%s422 + $0x108] sm:$0xff]
      %v1300 = vld [vmem:[%s422 + $0x110] sm:$0xff]
      %v1301 = vld [vmem:[%s422 + $0x120] sm:$0xff]
      %v1302 = vld [vmem:[%s422 + $0x128] sm:$0xff]
      %v1303 = vld [vmem:[%s422 + $0x138] sm:$0xff]
      %v1304 = vld [vmem:[%s422 + $0x140] sm:$0xff]
      %v1305 = vld [vmem:[%s422 + $0x150] sm:$0xff]
      %v1306 = vld [vmem:[%s422 + $0x158] sm:$0xff]
      %v1307 = vld [vmem:[%s422 + $0x168] sm:$0xff]
      %v1308 = vld [vmem:[%s422 + $0x170] sm:$0xff]
      %v1309 = vpack.c.bf16 %v1278, %v1277
      %v1310 = vpack.c.bf16 %v1280, %v1279
      %v1311 = vpack.c.bf16 %v1282, %v1281
      %v1312 = vpack.c.bf16 %v1284, %v1283
      %v1313 = vpack.c.bf16 %v1286, %v1285
      %v1314 = vpack.c.bf16 %v1288, %v1287
      %v1315 = vpack.c.bf16 %v1290, %v1289
      %v1316 = vpack.c.bf16 %v1292, %v1291
      %v1317 = vpack.c.bf16 %v1294, %v1293
      %v1318 = vpack.c.bf16 %v1296, %v1295
      %v1319 = vpack.c.bf16 %v1298, %v1297
      %v1320 = vpack.c.bf16 %v1300, %v1299
      %v1321 = vpack.c.bf16 %v1302, %v1301
      %v1322 = vpack.c.bf16 %v1304, %v1303
      %v1323 = vpack.c.bf16 %v1306, %v1305
      %v1324 = vpack.c.bf16 %v1308, %v1307
      %s1325 = scalar_lea.vmem %s1, 6
      %v1326 = vld [vmem:[%s1325] sm:$0x3]
      %v1328 = vsel %vm423, %v1309, 0
      %v1331 = vsel %vm423, %v1310, 0
      %v1334 = vsel %vm423, %v1311, 0
      %v1337 = vsel %vm423, %v1312, 0
      %v1340 = vsel %vm423, %v1313, 0
      %v1343 = vsel %vm423, %v1314, 0
      %v1346 = vsel %vm423, %v1315, 0
      %v1349 = vsel %vm423, %v1316, 0
      %v1352 = vsel %vm423, %v1317, 0
      %v1355 = vsel %vm423, %v1318, 0
      %v1358 = vsel %vm423, %v1319, 0
      %v1361 = vsel %vm423, %v1320, 0
      %v1364 = vsel %vm423, %v1321, 0
      %v1367 = vsel %vm423, %v1322, 0
      %v1370 = vsel %vm423, %v1323, 0
      %v1373 = vsel %vm423, %v1324, 0
      %v1376 = vand.u32 %v1326, %v606
      %1378 = vmatprep.subr.bf16.mxu0 0
      %1379 = vmatpush1.bf16.msra.mxu0 %v1376
      %1380 = vmatprep.subr.bf16.mxu0 0
      %1381 = vmatpush1.bf16.msra.mxu0 0
      %1382 = vmatprep.subr.bf16.mxu0 0
      %1383 = vmatpush1.bf16.msra.mxu0 0
      %1384 = vmatprep.subr.bf16.mxu0 0
      %1385 = vmatpush1.bf16.msra.mxu0 0
      %1386 = vmatprep.subr.bf16.mxu0 0
      %1387 = vmatpush1.bf16.msra.mxu0 0
      %1388 = vmatprep.subr.bf16.mxu0 0
      %1389 = vmatpush1.bf16.msra.mxu0 0
      %1390 = vmatprep.subr.bf16.mxu0 0
      %1391 = vmatpush1.bf16.msra.mxu0 0
      %1392 = vmatprep.subr.bf16.mxu0 0
      %1393 = vmatpush1.bf16.msra.mxu0 0
      %1394 = vmatprep.subr.bf16.mxu0 0
      %1395 = vmatpush1.bf16.msra.mxu0 0
      %1396 = vmatprep.subr.bf16.mxu0 0
      %1397 = vmatpush1.bf16.msra.mxu0 0
      %1398 = vmatprep.subr.bf16.mxu0 0
      %1399 = vmatpush1.bf16.msra.mxu0 0
      %1400 = vmatprep.subr.bf16.mxu0 0
      %1401 = vmatpush1.bf16.msra.mxu0 0
      %1402 = vmatprep.subr.bf16.mxu0 0
      %1403 = vmatpush1.bf16.msra.mxu0 0
      %1404 = vmatprep.subr.bf16.mxu0 0
      %1405 = vmatpush1.bf16.msra.mxu0 0
      %1406 = vmatprep.subr.bf16.mxu0 0
      %1407 = vmatpush1.bf16.msra.mxu0 0
      %1408 = vmatprep.subr.bf16.mxu0 0
      %1409 = vmatpush1.bf16.msra.mxu0 0
      %1410 = vmatprep.mubr.bf16.mxu0 0
      %1411 = vmatmul.mubr.bf16.gmra.mrb[0].mxu0 %v1328
      %v1412 = vpop.f32.mrb[0].mxu0
      %v1413 = vadd.f32 0.0, %v1412
      %v1414 = vpop.f32.mrb[0].mxu0
      %v1415 = vpop.f32.mrb[0].mxu0
      %v1416 = vadd.f32 0.0, %v1415
      %v1417 = vpop.f32.mrb[0].mxu0
      %1418 = vmatprep.mubr.bf16.mxu0 0
      %1419 = vmatmul.mubr.bf16.gmra.mrb[0].mxu0 %v1331
      %v1420 = vpop.f32.mrb[0].mxu0
      %v1421 = vadd.f32 0.0, %v1420
      %v1422 = vpop.f32.mrb[0].mxu0
      %v1423 = vpop.f32.mrb[0].mxu0
      %v1424 = vadd.f32 0.0, %v1423
      %v1425 = vpop.f32.mrb[0].mxu0
      %1426 = vmatprep.mubr.bf16.mxu0 0
      %1427 = vmatmul.mubr.bf16.gmra.mrb[0].mxu0 %v1334
      %v1428 = vpop.f32.mrb[0].mxu0
      %v1429 = vadd.f32 0.0, %v1428
      %v1430 = vpop.f32.mrb[0].mxu0
      %v1431 = vpop.f32.mrb[0].mxu0
      %v1432 = vadd.f32 0.0, %v1431
      %v1433 = vpop.f32.mrb[0].mxu0
      %1434 = vmatprep.mubr.bf16.mxu0 0
      %1435 = vmatmul.mubr.bf16.gmra.mrb[0].mxu0 %v1337
      %v1436 = vpop.f32.mrb[0].mxu0
      %v1437 = vadd.f32 0.0, %v1436
      %v1438 = vpop.f32.mrb[0].mxu0
      %v1439 = vpop.f32.mrb[0].mxu0
      %v1440 = vadd.f32 0.0, %v1439
      %v1441 = vpop.f32.mrb[0].mxu0
      %1442 = vmatprep.mubr.bf16.mxu0 0
      %1443 = vmatmul.mubr.bf16.gmra.mrb[0].mxu0 %v1340
      %v1444 = vpop.f32.mrb[0].mxu0
      %v1445 = vadd.f32 0.0, %v1444
      %v1446 = vpop.f32.mrb[0].mxu0
      %v1447 = vpop.f32.mrb[0].mxu0
      %v1448 = vadd.f32 0.0, %v1447
      %v1449 = vpop.f32.mrb[0].mxu0
      %1450 = vmatprep.mubr.bf16.mxu0 0
      %1451 = vmatmul.mubr.bf16.gmra.mrb[0].mxu0 %v1343
      %v1452 = vpop.f32.mrb[0].mxu0
      %v1453 = vadd.f32 0.0, %v1452
      %v1454 = vpop.f32.mrb[0].mxu0
      %v1455 = vpop.f32.mrb[0].mxu0
      %v1456 = vadd.f32 0.0, %v1455
      %v1457 = vpop.f32.mrb[0].mxu0
      %1458 = vmatprep.mubr.bf16.mxu0 0
      %1459 = vmatmul.mubr.bf16.gmra.mrb[0].mxu0 %v1346
      %v1460 = vpop.f32.mrb[0].mxu0
      %v1461 = vadd.f32 0.0, %v1460
      %v1462 = vpop.f32.mrb[0].mxu0
      %v1463 = vpop.f32.mrb[0].mxu0
      %v1464 = vadd.f32 0.0, %v1463
      %v1465 = vpop.f32.mrb[0].mxu0
      %1466 = vmatprep.mubr.bf16.mxu0 0
      %1467 = vmatmul.mubr.bf16.gmra.mrb[0].mxu0 %v1349
      %v1468 = vpop.f32.mrb[0].mxu0
      %v1469 = vadd.f32 0.0, %v1468
      %v1470 = vpop.f32.mrb[0].mxu0
      %v1471 = vpop.f32.mrb[0].mxu0
      %v1472 = vadd.f32 0.0, %v1471
      %v1473 = vpop.f32.mrb[0].mxu0
      %1474 = vmatprep.mubr.bf16.mxu0 0
      %1475 = vmatmul.mubr.bf16.gmra.mrb[0].mxu0 %v1352
      %v1476 = vpop.f32.mrb[0].mxu0
      %v1477 = vadd.f32 0.0, %v1476
      %v1478 = vpop.f32.mrb[0].mxu0
      %v1479 = vpop.f32.mrb[0].mxu0
      %v1480 = vadd.f32 0.0, %v1479
      %v1481 = vpop.f32.mrb[0].mxu0
      %1482 = vmatprep.mubr.bf16.mxu0 0
      %1483 = vmatmul.mubr.bf16.gmra.mrb[0].mxu0 %v1355
      %v1484 = vpop.f32.mrb[0].mxu0
      %v1485 = vadd.f32 0.0, %v1484
      %v1486 = vpop.f32.mrb[0].mxu0
      %v1487 = vpop.f32.mrb[0].mxu0
      %v1488 = vadd.f32 0.0, %v1487
      %v1489 = vpop.f32.mrb[0].mxu0
      %1490 = vmatprep.mubr.bf16.mxu0 0
      %1491 = vmatmul.mubr.bf16.gmra.mrb[0].mxu0 %v1358
      %v1492 = vpop.f32.mrb[0].mxu0
      %v1493 = vadd.f32 0.0, %v1492
      %v1494 = vpop.f32.mrb[0].mxu0
      %v1495 = vpop.f32.mrb[0].mxu0
      %v1496 = vadd.f32 0.0, %v1495
      %v1497 = vpop.f32.mrb[0].mxu0
      %1498 = vmatprep.mubr.bf16.mxu0 0
      %1499 = vmatmul.mubr.bf16.gmra.mrb[0].mxu0 %v1361
      %v1500 = vpop.f32.mrb[0].mxu0
      %v1501 = vadd.f32 0.0, %v1500
      %v1502 = vpop.f32.mrb[0].mxu0
      %v1503 = vpop.f32.mrb[0].mxu0
      %v1504 = vadd.f32 0.0, %v1503
      %v1505 = vpop.f32.mrb[0].mxu0
      %1506 = vmatprep.mubr.bf16.mxu0 0
      %1507 = vmatmul.mubr.bf16.gmra.mrb[0].mxu0 %v1364
      %v1508 = vpop.f32.mrb[0].mxu0
      %v1509 = vadd.f32 0.0, %v1508
      %v1510 = vpop.f32.mrb[0].mxu0
      %v1511 = vpop.f32.mrb[0].mxu0
      %v1512 = vadd.f32 0.0, %v1511
      %v1513 = vpop.f32.mrb[0].mxu0
      %1514 = vmatprep.mubr.bf16.mxu0 0
      %1515 = vmatmul.mubr.bf16.gmra.mrb[0].mxu0 %v1367
      %v1516 = vpop.f32.mrb[0].mxu0
      %v1517 = vadd.f32 0.0, %v1516
      %v1518 = vpop.f32.mrb[0].mxu0
      %v1519 = vpop.f32.mrb[0].mxu0
      %v1520 = vadd.f32 0.0, %v1519
      %v1521 = vpop.f32.mrb[0].mxu0
      %1522 = vmatprep.mubr.bf16.mxu0 0
      %1523 = vmatmul.mubr.bf16.gmra.mrb[0].mxu0 %v1370
      %v1524 = vpop.f32.mrb[0].mxu0
      %v1525 = vadd.f32 0.0, %v1524
      %v1526 = vpop.f32.mrb[0].mxu0
      %v1527 = vpop.f32.mrb[0].mxu0
      %v1528 = vadd.f32 0.0, %v1527
      %v1529 = vpop.f32.mrb[0].mxu0
      %1530 = vmatprep.mubr.bf16.mxu0 0
      %1531 = vmatmul.mubr.bf16.gmra.mrb[0].mxu0 %v1373
      %v1532 = vpop.f32.mrb[0].mxu0
      %v1533 = vadd.f32 0.0, %v1532
      %v1534 = vpop.f32.mrb[0].mxu0
      %v1535 = vpop.f32.mrb[0].mxu0
      %v1536 = vadd.f32 0.0, %v1535
      %v1537 = vpop.f32.mrb[0].mxu0
      %1538 = vdwg.mxu0
      %v1539 = vadd.f32 %v1245, %v1413
      %v1540 = vadd.f32 %v1246, %v1416
      %v1541 = vadd.f32 %v1247, %v1421
      %v1542 = vadd.f32 %v1248, %v1424
      %v1543 = vadd.f32 %v1249, %v1429
      %v1544 = vadd.f32 %v1250, %v1432
      %v1545 = vadd.f32 %v1251, %v1437
      %v1546 = vadd.f32 %v1252, %v1440
      %v1547 = vadd.f32 %v1253, %v1445
      %v1548 = vadd.f32 %v1254, %v1448
      %v1549 = vadd.f32 %v1255, %v1453
      %v1550 = vadd.f32 %v1256, %v1456
      %v1551 = vadd.f32 %v1257, %v1461
      %v1552 = vadd.f32 %v1258, %v1464
      %v1553 = vadd.f32 %v1259, %v1469
      %v1554 = vadd.f32 %v1260, %v1472
      %v1555 = vadd.f32 %v1261, %v1477
      %v1556 = vadd.f32 %v1262, %v1480
      %v1557 = vadd.f32 %v1263, %v1485
      %v1558 = vadd.f32 %v1264, %v1488
      %v1559 = vadd.f32 %v1265, %v1493
      %v1560 = vadd.f32 %v1266, %v1496
      %v1561 = vadd.f32 %v1267, %v1501
      %v1562 = vadd.f32 %v1268, %v1504
      %v1563 = vadd.f32 %v1269, %v1509
      %v1564 = vadd.f32 %v1270, %v1512
      %v1565 = vadd.f32 %v1271, %v1517
      %v1566 = vadd.f32 %v1272, %v1520
      %v1567 = vadd.f32 %v1273, %v1525
      %v1568 = vadd.f32 %v1274, %v1528
      %v1569 = vadd.f32 %v1275, %v1533
      %v1570 = vadd.f32 %v1276, %v1536
      %v1571 = vld [vmem:[%s422 + $0x1] sm:$0xff]
      %v1572 = vld [vmem:[%s422 + $0x9] sm:$0xff]
      %v1573 = vld [vmem:[%s422 + $0x19] sm:$0xff]
      %v1574 = vld [vmem:[%s422 + $0x21] sm:$0xff]
      %v1575 = vld [vmem:[%s422 + $0x31] sm:$0xff]
      %v1576 = vld [vmem:[%s422 + $0x39] sm:$0xff]
      %v1577 = vld [vmem:[%s422 + $0x49] sm:$0xff]
      %v1578 = vld [vmem:[%s422 + $0x51] sm:$0xff]
      %v1579 = vld [vmem:[%s422 + $0x61] sm:$0xff]
      %v1580 = vld [vmem:[%s422 + $0x69] sm:$0xff]
      %v1581 = vld [vmem:[%s422 + $0x79] sm:$0xff]
      %v1582 = vld [vmem:[%s422 + $0x81] sm:$0xff]
      %v1583 = vld [vmem:[%s422 + $0x91] sm:$0xff]
      %v1584 = vld [vmem:[%s422 + $0x99] sm:$0xff]
      %v1585 = vld [vmem:[%s422 + $0xa9] sm:$0xff]
      %v1586 = vld [vmem:[%s422 + $0xb1] sm:$0xff]
      %v1587 = vld [vmem:[%s422 + $0xc1] sm:$0xff]
      %v1588 = vld [vmem:[%s422 + $0xc9] sm:$0xff]
      %v1589 = vld [vmem:[%s422 + $0xd9] sm:$0xff]
      %v1590 = vld [vmem:[%s422 + $0xe1] sm:$0xff]
      %v1591 = vld [vmem:[%s422 + $0xf1] sm:$0xff]
      %v1592 = vld [vmem:[%s422 + $0xf9] sm:$0xff]
      %v1593 = vld [vmem:[%s422 + $0x109] sm:$0xff]
      %v1594 = vld [vmem:[%s422 + $0x111] sm:$0xff]
      %v1595 = vld [vmem:[%s422 + $0x121] sm:$0xff]
      %v1596 = vld [vmem:[%s422 + $0x129] sm:$0xff]
      %v1597 = vld [vmem:[%s422 + $0x139] sm:$0xff]
      %v1598 = vld [vmem:[%s422 + $0x141] sm:$0xff]
      %v1599 = vld [vmem:[%s422 + $0x151] sm:$0xff]
      %v1600 = vld [vmem:[%s422 + $0x159] sm:$0xff]
      %v1601 = vld [vmem:[%s422 + $0x169] sm:$0xff]
      %v1602 = vld [vmem:[%s422 + $0x171] sm:$0xff]
      %v1603 = vpack.c.bf16 %v1572, %v1571
      %v1604 = vpack.c.bf16 %v1574, %v1573
      %v1605 = vpack.c.bf16 %v1576, %v1575
      %v1606 = vpack.c.bf16 %v1578, %v1577
      %v1607 = vpack.c.bf16 %v1580, %v1579
      %v1608 = vpack.c.bf16 %v1582, %v1581
      %v1609 = vpack.c.bf16 %v1584, %v1583
      %v1610 = vpack.c.bf16 %v1586, %v1585
      %v1611 = vpack.c.bf16 %v1588, %v1587
      %v1612 = vpack.c.bf16 %v1590, %v1589
      %v1613 = vpack.c.bf16 %v1592, %v1591
      %v1614 = vpack.c.bf16 %v1594, %v1593
      %v1615 = vpack.c.bf16 %v1596, %v1595
      %v1616 = vpack.c.bf16 %v1598, %v1597
      %v1617 = vpack.c.bf16 %v1600, %v1599
      %v1618 = vpack.c.bf16 %v1602, %v1601
      %s1619 = scalar_lea.vmem %s1, 8
      %v1620 = vld [vmem:[%s1619] sm:$0x3]
      %v1622 = vsel %vm423, %v1603, 0
      %v1625 = vsel %vm423, %v1604, 0
      %v1628 = vsel %vm423, %v1605, 0
      %v1631 = vsel %vm423, %v1606, 0
      %v1634 = vsel %vm423, %v1607, 0
      %v1637 = vsel %vm423, %v1608, 0
      %v1640 = vsel %vm423, %v1609, 0
      %v1643 = vsel %vm423, %v1610, 0
      %v1646 = vsel %vm423, %v1611, 0
      %v1649 = vsel %vm423, %v1612, 0
      %v1652 = vsel %vm423, %v1613, 0
      %v1655 = vsel %vm423, %v1614, 0
      %v1658 = vsel %vm423, %v1615, 0
      %v1661 = vsel %vm423, %v1616, 0
      %v1664 = vsel %vm423, %v1617, 0
      %v1667 = vsel %vm423, %v1618, 0
      %v1670 = vand.u32 %v1620, %v606
      %1672 = vmatprep.subr.bf16.mxu0 0
      %1673 = vmatpush1.bf16.msra.mxu0 %v1670
      %1674 = vmatprep.subr.bf16.mxu0 0
      %1675 = vmatpush1.bf16.msra.mxu0 0
      %1676 = vmatprep.subr.bf16.mxu0 0
      %1677 = vmatpush1.bf16.msra.mxu0 0
      %1678 = vmatprep.subr.bf16.mxu0 0
      %1679 = vmatpush1.bf16.msra.mxu0 0
      %1680 = vmatprep.subr.bf16.mxu0 0
      %1681 = vmatpush1.bf16.msra.mxu0 0
      %1682 = vmatprep.subr.bf16.mxu0 0
      %1683 = vmatpush1.bf16.msra.mxu0 0
      %1684 = vmatprep.subr.bf16.mxu0 0
      %1685 = vmatpush1.bf16.msra.mxu0 0
      %1686 = vmatprep.subr.bf16.mxu0 0
      %1687 = vmatpush1.bf16.msra.mxu0 0
      %1688 = vmatprep.subr.bf16.mxu0 0
      %1689 = vmatpush1.bf16.msra.mxu0 0
      %1690 = vmatprep.subr.bf16.mxu0 0
      %1691 = vmatpush1.bf16.msra.mxu0 0
      %1692 = vmatprep.subr.bf16.mxu0 0
      %1693 = vmatpush1.bf16.msra.mxu0 0
      %1694 = vmatprep.subr.bf16.mxu0 0
      %1695 = vmatpush1.bf16.msra.mxu0 0
      %1696 = vmatprep.subr.bf16.mxu0 0
      %1697 = vmatpush1.bf16.msra.mxu0 0
      %1698 = vmatprep.subr.bf16.mxu0 0
      %1699 = vmatpush1.bf16.msra.mxu0 0
      %1700 = vmatprep.subr.bf16.mxu0 0
      %1701 = vmatpush1.bf16.msra.mxu0 0
      %1702 = vmatprep.subr.bf16.mxu0 0
      %1703 = vmatpush1.bf16.msra.mxu0 0
      %1704 = vmatprep.mubr.bf16.mxu0 0
      %1705 = vmatmul.mubr.bf16.gmra.mrb[0].mxu0 %v1622
      %v1706 = vpop.f32.mrb[0].mxu0
      %v1707 = vadd.f32 0.0, %v1706
      %v1708 = vpop.f32.mrb[0].mxu0
      %v1709 = vpop.f32.mrb[0].mxu0
      %v1710 = vadd.f32 0.0, %v1709
      %v1711 = vpop.f32.mrb[0].mxu0
      %1712 = vmatprep.mubr.bf16.mxu0 0
      %1713 = vmatmul.mubr.bf16.gmra.mrb[0].mxu0 %v1625
      %v1714 = vpop.f32.mrb[0].mxu0
      %v1715 = vadd.f32 0.0, %v1714
      %v1716 = vpop.f32.mrb[0].mxu0
      %v1717 = vpop.f32.mrb[0].mxu0
      %v1718 = vadd.f32 0.0, %v1717
      %v1719 = vpop.f32.mrb[0].mxu0
      %1720 = vmatprep.mubr.bf16.mxu0 0
      %1721 = vmatmul.mubr.bf16.gmra.mrb[0].mxu0 %v1628
      %v1722 = vpop.f32.mrb[0].mxu0
      %v1723 = vadd.f32 0.0, %v1722
      %v1724 = vpop.f32.mrb[0].mxu0
      %v1725 = vpop.f32.mrb[0].mxu0
      %v1726 = vadd.f32 0.0, %v1725
      %v1727 = vpop.f32.mrb[0].mxu0
      %1728 = vmatprep.mubr.bf16.mxu0 0
      %1729 = vmatmul.mubr.bf16.gmra.mrb[0].mxu0 %v1631
      %v1730 = vpop.f32.mrb[0].mxu0
      %v1731 = vadd.f32 0.0, %v1730
      %v1732 = vpop.f32.mrb[0].mxu0
      %v1733 = vpop.f32.mrb[0].mxu0
      %v1734 = vadd.f32 0.0, %v1733
      %v1735 = vpop.f32.mrb[0].mxu0
      %1736 = vmatprep.mubr.bf16.mxu0 0
      %1737 = vmatmul.mubr.bf16.gmra.mrb[0].mxu0 %v1634
      %v1738 = vpop.f32.mrb[0].mxu0
      %v1739 = vadd.f32 0.0, %v1738
      %v1740 = vpop.f32.mrb[0].mxu0
      %v1741 = vpop.f32.mrb[0].mxu0
      %v1742 = vadd.f32 0.0, %v1741
      %v1743 = vpop.f32.mrb[0].mxu0
      %1744 = vmatprep.mubr.bf16.mxu0 0
      %1745 = vmatmul.mubr.bf16.gmra.mrb[0].mxu0 %v1637
      %v1746 = vpop.f32.mrb[0].mxu0
      %v1747 = vadd.f32 0.0, %v1746
      %v1748 = vpop.f32.mrb[0].mxu0
      %v1749 = vpop.f32.mrb[0].mxu0
      %v1750 = vadd.f32 0.0, %v1749
      %v1751 = vpop.f32.mrb[0].mxu0
      %1752 = vmatprep.mubr.bf16.mxu0 0
      %1753 = vmatmul.mubr.bf16.gmra.mrb[0].mxu0 %v1640
      %v1754 = vpop.f32.mrb[0].mxu0
      %v1755 = vadd.f32 0.0, %v1754
      %v1756 = vpop.f32.mrb[0].mxu0
      %v1757 = vpop.f32.mrb[0].mxu0
      %v1758 = vadd.f32 0.0, %v1757
      %v1759 = vpop.f32.mrb[0].mxu0
      %1760 = vmatprep.mubr.bf16.mxu0 0
      %1761 = vmatmul.mubr.bf16.gmra.mrb[0].mxu0 %v1643
      %v1762 = vpop.f32.mrb[0].mxu0
      %v1763 = vadd.f32 0.0, %v1762
      %v1764 = vpop.f32.mrb[0].mxu0
      %v1765 = vpop.f32.mrb[0].mxu0
      %v1766 = vadd.f32 0.0, %v1765
      %v1767 = vpop.f32.mrb[0].mxu0
      %1768 = vmatprep.mubr.bf16.mxu0 0
      %1769 = vmatmul.mubr.bf16.gmra.mrb[0].mxu0 %v1646
      %v1770 = vpop.f32.mrb[0].mxu0
      %v1771 = vadd.f32 0.0, %v1770
      %v1772 = vpop.f32.mrb[0].mxu0
      %v1773 = vpop.f32.mrb[0].mxu0
      %v1774 = vadd.f32 0.0, %v1773
      %v1775 = vpop.f32.mrb[0].mxu0
      %1776 = vmatprep.mubr.bf16.mxu0 0
      %1777 = vmatmul.mubr.bf16.gmra.mrb[0].mxu0 %v1649
      %v1778 = vpop.f32.mrb[0].mxu0
      %v1779 = vadd.f32 0.0, %v1778
      %v1780 = vpop.f32.mrb[0].mxu0
      %v1781 = vpop.f32.mrb[0].mxu0
      %v1782 = vadd.f32 0.0, %v1781
      %v1783 = vpop.f32.mrb[0].mxu0
      %1784 = vmatprep.mubr.bf16.mxu0 0
      %1785 = vmatmul.mubr.bf16.gmra.mrb[0].mxu0 %v1652
      %v1786 = vpop.f32.mrb[0].mxu0
      %v1787 = vadd.f32 0.0, %v1786
      %v1788 = vpop.f32.mrb[0].mxu0
      %v1789 = vpop.f32.mrb[0].mxu0
      %v1790 = vadd.f32 0.0, %v1789
      %v1791 = vpop.f32.mrb[0].mxu0
      %1792 = vmatprep.mubr.bf16.mxu0 0
      %1793 = vmatmul.mubr.bf16.gmra.mrb[0].mxu0 %v1655
      %v1794 = vpop.f32.mrb[0].mxu0
      %v1795 = vadd.f32 0.0, %v1794
      %v1796 = vpop.f32.mrb[0].mxu0
      %v1797 = vpop.f32.mrb[0].mxu0
      %v1798 = vadd.f32 0.0, %v1797
      %v1799 = vpop.f32.mrb[0].mxu0
      %1800 = vmatprep.mubr.bf16.mxu0 0
      %1801 = vmatmul.mubr.bf16.gmra.mrb[0].mxu0 %v1658
      %v1802 = vpop.f32.mrb[0].mxu0
      %v1803 = vadd.f32 0.0, %v1802
      %v1804 = vpop.f32.mrb[0].mxu0
      %v1805 = vpop.f32.mrb[0].mxu0
      %v1806 = vadd.f32 0.0, %v1805
      %v1807 = vpop.f32.mrb[0].mxu0
      %1808 = vmatprep.mubr.bf16.mxu0 0
      %1809 = vmatmul.mubr.bf16.gmra.mrb[0].mxu0 %v1661
      %v1810 = vpop.f32.mrb[0].mxu0
      %v1811 = vadd.f32 0.0, %v1810
      %v1812 = vpop.f32.mrb[0].mxu0
      %v1813 = vpop.f32.mrb[0].mxu0
      %v1814 = vadd.f32 0.0, %v1813
      %v1815 = vpop.f32.mrb[0].mxu0
      %1816 = vmatprep.mubr.bf16.mxu0 0
      %1817 = vmatmul.mubr.bf16.gmra.mrb[0].mxu0 %v1664
      %v1818 = vpop.f32.mrb[0].mxu0
      %v1819 = vadd.f32 0.0, %v1818
      %v1820 = vpop.f32.mrb[0].mxu0
      %v1821 = vpop.f32.mrb[0].mxu0
      %v1822 = vadd.f32 0.0, %v1821
      %v1823 = vpop.f32.mrb[0].mxu0
      %1824 = vmatprep.mubr.bf16.mxu0 0
      %1825 = vmatmul.mubr.bf16.gmra.mrb[0].mxu0 %v1667
      %v1826 = vpop.f32.mrb[0].mxu0
      %v1827 = vadd.f32 0.0, %v1826
      %v1828 = vpop.f32.mrb[0].mxu0
      %v1829 = vpop.f32.mrb[0].mxu0
      %v1830 = vadd.f32 0.0, %v1829
      %v1831 = vpop.f32.mrb[0].mxu0
      %1832 = vdwg.mxu0
      %v1833 = vadd.f32 %v1539, %v1707
      %v1834 = vadd.f32 %v1540, %v1710
      %v1835 = vadd.f32 %v1541, %v1715
      %v1836 = vadd.f32 %v1542, %v1718
      %v1837 = vadd.f32 %v1543, %v1723
      %v1838 = vadd.f32 %v1544, %v1726
      %v1839 = vadd.f32 %v1545, %v1731
      %v1840 = vadd.f32 %v1546, %v1734
      %v1841 = vadd.f32 %v1547, %v1739
      %v1842 = vadd.f32 %v1548, %v1742
      %v1843 = vadd.f32 %v1549, %v1747
      %v1844 = vadd.f32 %v1550, %v1750
      %v1845 = vadd.f32 %v1551, %v1755
      %v1846 = vadd.f32 %v1552, %v1758
      %v1847 = vadd.f32 %v1553, %v1763
      %v1848 = vadd.f32 %v1554, %v1766
      %v1849 = vadd.f32 %v1555, %v1771
      %v1850 = vadd.f32 %v1556, %v1774
      %v1851 = vadd.f32 %v1557, %v1779
      %v1852 = vadd.f32 %v1558, %v1782
      %v1853 = vadd.f32 %v1559, %v1787
      %v1854 = vadd.f32 %v1560, %v1790
      %v1855 = vadd.f32 %v1561, %v1795
      %v1856 = vadd.f32 %v1562, %v1798
      %v1857 = vadd.f32 %v1563, %v1803
      %v1858 = vadd.f32 %v1564, %v1806
      %v1859 = vadd.f32 %v1565, %v1811
      %v1860 = vadd.f32 %v1566, %v1814
      %v1861 = vadd.f32 %v1567, %v1819
      %v1862 = vadd.f32 %v1568, %v1822
      %v1863 = vadd.f32 %v1569, %v1827
      %v1864 = vadd.f32 %v1570, %v1830
      %v1865 = vld [vmem:[%s422 + $0x2] sm:$0xff]
      %v1866 = vld [vmem:[%s422 + $0xa] sm:$0xff]
      %v1867 = vld [vmem:[%s422 + $0x1a] sm:$0xff]
      %v1868 = vld [vmem:[%s422 + $0x22] sm:$0xff]
      %v1869 = vld [vmem:[%s422 + $0x32] sm:$0xff]
      %v1870 = vld [vmem:[%s422 + $0x3a] sm:$0xff]
      %v1871 = vld [vmem:[%s422 + $0x4a] sm:$0xff]
      %v1872 = vld [vmem:[%s422 + $0x52] sm:$0xff]
      %v1873 = vld [vmem:[%s422 + $0x62] sm:$0xff]
      %v1874 = vld [vmem:[%s422 + $0x6a] sm:$0xff]
      %v1875 = vld [vmem:[%s422 + $0x7a] sm:$0xff]
      %v1876 = vld [vmem:[%s422 + $0x82] sm:$0xff]
      %v1877 = vld [vmem:[%s422 + $0x92] sm:$0xff]
      %v1878 = vld [vmem:[%s422 + $0x9a] sm:$0xff]
      %v1879 = vld [vmem:[%s422 + $0xaa] sm:$0xff]
      %v1880 = vld [vmem:[%s422 + $0xb2] sm:$0xff]
      %v1881 = vld [vmem:[%s422 + $0xc2] sm:$0xff]
      %v1882 = vld [vmem:[%s422 + $0xca] sm:$0xff]
      %v1883 = vld [vmem:[%s422 + $0xda] sm:$0xff]
      %v1884 = vld [vmem:[%s422 + $0xe2] sm:$0xff]
      %v1885 = vld [vmem:[%s422 + $0xf2] sm:$0xff]
      %v1886 = vld [vmem:[%s422 + $0xfa] sm:$0xff]
      %v1887 = vld [vmem:[%s422 + $0x10a] sm:$0xff]
      %v1888 = vld [vmem:[%s422 + $0x112] sm:$0xff]
      %v1889 = vld [vmem:[%s422 + $0x122] sm:$0xff]
      %v1890 = vld [vmem:[%s422 + $0x12a] sm:$0xff]
      %v1891 = vld [vmem:[%s422 + $0x13a] sm:$0xff]
      %v1892 = vld [vmem:[%s422 + $0x142] sm:$0xff]
      %v1893 = vld [vmem:[%s422 + $0x152] sm:$0xff]
      %v1894 = vld [vmem:[%s422 + $0x15a] sm:$0xff]
      %v1895 = vld [vmem:[%s422 + $0x16a] sm:$0xff]
      %v1896 = vld [vmem:[%s422 + $0x172] sm:$0xff]
      %v1897 = vpack.c.bf16 %v1866, %v1865
      %v1898 = vpack.c.bf16 %v1868, %v1867
      %v1899 = vpack.c.bf16 %v1870, %v1869
      %v1900 = vpack.c.bf16 %v1872, %v1871
      %v1901 = vpack.c.bf16 %v1874, %v1873
      %v1902 = vpack.c.bf16 %v1876, %v1875
      %v1903 = vpack.c.bf16 %v1878, %v1877
      %v1904 = vpack.c.bf16 %v1880, %v1879
      %v1905 = vpack.c.bf16 %v1882, %v1881
      %v1906 = vpack.c.bf16 %v1884, %v1883
      %v1907 = vpack.c.bf16 %v1886, %v1885
      %v1908 = vpack.c.bf16 %v1888, %v1887
      %v1909 = vpack.c.bf16 %v1890, %v1889
      %v1910 = vpack.c.bf16 %v1892, %v1891
      %v1911 = vpack.c.bf16 %v1894, %v1893
      %v1912 = vpack.c.bf16 %v1896, %v1895
      %s1913 = scalar_lea.vmem %s1, 10
      %v1914 = vld [vmem:[%s1913] sm:$0x3]
      %v1916 = vsel %vm423, %v1897, 0
      %v1919 = vsel %vm423, %v1898, 0
      %v1922 = vsel %vm423, %v1899, 0
      %v1925 = vsel %vm423, %v1900, 0
      %v1928 = vsel %vm423, %v1901, 0
      %v1931 = vsel %vm423, %v1902, 0
      %v1934 = vsel %vm423, %v1903, 0
      %v1937 = vsel %vm423, %v1904, 0
      %v1940 = vsel %vm423, %v1905, 0
      %v1943 = vsel %vm423, %v1906, 0
      %v1946 = vsel %vm423, %v1907, 0
      %v1949 = vsel %vm423, %v1908, 0
      %v1952 = vsel %vm423, %v1909, 0
      %v1955 = vsel %vm423, %v1910, 0
      %v1958 = vsel %vm423, %v1911, 0
      %v1961 = vsel %vm423, %v1912, 0
      %v1964 = vand.u32 %v1914, %v606
      %1966 = vmatprep.subr.bf16.mxu0 0
      %1967 = vmatpush1.bf16.msra.mxu0 %v1964
      %1968 = vmatprep.subr.bf16.mxu0 0
      %1969 = vmatpush1.bf16.msra.mxu0 0
      %1970 = vmatprep.subr.bf16.mxu0 0
      %1971 = vmatpush1.bf16.msra.mxu0 0
      %1972 = vmatprep.subr.bf16.mxu0 0
      %1973 = vmatpush1.bf16.msra.mxu0 0
      %1974 = vmatprep.subr.bf16.mxu0 0
      %1975 = vmatpush1.bf16.msra.mxu0 0
      %1976 = vmatprep.subr.bf16.mxu0 0
      %1977 = vmatpush1.bf16.msra.mxu0 0
      %1978 = vmatprep.subr.bf16.mxu0 0
      %1979 = vmatpush1.bf16.msra.mxu0 0
      %1980 = vmatprep.subr.bf16.mxu0 0
      %1981 = vmatpush1.bf16.msra.mxu0 0
      %1982 = vmatprep.subr.bf16.mxu0 0
      %1983 = vmatpush1.bf16.msra.mxu0 0
      %1984 = vmatprep.subr.bf16.mxu0 0
      %1985 = vmatpush1.bf16.msra.mxu0 0
      %1986 = vmatprep.subr.bf16.mxu0 0
      %1987 = vmatpush1.bf16.msra.mxu0 0
      %1988 = vmatprep.subr.bf16.mxu0 0
      %1989 = vmatpush1.bf16.msra.mxu0 0
      %1990 = vmatprep.subr.bf16.mxu0 0
      %1991 = vmatpush1.bf16.msra.mxu0 0
      %1992 = vmatprep.subr.bf16.mxu0 0
      %1993 = vmatpush1.bf16.msra.mxu0 0
      %1994 = vmatprep.subr.bf16.mxu0 0
      %1995 = vmatpush1.bf16.msra.mxu0 0
      %1996 = vmatprep.subr.bf16.mxu0 0
      %1997 = vmatpush1.bf16.msra.mxu0 0
      %1998 = vmatprep.mubr.bf16.mxu0 0
      %1999 = vmatmul.mubr.bf16.gmra.mrb[0].mxu0 %v1916
      %v2000 = vpop.f32.mrb[0].mxu0
      %v2001 = vadd.f32 0.0, %v2000
      %v2002 = vpop.f32.mrb[0].mxu0
      %v2003 = vpop.f32.mrb[0].mxu0
      %v2004 = vadd.f32 0.0, %v2003
      %v2005 = vpop.f32.mrb[0].mxu0
      %2006 = vmatprep.mubr.bf16.mxu0 0
      %2007 = vmatmul.mubr.bf16.gmra.mrb[0].mxu0 %v1919
      %v2008 = vpop.f32.mrb[0].mxu0
      %v2009 = vadd.f32 0.0, %v2008
      %v2010 = vpop.f32.mrb[0].mxu0
      %v2011 = vpop.f32.mrb[0].mxu0
      %v2012 = vadd.f32 0.0, %v2011
      %v2013 = vpop.f32.mrb[0].mxu0
      %2014 = vmatprep.mubr.bf16.mxu0 0
      %2015 = vmatmul.mubr.bf16.gmra.mrb[0].mxu0 %v1922
      %v2016 = vpop.f32.mrb[0].mxu0
      %v2017 = vadd.f32 0.0, %v2016
      %v2018 = vpop.f32.mrb[0].mxu0
      %v2019 = vpop.f32.mrb[0].mxu0
      %v2020 = vadd.f32 0.0, %v2019
      %v2021 = vpop.f32.mrb[0].mxu0
      %2022 = vmatprep.mubr.bf16.mxu0 0
      %2023 = vmatmul.mubr.bf16.gmra.mrb[0].mxu0 %v1925
      %v2024 = vpop.f32.mrb[0].mxu0
      %v2025 = vadd.f32 0.0, %v2024
      %v2026 = vpop.f32.mrb[0].mxu0
      %v2027 = vpop.f32.mrb[0].mxu0
      %v2028 = vadd.f32 0.0, %v2027
      %v2029 = vpop.f32.mrb[0].mxu0
      %2030 = vmatprep.mubr.bf16.mxu0 0
      %2031 = vmatmul.mubr.bf16.gmra.mrb[0].mxu0 %v1928
      %v2032 = vpop.f32.mrb[0].mxu0
      %v2033 = vadd.f32 0.0, %v2032
      %v2034 = vpop.f32.mrb[0].mxu0
      %v2035 = vpop.f32.mrb[0].mxu0
      %v2036 = vadd.f32 0.0, %v2035
      %v2037 = vpop.f32.mrb[0].mxu0
      %2038 = vmatprep.mubr.bf16.mxu0 0
      %2039 = vmatmul.mubr.bf16.gmra.mrb[0].mxu0 %v1931
      %v2040 = vpop.f32.mrb[0].mxu0
      %v2041 = vadd.f32 0.0, %v2040
      %v2042 = vpop.f32.mrb[0].mxu0
      %v2043 = vpop.f32.mrb[0].mxu0
      %v2044 = vadd.f32 0.0, %v2043
      %v2045 = vpop.f32.mrb[0].mxu0
      %2046 = vmatprep.mubr.bf16.mxu0 0
      %2047 = vmatmul.mubr.bf16.gmra.mrb[0].mxu0 %v1934
      %v2048 = vpop.f32.mrb[0].mxu0
      %v2049 = vadd.f32 0.0, %v2048
      %v2050 = vpop.f32.mrb[0].mxu0
      %v2051 = vpop.f32.mrb[0].mxu0
      %v2052 = vadd.f32 0.0, %v2051
      %v2053 = vpop.f32.mrb[0].mxu0
      %2054 = vmatprep.mubr.bf16.mxu0 0
      %2055 = vmatmul.mubr.bf16.gmra.mrb[0].mxu0 %v1937
      %v2056 = vpop.f32.mrb[0].mxu0
      %v2057 = vadd.f32 0.0, %v2056
      %v2058 = vpop.f32.mrb[0].mxu0
      %v2059 = vpop.f32.mrb[0].mxu0
      %v2060 = vadd.f32 0.0, %v2059
      %v2061 = vpop.f32.mrb[0].mxu0
      %2062 = vmatprep.mubr.bf16.mxu0 0
      %2063 = vmatmul.mubr.bf16.gmra.mrb[0].mxu0 %v1940
      %v2064 = vpop.f32.mrb[0].mxu0
      %v2065 = vadd.f32 0.0, %v2064
      %v2066 = vpop.f32.mrb[0].mxu0
      %v2067 = vpop.f32.mrb[0].mxu0
      %v2068 = vadd.f32 0.0, %v2067
      %v2069 = vpop.f32.mrb[0].mxu0
      %2070 = vmatprep.mubr.bf16.mxu0 0
      %2071 = vmatmul.mubr.bf16.gmra.mrb[0].mxu0 %v1943
      %v2072 = vpop.f32.mrb[0].mxu0
      %v2073 = vadd.f32 0.0, %v2072
      %v2074 = vpop.f32.mrb[0].mxu0
      %v2075 = vpop.f32.mrb[0].mxu0
      %v2076 = vadd.f32 0.0, %v2075
      %v2077 = vpop.f32.mrb[0].mxu0
      %2078 = vmatprep.mubr.bf16.mxu0 0
      %2079 = vmatmul.mubr.bf16.gmra.mrb[0].mxu0 %v1946
      %v2080 = vpop.f32.mrb[0].mxu0
      %v2081 = vadd.f32 0.0, %v2080
      %v2082 = vpop.f32.mrb[0].mxu0
      %v2083 = vpop.f32.mrb[0].mxu0
      %v2084 = vadd.f32 0.0, %v2083
      %v2085 = vpop.f32.mrb[0].mxu0
      %2086 = vmatprep.mubr.bf16.mxu0 0
      %2087 = vmatmul.mubr.bf16.gmra.mrb[0].mxu0 %v1949
      %v2088 = vpop.f32.mrb[0].mxu0
      %v2089 = vadd.f32 0.0, %v2088
      %v2090 = vpop.f32.mrb[0].mxu0
      %v2091 = vpop.f32.mrb[0].mxu0
      %v2092 = vadd.f32 0.0, %v2091
      %v2093 = vpop.f32.mrb[0].mxu0
      %2094 = vmatprep.mubr.bf16.mxu0 0
      %2095 = vmatmul.mubr.bf16.gmra.mrb[0].mxu0 %v1952
      %v2096 = vpop.f32.mrb[0].mxu0
      %v2097 = vadd.f32 0.0, %v2096
      %v2098 = vpop.f32.mrb[0].mxu0
      %v2099 = vpop.f32.mrb[0].mxu0
      %v2100 = vadd.f32 0.0, %v2099
      %v2101 = vpop.f32.mrb[0].mxu0
      %2102 = vmatprep.mubr.bf16.mxu0 0
      %2103 = vmatmul.mubr.bf16.gmra.mrb[0].mxu0 %v1955
      %v2104 = vpop.f32.mrb[0].mxu0
      %v2105 = vadd.f32 0.0, %v2104
      %v2106 = vpop.f32.mrb[0].mxu0
      %v2107 = vpop.f32.mrb[0].mxu0
      %v2108 = vadd.f32 0.0, %v2107
      %v2109 = vpop.f32.mrb[0].mxu0
      %2110 = vmatprep.mubr.bf16.mxu0 0
      %2111 = vmatmul.mubr.bf16.gmra.mrb[0].mxu0 %v1958
      %v2112 = vpop.f32.mrb[0].mxu0
      %v2113 = vadd.f32 0.0, %v2112
      %v2114 = vpop.f32.mrb[0].mxu0
      %v2115 = vpop.f32.mrb[0].mxu0
      %v2116 = vadd.f32 0.0, %v2115
      %v2117 = vpop.f32.mrb[0].mxu0
      %2118 = vmatprep.mubr.bf16.mxu0 0
      %2119 = vmatmul.mubr.bf16.gmra.mrb[0].mxu0 %v1961
      %v2120 = vpop.f32.mrb[0].mxu0
      %v2121 = vadd.f32 0.0, %v2120
      %v2122 = vpop.f32.mrb[0].mxu0
      %v2123 = vpop.f32.mrb[0].mxu0
      %v2124 = vadd.f32 0.0, %v2123
      %v2125 = vpop.f32.mrb[0].mxu0
      %2126 = vdwg.mxu0
      %v2127 = vadd.f32 %v1833, %v2001
      %v2128 = vadd.f32 %v1834, %v2004
      %v2129 = vadd.f32 %v1835, %v2009
      %v2130 = vadd.f32 %v1836, %v2012
      %v2131 = vadd.f32 %v1837, %v2017
      %v2132 = vadd.f32 %v1838, %v2020
      %v2133 = vadd.f32 %v1839, %v2025
      %v2134 = vadd.f32 %v1840, %v2028
      %v2135 = vadd.f32 %v1841, %v2033
      %v2136 = vadd.f32 %v1842, %v2036
      %v2137 = vadd.f32 %v1843, %v2041
      %v2138 = vadd.f32 %v1844, %v2044
      %v2139 = vadd.f32 %v1845, %v2049
      %v2140 = vadd.f32 %v1846, %v2052
      %v2141 = vadd.f32 %v1847, %v2057
      %v2142 = vadd.f32 %v1848, %v2060
      %v2143 = vadd.f32 %v1849, %v2065
      %v2144 = vadd.f32 %v1850, %v2068
      %v2145 = vadd.f32 %v1851, %v2073
      %v2146 = vadd.f32 %v1852, %v2076
      %v2147 = vadd.f32 %v1853, %v2081
      %v2148 = vadd.f32 %v1854, %v2084
      %v2149 = vadd.f32 %v1855, %v2089
      %v2150 = vadd.f32 %v1856, %v2092
      %v2151 = vadd.f32 %v1857, %v2097
      %v2152 = vadd.f32 %v1858, %v2100
      %v2153 = vadd.f32 %v1859, %v2105
      %v2154 = vadd.f32 %v1860, %v2108
      %v2155 = vadd.f32 %v1861, %v2113
      %v2156 = vadd.f32 %v1862, %v2116
      %v2157 = vadd.f32 %v1863, %v2121
      %v2158 = vadd.f32 %v1864, %v2124
      %s2159 = scalar_lea.vmem [#allocation2], 48
      %v2160 = vld [vmem:[%s2159] sm:$0xff]
      %v2161 = vld [vmem:[%s2159 + $0x8] sm:$0xff]
      %v2162 = vld [vmem:[%s2159 + $0x18] sm:$0xff]
      %v2163 = vld [vmem:[%s2159 + $0x20] sm:$0xff]
      %v2164 = vld [vmem:[%s2159 + $0x30] sm:$0xff]
      %v2165 = vld [vmem:[%s2159 + $0x38] sm:$0xff]
      %v2166 = vld [vmem:[%s2159 + $0x48] sm:$0xff]
      %v2167 = vld [vmem:[%s2159 + $0x50] sm:$0xff]
      %v2168 = vld [vmem:[%s2159 + $0x60] sm:$0xff]
      %v2169 = vld [vmem:[%s2159 + $0x68] sm:$0xff]
      %v2170 = vld [vmem:[%s2159 + $0x78] sm:$0xff]
      %v2171 = vld [vmem:[%s2159 + $0x80] sm:$0xff]
      %v2172 = vld [vmem:[%s2159 + $0x90] sm:$0xff]
      %v2173 = vld [vmem:[%s2159 + $0x98] sm:$0xff]
      %v2174 = vld [vmem:[%s2159 + $0xa8] sm:$0xff]
      %v2175 = vld [vmem:[%s2159 + $0xb0] sm:$0xff]
      %v2176 = vld [vmem:[%s2159 + $0xc0] sm:$0xff]
      %v2177 = vld [vmem:[%s2159 + $0xc8] sm:$0xff]
      %v2178 = vld [vmem:[%s2159 + $0xd8] sm:$0xff]
      %v2179 = vld [vmem:[%s2159 + $0xe0] sm:$0xff]
      %v2180 = vld [vmem:[%s2159 + $0xf0] sm:$0xff]
      %v2181 = vld [vmem:[%s2159 + $0xf8] sm:$0xff]
      %v2182 = vld [vmem:[%s2159 + $0x108] sm:$0xff]
      %v2183 = vld [vmem:[%s2159 + $0x110] sm:$0xff]
      %v2184 = vld [vmem:[%s2159 + $0x120] sm:$0xff]
      %v2185 = vld [vmem:[%s2159 + $0x128] sm:$0xff]
      %v2186 = vld [vmem:[%s2159 + $0x138] sm:$0xff]
      %v2187 = vld [vmem:[%s2159 + $0x140] sm:$0xff]
      %v2188 = vld [vmem:[%s2159 + $0x150] sm:$0xff]
      %v2189 = vld [vmem:[%s2159 + $0x158] sm:$0xff]
      %v2190 = vld [vmem:[%s2159 + $0x168] sm:$0xff]
      %v2191 = vld [vmem:[%s2159 + $0x170] sm:$0xff]
      %v2192 = vpack.c.bf16 %v2161, %v2160
      %v2193 = vpack.c.bf16 %v2163, %v2162
      %v2194 = vpack.c.bf16 %v2165, %v2164
      %v2195 = vpack.c.bf16 %v2167, %v2166
      %v2196 = vpack.c.bf16 %v2169, %v2168
      %v2197 = vpack.c.bf16 %v2171, %v2170
      %v2198 = vpack.c.bf16 %v2173, %v2172
      %v2199 = vpack.c.bf16 %v2175, %v2174
      %v2200 = vpack.c.bf16 %v2177, %v2176
      %v2201 = vpack.c.bf16 %v2179, %v2178
      %v2202 = vpack.c.bf16 %v2181, %v2180
      %v2203 = vpack.c.bf16 %v2183, %v2182
      %v2204 = vpack.c.bf16 %v2185, %v2184
      %v2205 = vpack.c.bf16 %v2187, %v2186
      %v2206 = vpack.c.bf16 %v2189, %v2188
      %v2207 = vpack.c.bf16 %v2191, %v2190
      %s2208 = scalar_lea.vmem %s1, 12
      %v2209 = vld [vmem:[%s2208] sm:$0x3]
      %v2211 = vsel %vm423, %v2192, 0
      %v2214 = vsel %vm423, %v2193, 0
      %v2217 = vsel %vm423, %v2194, 0
      %v2220 = vsel %vm423, %v2195, 0
      %v2223 = vsel %vm423, %v2196, 0
      %v2226 = vsel %vm423, %v2197, 0
      %v2229 = vsel %vm423, %v2198, 0
      %v2232 = vsel %vm423, %v2199, 0
      %v2235 = vsel %vm423, %v2200, 0
      %v2238 = vsel %vm423, %v2201, 0
      %v2241 = vsel %vm423, %v2202, 0
      %v2244 = vsel %vm423, %v2203, 0
      %v2247 = vsel %vm423, %v2204, 0
      %v2250 = vsel %vm423, %v2205, 0
      %v2253 = vsel %vm423, %v2206, 0
      %v2256 = vsel %vm423, %v2207, 0
      %v2259 = vand.u32 %v2209, %v606
      %2261 = vmatprep.subr.bf16.mxu0 0
      %2262 = vmatpush1.bf16.msra.mxu0 %v2259
      %2263 = vmatprep.subr.bf16.mxu0 0
      %2264 = vmatpush1.bf16.msra.mxu0 0
      %2265 = vmatprep.subr.bf16.mxu0 0
      %2266 = vmatpush1.bf16.msra.mxu0 0
      %2267 = vmatprep.subr.bf16.mxu0 0
      %2268 = vmatpush1.bf16.msra.mxu0 0
      %2269 = vmatprep.subr.bf16.mxu0 0
      %2270 = vmatpush1.bf16.msra.mxu0 0
      %2271 = vmatprep.subr.bf16.mxu0 0
      %2272 = vmatpush1.bf16.msra.mxu0 0
      %2273 = vmatprep.subr.bf16.mxu0 0
      %2274 = vmatpush1.bf16.msra.mxu0 0
      %2275 = vmatprep.subr.bf16.mxu0 0
      %2276 = vmatpush1.bf16.msra.mxu0 0
      %2277 = vmatprep.subr.bf16.mxu0 0
      %2278 = vmatpush1.bf16.msra.mxu0 0
      %2279 = vmatprep.subr.bf16.mxu0 0
      %2280 = vmatpush1.bf16.msra.mxu0 0
      %2281 = vmatprep.subr.bf16.mxu0 0
      %2282 = vmatpush1.bf16.msra.mxu0 0
      %2283 = vmatprep.subr.bf16.mxu0 0
      %2284 = vmatpush1.bf16.msra.mxu0 0
      %2285 = vmatprep.subr.bf16.mxu0 0
      %2286 = vmatpush1.bf16.msra.mxu0 0
      %2287 = vmatprep.subr.bf16.mxu0 0
      %2288 = vmatpush1.bf16.msra.mxu0 0
      %2289 = vmatprep.subr.bf16.mxu0 0
      %2290 = vmatpush1.bf16.msra.mxu0 0
      %2291 = vmatprep.subr.bf16.mxu0 0
      %2292 = vmatpush1.bf16.msra.mxu0 0
      %2293 = vmatprep.mubr.bf16.mxu0 0
      %2294 = vmatmul.mubr.bf16.gmra.mrb[0].mxu0 %v2211
      %v2295 = vpop.f32.mrb[0].mxu0
      %v2296 = vadd.f32 0.0, %v2295
      %v2297 = vpop.f32.mrb[0].mxu0
      %v2298 = vpop.f32.mrb[0].mxu0
      %v2299 = vadd.f32 0.0, %v2298
      %v2300 = vpop.f32.mrb[0].mxu0
      %2301 = vmatprep.mubr.bf16.mxu0 0
      %2302 = vmatmul.mubr.bf16.gmra.mrb[0].mxu0 %v2214
      %v2303 = vpop.f32.mrb[0].mxu0
      %v2304 = vadd.f32 0.0, %v2303
      %v2305 = vpop.f32.mrb[0].mxu0
      %v2306 = vpop.f32.mrb[0].mxu0
      %v2307 = vadd.f32 0.0, %v2306
      %v2308 = vpop.f32.mrb[0].mxu0
      %2309 = vmatprep.mubr.bf16.mxu0 0
      %2310 = vmatmul.mubr.bf16.gmra.mrb[0].mxu0 %v2217
      %v2311 = vpop.f32.mrb[0].mxu0
      %v2312 = vadd.f32 0.0, %v2311
      %v2313 = vpop.f32.mrb[0].mxu0
      %v2314 = vpop.f32.mrb[0].mxu0
      %v2315 = vadd.f32 0.0, %v2314
      %v2316 = vpop.f32.mrb[0].mxu0
      %2317 = vmatprep.mubr.bf16.mxu0 0
      %2318 = vmatmul.mubr.bf16.gmra.mrb[0].mxu0 %v2220
      %v2319 = vpop.f32.mrb[0].mxu0
      %v2320 = vadd.f32 0.0, %v2319
      %v2321 = vpop.f32.mrb[0].mxu0
      %v2322 = vpop.f32.mrb[0].mxu0
      %v2323 = vadd.f32 0.0, %v2322
      %v2324 = vpop.f32.mrb[0].mxu0
      %2325 = vmatprep.mubr.bf16.mxu0 0
      %2326 = vmatmul.mubr.bf16.gmra.mrb[0].mxu0 %v2223
      %v2327 = vpop.f32.mrb[0].mxu0
      %v2328 = vadd.f32 0.0, %v2327
      %v2329 = vpop.f32.mrb[0].mxu0
      %v2330 = vpop.f32.mrb[0].mxu0
      %v2331 = vadd.f32 0.0, %v2330
      %v2332 = vpop.f32.mrb[0].mxu0
      %2333 = vmatprep.mubr.bf16.mxu0 0
      %2334 = vmatmul.mubr.bf16.gmra.mrb[0].mxu0 %v2226
      %v2335 = vpop.f32.mrb[0].mxu0
      %v2336 = vadd.f32 0.0, %v2335
      %v2337 = vpop.f32.mrb[0].mxu0
      %v2338 = vpop.f32.mrb[0].mxu0
      %v2339 = vadd.f32 0.0, %v2338
      %v2340 = vpop.f32.mrb[0].mxu0
      %2341 = vmatprep.mubr.bf16.mxu0 0
      %2342 = vmatmul.mubr.bf16.gmra.mrb[0].mxu0 %v2229
      %v2343 = vpop.f32.mrb[0].mxu0
      %v2344 = vadd.f32 0.0, %v2343
      %v2345 = vpop.f32.mrb[0].mxu0
      %v2346 = vpop.f32.mrb[0].mxu0
      %v2347 = vadd.f32 0.0, %v2346
      %v2348 = vpop.f32.mrb[0].mxu0
      %2349 = vmatprep.mubr.bf16.mxu0 0
      %2350 = vmatmul.mubr.bf16.gmra.mrb[0].mxu0 %v2232
      %v2351 = vpop.f32.mrb[0].mxu0
      %v2352 = vadd.f32 0.0, %v2351
      %v2353 = vpop.f32.mrb[0].mxu0
      %v2354 = vpop.f32.mrb[0].mxu0
      %v2355 = vadd.f32 0.0, %v2354
      %v2356 = vpop.f32.mrb[0].mxu0
      %2357 = vmatprep.mubr.bf16.mxu0 0
      %2358 = vmatmul.mubr.bf16.gmra.mrb[0].mxu0 %v2235
      %v2359 = vpop.f32.mrb[0].mxu0
      %v2360 = vadd.f32 0.0, %v2359
      %v2361 = vpop.f32.mrb[0].mxu0
      %v2362 = vpop.f32.mrb[0].mxu0
      %v2363 = vadd.f32 0.0, %v2362
      %v2364 = vpop.f32.mrb[0].mxu0
      %2365 = vmatprep.mubr.bf16.mxu0 0
      %2366 = vmatmul.mubr.bf16.gmra.mrb[0].mxu0 %v2238
      %v2367 = vpop.f32.mrb[0].mxu0
      %v2368 = vadd.f32 0.0, %v2367
      %v2369 = vpop.f32.mrb[0].mxu0
      %v2370 = vpop.f32.mrb[0].mxu0
      %v2371 = vadd.f32 0.0, %v2370
      %v2372 = vpop.f32.mrb[0].mxu0
      %2373 = vmatprep.mubr.bf16.mxu0 0
      %2374 = vmatmul.mubr.bf16.gmra.mrb[0].mxu0 %v2241
      %v2375 = vpop.f32.mrb[0].mxu0
      %v2376 = vadd.f32 0.0, %v2375
      %v2377 = vpop.f32.mrb[0].mxu0
      %v2378 = vpop.f32.mrb[0].mxu0
      %v2379 = vadd.f32 0.0, %v2378
      %v2380 = vpop.f32.mrb[0].mxu0
      %2381 = vmatprep.mubr.bf16.mxu0 0
      %2382 = vmatmul.mubr.bf16.gmra.mrb[0].mxu0 %v2244
      %v2383 = vpop.f32.mrb[0].mxu0
      %v2384 = vadd.f32 0.0, %v2383
      %v2385 = vpop.f32.mrb[0].mxu0
      %v2386 = vpop.f32.mrb[0].mxu0
      %v2387 = vadd.f32 0.0, %v2386
      %v2388 = vpop.f32.mrb[0].mxu0
      %2389 = vmatprep.mubr.bf16.mxu0 0
      %2390 = vmatmul.mubr.bf16.gmra.mrb[0].mxu0 %v2247
      %v2391 = vpop.f32.mrb[0].mxu0
      %v2392 = vadd.f32 0.0, %v2391
      %v2393 = vpop.f32.mrb[0].mxu0
      %v2394 = vpop.f32.mrb[0].mxu0
      %v2395 = vadd.f32 0.0, %v2394
      %v2396 = vpop.f32.mrb[0].mxu0
      %2397 = vmatprep.mubr.bf16.mxu0 0
      %2398 = vmatmul.mubr.bf16.gmra.mrb[0].mxu0 %v2250
      %v2399 = vpop.f32.mrb[0].mxu0
      %v2400 = vadd.f32 0.0, %v2399
      %v2401 = vpop.f32.mrb[0].mxu0
      %v2402 = vpop.f32.mrb[0].mxu0
      %v2403 = vadd.f32 0.0, %v2402
      %v2404 = vpop.f32.mrb[0].mxu0
      %2405 = vmatprep.mubr.bf16.mxu0 0
      %2406 = vmatmul.mubr.bf16.gmra.mrb[0].mxu0 %v2253
      %v2407 = vpop.f32.mrb[0].mxu0
      %v2408 = vadd.f32 0.0, %v2407
      %v2409 = vpop.f32.mrb[0].mxu0
      %v2410 = vpop.f32.mrb[0].mxu0
      %v2411 = vadd.f32 0.0, %v2410
      %v2412 = vpop.f32.mrb[0].mxu0
      %2413 = vmatprep.mubr.bf16.mxu0 0
      %2414 = vmatmul.mubr.bf16.gmra.mrb[0].mxu0 %v2256
      %v2415 = vpop.f32.mrb[0].mxu0
      %v2416 = vadd.f32 0.0, %v2415
      %v2417 = vpop.f32.mrb[0].mxu0
      %v2418 = vpop.f32.mrb[0].mxu0
      %v2419 = vadd.f32 0.0, %v2418
      %v2420 = vpop.f32.mrb[0].mxu0
      %2421 = vdwg.mxu0
      %v2422 = vadd.f32 %v2127, %v2296
      %v2423 = vadd.f32 %v2128, %v2299
      %v2424 = vadd.f32 %v2129, %v2304
      %v2425 = vadd.f32 %v2130, %v2307
      %v2426 = vadd.f32 %v2131, %v2312
      %v2427 = vadd.f32 %v2132, %v2315
      %v2428 = vadd.f32 %v2133, %v2320
      %v2429 = vadd.f32 %v2134, %v2323
      %v2430 = vadd.f32 %v2135, %v2328
      %v2431 = vadd.f32 %v2136, %v2331
      %v2432 = vadd.f32 %v2137, %v2336
      %v2433 = vadd.f32 %v2138, %v2339
      %v2434 = vadd.f32 %v2139, %v2344
      %v2435 = vadd.f32 %v2140, %v2347
      %v2436 = vadd.f32 %v2141, %v2352
      %v2437 = vadd.f32 %v2142, %v2355
      %v2438 = vadd.f32 %v2143, %v2360
      %v2439 = vadd.f32 %v2144, %v2363
      %v2440 = vadd.f32 %v2145, %v2368
      %v2441 = vadd.f32 %v2146, %v2371
      %v2442 = vadd.f32 %v2147, %v2376
      %v2443 = vadd.f32 %v2148, %v2379
      %v2444 = vadd.f32 %v2149, %v2384
      %v2445 = vadd.f32 %v2150, %v2387
      %v2446 = vadd.f32 %v2151, %v2392
      %v2447 = vadd.f32 %v2152, %v2395
      %v2448 = vadd.f32 %v2153, %v2400
      %v2449 = vadd.f32 %v2154, %v2403
      %v2450 = vadd.f32 %v2155, %v2408
      %v2451 = vadd.f32 %v2156, %v2411
      %v2452 = vadd.f32 %v2157, %v2416
      %v2453 = vadd.f32 %v2158, %v2419
      %v2454 = vld [vmem:[%s2159 + $0x1] sm:$0xff]
      %v2455 = vld [vmem:[%s2159 + $0x9] sm:$0xff]
      %v2456 = vld [vmem:[%s2159 + $0x19] sm:$0xff]
      %v2457 = vld [vmem:[%s2159 + $0x21] sm:$0xff]
      %v2458 = vld [vmem:[%s2159 + $0x31] sm:$0xff]
      %v2459 = vld [vmem:[%s2159 + $0x39] sm:$0xff]
      %v2460 = vld [vmem:[%s2159 + $0x49] sm:$0xff]
      %v2461 = vld [vmem:[%s2159 + $0x51] sm:$0xff]
      %v2462 = vld [vmem:[%s2159 + $0x61] sm:$0xff]
      %v2463 = vld [vmem:[%s2159 + $0x69] sm:$0xff]
      %v2464 = vld [vmem:[%s2159 + $0x79] sm:$0xff]
      %v2465 = vld [vmem:[%s2159 + $0x81] sm:$0xff]
      %v2466 = vld [vmem:[%s2159 + $0x91] sm:$0xff]
      %v2467 = vld [vmem:[%s2159 + $0x99] sm:$0xff]
      %v2468 = vld [vmem:[%s2159 + $0xa9] sm:$0xff]
      %v2469 = vld [vmem:[%s2159 + $0xb1] sm:$0xff]
      %v2470 = vld [vmem:[%s2159 + $0xc1] sm:$0xff]
      %v2471 = vld [vmem:[%s2159 + $0xc9] sm:$0xff]
      %v2472 = vld [vmem:[%s2159 + $0xd9] sm:$0xff]
      %v2473 = vld [vmem:[%s2159 + $0xe1] sm:$0xff]
      %v2474 = vld [vmem:[%s2159 + $0xf1] sm:$0xff]
      %v2475 = vld [vmem:[%s2159 + $0xf9] sm:$0xff]
      %v2476 = vld [vmem:[%s2159 + $0x109] sm:$0xff]
      %v2477 = vld [vmem:[%s2159 + $0x111] sm:$0xff]
      %v2478 = vld [vmem:[%s2159 + $0x121] sm:$0xff]
      %v2479 = vld [vmem:[%s2159 + $0x129] sm:$0xff]
      %v2480 = vld [vmem:[%s2159 + $0x139] sm:$0xff]
      %v2481 = vld [vmem:[%s2159 + $0x141] sm:$0xff]
      %v2482 = vld [vmem:[%s2159 + $0x151] sm:$0xff]
      %v2483 = vld [vmem:[%s2159 + $0x159] sm:$0xff]
      %v2484 = vld [vmem:[%s2159 + $0x169] sm:$0xff]
      %v2485 = vld [vmem:[%s2159 + $0x171] sm:$0xff]
      %v2486 = vpack.c.bf16 %v2455, %v2454
      %v2487 = vpack.c.bf16 %v2457, %v2456
      %v2488 = vpack.c.bf16 %v2459, %v2458
      %v2489 = vpack.c.bf16 %v2461, %v2460
      %v2490 = vpack.c.bf16 %v2463, %v2462
      %v2491 = vpack.c.bf16 %v2465, %v2464
      %v2492 = vpack.c.bf16 %v2467, %v2466
      %v2493 = vpack.c.bf16 %v2469, %v2468
      %v2494 = vpack.c.bf16 %v2471, %v2470
      %v2495 = vpack.c.bf16 %v2473, %v2472
      %v2496 = vpack.c.bf16 %v2475, %v2474
      %v2497 = vpack.c.bf16 %v2477, %v2476
      %v2498 = vpack.c.bf16 %v2479, %v2478
      %v2499 = vpack.c.bf16 %v2481, %v2480
      %v2500 = vpack.c.bf16 %v2483, %v2482
      %v2501 = vpack.c.bf16 %v2485, %v2484
      %s2502 = scalar_lea.vmem %s1, 14
      %v2503 = vld [vmem:[%s2502] sm:$0x3]
      %v2505 = vsel %vm423, %v2486, 0
      %v2508 = vsel %vm423, %v2487, 0
      %v2511 = vsel %vm423, %v2488, 0
      %v2514 = vsel %vm423, %v2489, 0
      %v2517 = vsel %vm423, %v2490, 0
      %v2520 = vsel %vm423, %v2491, 0
      %v2523 = vsel %vm423, %v2492, 0
      %v2526 = vsel %vm423, %v2493, 0
      %v2529 = vsel %vm423, %v2494, 0
      %v2532 = vsel %vm423, %v2495, 0
      %v2535 = vsel %vm423, %v2496, 0
      %v2538 = vsel %vm423, %v2497, 0
      %v2541 = vsel %vm423, %v2498, 0
      %v2544 = vsel %vm423, %v2499, 0
      %v2547 = vsel %vm423, %v2500, 0
      %v2550 = vsel %vm423, %v2501, 0
      %v2553 = vand.u32 %v2503, %v606
      %2555 = vmatprep.subr.bf16.mxu0 0
      %2556 = vmatpush1.bf16.msra.mxu0 %v2553
      %2557 = vmatprep.subr.bf16.mxu0 0
      %2558 = vmatpush1.bf16.msra.mxu0 0
      %2559 = vmatprep.subr.bf16.mxu0 0
      %2560 = vmatpush1.bf16.msra.mxu0 0
      %2561 = vmatprep.subr.bf16.mxu0 0
      %2562 = vmatpush1.bf16.msra.mxu0 0
      %2563 = vmatprep.subr.bf16.mxu0 0
      %2564 = vmatpush1.bf16.msra.mxu0 0
      %2565 = vmatprep.subr.bf16.mxu0 0
      %2566 = vmatpush1.bf16.msra.mxu0 0
      %2567 = vmatprep.subr.bf16.mxu0 0
      %2568 = vmatpush1.bf16.msra.mxu0 0
      %2569 = vmatprep.subr.bf16.mxu0 0
      %2570 = vmatpush1.bf16.msra.mxu0 0
      %2571 = vmatprep.subr.bf16.mxu0 0
      %2572 = vmatpush1.bf16.msra.mxu0 0
      %2573 = vmatprep.subr.bf16.mxu0 0
      %2574 = vmatpush1.bf16.msra.mxu0 0
      %2575 = vmatprep.subr.bf16.mxu0 0
      %2576 = vmatpush1.bf16.msra.mxu0 0
      %2577 = vmatprep.subr.bf16.mxu0 0
      %2578 = vmatpush1.bf16.msra.mxu0 0
      %2579 = vmatprep.subr.bf16.mxu0 0
      %2580 = vmatpush1.bf16.msra.mxu0 0
      %2581 = vmatprep.subr.bf16.mxu0 0
      %2582 = vmatpush1.bf16.msra.mxu0 0
      %2583 = vmatprep.subr.bf16.mxu0 0
      %2584 = vmatpush1.bf16.msra.mxu0 0
      %2585 = vmatprep.subr.bf16.mxu0 0
      %2586 = vmatpush1.bf16.msra.mxu0 0
      %2587 = vmatprep.mubr.bf16.mxu0 0
      %2588 = vmatmul.mubr.bf16.gmra.mrb[0].mxu0 %v2505
      %v2589 = vpop.f32.mrb[0].mxu0
      %v2590 = vadd.f32 0.0, %v2589
      %v2591 = vpop.f32.mrb[0].mxu0
      %v2592 = vpop.f32.mrb[0].mxu0
      %v2593 = vadd.f32 0.0, %v2592
      %v2594 = vpop.f32.mrb[0].mxu0
      %2595 = vmatprep.mubr.bf16.mxu0 0
      %2596 = vmatmul.mubr.bf16.gmra.mrb[0].mxu0 %v2508
      %v2597 = vpop.f32.mrb[0].mxu0
      %v2598 = vadd.f32 0.0, %v2597
      %v2599 = vpop.f32.mrb[0].mxu0
      %v2600 = vpop.f32.mrb[0].mxu0
      %v2601 = vadd.f32 0.0, %v2600
      %v2602 = vpop.f32.mrb[0].mxu0
      %2603 = vmatprep.mubr.bf16.mxu0 0
      %2604 = vmatmul.mubr.bf16.gmra.mrb[0].mxu0 %v2511
      %v2605 = vpop.f32.mrb[0].mxu0
      %v2606 = vadd.f32 0.0, %v2605
      %v2607 = vpop.f32.mrb[0].mxu0
      %v2608 = vpop.f32.mrb[0].mxu0
      %v2609 = vadd.f32 0.0, %v2608
      %v2610 = vpop.f32.mrb[0].mxu0
      %2611 = vmatprep.mubr.bf16.mxu0 0
      %2612 = vmatmul.mubr.bf16.gmra.mrb[0].mxu0 %v2514
      %v2613 = vpop.f32.mrb[0].mxu0
      %v2614 = vadd.f32 0.0, %v2613
      %v2615 = vpop.f32.mrb[0].mxu0
      %v2616 = vpop.f32.mrb[0].mxu0
      %v2617 = vadd.f32 0.0, %v2616
      %v2618 = vpop.f32.mrb[0].mxu0
      %2619 = vmatprep.mubr.bf16.mxu0 0
      %2620 = vmatmul.mubr.bf16.gmra.mrb[0].mxu0 %v2517
      %v2621 = vpop.f32.mrb[0].mxu0
      %v2622 = vadd.f32 0.0, %v2621
      %v2623 = vpop.f32.mrb[0].mxu0
      %v2624 = vpop.f32.mrb[0].mxu0
      %v2625 = vadd.f32 0.0, %v2624
      %v2626 = vpop.f32.mrb[0].mxu0
      %2627 = vmatprep.mubr.bf16.mxu0 0
      %2628 = vmatmul.mubr.bf16.gmra.mrb[0].mxu0 %v2520
      %v2629 = vpop.f32.mrb[0].mxu0
      %v2630 = vadd.f32 0.0, %v2629
      %v2631 = vpop.f32.mrb[0].mxu0
      %v2632 = vpop.f32.mrb[0].mxu0
      %v2633 = vadd.f32 0.0, %v2632
      %v2634 = vpop.f32.mrb[0].mxu0
      %2635 = vmatprep.mubr.bf16.mxu0 0
      %2636 = vmatmul.mubr.bf16.gmra.mrb[0].mxu0 %v2523
      %v2637 = vpop.f32.mrb[0].mxu0
      %v2638 = vadd.f32 0.0, %v2637
      %v2639 = vpop.f32.mrb[0].mxu0
      %v2640 = vpop.f32.mrb[0].mxu0
      %v2641 = vadd.f32 0.0, %v2640
      %v2642 = vpop.f32.mrb[0].mxu0
      %2643 = vmatprep.mubr.bf16.mxu0 0
      %2644 = vmatmul.mubr.bf16.gmra.mrb[0].mxu0 %v2526
      %v2645 = vpop.f32.mrb[0].mxu0
      %v2646 = vadd.f32 0.0, %v2645
      %v2647 = vpop.f32.mrb[0].mxu0
      %v2648 = vpop.f32.mrb[0].mxu0
      %v2649 = vadd.f32 0.0, %v2648
      %v2650 = vpop.f32.mrb[0].mxu0
      %2651 = vmatprep.mubr.bf16.mxu0 0
      %2652 = vmatmul.mubr.bf16.gmra.mrb[0].mxu0 %v2529
      %v2653 = vpop.f32.mrb[0].mxu0
      %v2654 = vadd.f32 0.0, %v2653
      %v2655 = vpop.f32.mrb[0].mxu0
      %v2656 = vpop.f32.mrb[0].mxu0
      %v2657 = vadd.f32 0.0, %v2656
      %v2658 = vpop.f32.mrb[0].mxu0
      %2659 = vmatprep.mubr.bf16.mxu0 0
      %2660 = vmatmul.mubr.bf16.gmra.mrb[0].mxu0 %v2532
      %v2661 = vpop.f32.mrb[0].mxu0
      %v2662 = vadd.f32 0.0, %v2661
      %v2663 = vpop.f32.mrb[0].mxu0
      %v2664 = vpop.f32.mrb[0].mxu0
      %v2665 = vadd.f32 0.0, %v2664
      %v2666 = vpop.f32.mrb[0].mxu0
      %2667 = vmatprep.mubr.bf16.mxu0 0
      %2668 = vmatmul.mubr.bf16.gmra.mrb[0].mxu0 %v2535
      %v2669 = vpop.f32.mrb[0].mxu0
      %v2670 = vadd.f32 0.0, %v2669
      %v2671 = vpop.f32.mrb[0].mxu0
      %v2672 = vpop.f32.mrb[0].mxu0
      %v2673 = vadd.f32 0.0, %v2672
      %v2674 = vpop.f32.mrb[0].mxu0
      %2675 = vmatprep.mubr.bf16.mxu0 0
      %2676 = vmatmul.mubr.bf16.gmra.mrb[0].mxu0 %v2538
      %v2677 = vpop.f32.mrb[0].mxu0
      %v2678 = vadd.f32 0.0, %v2677
      %v2679 = vpop.f32.mrb[0].mxu0
      %v2680 = vpop.f32.mrb[0].mxu0
      %v2681 = vadd.f32 0.0, %v2680
      %v2682 = vpop.f32.mrb[0].mxu0
      %2683 = vmatprep.mubr.bf16.mxu0 0
      %2684 = vmatmul.mubr.bf16.gmra.mrb[0].mxu0 %v2541
      %v2685 = vpop.f32.mrb[0].mxu0
      %v2686 = vadd.f32 0.0, %v2685
      %v2687 = vpop.f32.mrb[0].mxu0
      %v2688 = vpop.f32.mrb[0].mxu0
      %v2689 = vadd.f32 0.0, %v2688
      %v2690 = vpop.f32.mrb[0].mxu0
      %2691 = vmatprep.mubr.bf16.mxu0 0
      %2692 = vmatmul.mubr.bf16.gmra.mrb[0].mxu0 %v2544
      %v2693 = vpop.f32.mrb[0].mxu0
      %v2694 = vadd.f32 0.0, %v2693
      %v2695 = vpop.f32.mrb[0].mxu0
      %v2696 = vpop.f32.mrb[0].mxu0
      %v2697 = vadd.f32 0.0, %v2696
      %v2698 = vpop.f32.mrb[0].mxu0
      %2699 = vmatprep.mubr.bf16.mxu0 0
      %2700 = vmatmul.mubr.bf16.gmra.mrb[0].mxu0 %v2547
      %v2701 = vpop.f32.mrb[0].mxu0
      %v2702 = vadd.f32 0.0, %v2701
      %v2703 = vpop.f32.mrb[0].mxu0
      %v2704 = vpop.f32.mrb[0].mxu0
      %v2705 = vadd.f32 0.0, %v2704
      %v2706 = vpop.f32.mrb[0].mxu0
      %2707 = vmatprep.mubr.bf16.mxu0 0
      %2708 = vmatmul.mubr.bf16.gmra.mrb[0].mxu0 %v2550
      %v2709 = vpop.f32.mrb[0].mxu0
      %v2710 = vadd.f32 0.0, %v2709
      %v2711 = vpop.f32.mrb[0].mxu0
      %v2712 = vpop.f32.mrb[0].mxu0
      %v2713 = vadd.f32 0.0, %v2712
      %v2714 = vpop.f32.mrb[0].mxu0
      %2715 = vdwg.mxu0
      %v2716 = vadd.f32 %v2422, %v2590
      %v2717 = vadd.f32 %v2423, %v2593
      %v2718 = vadd.f32 %v2424, %v2598
      %v2719 = vadd.f32 %v2425, %v2601
      %v2720 = vadd.f32 %v2426, %v2606
      %v2721 = vadd.f32 %v2427, %v2609
      %v2722 = vadd.f32 %v2428, %v2614
      %v2723 = vadd.f32 %v2429, %v2617
      %v2724 = vadd.f32 %v2430, %v2622
      %v2725 = vadd.f32 %v2431, %v2625
      %v2726 = vadd.f32 %v2432, %v2630
      %v2727 = vadd.f32 %v2433, %v2633
      %v2728 = vadd.f32 %v2434, %v2638
      %v2729 = vadd.f32 %v2435, %v2641
      %v2730 = vadd.f32 %v2436, %v2646
      %v2731 = vadd.f32 %v2437, %v2649
      %v2732 = vadd.f32 %v2438, %v2654
      %v2733 = vadd.f32 %v2439, %v2657
      %v2734 = vadd.f32 %v2440, %v2662
      %v2735 = vadd.f32 %v2441, %v2665
      %v2736 = vadd.f32 %v2442, %v2670
      %v2737 = vadd.f32 %v2443, %v2673
      %v2738 = vadd.f32 %v2444, %v2678
      %v2739 = vadd.f32 %v2445, %v2681
      %v2740 = vadd.f32 %v2446, %v2686
      %v2741 = vadd.f32 %v2447, %v2689
      %v2742 = vadd.f32 %v2448, %v2694
      %v2743 = vadd.f32 %v2449, %v2697
      %v2744 = vadd.f32 %v2450, %v2702
      %v2745 = vadd.f32 %v2451, %v2705
      %v2746 = vadd.f32 %v2452, %v2710
      %v2747 = vadd.f32 %v2453, %v2713
      %v2748 = vld [vmem:[%s2159 + $0x2] sm:$0xff]
      %v2749 = vld [vmem:[%s2159 + $0xa] sm:$0xff]
      %v2750 = vld [vmem:[%s2159 + $0x1a] sm:$0xff]
      %v2751 = vld [vmem:[%s2159 + $0x22] sm:$0xff]
      %v2752 = vld [vmem:[%s2159 + $0x32] sm:$0xff]
      %v2753 = vld [vmem:[%s2159 + $0x3a] sm:$0xff]
      %v2754 = vld [vmem:[%s2159 + $0x4a] sm:$0xff]
      %v2755 = vld [vmem:[%s2159 + $0x52] sm:$0xff]
      %v2756 = vld [vmem:[%s2159 + $0x62] sm:$0xff]
      %v2757 = vld [vmem:[%s2159 + $0x6a] sm:$0xff]
      %v2758 = vld [vmem:[%s2159 + $0x7a] sm:$0xff]
      %v2759 = vld [vmem:[%s2159 + $0x82] sm:$0xff]
      %v2760 = vld [vmem:[%s2159 + $0x92] sm:$0xff]
      %v2761 = vld [vmem:[%s2159 + $0x9a] sm:$0xff]
      %v2762 = vld [vmem:[%s2159 + $0xaa] sm:$0xff]
      %v2763 = vld [vmem:[%s2159 + $0xb2] sm:$0xff]
      %v2764 = vld [vmem:[%s2159 + $0xc2] sm:$0xff]
      %v2765 = vld [vmem:[%s2159 + $0xca] sm:$0xff]
      %v2766 = vld [vmem:[%s2159 + $0xda] sm:$0xff]
      %v2767 = vld [vmem:[%s2159 + $0xe2] sm:$0xff]
      %v2768 = vld [vmem:[%s2159 + $0xf2] sm:$0xff]
      %v2769 = vld [vmem:[%s2159 + $0xfa] sm:$0xff]
      %v2770 = vld [vmem:[%s2159 + $0x10a] sm:$0xff]
      %v2771 = vld [vmem:[%s2159 + $0x112] sm:$0xff]
      %v2772 = vld [vmem:[%s2159 + $0x122] sm:$0xff]
      %v2773 = vld [vmem:[%s2159 + $0x12a] sm:$0xff]
      %v2774 = vld [vmem:[%s2159 + $0x13a] sm:$0xff]
      %v2775 = vld [vmem:[%s2159 + $0x142] sm:$0xff]
      %v2776 = vld [vmem:[%s2159 + $0x152] sm:$0xff]
      %v2777 = vld [vmem:[%s2159 + $0x15a] sm:$0xff]
      %v2778 = vld [vmem:[%s2159 + $0x16a] sm:$0xff]
      %v2779 = vld [vmem:[%s2159 + $0x172] sm:$0xff]
      %v2780 = vpack.c.bf16 %v2749, %v2748
      %v2781 = vpack.c.bf16 %v2751, %v2750
      %v2782 = vpack.c.bf16 %v2753, %v2752
      %v2783 = vpack.c.bf16 %v2755, %v2754
      %v2784 = vpack.c.bf16 %v2757, %v2756
      %v2785 = vpack.c.bf16 %v2759, %v2758
      %v2786 = vpack.c.bf16 %v2761, %v2760
      %v2787 = vpack.c.bf16 %v2763, %v2762
      %v2788 = vpack.c.bf16 %v2765, %v2764
      %v2789 = vpack.c.bf16 %v2767, %v2766
      %v2790 = vpack.c.bf16 %v2769, %v2768
      %v2791 = vpack.c.bf16 %v2771, %v2770
      %v2792 = vpack.c.bf16 %v2773, %v2772
      %v2793 = vpack.c.bf16 %v2775, %v2774
      %v2794 = vpack.c.bf16 %v2777, %v2776
      %v2795 = vpack.c.bf16 %v2779, %v2778
      %s2796 = scalar_lea.vmem %s1, 16
      %v2797 = vld [vmem:[%s2796] sm:$0x3]
      %v2799 = vsel %vm423, %v2780, 0
      %v2802 = vsel %vm423, %v2781, 0
      %v2805 = vsel %vm423, %v2782, 0
      %v2808 = vsel %vm423, %v2783, 0
      %v2811 = vsel %vm423, %v2784, 0
      %v2814 = vsel %vm423, %v2785, 0
      %v2817 = vsel %vm423, %v2786, 0
      %v2820 = vsel %vm423, %v2787, 0
      %v2823 = vsel %vm423, %v2788, 0
      %v2826 = vsel %vm423, %v2789, 0
      %v2829 = vsel %vm423, %v2790, 0
      %v2832 = vsel %vm423, %v2791, 0
      %v2835 = vsel %vm423, %v2792, 0
      %v2838 = vsel %vm423, %v2793, 0
      %v2841 = vsel %vm423, %v2794, 0
      %v2844 = vsel %vm423, %v2795, 0
      %v2847 = vand.u32 %v2797, %v606
      %2849 = vmatprep.subr.bf16.mxu0 0
      %2850 = vmatpush1.bf16.msra.mxu0 %v2847
      %2851 = vmatprep.subr.bf16.mxu0 0
      %2852 = vmatpush1.bf16.msra.mxu0 0
      %2853 = vmatprep.subr.bf16.mxu0 0
      %2854 = vmatpush1.bf16.msra.mxu0 0
      %2855 = vmatprep.subr.bf16.mxu0 0
      %2856 = vmatpush1.bf16.msra.mxu0 0
      %2857 = vmatprep.subr.bf16.mxu0 0
      %2858 = vmatpush1.bf16.msra.mxu0 0
      %2859 = vmatprep.subr.bf16.mxu0 0
      %2860 = vmatpush1.bf16.msra.mxu0 0
      %2861 = vmatprep.subr.bf16.mxu0 0
      %2862 = vmatpush1.bf16.msra.mxu0 0
      %2863 = vmatprep.subr.bf16.mxu0 0
      %2864 = vmatpush1.bf16.msra.mxu0 0
      %2865 = vmatprep.subr.bf16.mxu0 0
      %2866 = vmatpush1.bf16.msra.mxu0 0
      %2867 = vmatprep.subr.bf16.mxu0 0
      %2868 = vmatpush1.bf16.msra.mxu0 0
      %2869 = vmatprep.subr.bf16.mxu0 0
      %2870 = vmatpush1.bf16.msra.mxu0 0
      %2871 = vmatprep.subr.bf16.mxu0 0
      %2872 = vmatpush1.bf16.msra.mxu0 0
      %2873 = vmatprep.subr.bf16.mxu0 0
      %2874 = vmatpush1.bf16.msra.mxu0 0
      %2875 = vmatprep.subr.bf16.mxu0 0
      %2876 = vmatpush1.bf16.msra.mxu0 0
      %2877 = vmatprep.subr.bf16.mxu0 0
      %2878 = vmatpush1.bf16.msra.mxu0 0
      %2879 = vmatprep.subr.bf16.mxu0 0
      %2880 = vmatpush1.bf16.msra.mxu0 0
      %2881 = vmatprep.mubr.bf16.mxu0 0
      %2882 = vmatmul.mubr.bf16.gmra.mrb[0].mxu0 %v2799
      %v2883 = vpop.f32.mrb[0].mxu0
      %v2884 = vadd.f32 0.0, %v2883
      %v2885 = vpop.f32.mrb[0].mxu0
      %v2886 = vpop.f32.mrb[0].mxu0
      %v2887 = vadd.f32 0.0, %v2886
      %v2888 = vpop.f32.mrb[0].mxu0
      %2889 = vmatprep.mubr.bf16.mxu0 0
      %2890 = vmatmul.mubr.bf16.gmra.mrb[0].mxu0 %v2802
      %v2891 = vpop.f32.mrb[0].mxu0
      %v2892 = vadd.f32 0.0, %v2891
      %v2893 = vpop.f32.mrb[0].mxu0
      %v2894 = vpop.f32.mrb[0].mxu0
      %v2895 = vadd.f32 0.0, %v2894
      %v2896 = vpop.f32.mrb[0].mxu0
      %2897 = vmatprep.mubr.bf16.mxu0 0
      %2898 = vmatmul.mubr.bf16.gmra.mrb[0].mxu0 %v2805
      %v2899 = vpop.f32.mrb[0].mxu0
      %v2900 = vadd.f32 0.0, %v2899
      %v2901 = vpop.f32.mrb[0].mxu0
      %v2902 = vpop.f32.mrb[0].mxu0
      %v2903 = vadd.f32 0.0, %v2902
      %v2904 = vpop.f32.mrb[0].mxu0
      %2905 = vmatprep.mubr.bf16.mxu0 0
      %2906 = vmatmul.mubr.bf16.gmra.mrb[0].mxu0 %v2808
      %v2907 = vpop.f32.mrb[0].mxu0
      %v2908 = vadd.f32 0.0, %v2907
      %v2909 = vpop.f32.mrb[0].mxu0
      %v2910 = vpop.f32.mrb[0].mxu0
      %v2911 = vadd.f32 0.0, %v2910
      %v2912 = vpop.f32.mrb[0].mxu0
      %2913 = vmatprep.mubr.bf16.mxu0 0
      %2914 = vmatmul.mubr.bf16.gmra.mrb[0].mxu0 %v2811
      %v2915 = vpop.f32.mrb[0].mxu0
      %v2916 = vadd.f32 0.0, %v2915
      %v2917 = vpop.f32.mrb[0].mxu0
      %v2918 = vpop.f32.mrb[0].mxu0
      %v2919 = vadd.f32 0.0, %v2918
      %v2920 = vpop.f32.mrb[0].mxu0
      %2921 = vmatprep.mubr.bf16.mxu0 0
      %2922 = vmatmul.mubr.bf16.gmra.mrb[0].mxu0 %v2814
      %v2923 = vpop.f32.mrb[0].mxu0
      %v2924 = vadd.f32 0.0, %v2923
      %v2925 = vpop.f32.mrb[0].mxu0
      %v2926 = vpop.f32.mrb[0].mxu0
      %v2927 = vadd.f32 0.0, %v2926
      %v2928 = vpop.f32.mrb[0].mxu0
      %2929 = vmatprep.mubr.bf16.mxu0 0
      %2930 = vmatmul.mubr.bf16.gmra.mrb[0].mxu0 %v2817
      %v2931 = vpop.f32.mrb[0].mxu0
      %v2932 = vadd.f32 0.0, %v2931
      %v2933 = vpop.f32.mrb[0].mxu0
      %v2934 = vpop.f32.mrb[0].mxu0
      %v2935 = vadd.f32 0.0, %v2934
      %v2936 = vpop.f32.mrb[0].mxu0
      %2937 = vmatprep.mubr.bf16.mxu0 0
      %2938 = vmatmul.mubr.bf16.gmra.mrb[0].mxu0 %v2820
      %v2939 = vpop.f32.mrb[0].mxu0
      %v2940 = vadd.f32 0.0, %v2939
      %v2941 = vpop.f32.mrb[0].mxu0
      %v2942 = vpop.f32.mrb[0].mxu0
      %v2943 = vadd.f32 0.0, %v2942
      %v2944 = vpop.f32.mrb[0].mxu0
      %2945 = vmatprep.mubr.bf16.mxu0 0
      %2946 = vmatmul.mubr.bf16.gmra.mrb[0].mxu0 %v2823
      %v2947 = vpop.f32.mrb[0].mxu0
      %v2948 = vadd.f32 0.0, %v2947
      %v2949 = vpop.f32.mrb[0].mxu0
      %v2950 = vpop.f32.mrb[0].mxu0
      %v2951 = vadd.f32 0.0, %v2950
      %v2952 = vpop.f32.mrb[0].mxu0
      %2953 = vmatprep.mubr.bf16.mxu0 0
      %2954 = vmatmul.mubr.bf16.gmra.mrb[0].mxu0 %v2826
      %v2955 = vpop.f32.mrb[0].mxu0
      %v2956 = vadd.f32 0.0, %v2955
      %v2957 = vpop.f32.mrb[0].mxu0
      %v2958 = vpop.f32.mrb[0].mxu0
      %v2959 = vadd.f32 0.0, %v2958
      %v2960 = vpop.f32.mrb[0].mxu0
      %2961 = vmatprep.mubr.bf16.mxu0 0
      %2962 = vmatmul.mubr.bf16.gmra.mrb[0].mxu0 %v2829
      %v2963 = vpop.f32.mrb[0].mxu0
      %v2964 = vadd.f32 0.0, %v2963
      %v2965 = vpop.f32.mrb[0].mxu0
      %v2966 = vpop.f32.mrb[0].mxu0
      %v2967 = vadd.f32 0.0, %v2966
      %v2968 = vpop.f32.mrb[0].mxu0
      %2969 = vmatprep.mubr.bf16.mxu0 0
      %2970 = vmatmul.mubr.bf16.gmra.mrb[0].mxu0 %v2832
      %v2971 = vpop.f32.mrb[0].mxu0
      %v2972 = vadd.f32 0.0, %v2971
      %v2973 = vpop.f32.mrb[0].mxu0
      %v2974 = vpop.f32.mrb[0].mxu0
      %v2975 = vadd.f32 0.0, %v2974
      %v2976 = vpop.f32.mrb[0].mxu0
      %2977 = vmatprep.mubr.bf16.mxu0 0
      %2978 = vmatmul.mubr.bf16.gmra.mrb[0].mxu0 %v2835
      %v2979 = vpop.f32.mrb[0].mxu0
      %v2980 = vadd.f32 0.0, %v2979
      %v2981 = vpop.f32.mrb[0].mxu0
      %v2982 = vpop.f32.mrb[0].mxu0
      %v2983 = vadd.f32 0.0, %v2982
      %v2984 = vpop.f32.mrb[0].mxu0
      %2985 = vmatprep.mubr.bf16.mxu0 0
      %2986 = vmatmul.mubr.bf16.gmra.mrb[0].mxu0 %v2838
      %v2987 = vpop.f32.mrb[0].mxu0
      %v2988 = vadd.f32 0.0, %v2987
      %v2989 = vpop.f32.mrb[0].mxu0
      %v2990 = vpop.f32.mrb[0].mxu0
      %v2991 = vadd.f32 0.0, %v2990
      %v2992 = vpop.f32.mrb[0].mxu0
      %2993 = vmatprep.mubr.bf16.mxu0 0
      %2994 = vmatmul.mubr.bf16.gmra.mrb[0].mxu0 %v2841
      %v2995 = vpop.f32.mrb[0].mxu0
      %v2996 = vadd.f32 0.0, %v2995
      %v2997 = vpop.f32.mrb[0].mxu0
      %v2998 = vpop.f32.mrb[0].mxu0
      %v2999 = vadd.f32 0.0, %v2998
      %v3000 = vpop.f32.mrb[0].mxu0
      %3001 = vmatprep.mubr.bf16.mxu0 0
      %3002 = vmatmul.mubr.bf16.gmra.mrb[0].mxu0 %v2844
      %v3003 = vpop.f32.mrb[0].mxu0
      %v3004 = vadd.f32 0.0, %v3003
      %v3005 = vpop.f32.mrb[0].mxu0
      %v3006 = vpop.f32.mrb[0].mxu0
      %v3007 = vadd.f32 0.0, %v3006
      %v3008 = vpop.f32.mrb[0].mxu0
      %3009 = vdwg.mxu0
      %v3010 = vadd.f32 %v2716, %v2884
      %v3011 = vadd.f32 %v2717, %v2887
      %v3012 = vadd.f32 %v2718, %v2892
      %v3013 = vadd.f32 %v2719, %v2895
      %v3014 = vadd.f32 %v2720, %v2900
      %v3015 = vadd.f32 %v2721, %v2903
      %v3016 = vadd.f32 %v2722, %v2908
      %v3017 = vadd.f32 %v2723, %v2911
      %v3018 = vadd.f32 %v2724, %v2916
      %v3019 = vadd.f32 %v2725, %v2919
      %v3020 = vadd.f32 %v2726, %v2924
      %v3021 = vadd.f32 %v2727, %v2927
      %v3022 = vadd.f32 %v2728, %v2932
      %v3023 = vadd.f32 %v2729, %v2935
      %v3024 = vadd.f32 %v2730, %v2940
      %v3025 = vadd.f32 %v2731, %v2943
      %v3026 = vadd.f32 %v2732, %v2948
      %v3027 = vadd.f32 %v2733, %v2951
      %v3028 = vadd.f32 %v2734, %v2956
      %v3029 = vadd.f32 %v2735, %v2959
      %v3030 = vadd.f32 %v2736, %v2964
      %v3031 = vadd.f32 %v2737, %v2967
      %v3032 = vadd.f32 %v2738, %v2972
      %v3033 = vadd.f32 %v2739, %v2975
      %v3034 = vadd.f32 %v2740, %v2980
      %v3035 = vadd.f32 %v2741, %v2983
      %v3036 = vadd.f32 %v2742, %v2988
      %v3037 = vadd.f32 %v2743, %v2991
      %v3038 = vadd.f32 %v2744, %v2996
      %v3039 = vadd.f32 %v2745, %v2999
      %v3040 = vadd.f32 %v2746, %v3004
      %v3041 = vadd.f32 %v2747, %v3007
      %v3042 = vld [vmem:[%s2] sm:$0x1]
      %v3044 = vlaneseq
      %v3045 = vshrl.u32 %v3044, 7
      %v3046 = vsub.s32 0, %v3045
      %v3047 = vrot.slane %v3042, %v3046
      %v3049 = vadd.f32 %v3010, %v3047
      %v3050 = vadd.f32 %v3011, %v3047
      %v3051 = vadd.f32 %v3012, %v3047
      %v3052 = vadd.f32 %v3013, %v3047
      %v3053 = vadd.f32 %v3014, %v3047
      %v3054 = vadd.f32 %v3015, %v3047
      %v3055 = vadd.f32 %v3016, %v3047
      %v3056 = vadd.f32 %v3017, %v3047
      %v3057 = vadd.f32 %v3018, %v3047
      %v3058 = vadd.f32 %v3019, %v3047
      %v3059 = vadd.f32 %v3020, %v3047
      %v3060 = vadd.f32 %v3021, %v3047
      %v3061 = vadd.f32 %v3022, %v3047
      %v3062 = vadd.f32 %v3023, %v3047
      %v3063 = vadd.f32 %v3024, %v3047
      %v3064 = vadd.f32 %v3025, %v3047
      %v3065 = vadd.f32 %v3026, %v3047
      %v3066 = vadd.f32 %v3027, %v3047
      %v3067 = vadd.f32 %v3028, %v3047
      %v3068 = vadd.f32 %v3029, %v3047
      %v3069 = vadd.f32 %v3030, %v3047
      %v3070 = vadd.f32 %v3031, %v3047
      %v3071 = vadd.f32 %v3032, %v3047
      %v3072 = vadd.f32 %v3033, %v3047
      %v3073 = vadd.f32 %v3034, %v3047
      %v3074 = vadd.f32 %v3035, %v3047
      %v3075 = vadd.f32 %v3036, %v3047
      %v3076 = vadd.f32 %v3037, %v3047
      %v3077 = vadd.f32 %v3038, %v3047
      %v3078 = vadd.f32 %v3039, %v3047
      %v3079 = vadd.f32 %v3040, %v3047
      %v3080 = vadd.f32 %v3041, %v3047
      %v3081 = vmax.f32 %v3049, 0.0
      %v3082 = vmax.f32 %v3050, 0.0
      %v3083 = vmax.f32 %v3051, 0.0
      %v3084 = vmax.f32 %v3052, 0.0
      %v3085 = vmax.f32 %v3053, 0.0
      %v3086 = vmax.f32 %v3054, 0.0
      %v3087 = vmax.f32 %v3055, 0.0
      %v3088 = vmax.f32 %v3056, 0.0
      %v3089 = vmax.f32 %v3057, 0.0
      %v3090 = vmax.f32 %v3058, 0.0
      %v3091 = vmax.f32 %v3059, 0.0
      %v3092 = vmax.f32 %v3060, 0.0
      %v3093 = vmax.f32 %v3061, 0.0
      %v3094 = vmax.f32 %v3062, 0.0
      %v3095 = vmax.f32 %v3063, 0.0
      %v3096 = vmax.f32 %v3064, 0.0
      %v3097 = vmax.f32 %v3065, 0.0
      %v3098 = vmax.f32 %v3066, 0.0
      %v3099 = vmax.f32 %v3067, 0.0
      %v3100 = vmax.f32 %v3068, 0.0
      %v3101 = vmax.f32 %v3069, 0.0
      %v3102 = vmax.f32 %v3070, 0.0
      %v3103 = vmax.f32 %v3071, 0.0
      %v3104 = vmax.f32 %v3072, 0.0
      %v3105 = vmax.f32 %v3073, 0.0
      %v3106 = vmax.f32 %v3074, 0.0
      %v3107 = vmax.f32 %v3075, 0.0
      %v3108 = vmax.f32 %v3076, 0.0
      %v3109 = vmax.f32 %v3077, 0.0
      %v3110 = vmax.f32 %v3078, 0.0
      %v3111 = vmax.f32 %v3079, 0.0
      %v3112 = vmax.f32 %v3080, 0.0
      %3113 = vst.msk [vmem:[#allocation2] sm:$0xff] %vm366, 0.0
      %3114 = vst.msk [vmem:[#allocation2 + $0x8] sm:$0xff] %vm366, 0.0
      %3115 = vst.msk [vmem:[#allocation2 + $0x10] sm:$0x3] %vm369, 0.0
      %3116 = vst.msk [vmem:[#allocation2 + $0x18] sm:$0xff] %vm366, 0.0
      %3117 = vst.msk [vmem:[#allocation2 + $0x20] sm:$0xff] %vm366, 0.0
      %3118 = vst.msk [vmem:[#allocation2 + $0x28] sm:$0x3] %vm369, 0.0
      %3119 = vst.msk [vmem:[#allocation2 + $0x30] sm:$0xff] %vm366, 0.0
      %3120 = vst.msk [vmem:[#allocation2 + $0x38] sm:$0xff] %vm366, 0.0
      %3121 = vst.msk [vmem:[#allocation2 + $0x40] sm:$0x3] %vm369, 0.0
      %3122 = vst.msk [vmem:[#allocation2 + $0x48] sm:$0xff] %vm366, 0.0
      %3123 = vst.msk [vmem:[#allocation2 + $0x50] sm:$0xff] %vm366, 0.0
      %3124 = vst.msk [vmem:[#allocation2 + $0x58] sm:$0x3] %vm369, 0.0
      %3125 = vst.msk [vmem:[#allocation2 + $0x60] sm:$0xff] %vm366, 0.0
      %3126 = vst.msk [vmem:[#allocation2 + $0x68] sm:$0xff] %vm366, 0.0
      %3127 = vst.msk [vmem:[#allocation2 + $0x70] sm:$0x3] %vm369, 0.0
      %3128 = vst.msk [vmem:[#allocation2 + $0x78] sm:$0xff] %vm366, 0.0
      %3129 = vst.msk [vmem:[#allocation2 + $0x80] sm:$0xff] %vm366, 0.0
      %3130 = vst.msk [vmem:[#allocation2 + $0x88] sm:$0x3] %vm369, 0.0
      %3131 = vst.msk [vmem:[#allocation2 + $0x90] sm:$0xff] %vm366, 0.0
      %3132 = vst.msk [vmem:[#allocation2 + $0x98] sm:$0xff] %vm366, 0.0
      %3133 = vst.msk [vmem:[#allocation2 + $0xa0] sm:$0x3] %vm369, 0.0
      %3134 = vst.msk [vmem:[#allocation2 + $0xa8] sm:$0xff] %vm366, 0.0
      %3135 = vst.msk [vmem:[#allocation2 + $0xb0] sm:$0xff] %vm366, 0.0
      %3136 = vst.msk [vmem:[#allocation2 + $0xb8] sm:$0x3] %vm369, 0.0
      %3137 = vst.msk [vmem:[#allocation2 + $0xc0] sm:$0xff] %vm366, 0.0
      %3138 = vst.msk [vmem:[#allocation2 + $0xc8] sm:$0xff] %vm366, 0.0
      %3139 = vst.msk [vmem:[#allocation2 + $0xd0] sm:$0x3] %vm369, 0.0
      %3140 = vst.msk [vmem:[#allocation2 + $0xd8] sm:$0xff] %vm366, 0.0
      %3141 = vst.msk [vmem:[#allocation2 + $0xe0] sm:$0xff] %vm366, 0.0
      %3142 = vst.msk [vmem:[#allocation2 + $0xe8] sm:$0x3] %vm369, 0.0
      %3143 = vst.msk [vmem:[#allocation2 + $0xf0] sm:$0xff] %vm366, 0.0
      %3144 = vst.msk [vmem:[#allocation2 + $0xf8] sm:$0xff] %vm366, 0.0
      %3145 = vst.msk [vmem:[#allocation2 + $0x100] sm:$0x3] %vm369, 0.0
      %3146 = vst.msk [vmem:[#allocation2 + $0x108] sm:$0xff] %vm366, 0.0
      %3147 = vst.msk [vmem:[#allocation2 + $0x110] sm:$0xff] %vm366, 0.0
      %3148 = vst.msk [vmem:[#allocation2 + $0x118] sm:$0x3] %vm369, 0.0
      %3149 = vst.msk [vmem:[#allocation2 + $0x120] sm:$0xff] %vm366, 0.0
      %3150 = vst.msk [vmem:[#allocation2 + $0x128] sm:$0xff] %vm366, 0.0
      %3151 = vst.msk [vmem:[#allocation2 + $0x130] sm:$0x3] %vm369, 0.0
      %3152 = vst.msk [vmem:[#allocation2 + $0x138] sm:$0xff] %vm366, 0.0
      %3153 = vst.msk [vmem:[#allocation2 + $0x140] sm:$0xff] %vm366, 0.0
      %3154 = vst.msk [vmem:[#allocation2 + $0x148] sm:$0x3] %vm369, 0.0
      %3155 = vst.msk [vmem:[#allocation2 + $0x150] sm:$0xff] %vm366, 0.0
      %3156 = vst.msk [vmem:[#allocation2 + $0x158] sm:$0xff] %vm366, 0.0
      %3157 = vst.msk [vmem:[#allocation2 + $0x160] sm:$0x3] %vm369, 0.0
      %3158 = vst.msk [vmem:[#allocation2 + $0x168] sm:$0xff] %vm366, 0.0
      %3159 = vst.msk [vmem:[#allocation2 + $0x170] sm:$0xff] %vm366, 0.0
      %3160 = vst.msk [vmem:[#allocation2 + $0x178] sm:$0x3] %vm369, 0.0
      %3161 = vst.msk [vmem:[#allocation2 + $0x180] sm:$0xff] %vm366, 0.0
      %3162 = vst.msk [vmem:[#allocation2 + $0x188] sm:$0xff] %vm366, 0.0
      %3163 = vst.msk [vmem:[#allocation2 + $0x190] sm:$0x3] %vm369, 0.0
      %3164 = vst.msk [vmem:[#allocation2 + $0x198] sm:$0xff] %vm366, 0.0
      %3165 = vst.msk [vmem:[#allocation2 + $0x1a0] sm:$0xff] %vm366, 0.0
      %3166 = vst.msk [vmem:[#allocation2 + $0x1a8] sm:$0x3] %vm369, 0.0
      %3167 = vst.msk [vmem:[%s422 + $0x1] sm:$0xff] %vm366, %v3081
      %3168 = vst.msk [vmem:[%s422 + $0x9] sm:$0xff] %vm366, %v3082
      %3169 = vst.msk [vmem:[%s422 + $0x19] sm:$0xff] %vm366, %v3083
      %3170 = vst.msk [vmem:[%s422 + $0x21] sm:$0xff] %vm366, %v3084
      %3171 = vst.msk [vmem:[%s422 + $0x31] sm:$0xff] %vm366, %v3085
      %3172 = vst.msk [vmem:[%s422 + $0x39] sm:$0xff] %vm366, %v3086
      %3173 = vst.msk [vmem:[%s422 + $0x49] sm:$0xff] %vm366, %v3087
      %3174 = vst.msk [vmem:[%s422 + $0x51] sm:$0xff] %vm366, %v3088
      %3175 = vst.msk [vmem:[%s422 + $0x61] sm:$0xff] %vm366, %v3089
      %3176 = vst.msk [vmem:[%s422 + $0x69] sm:$0xff] %vm366, %v3090
      %3177 = vst.msk [vmem:[%s422 + $0x79] sm:$0xff] %vm366, %v3091
      %3178 = vst.msk [vmem:[%s422 + $0x81] sm:$0xff] %vm366, %v3092
      %3179 = vst.msk [vmem:[%s422 + $0x91] sm:$0xff] %vm366, %v3093
      %3180 = vst.msk [vmem:[%s422 + $0x99] sm:$0xff] %vm366, %v3094
      %3181 = vst.msk [vmem:[%s422 + $0xa9] sm:$0xff] %vm366, %v3095
      %3182 = vst.msk [vmem:[%s422 + $0xb1] sm:$0xff] %vm366, %v3096
      %3183 = vst.msk [vmem:[%s422 + $0xc1] sm:$0xff] %vm366, %v3097
      %3184 = vst.msk [vmem:[%s422 + $0xc9] sm:$0xff] %vm366, %v3098
      %3185 = vst.msk [vmem:[%s422 + $0xd9] sm:$0xff] %vm366, %v3099
      %3186 = vst.msk [vmem:[%s422 + $0xe1] sm:$0xff] %vm366, %v3100
      %3187 = vst.msk [vmem:[%s422 + $0xf1] sm:$0xff] %vm366, %v3101
      %3188 = vst.msk [vmem:[%s422 + $0xf9] sm:$0xff] %vm366, %v3102
      %3189 = vst.msk [vmem:[%s422 + $0x109] sm:$0xff] %vm366, %v3103
      %3190 = vst.msk [vmem:[%s422 + $0x111] sm:$0xff] %vm366, %v3104
      %3191 = vst.msk [vmem:[%s422 + $0x121] sm:$0xff] %vm366, %v3105
      %3192 = vst.msk [vmem:[%s422 + $0x129] sm:$0xff] %vm366, %v3106
      %3193 = vst.msk [vmem:[%s422 + $0x139] sm:$0xff] %vm366, %v3107
      %3194 = vst.msk [vmem:[%s422 + $0x141] sm:$0xff] %vm366, %v3108
      %3195 = vst.msk [vmem:[%s422 + $0x151] sm:$0xff] %vm366, %v3109
      %3196 = vst.msk [vmem:[%s422 + $0x159] sm:$0xff] %vm366, %v3110
      %3197 = vst.msk [vmem:[%s422 + $0x169] sm:$0xff] %vm366, %v3111
      %3198 = vst.msk [vmem:[%s422 + $0x171] sm:$0xff] %vm366, %v3112
      %v3199 = vld [vmem:[#allocation2] sm:$0xff]
      %v3200 = vld [vmem:[#allocation2 + $0x8] sm:$0xff]
      %v3201 = vld [vmem:[#allocation2 + $0x18] sm:$0xff]
      %v3202 = vld [vmem:[#allocation2 + $0x20] sm:$0xff]
      %v3203 = vld [vmem:[#allocation2 + $0x30] sm:$0xff]
      %v3204 = vld [vmem:[#allocation2 + $0x38] sm:$0xff]
      %v3205 = vld [vmem:[#allocation2 + $0x48] sm:$0xff]
      %v3206 = vld [vmem:[#allocation2 + $0x50] sm:$0xff]
      %v3207 = vld [vmem:[#allocation2 + $0x60] sm:$0xff]
      %v3208 = vld [vmem:[#allocation2 + $0x68] sm:$0xff]
      %v3209 = vld [vmem:[#allocation2 + $0x78] sm:$0xff]
      %v3210 = vld [vmem:[#allocation2 + $0x80] sm:$0xff]
      %v3211 = vld [vmem:[#allocation2 + $0x90] sm:$0xff]
      %v3212 = vld [vmem:[#allocation2 + $0x98] sm:$0xff]
      %v3213 = vld [vmem:[#allocation2 + $0xa8] sm:$0xff]
      %v3214 = vld [vmem:[#allocation2 + $0xb0] sm:$0xff]
      %v3215 = vld [vmem:[#allocation2 + $0xc0] sm:$0xff]
      %v3216 = vld [vmem:[#allocation2 + $0xc8] sm:$0xff]
      %v3217 = vld [vmem:[#allocation2 + $0xd8] sm:$0xff]
      %v3218 = vld [vmem:[#allocation2 + $0xe0] sm:$0xff]
      %v3219 = vld [vmem:[#allocation2 + $0xf0] sm:$0xff]
      %v3220 = vld [vmem:[#allocation2 + $0xf8] sm:$0xff]
      %v3221 = vld [vmem:[#allocation2 + $0x108] sm:$0xff]
      %v3222 = vld [vmem:[#allocation2 + $0x110] sm:$0xff]
      %v3223 = vld [vmem:[#allocation2 + $0x120] sm:$0xff]
      %v3224 = vld [vmem:[#allocation2 + $0x128] sm:$0xff]
      %v3225 = vld [vmem:[#allocation2 + $0x138] sm:$0xff]
      %v3226 = vld [vmem:[#allocation2 + $0x140] sm:$0xff]
      %v3227 = vld [vmem:[#allocation2 + $0x150] sm:$0xff]
      %v3228 = vld [vmem:[#allocation2 + $0x158] sm:$0xff]
      %v3229 = vld [vmem:[#allocation2 + $0x168] sm:$0xff]
      %v3230 = vld [vmem:[#allocation2 + $0x170] sm:$0xff]
      %v3231 = vpack.c.bf16 %v3200, %v3199
      %v3232 = vpack.c.bf16 %v3202, %v3201
      %v3233 = vpack.c.bf16 %v3204, %v3203
      %v3234 = vpack.c.bf16 %v3206, %v3205
      %v3235 = vpack.c.bf16 %v3208, %v3207
      %v3236 = vpack.c.bf16 %v3210, %v3209
      %v3237 = vpack.c.bf16 %v3212, %v3211
      %v3238 = vpack.c.bf16 %v3214, %v3213
      %v3239 = vpack.c.bf16 %v3216, %v3215
      %v3240 = vpack.c.bf16 %v3218, %v3217
      %v3241 = vpack.c.bf16 %v3220, %v3219
      %v3242 = vpack.c.bf16 %v3222, %v3221
      %v3243 = vpack.c.bf16 %v3224, %v3223
      %v3244 = vpack.c.bf16 %v3226, %v3225
      %v3245 = vpack.c.bf16 %v3228, %v3227
      %v3246 = vpack.c.bf16 %v3230, %v3229
      %v3247 = vld [vmem:[%s3] sm:$0xf]
      %v3248 = vld [vmem:[%s3 + $0x4] sm:$0xf]
      %v3249 = vld [vmem:[%s3 + $0x8] sm:$0xf]
      %v3250 = vld [vmem:[%s3 + $0xc] sm:$0xf]
      %v3251 = vld [vmem:[%s3 + $0x10] sm:$0xf]
      %v3252 = vld [vmem:[%s3 + $0x14] sm:$0xf]
      %v3253 = vld [vmem:[%s3 + $0x18] sm:$0xf]
      %v3254 = vld [vmem:[%s3 + $0x1c] sm:$0xf]
      %v3255 = vld [vmem:[#allocation2 + $0x1] sm:$0xff]
      %v3256 = vld [vmem:[#allocation2 + $0x9] sm:$0xff]
      %v3257 = vld [vmem:[#allocation2 + $0x19] sm:$0xff]
      %v3258 = vld [vmem:[#allocation2 + $0x21] sm:$0xff]
      %v3259 = vld [vmem:[#allocation2 + $0x31] sm:$0xff]
      %v3260 = vld [vmem:[#allocation2 + $0x39] sm:$0xff]
      %v3261 = vld [vmem:[#allocation2 + $0x49] sm:$0xff]
      %v3262 = vld [vmem:[#allocation2 + $0x51] sm:$0xff]
      %v3263 = vld [vmem:[#allocation2 + $0x61] sm:$0xff]
      %v3264 = vld [vmem:[#allocation2 + $0x69] sm:$0xff]
      %v3265 = vld [vmem:[#allocation2 + $0x79] sm:$0xff]
      %v3266 = vld [vmem:[#allocation2 + $0x81] sm:$0xff]
      %v3267 = vld [vmem:[#allocation2 + $0x91] sm:$0xff]
      %v3268 = vld [vmem:[#allocation2 + $0x99] sm:$0xff]
      %v3269 = vld [vmem:[#allocation2 + $0xa9] sm:$0xff]
      %v3270 = vld [vmem:[#allocation2 + $0xb1] sm:$0xff]
      %v3271 = vld [vmem:[#allocation2 + $0xc1] sm:$0xff]
      %v3272 = vld [vmem:[#allocation2 + $0xc9] sm:$0xff]
      %v3273 = vld [vmem:[#allocation2 + $0xd9] sm:$0xff]
      %v3274 = vld [vmem:[#allocation2 + $0xe1] sm:$0xff]
      %v3275 = vld [vmem:[#allocation2 + $0xf1] sm:$0xff]
      %v3276 = vld [vmem:[#allocation2 + $0xf9] sm:$0xff]
      %v3277 = vld [vmem:[#allocation2 + $0x109] sm:$0xff]
      %v3278 = vld [vmem:[#allocation2 + $0x111] sm:$0xff]
      %v3279 = vld [vmem:[#allocation2 + $0x121] sm:$0xff]
      %v3280 = vld [vmem:[#allocation2 + $0x129] sm:$0xff]
      %v3281 = vld [vmem:[#allocation2 + $0x139] sm:$0xff]
      %v3282 = vld [vmem:[#allocation2 + $0x141] sm:$0xff]
      %v3283 = vld [vmem:[#allocation2 + $0x151] sm:$0xff]
      %v3284 = vld [vmem:[#allocation2 + $0x159] sm:$0xff]
      %v3285 = vld [vmem:[#allocation2 + $0x169] sm:$0xff]
      %v3286 = vld [vmem:[#allocation2 + $0x171] sm:$0xff]
      %v3287 = vpack.c.bf16 %v3256, %v3255
      %v3288 = vpack.c.bf16 %v3258, %v3257
      %v3289 = vpack.c.bf16 %v3260, %v3259
      %v3290 = vpack.c.bf16 %v3262, %v3261
      %v3291 = vpack.c.bf16 %v3264, %v3263
      %v3292 = vpack.c.bf16 %v3266, %v3265
      %v3293 = vpack.c.bf16 %v3268, %v3267
      %v3294 = vpack.c.bf16 %v3270, %v3269
      %v3295 = vpack.c.bf16 %v3272, %v3271
      %v3296 = vpack.c.bf16 %v3274, %v3273
      %v3297 = vpack.c.bf16 %v3276, %v3275
      %v3298 = vpack.c.bf16 %v3278, %v3277
      %v3299 = vpack.c.bf16 %v3280, %v3279
      %v3300 = vpack.c.bf16 %v3282, %v3281
      %v3301 = vpack.c.bf16 %v3284, %v3283
      %v3302 = vpack.c.bf16 %v3286, %v3285
      %s3303 = scalar_lea.vmem %s3, 32
      %v3304 = vld [vmem:[%s3303] sm:$0xf]
      %v3305 = vld [vmem:[%s3303 + $0x4] sm:$0xf]
      %v3306 = vld [vmem:[%s3303 + $0x8] sm:$0xf]
      %v3307 = vld [vmem:[%s3303 + $0xc] sm:$0xf]
      %v3308 = vld [vmem:[%s3303 + $0x10] sm:$0xf]
      %v3309 = vld [vmem:[%s3303 + $0x14] sm:$0xf]
      %v3310 = vld [vmem:[%s3303 + $0x18] sm:$0xf]
      %v3311 = vld [vmem:[%s3303 + $0x1c] sm:$0xf]
      %v3320 = vunpack.c.l.b16 %v3304
      %v3321 = vunpack.c.l.b16 %v3305
      %v3322 = vunpack.c.l.b16 %v3306
      %v3323 = vunpack.c.l.b16 %v3307
      %v3324 = vunpack.c.l.b16 %v3308
      %v3325 = vunpack.c.l.b16 %v3309
      %v3326 = vunpack.c.l.b16 %v3310
      %v3327 = vunpack.c.l.b16 %v3311
      %v3328 = vpack.c.b16 %v3321, %v3320
      %v3329 = vpack.c.b16 %v3323, %v3322
      %v3330 = vpack.c.b16 %v3325, %v3324
      %v3331 = vpack.c.b16 %v3327, %v3326
      %v3337 = vsel %vm366, %v3287, 0
      %v3340 = vsel %vm366, %v3288, 0
      %v3343 = vsel %vm366, %v3289, 0
      %v3346 = vsel %vm366, %v3290, 0
      %v3349 = vsel %vm366, %v3291, 0
      %v3352 = vsel %vm366, %v3292, 0
      %v3355 = vsel %vm366, %v3293, 0
      %v3358 = vsel %vm366, %v3294, 0
      %v3361 = vsel %vm366, %v3295, 0
      %v3364 = vsel %vm366, %v3296, 0
      %v3367 = vsel %vm366, %v3297, 0
      %v3370 = vsel %vm366, %v3298, 0
      %v3373 = vsel %vm366, %v3299, 0
      %v3376 = vsel %vm366, %v3300, 0
      %v3379 = vsel %vm366, %v3301, 0
      %v3382 = vsel %vm366, %v3302, 0
      %3384 = vmatprep.subr.bf16.mxu0 0
      %3385 = vmatpush1.bf16.msra.mxu0 %v3328
      %3386 = vmatprep.subr.bf16.mxu0 0
      %3387 = vmatpush1.bf16.msra.mxu0 %v3329
      %3388 = vmatprep.subr.bf16.mxu0 0
      %3389 = vmatpush1.bf16.msra.mxu0 %v3330
      %3390 = vmatprep.subr.bf16.mxu0 0
      %3391 = vmatpush1.bf16.msra.mxu0 %v3331
      %3392 = vmatprep.subr.bf16.mxu0 0
      %3393 = vmatpush1.bf16.msra.mxu0 0
      %3394 = vmatprep.subr.bf16.mxu0 0
      %3395 = vmatpush1.bf16.msra.mxu0 0
      %3396 = vmatprep.subr.bf16.mxu0 0
      %3397 = vmatpush1.bf16.msra.mxu0 0
      %3398 = vmatprep.subr.bf16.mxu0 0
      %3399 = vmatpush1.bf16.msra.mxu0 0
      %3400 = vmatprep.subr.bf16.mxu0 0
      %3401 = vmatpush1.bf16.msra.mxu0 0
      %3402 = vmatprep.subr.bf16.mxu0 0
      %3403 = vmatpush1.bf16.msra.mxu0 0
      %3404 = vmatprep.subr.bf16.mxu0 0
      %3405 = vmatpush1.bf16.msra.mxu0 0
      %3406 = vmatprep.subr.bf16.mxu0 0
      %3407 = vmatpush1.bf16.msra.mxu0 0
      %3408 = vmatprep.subr.bf16.mxu0 0
      %3409 = vmatpush1.bf16.msra.mxu0 0
      %3410 = vmatprep.subr.bf16.mxu0 0
      %3411 = vmatpush1.bf16.msra.mxu0 0
      %3412 = vmatprep.subr.bf16.mxu0 0
      %3413 = vmatpush1.bf16.msra.mxu0 0
      %3414 = vmatprep.subr.bf16.mxu0 0
      %3415 = vmatpush1.bf16.msra.mxu0 0
      %3416 = vmatprep.mubr.bf16.mxu0 0
      %3417 = vmatmul.mubr.bf16.gmra.mrb[0].mxu0 %v3337
      %v3418 = vpop.f32.mrb[0].mxu0
      %v3419 = vadd.f32 0.0, %v3418
      %v3420 = vpop.f32.mrb[0].mxu0
      %v3421 = vpop.f32.mrb[0].mxu0
      %v3422 = vadd.f32 0.0, %v3421
      %v3423 = vpop.f32.mrb[0].mxu0
      %3424 = vmatprep.mubr.bf16.mxu0 0
      %3425 = vmatmul.mubr.bf16.gmra.mrb[0].mxu0 %v3340
      %v3426 = vpop.f32.mrb[0].mxu0
      %v3427 = vadd.f32 0.0, %v3426
      %v3428 = vpop.f32.mrb[0].mxu0
      %v3429 = vpop.f32.mrb[0].mxu0
      %v3430 = vadd.f32 0.0, %v3429
      %v3431 = vpop.f32.mrb[0].mxu0
      %3432 = vmatprep.mubr.bf16.mxu0 0
      %3433 = vmatmul.mubr.bf16.gmra.mrb[0].mxu0 %v3343
      %v3434 = vpop.f32.mrb[0].mxu0
      %v3435 = vadd.f32 0.0, %v3434
      %v3436 = vpop.f32.mrb[0].mxu0
      %v3437 = vpop.f32.mrb[0].mxu0
      %v3438 = vadd.f32 0.0, %v3437
      %v3439 = vpop.f32.mrb[0].mxu0
      %3440 = vmatprep.mubr.bf16.mxu0 0
      %3441 = vmatmul.mubr.bf16.gmra.mrb[0].mxu0 %v3346
      %v3442 = vpop.f32.mrb[0].mxu0
      %v3443 = vadd.f32 0.0, %v3442
      %v3444 = vpop.f32.mrb[0].mxu0
      %v3445 = vpop.f32.mrb[0].mxu0
      %v3446 = vadd.f32 0.0, %v3445
      %v3447 = vpop.f32.mrb[0].mxu0
      %3448 = vmatprep.mubr.bf16.mxu0 0
      %3449 = vmatmul.mubr.bf16.gmra.mrb[0].mxu0 %v3349
      %v3450 = vpop.f32.mrb[0].mxu0
      %v3451 = vadd.f32 0.0, %v3450
      %v3452 = vpop.f32.mrb[0].mxu0
      %v3453 = vpop.f32.mrb[0].mxu0
      %v3454 = vadd.f32 0.0, %v3453
      %v3455 = vpop.f32.mrb[0].mxu0
      %3456 = vmatprep.mubr.bf16.mxu0 0
      %3457 = vmatmul.mubr.bf16.gmra.mrb[0].mxu0 %v3352
      %v3458 = vpop.f32.mrb[0].mxu0
      %v3459 = vadd.f32 0.0, %v3458
      %v3460 = vpop.f32.mrb[0].mxu0
      %v3461 = vpop.f32.mrb[0].mxu0
      %v3462 = vadd.f32 0.0, %v3461
      %v3463 = vpop.f32.mrb[0].mxu0
      %3464 = vmatprep.mubr.bf16.mxu0 0
      %3465 = vmatmul.mubr.bf16.gmra.mrb[0].mxu0 %v3355
      %v3466 = vpop.f32.mrb[0].mxu0
      %v3467 = vadd.f32 0.0, %v3466
      %v3468 = vpop.f32.mrb[0].mxu0
      %v3469 = vpop.f32.mrb[0].mxu0
      %v3470 = vadd.f32 0.0, %v3469
      %v3471 = vpop.f32.mrb[0].mxu0
      %3472 = vmatprep.mubr.bf16.mxu0 0
      %3473 = vmatmul.mubr.bf16.gmra.mrb[0].mxu0 %v3358
      %v3474 = vpop.f32.mrb[0].mxu0
      %v3475 = vadd.f32 0.0, %v3474
      %v3476 = vpop.f32.mrb[0].mxu0
      %v3477 = vpop.f32.mrb[0].mxu0
      %v3478 = vadd.f32 0.0, %v3477
      %v3479 = vpop.f32.mrb[0].mxu0
      %3480 = vmatprep.mubr.bf16.mxu0 0
      %3481 = vmatmul.mubr.bf16.gmra.mrb[0].mxu0 %v3361
      %v3482 = vpop.f32.mrb[0].mxu0
      %v3483 = vadd.f32 0.0, %v3482
      %v3484 = vpop.f32.mrb[0].mxu0
      %v3485 = vpop.f32.mrb[0].mxu0
      %v3486 = vadd.f32 0.0, %v3485
      %v3487 = vpop.f32.mrb[0].mxu0
      %3488 = vmatprep.mubr.bf16.mxu0 0
      %3489 = vmatmul.mubr.bf16.gmra.mrb[0].mxu0 %v3364
      %v3490 = vpop.f32.mrb[0].mxu0
      %v3491 = vadd.f32 0.0, %v3490
      %v3492 = vpop.f32.mrb[0].mxu0
      %v3493 = vpop.f32.mrb[0].mxu0
      %v3494 = vadd.f32 0.0, %v3493
      %v3495 = vpop.f32.mrb[0].mxu0
      %3496 = vmatprep.mubr.bf16.mxu0 0
      %3497 = vmatmul.mubr.bf16.gmra.mrb[0].mxu0 %v3367
      %v3498 = vpop.f32.mrb[0].mxu0
      %v3499 = vadd.f32 0.0, %v3498
      %v3500 = vpop.f32.mrb[0].mxu0
      %v3501 = vpop.f32.mrb[0].mxu0
      %v3502 = vadd.f32 0.0, %v3501
      %v3503 = vpop.f32.mrb[0].mxu0
      %3504 = vmatprep.mubr.bf16.mxu0 0
      %3505 = vmatmul.mubr.bf16.gmra.mrb[0].mxu0 %v3370
      %v3506 = vpop.f32.mrb[0].mxu0
      %v3507 = vadd.f32 0.0, %v3506
      %v3508 = vpop.f32.mrb[0].mxu0
      %v3509 = vpop.f32.mrb[0].mxu0
      %v3510 = vadd.f32 0.0, %v3509
      %v3511 = vpop.f32.mrb[0].mxu0
      %3512 = vmatprep.mubr.bf16.mxu0 0
      %3513 = vmatmul.mubr.bf16.gmra.mrb[0].mxu0 %v3373
      %v3514 = vpop.f32.mrb[0].mxu0
      %v3515 = vadd.f32 0.0, %v3514
      %v3516 = vpop.f32.mrb[0].mxu0
      %v3517 = vpop.f32.mrb[0].mxu0
      %v3518 = vadd.f32 0.0, %v3517
      %v3519 = vpop.f32.mrb[0].mxu0
      %3520 = vmatprep.mubr.bf16.mxu0 0
      %3521 = vmatmul.mubr.bf16.gmra.mrb[0].mxu0 %v3376
      %v3522 = vpop.f32.mrb[0].mxu0
      %v3523 = vadd.f32 0.0, %v3522
      %v3524 = vpop.f32.mrb[0].mxu0
      %v3525 = vpop.f32.mrb[0].mxu0
      %v3526 = vadd.f32 0.0, %v3525
      %v3527 = vpop.f32.mrb[0].mxu0
      %3528 = vmatprep.mubr.bf16.mxu0 0
      %3529 = vmatmul.mubr.bf16.gmra.mrb[0].mxu0 %v3379
      %v3530 = vpop.f32.mrb[0].mxu0
      %v3531 = vadd.f32 0.0, %v3530
      %v3532 = vpop.f32.mrb[0].mxu0
      %v3533 = vpop.f32.mrb[0].mxu0
      %v3534 = vadd.f32 0.0, %v3533
      %v3535 = vpop.f32.mrb[0].mxu0
      %3536 = vmatprep.mubr.bf16.mxu0 0
      %3537 = vmatmul.mubr.bf16.gmra.mrb[0].mxu0 %v3382
      %v3538 = vpop.f32.mrb[0].mxu0
      %v3539 = vadd.f32 0.0, %v3538
      %v3540 = vpop.f32.mrb[0].mxu0
      %v3541 = vpop.f32.mrb[0].mxu0
      %v3542 = vadd.f32 0.0, %v3541
      %v3543 = vpop.f32.mrb[0].mxu0
      %3544 = vdwg.mxu0
      %v3553 = vunpack.c.l.b16 %v3247
      %v3554 = vunpack.c.l.b16 %v3248
      %v3555 = vunpack.c.l.b16 %v3249
      %v3556 = vunpack.c.l.b16 %v3250
      %v3557 = vunpack.c.l.b16 %v3251
      %v3558 = vunpack.c.l.b16 %v3252
      %v3559 = vunpack.c.l.b16 %v3253
      %v3560 = vunpack.c.l.b16 %v3254
      %v3561 = vpack.c.b16 %v3554, %v3553
      %v3562 = vpack.c.b16 %v3556, %v3555
      %v3563 = vpack.c.b16 %v3558, %v3557
      %v3564 = vpack.c.b16 %v3560, %v3559
      %v3570 = vsel %vm366, %v3231, 0
      %v3573 = vsel %vm366, %v3232, 0
      %v3576 = vsel %vm366, %v3233, 0
      %v3579 = vsel %vm366, %v3234, 0
      %v3582 = vsel %vm366, %v3235, 0
      %v3585 = vsel %vm366, %v3236, 0
      %v3588 = vsel %vm366, %v3237, 0
      %v3591 = vsel %vm366, %v3238, 0
      %v3594 = vsel %vm366, %v3239, 0
      %v3597 = vsel %vm366, %v3240, 0
      %v3600 = vsel %vm366, %v3241, 0
      %v3603 = vsel %vm366, %v3242, 0
      %v3606 = vsel %vm366, %v3243, 0
      %v3609 = vsel %vm366, %v3244, 0
      %v3612 = vsel %vm366, %v3245, 0
      %v3615 = vsel %vm366, %v3246, 0
      %3617 = vmatprep.subr.bf16.mxu0 0
      %3618 = vmatpush1.bf16.msra.mxu0 %v3561
      %3619 = vmatprep.subr.bf16.mxu0 0
      %3620 = vmatpush1.bf16.msra.mxu0 %v3562
      %3621 = vmatprep.subr.bf16.mxu0 0
      %3622 = vmatpush1.bf16.msra.mxu0 %v3563
      %3623 = vmatprep.subr.bf16.mxu0 0
      %3624 = vmatpush1.bf16.msra.mxu0 %v3564
      %3625 = vmatprep.subr.bf16.mxu0 0
      %3626 = vmatpush1.bf16.msra.mxu0 0
      %3627 = vmatprep.subr.bf16.mxu0 0
      %3628 = vmatpush1.bf16.msra.mxu0 0
      %3629 = vmatprep.subr.bf16.mxu0 0
      %3630 = vmatpush1.bf16.msra.mxu0 0
      %3631 = vmatprep.subr.bf16.mxu0 0
      %3632 = vmatpush1.bf16.msra.mxu0 0
      %3633 = vmatprep.subr.bf16.mxu0 0
      %3634 = vmatpush1.bf16.msra.mxu0 0
      %3635 = vmatprep.subr.bf16.mxu0 0
      %3636 = vmatpush1.bf16.msra.mxu0 0
      %3637 = vmatprep.subr.bf16.mxu0 0
      %3638 = vmatpush1.bf16.msra.mxu0 0
      %3639 = vmatprep.subr.bf16.mxu0 0
      %3640 = vmatpush1.bf16.msra.mxu0 0
      %3641 = vmatprep.subr.bf16.mxu0 0
      %3642 = vmatpush1.bf16.msra.mxu0 0
      %3643 = vmatprep.subr.bf16.mxu0 0
      %3644 = vmatpush1.bf16.msra.mxu0 0
      %3645 = vmatprep.subr.bf16.mxu0 0
      %3646 = vmatpush1.bf16.msra.mxu0 0
      %3647 = vmatprep.subr.bf16.mxu0 0
      %3648 = vmatpush1.bf16.msra.mxu0 0
      %3649 = vmatprep.mubr.bf16.mxu0 0
      %3650 = vmatmul.mubr.bf16.gmra.mrb[0].mxu0 %v3570
      %v3651 = vpop.f32.mrb[0].mxu0
      %v3652 = vadd.f32 %v3419, %v3651
      %v3653 = vpop.f32.mrb[0].mxu0
      %v3654 = vpop.f32.mrb[0].mxu0
      %v3655 = vadd.f32 %v3422, %v3654
      %v3656 = vpop.f32.mrb[0].mxu0
      %3657 = vmatprep.mubr.bf16.mxu0 0
      %3658 = vmatmul.mubr.bf16.gmra.mrb[0].mxu0 %v3573
      %v3659 = vpop.f32.mrb[0].mxu0
      %v3660 = vadd.f32 %v3427, %v3659
      %v3661 = vpop.f32.mrb[0].mxu0
      %v3662 = vpop.f32.mrb[0].mxu0
      %v3663 = vadd.f32 %v3430, %v3662
      %v3664 = vpop.f32.mrb[0].mxu0
      %3665 = vmatprep.mubr.bf16.mxu0 0
      %3666 = vmatmul.mubr.bf16.gmra.mrb[0].mxu0 %v3576
      %v3667 = vpop.f32.mrb[0].mxu0
      %v3668 = vadd.f32 %v3435, %v3667
      %v3669 = vpop.f32.mrb[0].mxu0
      %v3670 = vpop.f32.mrb[0].mxu0
      %v3671 = vadd.f32 %v3438, %v3670
      %v3672 = vpop.f32.mrb[0].mxu0
      %3673 = vmatprep.mubr.bf16.mxu0 0
      %3674 = vmatmul.mubr.bf16.gmra.mrb[0].mxu0 %v3579
      %v3675 = vpop.f32.mrb[0].mxu0
      %v3676 = vadd.f32 %v3443, %v3675
      %v3677 = vpop.f32.mrb[0].mxu0
      %v3678 = vpop.f32.mrb[0].mxu0
      %v3679 = vadd.f32 %v3446, %v3678
      %v3680 = vpop.f32.mrb[0].mxu0
      %3681 = vmatprep.mubr.bf16.mxu0 0
      %3682 = vmatmul.mubr.bf16.gmra.mrb[0].mxu0 %v3582
      %v3683 = vpop.f32.mrb[0].mxu0
      %v3684 = vadd.f32 %v3451, %v3683
      %v3685 = vpop.f32.mrb[0].mxu0
      %v3686 = vpop.f32.mrb[0].mxu0
      %v3687 = vadd.f32 %v3454, %v3686
      %v3688 = vpop.f32.mrb[0].mxu0
      %3689 = vmatprep.mubr.bf16.mxu0 0
      %3690 = vmatmul.mubr.bf16.gmra.mrb[0].mxu0 %v3585
      %v3691 = vpop.f32.mrb[0].mxu0
      %v3692 = vadd.f32 %v3459, %v3691
      %v3693 = vpop.f32.mrb[0].mxu0
      %v3694 = vpop.f32.mrb[0].mxu0
      %v3695 = vadd.f32 %v3462, %v3694
      %v3696 = vpop.f32.mrb[0].mxu0
      %3697 = vmatprep.mubr.bf16.mxu0 0
      %3698 = vmatmul.mubr.bf16.gmra.mrb[0].mxu0 %v3588
      %v3699 = vpop.f32.mrb[0].mxu0
      %v3700 = vadd.f32 %v3467, %v3699
      %v3701 = vpop.f32.mrb[0].mxu0
      %v3702 = vpop.f32.mrb[0].mxu0
      %v3703 = vadd.f32 %v3470, %v3702
      %v3704 = vpop.f32.mrb[0].mxu0
      %3705 = vmatprep.mubr.bf16.mxu0 0
      %3706 = vmatmul.mubr.bf16.gmra.mrb[0].mxu0 %v3591
      %v3707 = vpop.f32.mrb[0].mxu0
      %v3708 = vadd.f32 %v3475, %v3707
      %v3709 = vpop.f32.mrb[0].mxu0
      %v3710 = vpop.f32.mrb[0].mxu0
      %v3711 = vadd.f32 %v3478, %v3710
      %v3712 = vpop.f32.mrb[0].mxu0
      %3713 = vmatprep.mubr.bf16.mxu0 0
      %3714 = vmatmul.mubr.bf16.gmra.mrb[0].mxu0 %v3594
      %v3715 = vpop.f32.mrb[0].mxu0
      %v3716 = vadd.f32 %v3483, %v3715
      %v3717 = vpop.f32.mrb[0].mxu0
      %v3718 = vpop.f32.mrb[0].mxu0
      %v3719 = vadd.f32 %v3486, %v3718
      %v3720 = vpop.f32.mrb[0].mxu0
      %3721 = vmatprep.mubr.bf16.mxu0 0
      %3722 = vmatmul.mubr.bf16.gmra.mrb[0].mxu0 %v3597
      %v3723 = vpop.f32.mrb[0].mxu0
      %v3724 = vadd.f32 %v3491, %v3723
      %v3725 = vpop.f32.mrb[0].mxu0
      %v3726 = vpop.f32.mrb[0].mxu0
      %v3727 = vadd.f32 %v3494, %v3726
      %v3728 = vpop.f32.mrb[0].mxu0
      %3729 = vmatprep.mubr.bf16.mxu0 0
      %3730 = vmatmul.mubr.bf16.gmra.mrb[0].mxu0 %v3600
      %v3731 = vpop.f32.mrb[0].mxu0
      %v3732 = vadd.f32 %v3499, %v3731
      %v3733 = vpop.f32.mrb[0].mxu0
      %v3734 = vpop.f32.mrb[0].mxu0
      %v3735 = vadd.f32 %v3502, %v3734
      %v3736 = vpop.f32.mrb[0].mxu0
      %3737 = vmatprep.mubr.bf16.mxu0 0
      %3738 = vmatmul.mubr.bf16.gmra.mrb[0].mxu0 %v3603
      %v3739 = vpop.f32.mrb[0].mxu0
      %v3740 = vadd.f32 %v3507, %v3739
      %v3741 = vpop.f32.mrb[0].mxu0
      %v3742 = vpop.f32.mrb[0].mxu0
      %v3743 = vadd.f32 %v3510, %v3742
      %v3744 = vpop.f32.mrb[0].mxu0
      %3745 = vmatprep.mubr.bf16.mxu0 0
      %3746 = vmatmul.mubr.bf16.gmra.mrb[0].mxu0 %v3606
      %v3747 = vpop.f32.mrb[0].mxu0
      %v3748 = vadd.f32 %v3515, %v3747
      %v3749 = vpop.f32.mrb[0].mxu0
      %v3750 = vpop.f32.mrb[0].mxu0
      %v3751 = vadd.f32 %v3518, %v3750
      %v3752 = vpop.f32.mrb[0].mxu0
      %3753 = vmatprep.mubr.bf16.mxu0 0
      %3754 = vmatmul.mubr.bf16.gmra.mrb[0].mxu0 %v3609
      %v3755 = vpop.f32.mrb[0].mxu0
      %v3756 = vadd.f32 %v3523, %v3755
      %v3757 = vpop.f32.mrb[0].mxu0
      %v3758 = vpop.f32.mrb[0].mxu0
      %v3759 = vadd.f32 %v3526, %v3758
      %v3760 = vpop.f32.mrb[0].mxu0
      %3761 = vmatprep.mubr.bf16.mxu0 0
      %3762 = vmatmul.mubr.bf16.gmra.mrb[0].mxu0 %v3612
      %v3763 = vpop.f32.mrb[0].mxu0
      %v3764 = vadd.f32 %v3531, %v3763
      %v3765 = vpop.f32.mrb[0].mxu0
      %v3766 = vpop.f32.mrb[0].mxu0
      %v3767 = vadd.f32 %v3534, %v3766
      %v3768 = vpop.f32.mrb[0].mxu0
      %3769 = vmatprep.mubr.bf16.mxu0 0
      %3770 = vmatmul.mubr.bf16.gmra.mrb[0].mxu0 %v3615
      %v3771 = vpop.f32.mrb[0].mxu0
      %v3772 = vadd.f32 %v3539, %v3771
      %v3773 = vpop.f32.mrb[0].mxu0
      %v3774 = vpop.f32.mrb[0].mxu0
      %v3775 = vadd.f32 %v3542, %v3774
      %v3776 = vpop.f32.mrb[0].mxu0
      %3777 = vdwg.mxu0
      %v3778 = vld [vmem:[#allocation2 + $0x2] sm:$0xff]
      %v3779 = vld [vmem:[#allocation2 + $0xa] sm:$0xff]
      %v3780 = vld [vmem:[#allocation2 + $0x1a] sm:$0xff]
      %v3781 = vld [vmem:[#allocation2 + $0x22] sm:$0xff]
      %v3782 = vld [vmem:[#allocation2 + $0x32] sm:$0xff]
      %v3783 = vld [vmem:[#allocation2 + $0x3a] sm:$0xff]
      %v3784 = vld [vmem:[#allocation2 + $0x4a] sm:$0xff]
      %v3785 = vld [vmem:[#allocation2 + $0x52] sm:$0xff]
      %v3786 = vld [vmem:[#allocation2 + $0x62] sm:$0xff]
      %v3787 = vld [vmem:[#allocation2 + $0x6a] sm:$0xff]
      %v3788 = vld [vmem:[#allocation2 + $0x7a] sm:$0xff]
      %v3789 = vld [vmem:[#allocation2 + $0x82] sm:$0xff]
      %v3790 = vld [vmem:[#allocation2 + $0x92] sm:$0xff]
      %v3791 = vld [vmem:[#allocation2 + $0x9a] sm:$0xff]
      %v3792 = vld [vmem:[#allocation2 + $0xaa] sm:$0xff]
      %v3793 = vld [vmem:[#allocation2 + $0xb2] sm:$0xff]
      %v3794 = vld [vmem:[#allocation2 + $0xc2] sm:$0xff]
      %v3795 = vld [vmem:[#allocation2 + $0xca] sm:$0xff]
      %v3796 = vld [vmem:[#allocation2 + $0xda] sm:$0xff]
      %v3797 = vld [vmem:[#allocation2 + $0xe2] sm:$0xff]
      %v3798 = vld [vmem:[#allocation2 + $0xf2] sm:$0xff]
      %v3799 = vld [vmem:[#allocation2 + $0xfa] sm:$0xff]
      %v3800 = vld [vmem:[#allocation2 + $0x10a] sm:$0xff]
      %v3801 = vld [vmem:[#allocation2 + $0x112] sm:$0xff]
      %v3802 = vld [vmem:[#allocation2 + $0x122] sm:$0xff]
      %v3803 = vld [vmem:[#allocation2 + $0x12a] sm:$0xff]
      %v3804 = vld [vmem:[#allocation2 + $0x13a] sm:$0xff]
      %v3805 = vld [vmem:[#allocation2 + $0x142] sm:$0xff]
      %v3806 = vld [vmem:[#allocation2 + $0x152] sm:$0xff]
      %v3807 = vld [vmem:[#allocation2 + $0x15a] sm:$0xff]
      %v3808 = vld [vmem:[#allocation2 + $0x16a] sm:$0xff]
      %v3809 = vld [vmem:[#allocation2 + $0x172] sm:$0xff]
      %v3810 = vpack.c.bf16 %v3779, %v3778
      %v3811 = vpack.c.bf16 %v3781, %v3780
      %v3812 = vpack.c.bf16 %v3783, %v3782
      %v3813 = vpack.c.bf16 %v3785, %v3784
      %v3814 = vpack.c.bf16 %v3787, %v3786
      %v3815 = vpack.c.bf16 %v3789, %v3788
      %v3816 = vpack.c.bf16 %v3791, %v3790
      %v3817 = vpack.c.bf16 %v3793, %v3792
      %v3818 = vpack.c.bf16 %v3795, %v3794
      %v3819 = vpack.c.bf16 %v3797, %v3796
      %v3820 = vpack.c.bf16 %v3799, %v3798
      %v3821 = vpack.c.bf16 %v3801, %v3800
      %v3822 = vpack.c.bf16 %v3803, %v3802
      %v3823 = vpack.c.bf16 %v3805, %v3804
      %v3824 = vpack.c.bf16 %v3807, %v3806
      %v3825 = vpack.c.bf16 %v3809, %v3808
      %s3826 = scalar_lea.vmem %s3, 64
      %v3827 = vld [vmem:[%s3826] sm:$0xf]
      %v3828 = vld [vmem:[%s3826 + $0x4] sm:$0xf]
      %v3829 = vld [vmem:[%s3826 + $0x8] sm:$0xf]
      %v3830 = vld [vmem:[%s3826 + $0xc] sm:$0xf]
      %v3831 = vld [vmem:[%s3826 + $0x10] sm:$0xf]
      %v3832 = vld [vmem:[%s3826 + $0x14] sm:$0xf]
      %v3833 = vld [vmem:[%s3826 + $0x18] sm:$0xf]
      %v3834 = vld [vmem:[%s3826 + $0x1c] sm:$0xf]
      %v3843 = vunpack.c.l.b16 %v3827
      %v3844 = vunpack.c.l.b16 %v3828
      %v3845 = vunpack.c.l.b16 %v3829
      %v3846 = vunpack.c.l.b16 %v3830
      %v3847 = vunpack.c.l.b16 %v3831
      %v3848 = vunpack.c.l.b16 %v3832
      %v3849 = vunpack.c.l.b16 %v3833
      %v3850 = vunpack.c.l.b16 %v3834
      %v3851 = vpack.c.b16 %v3844, %v3843
      %v3852 = vpack.c.b16 %v3846, %v3845
      %v3853 = vpack.c.b16 %v3848, %v3847
      %v3854 = vpack.c.b16 %v3850, %v3849
      %v3860 = vsel %vm366, %v3810, 0
      %v3863 = vsel %vm366, %v3811, 0
      %v3866 = vsel %vm366, %v3812, 0
      %v3869 = vsel %vm366, %v3813, 0
      %v3872 = vsel %vm366, %v3814, 0
      %v3875 = vsel %vm366, %v3815, 0
      %v3878 = vsel %vm366, %v3816, 0
      %v3881 = vsel %vm366, %v3817, 0
      %v3884 = vsel %vm366, %v3818, 0
      %v3887 = vsel %vm366, %v3819, 0
      %v3890 = vsel %vm366, %v3820, 0
      %v3893 = vsel %vm366, %v3821, 0
      %v3896 = vsel %vm366, %v3822, 0
      %v3899 = vsel %vm366, %v3823, 0
      %v3902 = vsel %vm366, %v3824, 0
      %v3905 = vsel %vm366, %v3825, 0
      %3907 = vmatprep.subr.bf16.mxu0 0
      %3908 = vmatpush1.bf16.msra.mxu0 %v3851
      %3909 = vmatprep.subr.bf16.mxu0 0
      %3910 = vmatpush1.bf16.msra.mxu0 %v3852
      %3911 = vmatprep.subr.bf16.mxu0 0
      %3912 = vmatpush1.bf16.msra.mxu0 %v3853
      %3913 = vmatprep.subr.bf16.mxu0 0
      %3914 = vmatpush1.bf16.msra.mxu0 %v3854
      %3915 = vmatprep.subr.bf16.mxu0 0
      %3916 = vmatpush1.bf16.msra.mxu0 0
      %3917 = vmatprep.subr.bf16.mxu0 0
      %3918 = vmatpush1.bf16.msra.mxu0 0
      %3919 = vmatprep.subr.bf16.mxu0 0
      %3920 = vmatpush1.bf16.msra.mxu0 0
      %3921 = vmatprep.subr.bf16.mxu0 0
      %3922 = vmatpush1.bf16.msra.mxu0 0
      %3923 = vmatprep.subr.bf16.mxu0 0
      %3924 = vmatpush1.bf16.msra.mxu0 0
      %3925 = vmatprep.subr.bf16.mxu0 0
      %3926 = vmatpush1.bf16.msra.mxu0 0
      %3927 = vmatprep.subr.bf16.mxu0 0
      %3928 = vmatpush1.bf16.msra.mxu0 0
      %3929 = vmatprep.subr.bf16.mxu0 0
      %3930 = vmatpush1.bf16.msra.mxu0 0
      %3931 = vmatprep.subr.bf16.mxu0 0
      %3932 = vmatpush1.bf16.msra.mxu0 0
      %3933 = vmatprep.subr.bf16.mxu0 0
      %3934 = vmatpush1.bf16.msra.mxu0 0
      %3935 = vmatprep.subr.bf16.mxu0 0
      %3936 = vmatpush1.bf16.msra.mxu0 0
      %3937 = vmatprep.subr.bf16.mxu0 0
      %3938 = vmatpush1.bf16.msra.mxu0 0
      %3939 = vmatprep.mubr.bf16.mxu0 0
      %3940 = vmatmul.mubr.bf16.gmra.mrb[0].mxu0 %v3860
      %v3941 = vpop.f32.mrb[0].mxu0
      %v3942 = vadd.f32 0.0, %v3941
      %v3943 = vpop.f32.mrb[0].mxu0
      %v3944 = vpop.f32.mrb[0].mxu0
      %v3945 = vadd.f32 0.0, %v3944
      %v3946 = vpop.f32.mrb[0].mxu0
      %3947 = vmatprep.mubr.bf16.mxu0 0
      %3948 = vmatmul.mubr.bf16.gmra.mrb[0].mxu0 %v3863
      %v3949 = vpop.f32.mrb[0].mxu0
      %v3950 = vadd.f32 0.0, %v3949
      %v3951 = vpop.f32.mrb[0].mxu0
      %v3952 = vpop.f32.mrb[0].mxu0
      %v3953 = vadd.f32 0.0, %v3952
      %v3954 = vpop.f32.mrb[0].mxu0
      %3955 = vmatprep.mubr.bf16.mxu0 0
      %3956 = vmatmul.mubr.bf16.gmra.mrb[0].mxu0 %v3866
      %v3957 = vpop.f32.mrb[0].mxu0
      %v3958 = vadd.f32 0.0, %v3957
      %v3959 = vpop.f32.mrb[0].mxu0
      %v3960 = vpop.f32.mrb[0].mxu0
      %v3961 = vadd.f32 0.0, %v3960
      %v3962 = vpop.f32.mrb[0].mxu0
      %3963 = vmatprep.mubr.bf16.mxu0 0
      %3964 = vmatmul.mubr.bf16.gmra.mrb[0].mxu0 %v3869
      %v3965 = vpop.f32.mrb[0].mxu0
      %v3966 = vadd.f32 0.0, %v3965
      %v3967 = vpop.f32.mrb[0].mxu0
      %v3968 = vpop.f32.mrb[0].mxu0
      %v3969 = vadd.f32 0.0, %v3968
      %v3970 = vpop.f32.mrb[0].mxu0
      %3971 = vmatprep.mubr.bf16.mxu0 0
      %3972 = vmatmul.mubr.bf16.gmra.mrb[0].mxu0 %v3872
      %v3973 = vpop.f32.mrb[0].mxu0
      %v3974 = vadd.f32 0.0, %v3973
      %v3975 = vpop.f32.mrb[0].mxu0
      %v3976 = vpop.f32.mrb[0].mxu0
      %v3977 = vadd.f32 0.0, %v3976
      %v3978 = vpop.f32.mrb[0].mxu0
      %3979 = vmatprep.mubr.bf16.mxu0 0
      %3980 = vmatmul.mubr.bf16.gmra.mrb[0].mxu0 %v3875
      %v3981 = vpop.f32.mrb[0].mxu0
      %v3982 = vadd.f32 0.0, %v3981
      %v3983 = vpop.f32.mrb[0].mxu0
      %v3984 = vpop.f32.mrb[0].mxu0
      %v3985 = vadd.f32 0.0, %v3984
      %v3986 = vpop.f32.mrb[0].mxu0
      %3987 = vmatprep.mubr.bf16.mxu0 0
      %3988 = vmatmul.mubr.bf16.gmra.mrb[0].mxu0 %v3878
      %v3989 = vpop.f32.mrb[0].mxu0
      %v3990 = vadd.f32 0.0, %v3989
      %v3991 = vpop.f32.mrb[0].mxu0
      %v3992 = vpop.f32.mrb[0].mxu0
      %v3993 = vadd.f32 0.0, %v3992
      %v3994 = vpop.f32.mrb[0].mxu0
      %3995 = vmatprep.mubr.bf16.mxu0 0
      %3996 = vmatmul.mubr.bf16.gmra.mrb[0].mxu0 %v3881
      %v3997 = vpop.f32.mrb[0].mxu0
      %v3998 = vadd.f32 0.0, %v3997
      %v3999 = vpop.f32.mrb[0].mxu0
      %v4000 = vpop.f32.mrb[0].mxu0
      %v4001 = vadd.f32 0.0, %v4000
      %v4002 = vpop.f32.mrb[0].mxu0
      %4003 = vmatprep.mubr.bf16.mxu0 0
      %4004 = vmatmul.mubr.bf16.gmra.mrb[0].mxu0 %v3884
      %v4005 = vpop.f32.mrb[0].mxu0
      %v4006 = vadd.f32 0.0, %v4005
      %v4007 = vpop.f32.mrb[0].mxu0
      %v4008 = vpop.f32.mrb[0].mxu0
      %v4009 = vadd.f32 0.0, %v4008
      %v4010 = vpop.f32.mrb[0].mxu0
      %4011 = vmatprep.mubr.bf16.mxu0 0
      %4012 = vmatmul.mubr.bf16.gmra.mrb[0].mxu0 %v3887
      %v4013 = vpop.f32.mrb[0].mxu0
      %v4014 = vadd.f32 0.0, %v4013
      %v4015 = vpop.f32.mrb[0].mxu0
      %v4016 = vpop.f32.mrb[0].mxu0
      %v4017 = vadd.f32 0.0, %v4016
      %v4018 = vpop.f32.mrb[0].mxu0
      %4019 = vmatprep.mubr.bf16.mxu0 0
      %4020 = vmatmul.mubr.bf16.gmra.mrb[0].mxu0 %v3890
      %v4021 = vpop.f32.mrb[0].mxu0
      %v4022 = vadd.f32 0.0, %v4021
      %v4023 = vpop.f32.mrb[0].mxu0
      %v4024 = vpop.f32.mrb[0].mxu0
      %v4025 = vadd.f32 0.0, %v4024
      %v4026 = vpop.f32.mrb[0].mxu0
      %4027 = vmatprep.mubr.bf16.mxu0 0
      %4028 = vmatmul.mubr.bf16.gmra.mrb[0].mxu0 %v3893
      %v4029 = vpop.f32.mrb[0].mxu0
      %v4030 = vadd.f32 0.0, %v4029
      %v4031 = vpop.f32.mrb[0].mxu0
      %v4032 = vpop.f32.mrb[0].mxu0
      %v4033 = vadd.f32 0.0, %v4032
      %v4034 = vpop.f32.mrb[0].mxu0
      %4035 = vmatprep.mubr.bf16.mxu0 0
      %4036 = vmatmul.mubr.bf16.gmra.mrb[0].mxu0 %v3896
      %v4037 = vpop.f32.mrb[0].mxu0
      %v4038 = vadd.f32 0.0, %v4037
      %v4039 = vpop.f32.mrb[0].mxu0
      %v4040 = vpop.f32.mrb[0].mxu0
      %v4041 = vadd.f32 0.0, %v4040
      %v4042 = vpop.f32.mrb[0].mxu0
      %4043 = vmatprep.mubr.bf16.mxu0 0
      %4044 = vmatmul.mubr.bf16.gmra.mrb[0].mxu0 %v3899
      %v4045 = vpop.f32.mrb[0].mxu0
      %v4046 = vadd.f32 0.0, %v4045
      %v4047 = vpop.f32.mrb[0].mxu0
      %v4048 = vpop.f32.mrb[0].mxu0
      %v4049 = vadd.f32 0.0, %v4048
      %v4050 = vpop.f32.mrb[0].mxu0
      %4051 = vmatprep.mubr.bf16.mxu0 0
      %4052 = vmatmul.mubr.bf16.gmra.mrb[0].mxu0 %v3902
      %v4053 = vpop.f32.mrb[0].mxu0
      %v4054 = vadd.f32 0.0, %v4053
      %v4055 = vpop.f32.mrb[0].mxu0
      %v4056 = vpop.f32.mrb[0].mxu0
      %v4057 = vadd.f32 0.0, %v4056
      %v4058 = vpop.f32.mrb[0].mxu0
      %4059 = vmatprep.mubr.bf16.mxu0 0
      %4060 = vmatmul.mubr.bf16.gmra.mrb[0].mxu0 %v3905
      %v4061 = vpop.f32.mrb[0].mxu0
      %v4062 = vadd.f32 0.0, %v4061
      %v4063 = vpop.f32.mrb[0].mxu0
      %v4064 = vpop.f32.mrb[0].mxu0
      %v4065 = vadd.f32 0.0, %v4064
      %v4066 = vpop.f32.mrb[0].mxu0
      %4067 = vdwg.mxu0
      %v4068 = vadd.f32 %v3652, %v3942
      %v4069 = vadd.f32 %v3655, %v3945
      %v4070 = vadd.f32 %v3660, %v3950
      %v4071 = vadd.f32 %v3663, %v3953
      %v4072 = vadd.f32 %v3668, %v3958
      %v4073 = vadd.f32 %v3671, %v3961
      %v4074 = vadd.f32 %v3676, %v3966
      %v4075 = vadd.f32 %v3679, %v3969
      %v4076 = vadd.f32 %v3684, %v3974
      %v4077 = vadd.f32 %v3687, %v3977
      %v4078 = vadd.f32 %v3692, %v3982
      %v4079 = vadd.f32 %v3695, %v3985
      %v4080 = vadd.f32 %v3700, %v3990
      %v4081 = vadd.f32 %v3703, %v3993
      %v4082 = vadd.f32 %v3708, %v3998
      %v4083 = vadd.f32 %v3711, %v4001
      %v4084 = vadd.f32 %v3716, %v4006
      %v4085 = vadd.f32 %v3719, %v4009
      %v4086 = vadd.f32 %v3724, %v4014
      %v4087 = vadd.f32 %v3727, %v4017
      %v4088 = vadd.f32 %v3732, %v4022
      %v4089 = vadd.f32 %v3735, %v4025
      %v4090 = vadd.f32 %v3740, %v4030
      %v4091 = vadd.f32 %v3743, %v4033
      %v4092 = vadd.f32 %v3748, %v4038
      %v4093 = vadd.f32 %v3751, %v4041
      %v4094 = vadd.f32 %v3756, %v4046
      %v4095 = vadd.f32 %v3759, %v4049
      %v4096 = vadd.f32 %v3764, %v4054
      %v4097 = vadd.f32 %v3767, %v4057
      %v4098 = vadd.f32 %v3772, %v4062
      %v4099 = vadd.f32 %v3775, %v4065
      %v4100 = vld [vmem:[%s422] sm:$0xff]
      %v4101 = vld [vmem:[%s422 + $0x8] sm:$0xff]
      %v4102 = vld [vmem:[%s422 + $0x18] sm:$0xff]
      %v4103 = vld [vmem:[%s422 + $0x20] sm:$0xff]
      %v4104 = vld [vmem:[%s422 + $0x30] sm:$0xff]
      %v4105 = vld [vmem:[%s422 + $0x38] sm:$0xff]
      %v4106 = vld [vmem:[%s422 + $0x48] sm:$0xff]
      %v4107 = vld [vmem:[%s422 + $0x50] sm:$0xff]
      %v4108 = vld [vmem:[%s422 + $0x60] sm:$0xff]
      %v4109 = vld [vmem:[%s422 + $0x68] sm:$0xff]
      %v4110 = vld [vmem:[%s422 + $0x78] sm:$0xff]
      %v4111 = vld [vmem:[%s422 + $0x80] sm:$0xff]
      %v4112 = vld [vmem:[%s422 + $0x90] sm:$0xff]
      %v4113 = vld [vmem:[%s422 + $0x98] sm:$0xff]
      %v4114 = vld [vmem:[%s422 + $0xa8] sm:$0xff]
      %v4115 = vld [vmem:[%s422 + $0xb0] sm:$0xff]
      %v4116 = vld [vmem:[%s422 + $0xc0] sm:$0xff]
      %v4117 = vld [vmem:[%s422 + $0xc8] sm:$0xff]
      %v4118 = vld [vmem:[%s422 + $0xd8] sm:$0xff]
      %v4119 = vld [vmem:[%s422 + $0xe0] sm:$0xff]
      %v4120 = vld [vmem:[%s422 + $0xf0] sm:$0xff]
      %v4121 = vld [vmem:[%s422 + $0xf8] sm:$0xff]
      %v4122 = vld [vmem:[%s422 + $0x108] sm:$0xff]
      %v4123 = vld [vmem:[%s422 + $0x110] sm:$0xff]
      %v4124 = vld [vmem:[%s422 + $0x120] sm:$0xff]
      %v4125 = vld [vmem:[%s422 + $0x128] sm:$0xff]
      %v4126 = vld [vmem:[%s422 + $0x138] sm:$0xff]
      %v4127 = vld [vmem:[%s422 + $0x140] sm:$0xff]
      %v4128 = vld [vmem:[%s422 + $0x150] sm:$0xff]
      %v4129 = vld [vmem:[%s422 + $0x158] sm:$0xff]
      %v4130 = vld [vmem:[%s422 + $0x168] sm:$0xff]
      %v4131 = vld [vmem:[%s422 + $0x170] sm:$0xff]
      %v4132 = vpack.c.bf16 %v4101, %v4100
      %v4133 = vpack.c.bf16 %v4103, %v4102
      %v4134 = vpack.c.bf16 %v4105, %v4104
      %v4135 = vpack.c.bf16 %v4107, %v4106
      %v4136 = vpack.c.bf16 %v4109, %v4108
      %v4137 = vpack.c.bf16 %v4111, %v4110
      %v4138 = vpack.c.bf16 %v4113, %v4112
      %v4139 = vpack.c.bf16 %v4115, %v4114
      %v4140 = vpack.c.bf16 %v4117, %v4116
      %v4141 = vpack.c.bf16 %v4119, %v4118
      %v4142 = vpack.c.bf16 %v4121, %v4120
      %v4143 = vpack.c.bf16 %v4123, %v4122
      %v4144 = vpack.c.bf16 %v4125, %v4124
      %v4145 = vpack.c.bf16 %v4127, %v4126
      %v4146 = vpack.c.bf16 %v4129, %v4128
      %v4147 = vpack.c.bf16 %v4131, %v4130
      %s4148 = scalar_lea.vmem %s3, 96
      %v4149 = vld [vmem:[%s4148] sm:$0xf]
      %v4150 = vld [vmem:[%s4148 + $0x4] sm:$0xf]
      %v4151 = vld [vmem:[%s4148 + $0x8] sm:$0xf]
      %v4152 = vld [vmem:[%s4148 + $0xc] sm:$0xf]
      %v4153 = vld [vmem:[%s4148 + $0x10] sm:$0xf]
      %v4154 = vld [vmem:[%s4148 + $0x14] sm:$0xf]
      %v4155 = vld [vmem:[%s4148 + $0x18] sm:$0xf]
      %v4156 = vld [vmem:[%s4148 + $0x1c] sm:$0xf]
      %v4165 = vunpack.c.l.b16 %v4149
      %v4166 = vunpack.c.l.b16 %v4150
      %v4167 = vunpack.c.l.b16 %v4151
      %v4168 = vunpack.c.l.b16 %v4152
      %v4169 = vunpack.c.l.b16 %v4153
      %v4170 = vunpack.c.l.b16 %v4154
      %v4171 = vunpack.c.l.b16 %v4155
      %v4172 = vunpack.c.l.b16 %v4156
      %v4173 = vpack.c.b16 %v4166, %v4165
      %v4174 = vpack.c.b16 %v4168, %v4167
      %v4175 = vpack.c.b16 %v4170, %v4169
      %v4176 = vpack.c.b16 %v4172, %v4171
      %v4182 = vsel %vm366, %v4132, 0
      %v4185 = vsel %vm366, %v4133, 0
      %v4188 = vsel %vm366, %v4134, 0
      %v4191 = vsel %vm366, %v4135, 0
      %v4194 = vsel %vm366, %v4136, 0
      %v4197 = vsel %vm366, %v4137, 0
      %v4200 = vsel %vm366, %v4138, 0
      %v4203 = vsel %vm366, %v4139, 0
      %v4206 = vsel %vm366, %v4140, 0
      %v4209 = vsel %vm366, %v4141, 0
      %v4212 = vsel %vm366, %v4142, 0
      %v4215 = vsel %vm366, %v4143, 0
      %v4218 = vsel %vm366, %v4144, 0
      %v4221 = vsel %vm366, %v4145, 0
      %v4224 = vsel %vm366, %v4146, 0
      %v4227 = vsel %vm366, %v4147, 0
      %4229 = vmatprep.subr.bf16.mxu0 0
      %4230 = vmatpush1.bf16.msra.mxu0 %v4173
      %4231 = vmatprep.subr.bf16.mxu0 0
      %4232 = vmatpush1.bf16.msra.mxu0 %v4174
      %4233 = vmatprep.subr.bf16.mxu0 0
      %4234 = vmatpush1.bf16.msra.mxu0 %v4175
      %4235 = vmatprep.subr.bf16.mxu0 0
      %4236 = vmatpush1.bf16.msra.mxu0 %v4176
      %4237 = vmatprep.subr.bf16.mxu0 0
      %4238 = vmatpush1.bf16.msra.mxu0 0
      %4239 = vmatprep.subr.bf16.mxu0 0
      %4240 = vmatpush1.bf16.msra.mxu0 0
      %4241 = vmatprep.subr.bf16.mxu0 0
      %4242 = vmatpush1.bf16.msra.mxu0 0
      %4243 = vmatprep.subr.bf16.mxu0 0
      %4244 = vmatpush1.bf16.msra.mxu0 0
      %4245 = vmatprep.subr.bf16.mxu0 0
      %4246 = vmatpush1.bf16.msra.mxu0 0
      %4247 = vmatprep.subr.bf16.mxu0 0
      %4248 = vmatpush1.bf16.msra.mxu0 0
      %4249 = vmatprep.subr.bf16.mxu0 0
      %4250 = vmatpush1.bf16.msra.mxu0 0
      %4251 = vmatprep.subr.bf16.mxu0 0
      %4252 = vmatpush1.bf16.msra.mxu0 0
      %4253 = vmatprep.subr.bf16.mxu0 0
      %4254 = vmatpush1.bf16.msra.mxu0 0
      %4255 = vmatprep.subr.bf16.mxu0 0
      %4256 = vmatpush1.bf16.msra.mxu0 0
      %4257 = vmatprep.subr.bf16.mxu0 0
      %4258 = vmatpush1.bf16.msra.mxu0 0
      %4259 = vmatprep.subr.bf16.mxu0 0
      %4260 = vmatpush1.bf16.msra.mxu0 0
      %4261 = vmatprep.mubr.bf16.mxu0 0
      %4262 = vmatmul.mubr.bf16.gmra.mrb[0].mxu0 %v4182
      %v4263 = vpop.f32.mrb[0].mxu0
      %v4264 = vadd.f32 0.0, %v4263
      %v4265 = vpop.f32.mrb[0].mxu0
      %v4266 = vpop.f32.mrb[0].mxu0
      %v4267 = vadd.f32 0.0, %v4266
      %v4268 = vpop.f32.mrb[0].mxu0
      %4269 = vmatprep.mubr.bf16.mxu0 0
      %4270 = vmatmul.mubr.bf16.gmra.mrb[0].mxu0 %v4185
      %v4271 = vpop.f32.mrb[0].mxu0
      %v4272 = vadd.f32 0.0, %v4271
      %v4273 = vpop.f32.mrb[0].mxu0
      %v4274 = vpop.f32.mrb[0].mxu0
      %v4275 = vadd.f32 0.0, %v4274
      %v4276 = vpop.f32.mrb[0].mxu0
      %4277 = vmatprep.mubr.bf16.mxu0 0
      %4278 = vmatmul.mubr.bf16.gmra.mrb[0].mxu0 %v4188
      %v4279 = vpop.f32.mrb[0].mxu0
      %v4280 = vadd.f32 0.0, %v4279
      %v4281 = vpop.f32.mrb[0].mxu0
      %v4282 = vpop.f32.mrb[0].mxu0
      %v4283 = vadd.f32 0.0, %v4282
      %v4284 = vpop.f32.mrb[0].mxu0
      %4285 = vmatprep.mubr.bf16.mxu0 0
      %4286 = vmatmul.mubr.bf16.gmra.mrb[0].mxu0 %v4191
      %v4287 = vpop.f32.mrb[0].mxu0
      %v4288 = vadd.f32 0.0, %v4287
      %v4289 = vpop.f32.mrb[0].mxu0
      %v4290 = vpop.f32.mrb[0].mxu0
      %v4291 = vadd.f32 0.0, %v4290
      %v4292 = vpop.f32.mrb[0].mxu0
      %4293 = vmatprep.mubr.bf16.mxu0 0
      %4294 = vmatmul.mubr.bf16.gmra.mrb[0].mxu0 %v4194
      %v4295 = vpop.f32.mrb[0].mxu0
      %v4296 = vadd.f32 0.0, %v4295
      %v4297 = vpop.f32.mrb[0].mxu0
      %v4298 = vpop.f32.mrb[0].mxu0
      %v4299 = vadd.f32 0.0, %v4298
      %v4300 = vpop.f32.mrb[0].mxu0
      %4301 = vmatprep.mubr.bf16.mxu0 0
      %4302 = vmatmul.mubr.bf16.gmra.mrb[0].mxu0 %v4197
      %v4303 = vpop.f32.mrb[0].mxu0
      %v4304 = vadd.f32 0.0, %v4303
      %v4305 = vpop.f32.mrb[0].mxu0
      %v4306 = vpop.f32.mrb[0].mxu0
      %v4307 = vadd.f32 0.0, %v4306
      %v4308 = vpop.f32.mrb[0].mxu0
      %4309 = vmatprep.mubr.bf16.mxu0 0
      %4310 = vmatmul.mubr.bf16.gmra.mrb[0].mxu0 %v4200
      %v4311 = vpop.f32.mrb[0].mxu0
      %v4312 = vadd.f32 0.0, %v4311
      %v4313 = vpop.f32.mrb[0].mxu0
      %v4314 = vpop.f32.mrb[0].mxu0
      %v4315 = vadd.f32 0.0, %v4314
      %v4316 = vpop.f32.mrb[0].mxu0
      %4317 = vmatprep.mubr.bf16.mxu0 0
      %4318 = vmatmul.mubr.bf16.gmra.mrb[0].mxu0 %v4203
      %v4319 = vpop.f32.mrb[0].mxu0
      %v4320 = vadd.f32 0.0, %v4319
      %v4321 = vpop.f32.mrb[0].mxu0
      %v4322 = vpop.f32.mrb[0].mxu0
      %v4323 = vadd.f32 0.0, %v4322
      %v4324 = vpop.f32.mrb[0].mxu0
      %4325 = vmatprep.mubr.bf16.mxu0 0
      %4326 = vmatmul.mubr.bf16.gmra.mrb[0].mxu0 %v4206
      %v4327 = vpop.f32.mrb[0].mxu0
      %v4328 = vadd.f32 0.0, %v4327
      %v4329 = vpop.f32.mrb[0].mxu0
      %v4330 = vpop.f32.mrb[0].mxu0
      %v4331 = vadd.f32 0.0, %v4330
      %v4332 = vpop.f32.mrb[0].mxu0
      %4333 = vmatprep.mubr.bf16.mxu0 0
      %4334 = vmatmul.mubr.bf16.gmra.mrb[0].mxu0 %v4209
      %v4335 = vpop.f32.mrb[0].mxu0
      %v4336 = vadd.f32 0.0, %v4335
      %v4337 = vpop.f32.mrb[0].mxu0
      %v4338 = vpop.f32.mrb[0].mxu0
      %v4339 = vadd.f32 0.0, %v4338
      %v4340 = vpop.f32.mrb[0].mxu0
      %4341 = vmatprep.mubr.bf16.mxu0 0
      %4342 = vmatmul.mubr.bf16.gmra.mrb[0].mxu0 %v4212
      %v4343 = vpop.f32.mrb[0].mxu0
      %v4344 = vadd.f32 0.0, %v4343
      %v4345 = vpop.f32.mrb[0].mxu0
      %v4346 = vpop.f32.mrb[0].mxu0
      %v4347 = vadd.f32 0.0, %v4346
      %v4348 = vpop.f32.mrb[0].mxu0
      %4349 = vmatprep.mubr.bf16.mxu0 0
      %4350 = vmatmul.mubr.bf16.gmra.mrb[0].mxu0 %v4215
      %v4351 = vpop.f32.mrb[0].mxu0
      %v4352 = vadd.f32 0.0, %v4351
      %v4353 = vpop.f32.mrb[0].mxu0
      %v4354 = vpop.f32.mrb[0].mxu0
      %v4355 = vadd.f32 0.0, %v4354
      %v4356 = vpop.f32.mrb[0].mxu0
      %4357 = vmatprep.mubr.bf16.mxu0 0
      %4358 = vmatmul.mubr.bf16.gmra.mrb[0].mxu0 %v4218
      %v4359 = vpop.f32.mrb[0].mxu0
      %v4360 = vadd.f32 0.0, %v4359
      %v4361 = vpop.f32.mrb[0].mxu0
      %v4362 = vpop.f32.mrb[0].mxu0
      %v4363 = vadd.f32 0.0, %v4362
      %v4364 = vpop.f32.mrb[0].mxu0
      %4365 = vmatprep.mubr.bf16.mxu0 0
      %4366 = vmatmul.mubr.bf16.gmra.mrb[0].mxu0 %v4221
      %v4367 = vpop.f32.mrb[0].mxu0
      %v4368 = vadd.f32 0.0, %v4367
      %v4369 = vpop.f32.mrb[0].mxu0
      %v4370 = vpop.f32.mrb[0].mxu0
      %v4371 = vadd.f32 0.0, %v4370
      %v4372 = vpop.f32.mrb[0].mxu0
      %4373 = vmatprep.mubr.bf16.mxu0 0
      %4374 = vmatmul.mubr.bf16.gmra.mrb[0].mxu0 %v4224
      %v4375 = vpop.f32.mrb[0].mxu0
      %v4376 = vadd.f32 0.0, %v4375
      %v4377 = vpop.f32.mrb[0].mxu0
      %v4378 = vpop.f32.mrb[0].mxu0
      %v4379 = vadd.f32 0.0, %v4378
      %v4380 = vpop.f32.mrb[0].mxu0
      %4381 = vmatprep.mubr.bf16.mxu0 0
      %4382 = vmatmul.mubr.bf16.gmra.mrb[0].mxu0 %v4227
      %v4383 = vpop.f32.mrb[0].mxu0
      %v4384 = vadd.f32 0.0, %v4383
      %v4385 = vpop.f32.mrb[0].mxu0
      %v4386 = vpop.f32.mrb[0].mxu0
      %v4387 = vadd.f32 0.0, %v4386
      %v4388 = vpop.f32.mrb[0].mxu0
      %4389 = vdwg.mxu0
      %v4390 = vadd.f32 %v4068, %v4264
      %v4391 = vadd.f32 %v4069, %v4267
      %v4392 = vadd.f32 %v4070, %v4272
      %v4393 = vadd.f32 %v4071, %v4275
      %v4394 = vadd.f32 %v4072, %v4280
      %v4395 = vadd.f32 %v4073, %v4283
      %v4396 = vadd.f32 %v4074, %v4288
      %v4397 = vadd.f32 %v4075, %v4291
      %v4398 = vadd.f32 %v4076, %v4296
      %v4399 = vadd.f32 %v4077, %v4299
      %v4400 = vadd.f32 %v4078, %v4304
      %v4401 = vadd.f32 %v4079, %v4307
      %v4402 = vadd.f32 %v4080, %v4312
      %v4403 = vadd.f32 %v4081, %v4315
      %v4404 = vadd.f32 %v4082, %v4320
      %v4405 = vadd.f32 %v4083, %v4323
      %v4406 = vadd.f32 %v4084, %v4328
      %v4407 = vadd.f32 %v4085, %v4331
      %v4408 = vadd.f32 %v4086, %v4336
      %v4409 = vadd.f32 %v4087, %v4339
      %v4410 = vadd.f32 %v4088, %v4344
      %v4411 = vadd.f32 %v4089, %v4347
      %v4412 = vadd.f32 %v4090, %v4352
      %v4413 = vadd.f32 %v4091, %v4355
      %v4414 = vadd.f32 %v4092, %v4360
      %v4415 = vadd.f32 %v4093, %v4363
      %v4416 = vadd.f32 %v4094, %v4368
      %v4417 = vadd.f32 %v4095, %v4371
      %v4418 = vadd.f32 %v4096, %v4376
      %v4419 = vadd.f32 %v4097, %v4379
      %v4420 = vadd.f32 %v4098, %v4384
      %v4421 = vadd.f32 %v4099, %v4387
      %v4422 = vld [vmem:[%s422 + $0x1] sm:$0xff]
      %v4423 = vld [vmem:[%s422 + $0x9] sm:$0xff]
      %v4424 = vld [vmem:[%s422 + $0x19] sm:$0xff]
      %v4425 = vld [vmem:[%s422 + $0x21] sm:$0xff]
      %v4426 = vld [vmem:[%s422 + $0x31] sm:$0xff]
      %v4427 = vld [vmem:[%s422 + $0x39] sm:$0xff]
      %v4428 = vld [vmem:[%s422 + $0x49] sm:$0xff]
      %v4429 = vld [vmem:[%s422 + $0x51] sm:$0xff]
      %v4430 = vld [vmem:[%s422 + $0x61] sm:$0xff]
      %v4431 = vld [vmem:[%s422 + $0x69] sm:$0xff]
      %v4432 = vld [vmem:[%s422 + $0x79] sm:$0xff]
      %v4433 = vld [vmem:[%s422 + $0x81] sm:$0xff]
      %v4434 = vld [vmem:[%s422 + $0x91] sm:$0xff]
      %v4435 = vld [vmem:[%s422 + $0x99] sm:$0xff]
      %v4436 = vld [vmem:[%s422 + $0xa9] sm:$0xff]
      %v4437 = vld [vmem:[%s422 + $0xb1] sm:$0xff]
      %v4438 = vld [vmem:[%s422 + $0xc1] sm:$0xff]
      %v4439 = vld [vmem:[%s422 + $0xc9] sm:$0xff]
      %v4440 = vld [vmem:[%s422 + $0xd9] sm:$0xff]
      %v4441 = vld [vmem:[%s422 + $0xe1] sm:$0xff]
      %v4442 = vld [vmem:[%s422 + $0xf1] sm:$0xff]
      %v4443 = vld [vmem:[%s422 + $0xf9] sm:$0xff]
      %v4444 = vld [vmem:[%s422 + $0x109] sm:$0xff]
      %v4445 = vld [vmem:[%s422 + $0x111] sm:$0xff]
      %v4446 = vld [vmem:[%s422 + $0x121] sm:$0xff]
      %v4447 = vld [vmem:[%s422 + $0x129] sm:$0xff]
      %v4448 = vld [vmem:[%s422 + $0x139] sm:$0xff]
      %v4449 = vld [vmem:[%s422 + $0x141] sm:$0xff]
      %v4450 = vld [vmem:[%s422 + $0x151] sm:$0xff]
      %v4451 = vld [vmem:[%s422 + $0x159] sm:$0xff]
      %v4452 = vld [vmem:[%s422 + $0x169] sm:$0xff]
      %v4453 = vld [vmem:[%s422 + $0x171] sm:$0xff]
      %v4454 = vpack.c.bf16 %v4423, %v4422
      %v4455 = vpack.c.bf16 %v4425, %v4424
      %v4456 = vpack.c.bf16 %v4427, %v4426
      %v4457 = vpack.c.bf16 %v4429, %v4428
      %v4458 = vpack.c.bf16 %v4431, %v4430
      %v4459 = vpack.c.bf16 %v4433, %v4432
      %v4460 = vpack.c.bf16 %v4435, %v4434
      %v4461 = vpack.c.bf16 %v4437, %v4436
      %v4462 = vpack.c.bf16 %v4439, %v4438
      %v4463 = vpack.c.bf16 %v4441, %v4440
      %v4464 = vpack.c.bf16 %v4443, %v4442
      %v4465 = vpack.c.bf16 %v4445, %v4444
      %v4466 = vpack.c.bf16 %v4447, %v4446
      %v4467 = vpack.c.bf16 %v4449, %v4448
      %v4468 = vpack.c.bf16 %v4451, %v4450
      %v4469 = vpack.c.bf16 %v4453, %v4452
      %s4470 = scalar_lea.vmem %s3, 128
      %v4471 = vld [vmem:[%s4470] sm:$0xf]
      %v4472 = vld [vmem:[%s4470 + $0x4] sm:$0xf]
      %v4473 = vld [vmem:[%s4470 + $0x8] sm:$0xf]
      %v4474 = vld [vmem:[%s4470 + $0xc] sm:$0xf]
      %v4475 = vld [vmem:[%s4470 + $0x10] sm:$0xf]
      %v4476 = vld [vmem:[%s4470 + $0x14] sm:$0xf]
      %v4477 = vld [vmem:[%s4470 + $0x18] sm:$0xf]
      %v4478 = vld [vmem:[%s4470 + $0x1c] sm:$0xf]
      %v4487 = vunpack.c.l.b16 %v4471
      %v4488 = vunpack.c.l.b16 %v4472
      %v4489 = vunpack.c.l.b16 %v4473
      %v4490 = vunpack.c.l.b16 %v4474
      %v4491 = vunpack.c.l.b16 %v4475
      %v4492 = vunpack.c.l.b16 %v4476
      %v4493 = vunpack.c.l.b16 %v4477
      %v4494 = vunpack.c.l.b16 %v4478
      %v4495 = vpack.c.b16 %v4488, %v4487
      %v4496 = vpack.c.b16 %v4490, %v4489
      %v4497 = vpack.c.b16 %v4492, %v4491
      %v4498 = vpack.c.b16 %v4494, %v4493
      %v4504 = vsel %vm366, %v4454, 0
      %v4507 = vsel %vm366, %v4455, 0
      %v4510 = vsel %vm366, %v4456, 0
      %v4513 = vsel %vm366, %v4457, 0
      %v4516 = vsel %vm366, %v4458, 0
      %v4519 = vsel %vm366, %v4459, 0
      %v4522 = vsel %vm366, %v4460, 0
      %v4525 = vsel %vm366, %v4461, 0
      %v4528 = vsel %vm366, %v4462, 0
      %v4531 = vsel %vm366, %v4463, 0
      %v4534 = vsel %vm366, %v4464, 0
      %v4537 = vsel %vm366, %v4465, 0
      %v4540 = vsel %vm366, %v4466, 0
      %v4543 = vsel %vm366, %v4467, 0
      %v4546 = vsel %vm366, %v4468, 0
      %v4549 = vsel %vm366, %v4469, 0
      %4551 = vmatprep.subr.bf16.mxu0 0
      %4552 = vmatpush1.bf16.msra.mxu0 %v4495
      %4553 = vmatprep.subr.bf16.mxu0 0
      %4554 = vmatpush1.bf16.msra.mxu0 %v4496
      %4555 = vmatprep.subr.bf16.mxu0 0
      %4556 = vmatpush1.bf16.msra.mxu0 %v4497
      %4557 = vmatprep.subr.bf16.mxu0 0
      %4558 = vmatpush1.bf16.msra.mxu0 %v4498
      %4559 = vmatprep.subr.bf16.mxu0 0
      %4560 = vmatpush1.bf16.msra.mxu0 0
      %4561 = vmatprep.subr.bf16.mxu0 0
      %4562 = vmatpush1.bf16.msra.mxu0 0
      %4563 = vmatprep.subr.bf16.mxu0 0
      %4564 = vmatpush1.bf16.msra.mxu0 0
      %4565 = vmatprep.subr.bf16.mxu0 0
      %4566 = vmatpush1.bf16.msra.mxu0 0
      %4567 = vmatprep.subr.bf16.mxu0 0
      %4568 = vmatpush1.bf16.msra.mxu0 0
      %4569 = vmatprep.subr.bf16.mxu0 0
      %4570 = vmatpush1.bf16.msra.mxu0 0
      %4571 = vmatprep.subr.bf16.mxu0 0
      %4572 = vmatpush1.bf16.msra.mxu0 0
      %4573 = vmatprep.subr.bf16.mxu0 0
      %4574 = vmatpush1.bf16.msra.mxu0 0
      %4575 = vmatprep.subr.bf16.mxu0 0
      %4576 = vmatpush1.bf16.msra.mxu0 0
      %4577 = vmatprep.subr.bf16.mxu0 0
      %4578 = vmatpush1.bf16.msra.mxu0 0
      %4579 = vmatprep.subr.bf16.mxu0 0
      %4580 = vmatpush1.bf16.msra.mxu0 0
      %4581 = vmatprep.subr.bf16.mxu0 0
      %4582 = vmatpush1.bf16.msra.mxu0 0
      %4583 = vmatprep.mubr.bf16.mxu0 0
      %4584 = vmatmul.mubr.bf16.gmra.mrb[0].mxu0 %v4504
      %v4585 = vpop.f32.mrb[0].mxu0
      %v4586 = vadd.f32 0.0, %v4585
      %v4587 = vpop.f32.mrb[0].mxu0
      %v4588 = vpop.f32.mrb[0].mxu0
      %v4589 = vadd.f32 0.0, %v4588
      %v4590 = vpop.f32.mrb[0].mxu0
      %4591 = vmatprep.mubr.bf16.mxu0 0
      %4592 = vmatmul.mubr.bf16.gmra.mrb[0].mxu0 %v4507
      %v4593 = vpop.f32.mrb[0].mxu0
      %v4594 = vadd.f32 0.0, %v4593
      %v4595 = vpop.f32.mrb[0].mxu0
      %v4596 = vpop.f32.mrb[0].mxu0
      %v4597 = vadd.f32 0.0, %v4596
      %v4598 = vpop.f32.mrb[0].mxu0
      %4599 = vmatprep.mubr.bf16.mxu0 0
      %4600 = vmatmul.mubr.bf16.gmra.mrb[0].mxu0 %v4510
      %v4601 = vpop.f32.mrb[0].mxu0
      %v4602 = vadd.f32 0.0, %v4601
      %v4603 = vpop.f32.mrb[0].mxu0
      %v4604 = vpop.f32.mrb[0].mxu0
      %v4605 = vadd.f32 0.0, %v4604
      %v4606 = vpop.f32.mrb[0].mxu0
      %4607 = vmatprep.mubr.bf16.mxu0 0
      %4608 = vmatmul.mubr.bf16.gmra.mrb[0].mxu0 %v4513
      %v4609 = vpop.f32.mrb[0].mxu0
      %v4610 = vadd.f32 0.0, %v4609
      %v4611 = vpop.f32.mrb[0].mxu0
      %v4612 = vpop.f32.mrb[0].mxu0
      %v4613 = vadd.f32 0.0, %v4612
      %v4614 = vpop.f32.mrb[0].mxu0
      %4615 = vmatprep.mubr.bf16.mxu0 0
      %4616 = vmatmul.mubr.bf16.gmra.mrb[0].mxu0 %v4516
      %v4617 = vpop.f32.mrb[0].mxu0
      %v4618 = vadd.f32 0.0, %v4617
      %v4619 = vpop.f32.mrb[0].mxu0
      %v4620 = vpop.f32.mrb[0].mxu0
      %v4621 = vadd.f32 0.0, %v4620
      %v4622 = vpop.f32.mrb[0].mxu0
      %4623 = vmatprep.mubr.bf16.mxu0 0
      %4624 = vmatmul.mubr.bf16.gmra.mrb[0].mxu0 %v4519
      %v4625 = vpop.f32.mrb[0].mxu0
      %v4626 = vadd.f32 0.0, %v4625
      %v4627 = vpop.f32.mrb[0].mxu0
      %v4628 = vpop.f32.mrb[0].mxu0
      %v4629 = vadd.f32 0.0, %v4628
      %v4630 = vpop.f32.mrb[0].mxu0
      %4631 = vmatprep.mubr.bf16.mxu0 0
      %4632 = vmatmul.mubr.bf16.gmra.mrb[0].mxu0 %v4522
      %v4633 = vpop.f32.mrb[0].mxu0
      %v4634 = vadd.f32 0.0, %v4633
      %v4635 = vpop.f32.mrb[0].mxu0
      %v4636 = vpop.f32.mrb[0].mxu0
      %v4637 = vadd.f32 0.0, %v4636
      %v4638 = vpop.f32.mrb[0].mxu0
      %4639 = vmatprep.mubr.bf16.mxu0 0
      %4640 = vmatmul.mubr.bf16.gmra.mrb[0].mxu0 %v4525
      %v4641 = vpop.f32.mrb[0].mxu0
      %v4642 = vadd.f32 0.0, %v4641
      %v4643 = vpop.f32.mrb[0].mxu0
      %v4644 = vpop.f32.mrb[0].mxu0
      %v4645 = vadd.f32 0.0, %v4644
      %v4646 = vpop.f32.mrb[0].mxu0
      %4647 = vmatprep.mubr.bf16.mxu0 0
      %4648 = vmatmul.mubr.bf16.gmra.mrb[0].mxu0 %v4528
      %v4649 = vpop.f32.mrb[0].mxu0
      %v4650 = vadd.f32 0.0, %v4649
      %v4651 = vpop.f32.mrb[0].mxu0
      %v4652 = vpop.f32.mrb[0].mxu0
      %v4653 = vadd.f32 0.0, %v4652
      %v4654 = vpop.f32.mrb[0].mxu0
      %4655 = vmatprep.mubr.bf16.mxu0 0
      %4656 = vmatmul.mubr.bf16.gmra.mrb[0].mxu0 %v4531
      %v4657 = vpop.f32.mrb[0].mxu0
      %v4658 = vadd.f32 0.0, %v4657
      %v4659 = vpop.f32.mrb[0].mxu0
      %v4660 = vpop.f32.mrb[0].mxu0
      %v4661 = vadd.f32 0.0, %v4660
      %v4662 = vpop.f32.mrb[0].mxu0
      %4663 = vmatprep.mubr.bf16.mxu0 0
      %4664 = vmatmul.mubr.bf16.gmra.mrb[0].mxu0 %v4534
      %v4665 = vpop.f32.mrb[0].mxu0
      %v4666 = vadd.f32 0.0, %v4665
      %v4667 = vpop.f32.mrb[0].mxu0
      %v4668 = vpop.f32.mrb[0].mxu0
      %v4669 = vadd.f32 0.0, %v4668
      %v4670 = vpop.f32.mrb[0].mxu0
      %4671 = vmatprep.mubr.bf16.mxu0 0
      %4672 = vmatmul.mubr.bf16.gmra.mrb[0].mxu0 %v4537
      %v4673 = vpop.f32.mrb[0].mxu0
      %v4674 = vadd.f32 0.0, %v4673
      %v4675 = vpop.f32.mrb[0].mxu0
      %v4676 = vpop.f32.mrb[0].mxu0
      %v4677 = vadd.f32 0.0, %v4676
      %v4678 = vpop.f32.mrb[0].mxu0
      %4679 = vmatprep.mubr.bf16.mxu0 0
      %4680 = vmatmul.mubr.bf16.gmra.mrb[0].mxu0 %v4540
      %v4681 = vpop.f32.mrb[0].mxu0
      %v4682 = vadd.f32 0.0, %v4681
      %v4683 = vpop.f32.mrb[0].mxu0
      %v4684 = vpop.f32.mrb[0].mxu0
      %v4685 = vadd.f32 0.0, %v4684
      %v4686 = vpop.f32.mrb[0].mxu0
      %4687 = vmatprep.mubr.bf16.mxu0 0
      %4688 = vmatmul.mubr.bf16.gmra.mrb[0].mxu0 %v4543
      %v4689 = vpop.f32.mrb[0].mxu0
      %v4690 = vadd.f32 0.0, %v4689
      %v4691 = vpop.f32.mrb[0].mxu0
      %v4692 = vpop.f32.mrb[0].mxu0
      %v4693 = vadd.f32 0.0, %v4692
      %v4694 = vpop.f32.mrb[0].mxu0
      %4695 = vmatprep.mubr.bf16.mxu0 0
      %4696 = vmatmul.mubr.bf16.gmra.mrb[0].mxu0 %v4546
      %v4697 = vpop.f32.mrb[0].mxu0
      %v4698 = vadd.f32 0.0, %v4697
      %v4699 = vpop.f32.mrb[0].mxu0
      %v4700 = vpop.f32.mrb[0].mxu0
      %v4701 = vadd.f32 0.0, %v4700
      %v4702 = vpop.f32.mrb[0].mxu0
      %4703 = vmatprep.mubr.bf16.mxu0 0
      %4704 = vmatmul.mubr.bf16.gmra.mrb[0].mxu0 %v4549
      %v4705 = vpop.f32.mrb[0].mxu0
      %v4706 = vadd.f32 0.0, %v4705
      %v4707 = vpop.f32.mrb[0].mxu0
      %v4708 = vpop.f32.mrb[0].mxu0
      %v4709 = vadd.f32 0.0, %v4708
      %v4710 = vpop.f32.mrb[0].mxu0
      %4711 = vdwg.mxu0
      %v4712 = vadd.f32 %v4390, %v4586
      %v4713 = vadd.f32 %v4391, %v4589
      %v4714 = vadd.f32 %v4392, %v4594
      %v4715 = vadd.f32 %v4393, %v4597
      %v4716 = vadd.f32 %v4394, %v4602
      %v4717 = vadd.f32 %v4395, %v4605
      %v4718 = vadd.f32 %v4396, %v4610
      %v4719 = vadd.f32 %v4397, %v4613
      %v4720 = vadd.f32 %v4398, %v4618
      %v4721 = vadd.f32 %v4399, %v4621
      %v4722 = vadd.f32 %v4400, %v4626
      %v4723 = vadd.f32 %v4401, %v4629
      %v4724 = vadd.f32 %v4402, %v4634
      %v4725 = vadd.f32 %v4403, %v4637
      %v4726 = vadd.f32 %v4404, %v4642
      %v4727 = vadd.f32 %v4405, %v4645
      %v4728 = vadd.f32 %v4406, %v4650
      %v4729 = vadd.f32 %v4407, %v4653
      %v4730 = vadd.f32 %v4408, %v4658
      %v4731 = vadd.f32 %v4409, %v4661
      %v4732 = vadd.f32 %v4410, %v4666
      %v4733 = vadd.f32 %v4411, %v4669
      %v4734 = vadd.f32 %v4412, %v4674
      %v4735 = vadd.f32 %v4413, %v4677
      %v4736 = vadd.f32 %v4414, %v4682
      %v4737 = vadd.f32 %v4415, %v4685
      %v4738 = vadd.f32 %v4416, %v4690
      %v4739 = vadd.f32 %v4417, %v4693
      %v4740 = vadd.f32 %v4418, %v4698
      %v4741 = vadd.f32 %v4419, %v4701
      %v4742 = vadd.f32 %v4420, %v4706
      %v4743 = vadd.f32 %v4421, %v4709
      %v4744 = vld [vmem:[%s422 + $0x2] sm:$0xff]
      %v4745 = vld [vmem:[%s422 + $0xa] sm:$0xff]
      %v4746 = vld [vmem:[%s422 + $0x1a] sm:$0xff]
      %v4747 = vld [vmem:[%s422 + $0x22] sm:$0xff]
      %v4748 = vld [vmem:[%s422 + $0x32] sm:$0xff]
      %v4749 = vld [vmem:[%s422 + $0x3a] sm:$0xff]
      %v4750 = vld [vmem:[%s422 + $0x4a] sm:$0xff]
      %v4751 = vld [vmem:[%s422 + $0x52] sm:$0xff]
      %v4752 = vld [vmem:[%s422 + $0x62] sm:$0xff]
      %v4753 = vld [vmem:[%s422 + $0x6a] sm:$0xff]
      %v4754 = vld [vmem:[%s422 + $0x7a] sm:$0xff]
      %v4755 = vld [vmem:[%s422 + $0x82] sm:$0xff]
      %v4756 = vld [vmem:[%s422 + $0x92] sm:$0xff]
      %v4757 = vld [vmem:[%s422 + $0x9a] sm:$0xff]
      %v4758 = vld [vmem:[%s422 + $0xaa] sm:$0xff]
      %v4759 = vld [vmem:[%s422 + $0xb2] sm:$0xff]
      %v4760 = vld [vmem:[%s422 + $0xc2] sm:$0xff]
      %v4761 = vld [vmem:[%s422 + $0xca] sm:$0xff]
      %v4762 = vld [vmem:[%s422 + $0xda] sm:$0xff]
      %v4763 = vld [vmem:[%s422 + $0xe2] sm:$0xff]
      %v4764 = vld [vmem:[%s422 + $0xf2] sm:$0xff]
      %v4765 = vld [vmem:[%s422 + $0xfa] sm:$0xff]
      %v4766 = vld [vmem:[%s422 + $0x10a] sm:$0xff]
      %v4767 = vld [vmem:[%s422 + $0x112] sm:$0xff]
      %v4768 = vld [vmem:[%s422 + $0x122] sm:$0xff]
      %v4769 = vld [vmem:[%s422 + $0x12a] sm:$0xff]
      %v4770 = vld [vmem:[%s422 + $0x13a] sm:$0xff]
      %v4771 = vld [vmem:[%s422 + $0x142] sm:$0xff]
      %v4772 = vld [vmem:[%s422 + $0x152] sm:$0xff]
      %v4773 = vld [vmem:[%s422 + $0x15a] sm:$0xff]
      %v4774 = vld [vmem:[%s422 + $0x16a] sm:$0xff]
      %v4775 = vld [vmem:[%s422 + $0x172] sm:$0xff]
      %v4776 = vpack.c.bf16 %v4745, %v4744
      %v4777 = vpack.c.bf16 %v4747, %v4746
      %v4778 = vpack.c.bf16 %v4749, %v4748
      %v4779 = vpack.c.bf16 %v4751, %v4750
      %v4780 = vpack.c.bf16 %v4753, %v4752
      %v4781 = vpack.c.bf16 %v4755, %v4754
      %v4782 = vpack.c.bf16 %v4757, %v4756
      %v4783 = vpack.c.bf16 %v4759, %v4758
      %v4784 = vpack.c.bf16 %v4761, %v4760
      %v4785 = vpack.c.bf16 %v4763, %v4762
      %v4786 = vpack.c.bf16 %v4765, %v4764
      %v4787 = vpack.c.bf16 %v4767, %v4766
      %v4788 = vpack.c.bf16 %v4769, %v4768
      %v4789 = vpack.c.bf16 %v4771, %v4770
      %v4790 = vpack.c.bf16 %v4773, %v4772
      %v4791 = vpack.c.bf16 %v4775, %v4774
      %s4792 = scalar_lea.vmem %s3, 160
      %v4793 = vld [vmem:[%s4792] sm:$0xf]
      %v4794 = vld [vmem:[%s4792 + $0x4] sm:$0xf]
      %v4795 = vld [vmem:[%s4792 + $0x8] sm:$0xf]
      %v4796 = vld [vmem:[%s4792 + $0xc] sm:$0xf]
      %v4797 = vld [vmem:[%s4792 + $0x10] sm:$0xf]
      %v4798 = vld [vmem:[%s4792 + $0x14] sm:$0xf]
      %v4799 = vld [vmem:[%s4792 + $0x18] sm:$0xf]
      %v4800 = vld [vmem:[%s4792 + $0x1c] sm:$0xf]
      %v4809 = vunpack.c.l.b16 %v4793
      %v4810 = vunpack.c.l.b16 %v4794
      %v4811 = vunpack.c.l.b16 %v4795
      %v4812 = vunpack.c.l.b16 %v4796
      %v4813 = vunpack.c.l.b16 %v4797
      %v4814 = vunpack.c.l.b16 %v4798
      %v4815 = vunpack.c.l.b16 %v4799
      %v4816 = vunpack.c.l.b16 %v4800
      %v4817 = vpack.c.b16 %v4810, %v4809
      %v4818 = vpack.c.b16 %v4812, %v4811
      %v4819 = vpack.c.b16 %v4814, %v4813
      %v4820 = vpack.c.b16 %v4816, %v4815
      %v4826 = vsel %vm366, %v4776, 0
      %v4829 = vsel %vm366, %v4777, 0
      %v4832 = vsel %vm366, %v4778, 0
      %v4835 = vsel %vm366, %v4779, 0
      %v4838 = vsel %vm366, %v4780, 0
      %v4841 = vsel %vm366, %v4781, 0
      %v4844 = vsel %vm366, %v4782, 0
      %v4847 = vsel %vm366, %v4783, 0
      %v4850 = vsel %vm366, %v4784, 0
      %v4853 = vsel %vm366, %v4785, 0
      %v4856 = vsel %vm366, %v4786, 0
      %v4859 = vsel %vm366, %v4787, 0
      %v4862 = vsel %vm366, %v4788, 0
      %v4865 = vsel %vm366, %v4789, 0
      %v4868 = vsel %vm366, %v4790, 0
      %v4871 = vsel %vm366, %v4791, 0
      %4873 = vmatprep.subr.bf16.mxu0 0
      %4874 = vmatpush1.bf16.msra.mxu0 %v4817
      %4875 = vmatprep.subr.bf16.mxu0 0
      %4876 = vmatpush1.bf16.msra.mxu0 %v4818
      %4877 = vmatprep.subr.bf16.mxu0 0
      %4878 = vmatpush1.bf16.msra.mxu0 %v4819
      %4879 = vmatprep.subr.bf16.mxu0 0
      %4880 = vmatpush1.bf16.msra.mxu0 %v4820
      %4881 = vmatprep.subr.bf16.mxu0 0
      %4882 = vmatpush1.bf16.msra.mxu0 0
      %4883 = vmatprep.subr.bf16.mxu0 0
      %4884 = vmatpush1.bf16.msra.mxu0 0
      %4885 = vmatprep.subr.bf16.mxu0 0
      %4886 = vmatpush1.bf16.msra.mxu0 0
      %4887 = vmatprep.subr.bf16.mxu0 0
      %4888 = vmatpush1.bf16.msra.mxu0 0
      %4889 = vmatprep.subr.bf16.mxu0 0
      %4890 = vmatpush1.bf16.msra.mxu0 0
      %4891 = vmatprep.subr.bf16.mxu0 0
      %4892 = vmatpush1.bf16.msra.mxu0 0
      %4893 = vmatprep.subr.bf16.mxu0 0
      %4894 = vmatpush1.bf16.msra.mxu0 0
      %4895 = vmatprep.subr.bf16.mxu0 0
      %4896 = vmatpush1.bf16.msra.mxu0 0
      %4897 = vmatprep.subr.bf16.mxu0 0
      %4898 = vmatpush1.bf16.msra.mxu0 0
      %4899 = vmatprep.subr.bf16.mxu0 0
      %4900 = vmatpush1.bf16.msra.mxu0 0
      %4901 = vmatprep.subr.bf16.mxu0 0
      %4902 = vmatpush1.bf16.msra.mxu0 0
      %4903 = vmatprep.subr.bf16.mxu0 0
      %4904 = vmatpush1.bf16.msra.mxu0 0
      %4905 = vmatprep.mubr.bf16.mxu0 0
      %4906 = vmatmul.mubr.bf16.gmra.mrb[0].mxu0 %v4826
      %v4907 = vpop.f32.mrb[0].mxu0
      %v4908 = vadd.f32 0.0, %v4907
      %v4909 = vpop.f32.mrb[0].mxu0
      %v4910 = vpop.f32.mrb[0].mxu0
      %v4911 = vadd.f32 0.0, %v4910
      %v4912 = vpop.f32.mrb[0].mxu0
      %4913 = vmatprep.mubr.bf16.mxu0 0
      %4914 = vmatmul.mubr.bf16.gmra.mrb[0].mxu0 %v4829
      %v4915 = vpop.f32.mrb[0].mxu0
      %v4916 = vadd.f32 0.0, %v4915
      %v4917 = vpop.f32.mrb[0].mxu0
      %v4918 = vpop.f32.mrb[0].mxu0
      %v4919 = vadd.f32 0.0, %v4918
      %v4920 = vpop.f32.mrb[0].mxu0
      %4921 = vmatprep.mubr.bf16.mxu0 0
      %4922 = vmatmul.mubr.bf16.gmra.mrb[0].mxu0 %v4832
      %v4923 = vpop.f32.mrb[0].mxu0
      %v4924 = vadd.f32 0.0, %v4923
      %v4925 = vpop.f32.mrb[0].mxu0
      %v4926 = vpop.f32.mrb[0].mxu0
      %v4927 = vadd.f32 0.0, %v4926
      %v4928 = vpop.f32.mrb[0].mxu0
      %4929 = vmatprep.mubr.bf16.mxu0 0
      %4930 = vmatmul.mubr.bf16.gmra.mrb[0].mxu0 %v4835
      %v4931 = vpop.f32.mrb[0].mxu0
      %v4932 = vadd.f32 0.0, %v4931
      %v4933 = vpop.f32.mrb[0].mxu0
      %v4934 = vpop.f32.mrb[0].mxu0
      %v4935 = vadd.f32 0.0, %v4934
      %v4936 = vpop.f32.mrb[0].mxu0
      %4937 = vmatprep.mubr.bf16.mxu0 0
      %4938 = vmatmul.mubr.bf16.gmra.mrb[0].mxu0 %v4838
      %v4939 = vpop.f32.mrb[0].mxu0
      %v4940 = vadd.f32 0.0, %v4939
      %v4941 = vpop.f32.mrb[0].mxu0
      %v4942 = vpop.f32.mrb[0].mxu0
      %v4943 = vadd.f32 0.0, %v4942
      %v4944 = vpop.f32.mrb[0].mxu0
      %4945 = vmatprep.mubr.bf16.mxu0 0
      %4946 = vmatmul.mubr.bf16.gmra.mrb[0].mxu0 %v4841
      %v4947 = vpop.f32.mrb[0].mxu0
      %v4948 = vadd.f32 0.0, %v4947
      %v4949 = vpop.f32.mrb[0].mxu0
      %v4950 = vpop.f32.mrb[0].mxu0
      %v4951 = vadd.f32 0.0, %v4950
      %v4952 = vpop.f32.mrb[0].mxu0
      %4953 = vmatprep.mubr.bf16.mxu0 0
      %4954 = vmatmul.mubr.bf16.gmra.mrb[0].mxu0 %v4844
      %v4955 = vpop.f32.mrb[0].mxu0
      %v4956 = vadd.f32 0.0, %v4955
      %v4957 = vpop.f32.mrb[0].mxu0
      %v4958 = vpop.f32.mrb[0].mxu0
      %v4959 = vadd.f32 0.0, %v4958
      %v4960 = vpop.f32.mrb[0].mxu0
      %4961 = vmatprep.mubr.bf16.mxu0 0
      %4962 = vmatmul.mubr.bf16.gmra.mrb[0].mxu0 %v4847
      %v4963 = vpop.f32.mrb[0].mxu0
      %v4964 = vadd.f32 0.0, %v4963
      %v4965 = vpop.f32.mrb[0].mxu0
      %v4966 = vpop.f32.mrb[0].mxu0
      %v4967 = vadd.f32 0.0, %v4966
      %v4968 = vpop.f32.mrb[0].mxu0
      %4969 = vmatprep.mubr.bf16.mxu0 0
      %4970 = vmatmul.mubr.bf16.gmra.mrb[0].mxu0 %v4850
      %v4971 = vpop.f32.mrb[0].mxu0
      %v4972 = vadd.f32 0.0, %v4971
      %v4973 = vpop.f32.mrb[0].mxu0
      %v4974 = vpop.f32.mrb[0].mxu0
      %v4975 = vadd.f32 0.0, %v4974
      %v4976 = vpop.f32.mrb[0].mxu0
      %4977 = vmatprep.mubr.bf16.mxu0 0
      %4978 = vmatmul.mubr.bf16.gmra.mrb[0].mxu0 %v4853
      %v4979 = vpop.f32.mrb[0].mxu0
      %v4980 = vadd.f32 0.0, %v4979
      %v4981 = vpop.f32.mrb[0].mxu0
      %v4982 = vpop.f32.mrb[0].mxu0
      %v4983 = vadd.f32 0.0, %v4982
      %v4984 = vpop.f32.mrb[0].mxu0
      %4985 = vmatprep.mubr.bf16.mxu0 0
      %4986 = vmatmul.mubr.bf16.gmra.mrb[0].mxu0 %v4856
      %v4987 = vpop.f32.mrb[0].mxu0
      %v4988 = vadd.f32 0.0, %v4987
      %v4989 = vpop.f32.mrb[0].mxu0
      %v4990 = vpop.f32.mrb[0].mxu0
      %v4991 = vadd.f32 0.0, %v4990
      %v4992 = vpop.f32.mrb[0].mxu0
      %4993 = vmatprep.mubr.bf16.mxu0 0
      %4994 = vmatmul.mubr.bf16.gmra.mrb[0].mxu0 %v4859
      %v4995 = vpop.f32.mrb[0].mxu0
      %v4996 = vadd.f32 0.0, %v4995
      %v4997 = vpop.f32.mrb[0].mxu0
      %v4998 = vpop.f32.mrb[0].mxu0
      %v4999 = vadd.f32 0.0, %v4998
      %v5000 = vpop.f32.mrb[0].mxu0
      %5001 = vmatprep.mubr.bf16.mxu0 0
      %5002 = vmatmul.mubr.bf16.gmra.mrb[0].mxu0 %v4862
      %v5003 = vpop.f32.mrb[0].mxu0
      %v5004 = vadd.f32 0.0, %v5003
      %v5005 = vpop.f32.mrb[0].mxu0
      %v5006 = vpop.f32.mrb[0].mxu0
      %v5007 = vadd.f32 0.0, %v5006
      %v5008 = vpop.f32.mrb[0].mxu0
      %5009 = vmatprep.mubr.bf16.mxu0 0
      %5010 = vmatmul.mubr.bf16.gmra.mrb[0].mxu0 %v4865
      %v5011 = vpop.f32.mrb[0].mxu0
      %v5012 = vadd.f32 0.0, %v5011
      %v5013 = vpop.f32.mrb[0].mxu0
      %v5014 = vpop.f32.mrb[0].mxu0
      %v5015 = vadd.f32 0.0, %v5014
      %v5016 = vpop.f32.mrb[0].mxu0
      %5017 = vmatprep.mubr.bf16.mxu0 0
      %5018 = vmatmul.mubr.bf16.gmra.mrb[0].mxu0 %v4868
      %v5019 = vpop.f32.mrb[0].mxu0
      %v5020 = vadd.f32 0.0, %v5019
      %v5021 = vpop.f32.mrb[0].mxu0
      %v5022 = vpop.f32.mrb[0].mxu0
      %v5023 = vadd.f32 0.0, %v5022
      %v5024 = vpop.f32.mrb[0].mxu0
      %5025 = vmatprep.mubr.bf16.mxu0 0
      %5026 = vmatmul.mubr.bf16.gmra.mrb[0].mxu0 %v4871
      %v5027 = vpop.f32.mrb[0].mxu0
      %v5028 = vadd.f32 0.0, %v5027
      %v5029 = vpop.f32.mrb[0].mxu0
      %v5030 = vpop.f32.mrb[0].mxu0
      %v5031 = vadd.f32 0.0, %v5030
      %v5032 = vpop.f32.mrb[0].mxu0
      %5033 = vdwg.mxu0
      %v5034 = vadd.f32 %v4712, %v4908
      %v5035 = vadd.f32 %v4713, %v4911
      %v5036 = vadd.f32 %v4714, %v4916
      %v5037 = vadd.f32 %v4715, %v4919
      %v5038 = vadd.f32 %v4716, %v4924
      %v5039 = vadd.f32 %v4717, %v4927
      %v5040 = vadd.f32 %v4718, %v4932
      %v5041 = vadd.f32 %v4719, %v4935
      %v5042 = vadd.f32 %v4720, %v4940
      %v5043 = vadd.f32 %v4721, %v4943
      %v5044 = vadd.f32 %v4722, %v4948
      %v5045 = vadd.f32 %v4723, %v4951
      %v5046 = vadd.f32 %v4724, %v4956
      %v5047 = vadd.f32 %v4725, %v4959
      %v5048 = vadd.f32 %v4726, %v4964
      %v5049 = vadd.f32 %v4727, %v4967
      %v5050 = vadd.f32 %v4728, %v4972
      %v5051 = vadd.f32 %v4729, %v4975
      %v5052 = vadd.f32 %v4730, %v4980
      %v5053 = vadd.f32 %v4731, %v4983
      %v5054 = vadd.f32 %v4732, %v4988
      %v5055 = vadd.f32 %v4733, %v4991
      %v5056 = vadd.f32 %v4734, %v4996
      %v5057 = vadd.f32 %v4735, %v4999
      %v5058 = vadd.f32 %v4736, %v5004
      %v5059 = vadd.f32 %v4737, %v5007
      %v5060 = vadd.f32 %v4738, %v5012
      %v5061 = vadd.f32 %v4739, %v5015
      %v5062 = vadd.f32 %v4740, %v5020
      %v5063 = vadd.f32 %v4741, %v5023
      %v5064 = vadd.f32 %v4742, %v5028
      %v5065 = vadd.f32 %v4743, %v5031
      %v5066 = vld [vmem:[%s2159] sm:$0xff]
      %v5067 = vld [vmem:[%s2159 + $0x8] sm:$0xff]
      %v5068 = vld [vmem:[%s2159 + $0x18] sm:$0xff]
      %v5069 = vld [vmem:[%s2159 + $0x20] sm:$0xff]
      %v5070 = vld [vmem:[%s2159 + $0x30] sm:$0xff]
      %v5071 = vld [vmem:[%s2159 + $0x38] sm:$0xff]
      %v5072 = vld [vmem:[%s2159 + $0x48] sm:$0xff]
      %v5073 = vld [vmem:[%s2159 + $0x50] sm:$0xff]
      %v5074 = vld [vmem:[%s2159 + $0x60] sm:$0xff]
      %v5075 = vld [vmem:[%s2159 + $0x68] sm:$0xff]
      %v5076 = vld [vmem:[%s2159 + $0x78] sm:$0xff]
      %v5077 = vld [vmem:[%s2159 + $0x80] sm:$0xff]
      %v5078 = vld [vmem:[%s2159 + $0x90] sm:$0xff]
      %v5079 = vld [vmem:[%s2159 + $0x98] sm:$0xff]
      %v5080 = vld [vmem:[%s2159 + $0xa8] sm:$0xff]
      %v5081 = vld [vmem:[%s2159 + $0xb0] sm:$0xff]
      %v5082 = vld [vmem:[%s2159 + $0xc0] sm:$0xff]
      %v5083 = vld [vmem:[%s2159 + $0xc8] sm:$0xff]
      %v5084 = vld [vmem:[%s2159 + $0xd8] sm:$0xff]
      %v5085 = vld [vmem:[%s2159 + $0xe0] sm:$0xff]
      %v5086 = vld [vmem:[%s2159 + $0xf0] sm:$0xff]
      %v5087 = vld [vmem:[%s2159 + $0xf8] sm:$0xff]
      %v5088 = vld [vmem:[%s2159 + $0x108] sm:$0xff]
      %v5089 = vld [vmem:[%s2159 + $0x110] sm:$0xff]
      %v5090 = vld [vmem:[%s2159 + $0x120] sm:$0xff]
      %v5091 = vld [vmem:[%s2159 + $0x128] sm:$0xff]
      %v5092 = vld [vmem:[%s2159 + $0x138] sm:$0xff]
      %v5093 = vld [vmem:[%s2159 + $0x140] sm:$0xff]
      %v5094 = vld [vmem:[%s2159 + $0x150] sm:$0xff]
      %v5095 = vld [vmem:[%s2159 + $0x158] sm:$0xff]
      %v5096 = vld [vmem:[%s2159 + $0x168] sm:$0xff]
      %v5097 = vld [vmem:[%s2159 + $0x170] sm:$0xff]
      %v5098 = vpack.c.bf16 %v5067, %v5066
      %v5099 = vpack.c.bf16 %v5069, %v5068
      %v5100 = vpack.c.bf16 %v5071, %v5070
      %v5101 = vpack.c.bf16 %v5073, %v5072
      %v5102 = vpack.c.bf16 %v5075, %v5074
      %v5103 = vpack.c.bf16 %v5077, %v5076
      %v5104 = vpack.c.bf16 %v5079, %v5078
      %v5105 = vpack.c.bf16 %v5081, %v5080
      %v5106 = vpack.c.bf16 %v5083, %v5082
      %v5107 = vpack.c.bf16 %v5085, %v5084
      %v5108 = vpack.c.bf16 %v5087, %v5086
      %v5109 = vpack.c.bf16 %v5089, %v5088
      %v5110 = vpack.c.bf16 %v5091, %v5090
      %v5111 = vpack.c.bf16 %v5093, %v5092
      %v5112 = vpack.c.bf16 %v5095, %v5094
      %v5113 = vpack.c.bf16 %v5097, %v5096
      %s5114 = scalar_lea.vmem %s3, 192
      %v5115 = vld [vmem:[%s5114] sm:$0xf]
      %v5116 = vld [vmem:[%s5114 + $0x4] sm:$0xf]
      %v5117 = vld [vmem:[%s5114 + $0x8] sm:$0xf]
      %v5118 = vld [vmem:[%s5114 + $0xc] sm:$0xf]
      %v5119 = vld [vmem:[%s5114 + $0x10] sm:$0xf]
      %v5120 = vld [vmem:[%s5114 + $0x14] sm:$0xf]
      %v5121 = vld [vmem:[%s5114 + $0x18] sm:$0xf]
      %v5122 = vld [vmem:[%s5114 + $0x1c] sm:$0xf]
      %v5131 = vunpack.c.l.b16 %v5115
      %v5132 = vunpack.c.l.b16 %v5116
      %v5133 = vunpack.c.l.b16 %v5117
      %v5134 = vunpack.c.l.b16 %v5118
      %v5135 = vunpack.c.l.b16 %v5119
      %v5136 = vunpack.c.l.b16 %v5120
      %v5137 = vunpack.c.l.b16 %v5121
      %v5138 = vunpack.c.l.b16 %v5122
      %v5139 = vpack.c.b16 %v5132, %v5131
      %v5140 = vpack.c.b16 %v5134, %v5133
      %v5141 = vpack.c.b16 %v5136, %v5135
      %v5142 = vpack.c.b16 %v5138, %v5137
      %v5148 = vsel %vm366, %v5098, 0
      %v5151 = vsel %vm366, %v5099, 0
      %v5154 = vsel %vm366, %v5100, 0
      %v5157 = vsel %vm366, %v5101, 0
      %v5160 = vsel %vm366, %v5102, 0
      %v5163 = vsel %vm366, %v5103, 0
      %v5166 = vsel %vm366, %v5104, 0
      %v5169 = vsel %vm366, %v5105, 0
      %v5172 = vsel %vm366, %v5106, 0
      %v5175 = vsel %vm366, %v5107, 0
      %v5178 = vsel %vm366, %v5108, 0
      %v5181 = vsel %vm366, %v5109, 0
      %v5184 = vsel %vm366, %v5110, 0
      %v5187 = vsel %vm366, %v5111, 0
      %v5190 = vsel %vm366, %v5112, 0
      %v5193 = vsel %vm366, %v5113, 0
      %5195 = vmatprep.subr.bf16.mxu0 0
      %5196 = vmatpush1.bf16.msra.mxu0 %v5139
      %5197 = vmatprep.subr.bf16.mxu0 0
      %5198 = vmatpush1.bf16.msra.mxu0 %v5140
      %5199 = vmatprep.subr.bf16.mxu0 0
      %5200 = vmatpush1.bf16.msra.mxu0 %v5141
      %5201 = vmatprep.subr.bf16.mxu0 0
      %5202 = vmatpush1.bf16.msra.mxu0 %v5142
      %5203 = vmatprep.subr.bf16.mxu0 0
      %5204 = vmatpush1.bf16.msra.mxu0 0
      %5205 = vmatprep.subr.bf16.mxu0 0
      %5206 = vmatpush1.bf16.msra.mxu0 0
      %5207 = vmatprep.subr.bf16.mxu0 0
      %5208 = vmatpush1.bf16.msra.mxu0 0
      %5209 = vmatprep.subr.bf16.mxu0 0
      %5210 = vmatpush1.bf16.msra.mxu0 0
      %5211 = vmatprep.subr.bf16.mxu0 0
      %5212 = vmatpush1.bf16.msra.mxu0 0
      %5213 = vmatprep.subr.bf16.mxu0 0
      %5214 = vmatpush1.bf16.msra.mxu0 0
      %5215 = vmatprep.subr.bf16.mxu0 0
      %5216 = vmatpush1.bf16.msra.mxu0 0
      %5217 = vmatprep.subr.bf16.mxu0 0
      %5218 = vmatpush1.bf16.msra.mxu0 0
      %5219 = vmatprep.subr.bf16.mxu0 0
      %5220 = vmatpush1.bf16.msra.mxu0 0
      %5221 = vmatprep.subr.bf16.mxu0 0
      %5222 = vmatpush1.bf16.msra.mxu0 0
      %5223 = vmatprep.subr.bf16.mxu0 0
      %5224 = vmatpush1.bf16.msra.mxu0 0
      %5225 = vmatprep.subr.bf16.mxu0 0
      %5226 = vmatpush1.bf16.msra.mxu0 0
      %5227 = vmatprep.mubr.bf16.mxu0 0
      %5228 = vmatmul.mubr.bf16.gmra.mrb[0].mxu0 %v5148
      %v5229 = vpop.f32.mrb[0].mxu0
      %v5230 = vadd.f32 0.0, %v5229
      %v5231 = vpop.f32.mrb[0].mxu0
      %v5232 = vpop.f32.mrb[0].mxu0
      %v5233 = vadd.f32 0.0, %v5232
      %v5234 = vpop.f32.mrb[0].mxu0
      %5235 = vmatprep.mubr.bf16.mxu0 0
      %5236 = vmatmul.mubr.bf16.gmra.mrb[0].mxu0 %v5151
      %v5237 = vpop.f32.mrb[0].mxu0
      %v5238 = vadd.f32 0.0, %v5237
      %v5239 = vpop.f32.mrb[0].mxu0
      %v5240 = vpop.f32.mrb[0].mxu0
      %v5241 = vadd.f32 0.0, %v5240
      %v5242 = vpop.f32.mrb[0].mxu0
      %5243 = vmatprep.mubr.bf16.mxu0 0
      %5244 = vmatmul.mubr.bf16.gmra.mrb[0].mxu0 %v5154
      %v5245 = vpop.f32.mrb[0].mxu0
      %v5246 = vadd.f32 0.0, %v5245
      %v5247 = vpop.f32.mrb[0].mxu0
      %v5248 = vpop.f32.mrb[0].mxu0
      %v5249 = vadd.f32 0.0, %v5248
      %v5250 = vpop.f32.mrb[0].mxu0
      %5251 = vmatprep.mubr.bf16.mxu0 0
      %5252 = vmatmul.mubr.bf16.gmra.mrb[0].mxu0 %v5157
      %v5253 = vpop.f32.mrb[0].mxu0
      %v5254 = vadd.f32 0.0, %v5253
      %v5255 = vpop.f32.mrb[0].mxu0
      %v5256 = vpop.f32.mrb[0].mxu0
      %v5257 = vadd.f32 0.0, %v5256
      %v5258 = vpop.f32.mrb[0].mxu0
      %5259 = vmatprep.mubr.bf16.mxu0 0
      %5260 = vmatmul.mubr.bf16.gmra.mrb[0].mxu0 %v5160
      %v5261 = vpop.f32.mrb[0].mxu0
      %v5262 = vadd.f32 0.0, %v5261
      %v5263 = vpop.f32.mrb[0].mxu0
      %v5264 = vpop.f32.mrb[0].mxu0
      %v5265 = vadd.f32 0.0, %v5264
      %v5266 = vpop.f32.mrb[0].mxu0
      %5267 = vmatprep.mubr.bf16.mxu0 0
      %5268 = vmatmul.mubr.bf16.gmra.mrb[0].mxu0 %v5163
      %v5269 = vpop.f32.mrb[0].mxu0
      %v5270 = vadd.f32 0.0, %v5269
      %v5271 = vpop.f32.mrb[0].mxu0
      %v5272 = vpop.f32.mrb[0].mxu0
      %v5273 = vadd.f32 0.0, %v5272
      %v5274 = vpop.f32.mrb[0].mxu0
      %5275 = vmatprep.mubr.bf16.mxu0 0
      %5276 = vmatmul.mubr.bf16.gmra.mrb[0].mxu0 %v5166
      %v5277 = vpop.f32.mrb[0].mxu0
      %v5278 = vadd.f32 0.0, %v5277
      %v5279 = vpop.f32.mrb[0].mxu0
      %v5280 = vpop.f32.mrb[0].mxu0
      %v5281 = vadd.f32 0.0, %v5280
      %v5282 = vpop.f32.mrb[0].mxu0
      %5283 = vmatprep.mubr.bf16.mxu0 0
      %5284 = vmatmul.mubr.bf16.gmra.mrb[0].mxu0 %v5169
      %v5285 = vpop.f32.mrb[0].mxu0
      %v5286 = vadd.f32 0.0, %v5285
      %v5287 = vpop.f32.mrb[0].mxu0
      %v5288 = vpop.f32.mrb[0].mxu0
      %v5289 = vadd.f32 0.0, %v5288
      %v5290 = vpop.f32.mrb[0].mxu0
      %5291 = vmatprep.mubr.bf16.mxu0 0
      %5292 = vmatmul.mubr.bf16.gmra.mrb[0].mxu0 %v5172
      %v5293 = vpop.f32.mrb[0].mxu0
      %v5294 = vadd.f32 0.0, %v5293
      %v5295 = vpop.f32.mrb[0].mxu0
      %v5296 = vpop.f32.mrb[0].mxu0
      %v5297 = vadd.f32 0.0, %v5296
      %v5298 = vpop.f32.mrb[0].mxu0
      %5299 = vmatprep.mubr.bf16.mxu0 0
      %5300 = vmatmul.mubr.bf16.gmra.mrb[0].mxu0 %v5175
      %v5301 = vpop.f32.mrb[0].mxu0
      %v5302 = vadd.f32 0.0, %v5301
      %v5303 = vpop.f32.mrb[0].mxu0
      %v5304 = vpop.f32.mrb[0].mxu0
      %v5305 = vadd.f32 0.0, %v5304
      %v5306 = vpop.f32.mrb[0].mxu0
      %5307 = vmatprep.mubr.bf16.mxu0 0
      %5308 = vmatmul.mubr.bf16.gmra.mrb[0].mxu0 %v5178
      %v5309 = vpop.f32.mrb[0].mxu0
      %v5310 = vadd.f32 0.0, %v5309
      %v5311 = vpop.f32.mrb[0].mxu0
      %v5312 = vpop.f32.mrb[0].mxu0
      %v5313 = vadd.f32 0.0, %v5312
      %v5314 = vpop.f32.mrb[0].mxu0
      %5315 = vmatprep.mubr.bf16.mxu0 0
      %5316 = vmatmul.mubr.bf16.gmra.mrb[0].mxu0 %v5181
      %v5317 = vpop.f32.mrb[0].mxu0
      %v5318 = vadd.f32 0.0, %v5317
      %v5319 = vpop.f32.mrb[0].mxu0
      %v5320 = vpop.f32.mrb[0].mxu0
      %v5321 = vadd.f32 0.0, %v5320
      %v5322 = vpop.f32.mrb[0].mxu0
      %5323 = vmatprep.mubr.bf16.mxu0 0
      %5324 = vmatmul.mubr.bf16.gmra.mrb[0].mxu0 %v5184
      %v5325 = vpop.f32.mrb[0].mxu0
      %v5326 = vadd.f32 0.0, %v5325
      %v5327 = vpop.f32.mrb[0].mxu0
      %v5328 = vpop.f32.mrb[0].mxu0
      %v5329 = vadd.f32 0.0, %v5328
      %v5330 = vpop.f32.mrb[0].mxu0
      %5331 = vmatprep.mubr.bf16.mxu0 0
      %5332 = vmatmul.mubr.bf16.gmra.mrb[0].mxu0 %v5187
      %v5333 = vpop.f32.mrb[0].mxu0
      %v5334 = vadd.f32 0.0, %v5333
      %v5335 = vpop.f32.mrb[0].mxu0
      %v5336 = vpop.f32.mrb[0].mxu0
      %v5337 = vadd.f32 0.0, %v5336
      %v5338 = vpop.f32.mrb[0].mxu0
      %5339 = vmatprep.mubr.bf16.mxu0 0
      %5340 = vmatmul.mubr.bf16.gmra.mrb[0].mxu0 %v5190
      %v5341 = vpop.f32.mrb[0].mxu0
      %v5342 = vadd.f32 0.0, %v5341
      %v5343 = vpop.f32.mrb[0].mxu0
      %v5344 = vpop.f32.mrb[0].mxu0
      %v5345 = vadd.f32 0.0, %v5344
      %v5346 = vpop.f32.mrb[0].mxu0
      %5347 = vmatprep.mubr.bf16.mxu0 0
      %5348 = vmatmul.mubr.bf16.gmra.mrb[0].mxu0 %v5193
      %v5349 = vpop.f32.mrb[0].mxu0
      %v5350 = vadd.f32 0.0, %v5349
      %v5351 = vpop.f32.mrb[0].mxu0
      %v5352 = vpop.f32.mrb[0].mxu0
      %v5353 = vadd.f32 0.0, %v5352
      %v5354 = vpop.f32.mrb[0].mxu0
      %5355 = vdwg.mxu0
      %v5356 = vadd.f32 %v5034, %v5230
      %v5357 = vadd.f32 %v5035, %v5233
      %v5358 = vadd.f32 %v5036, %v5238
      %v5359 = vadd.f32 %v5037, %v5241
      %v5360 = vadd.f32 %v5038, %v5246
      %v5361 = vadd.f32 %v5039, %v5249
      %v5362 = vadd.f32 %v5040, %v5254
      %v5363 = vadd.f32 %v5041, %v5257
      %v5364 = vadd.f32 %v5042, %v5262
      %v5365 = vadd.f32 %v5043, %v5265
      %v5366 = vadd.f32 %v5044, %v5270
      %v5367 = vadd.f32 %v5045, %v5273
      %v5368 = vadd.f32 %v5046, %v5278
      %v5369 = vadd.f32 %v5047, %v5281
      %v5370 = vadd.f32 %v5048, %v5286
      %v5371 = vadd.f32 %v5049, %v5289
      %v5372 = vadd.f32 %v5050, %v5294
      %v5373 = vadd.f32 %v5051, %v5297
      %v5374 = vadd.f32 %v5052, %v5302
      %v5375 = vadd.f32 %v5053, %v5305
      %v5376 = vadd.f32 %v5054, %v5310
      %v5377 = vadd.f32 %v5055, %v5313
      %v5378 = vadd.f32 %v5056, %v5318
      %v5379 = vadd.f32 %v5057, %v5321
      %v5380 = vadd.f32 %v5058, %v5326
      %v5381 = vadd.f32 %v5059, %v5329
      %v5382 = vadd.f32 %v5060, %v5334
      %v5383 = vadd.f32 %v5061, %v5337
      %v5384 = vadd.f32 %v5062, %v5342
      %v5385 = vadd.f32 %v5063, %v5345
      %v5386 = vadd.f32 %v5064, %v5350
      %v5387 = vadd.f32 %v5065, %v5353
      %v5388 = vld [vmem:[%s2159 + $0x1] sm:$0xff]
      %v5389 = vld [vmem:[%s2159 + $0x9] sm:$0xff]
      %v5390 = vld [vmem:[%s2159 + $0x19] sm:$0xff]
      %v5391 = vld [vmem:[%s2159 + $0x21] sm:$0xff]
      %v5392 = vld [vmem:[%s2159 + $0x31] sm:$0xff]
      %v5393 = vld [vmem:[%s2159 + $0x39] sm:$0xff]
      %v5394 = vld [vmem:[%s2159 + $0x49] sm:$0xff]
      %v5395 = vld [vmem:[%s2159 + $0x51] sm:$0xff]
      %v5396 = vld [vmem:[%s2159 + $0x61] sm:$0xff]
      %v5397 = vld [vmem:[%s2159 + $0x69] sm:$0xff]
      %v5398 = vld [vmem:[%s2159 + $0x79] sm:$0xff]
      %v5399 = vld [vmem:[%s2159 + $0x81] sm:$0xff]
      %v5400 = vld [vmem:[%s2159 + $0x91] sm:$0xff]
      %v5401 = vld [vmem:[%s2159 + $0x99] sm:$0xff]
      %v5402 = vld [vmem:[%s2159 + $0xa9] sm:$0xff]
      %v5403 = vld [vmem:[%s2159 + $0xb1] sm:$0xff]
      %v5404 = vld [vmem:[%s2159 + $0xc1] sm:$0xff]
      %v5405 = vld [vmem:[%s2159 + $0xc9] sm:$0xff]
      %v5406 = vld [vmem:[%s2159 + $0xd9] sm:$0xff]
      %v5407 = vld [vmem:[%s2159 + $0xe1] sm:$0xff]
      %v5408 = vld [vmem:[%s2159 + $0xf1] sm:$0xff]
      %v5409 = vld [vmem:[%s2159 + $0xf9] sm:$0xff]
      %v5410 = vld [vmem:[%s2159 + $0x109] sm:$0xff]
      %v5411 = vld [vmem:[%s2159 + $0x111] sm:$0xff]
      %v5412 = vld [vmem:[%s2159 + $0x121] sm:$0xff]
      %v5413 = vld [vmem:[%s2159 + $0x129] sm:$0xff]
      %v5414 = vld [vmem:[%s2159 + $0x139] sm:$0xff]
      %v5415 = vld [vmem:[%s2159 + $0x141] sm:$0xff]
      %v5416 = vld [vmem:[%s2159 + $0x151] sm:$0xff]
      %v5417 = vld [vmem:[%s2159 + $0x159] sm:$0xff]
      %v5418 = vld [vmem:[%s2159 + $0x169] sm:$0xff]
      %v5419 = vld [vmem:[%s2159 + $0x171] sm:$0xff]
      %v5420 = vpack.c.bf16 %v5389, %v5388
      %v5421 = vpack.c.bf16 %v5391, %v5390
      %v5422 = vpack.c.bf16 %v5393, %v5392
      %v5423 = vpack.c.bf16 %v5395, %v5394
      %v5424 = vpack.c.bf16 %v5397, %v5396
      %v5425 = vpack.c.bf16 %v5399, %v5398
      %v5426 = vpack.c.bf16 %v5401, %v5400
      %v5427 = vpack.c.bf16 %v5403, %v5402
      %v5428 = vpack.c.bf16 %v5405, %v5404
      %v5429 = vpack.c.bf16 %v5407, %v5406
      %v5430 = vpack.c.bf16 %v5409, %v5408
      %v5431 = vpack.c.bf16 %v5411, %v5410
      %v5432 = vpack.c.bf16 %v5413, %v5412
      %v5433 = vpack.c.bf16 %v5415, %v5414
      %v5434 = vpack.c.bf16 %v5417, %v5416
      %v5435 = vpack.c.bf16 %v5419, %v5418
      %s5436 = scalar_lea.vmem %s3, 224
      %v5437 = vld [vmem:[%s5436] sm:$0xf]
      %v5438 = vld [vmem:[%s5436 + $0x4] sm:$0xf]
      %v5439 = vld [vmem:[%s5436 + $0x8] sm:$0xf]
      %v5440 = vld [vmem:[%s5436 + $0xc] sm:$0xf]
      %v5441 = vld [vmem:[%s5436 + $0x10] sm:$0xf]
      %v5442 = vld [vmem:[%s5436 + $0x14] sm:$0xf]
      %v5443 = vld [vmem:[%s5436 + $0x18] sm:$0xf]
      %v5444 = vld [vmem:[%s5436 + $0x1c] sm:$0xf]
      %v5453 = vunpack.c.l.b16 %v5437
      %v5454 = vunpack.c.l.b16 %v5438
      %v5455 = vunpack.c.l.b16 %v5439
      %v5456 = vunpack.c.l.b16 %v5440
      %v5457 = vunpack.c.l.b16 %v5441
      %v5458 = vunpack.c.l.b16 %v5442
      %v5459 = vunpack.c.l.b16 %v5443
      %v5460 = vunpack.c.l.b16 %v5444
      %v5461 = vpack.c.b16 %v5454, %v5453
      %v5462 = vpack.c.b16 %v5456, %v5455
      %v5463 = vpack.c.b16 %v5458, %v5457
      %v5464 = vpack.c.b16 %v5460, %v5459
      %v5470 = vsel %vm366, %v5420, 0
      %v5473 = vsel %vm366, %v5421, 0
      %v5476 = vsel %vm366, %v5422, 0
      %v5479 = vsel %vm366, %v5423, 0
      %v5482 = vsel %vm366, %v5424, 0
      %v5485 = vsel %vm366, %v5425, 0
      %v5488 = vsel %vm366, %v5426, 0
      %v5491 = vsel %vm366, %v5427, 0
      %v5494 = vsel %vm366, %v5428, 0
      %v5497 = vsel %vm366, %v5429, 0
      %v5500 = vsel %vm366, %v5430, 0
      %v5503 = vsel %vm366, %v5431, 0
      %v5506 = vsel %vm366, %v5432, 0
      %v5509 = vsel %vm366, %v5433, 0
      %v5512 = vsel %vm366, %v5434, 0
      %v5515 = vsel %vm366, %v5435, 0
      %5517 = vmatprep.subr.bf16.mxu0 0
      %5518 = vmatpush1.bf16.msra.mxu0 %v5461
      %5519 = vmatprep.subr.bf16.mxu0 0
      %5520 = vmatpush1.bf16.msra.mxu0 %v5462
      %5521 = vmatprep.subr.bf16.mxu0 0
      %5522 = vmatpush1.bf16.msra.mxu0 %v5463
      %5523 = vmatprep.subr.bf16.mxu0 0
      %5524 = vmatpush1.bf16.msra.mxu0 %v5464
      %5525 = vmatprep.subr.bf16.mxu0 0
      %5526 = vmatpush1.bf16.msra.mxu0 0
      %5527 = vmatprep.subr.bf16.mxu0 0
      %5528 = vmatpush1.bf16.msra.mxu0 0
      %5529 = vmatprep.subr.bf16.mxu0 0
      %5530 = vmatpush1.bf16.msra.mxu0 0
      %5531 = vmatprep.subr.bf16.mxu0 0
      %5532 = vmatpush1.bf16.msra.mxu0 0
      %5533 = vmatprep.subr.bf16.mxu0 0
      %5534 = vmatpush1.bf16.msra.mxu0 0
      %5535 = vmatprep.subr.bf16.mxu0 0
      %5536 = vmatpush1.bf16.msra.mxu0 0
      %5537 = vmatprep.subr.bf16.mxu0 0
      %5538 = vmatpush1.bf16.msra.mxu0 0
      %5539 = vmatprep.subr.bf16.mxu0 0
      %5540 = vmatpush1.bf16.msra.mxu0 0
      %5541 = vmatprep.subr.bf16.mxu0 0
      %5542 = vmatpush1.bf16.msra.mxu0 0
      %5543 = vmatprep.subr.bf16.mxu0 0
      %5544 = vmatpush1.bf16.msra.mxu0 0
      %5545 = vmatprep.subr.bf16.mxu0 0
      %5546 = vmatpush1.bf16.msra.mxu0 0
      %5547 = vmatprep.subr.bf16.mxu0 0
      %5548 = vmatpush1.bf16.msra.mxu0 0
      %5549 = vmatprep.mubr.bf16.mxu0 0
      %5550 = vmatmul.mubr.bf16.gmra.mrb[0].mxu0 %v5470
      %v5551 = vpop.f32.mrb[0].mxu0
      %v5552 = vadd.f32 0.0, %v5551
      %v5553 = vpop.f32.mrb[0].mxu0
      %v5554 = vpop.f32.mrb[0].mxu0
      %v5555 = vadd.f32 0.0, %v5554
      %v5556 = vpop.f32.mrb[0].mxu0
      %5557 = vmatprep.mubr.bf16.mxu0 0
      %5558 = vmatmul.mubr.bf16.gmra.mrb[0].mxu0 %v5473
      %v5559 = vpop.f32.mrb[0].mxu0
      %v5560 = vadd.f32 0.0, %v5559
      %v5561 = vpop.f32.mrb[0].mxu0
      %v5562 = vpop.f32.mrb[0].mxu0
      %v5563 = vadd.f32 0.0, %v5562
      %v5564 = vpop.f32.mrb[0].mxu0
      %5565 = vmatprep.mubr.bf16.mxu0 0
      %5566 = vmatmul.mubr.bf16.gmra.mrb[0].mxu0 %v5476
      %v5567 = vpop.f32.mrb[0].mxu0
      %v5568 = vadd.f32 0.0, %v5567
      %v5569 = vpop.f32.mrb[0].mxu0
      %v5570 = vpop.f32.mrb[0].mxu0
      %v5571 = vadd.f32 0.0, %v5570
      %v5572 = vpop.f32.mrb[0].mxu0
      %5573 = vmatprep.mubr.bf16.mxu0 0
      %5574 = vmatmul.mubr.bf16.gmra.mrb[0].mxu0 %v5479
      %v5575 = vpop.f32.mrb[0].mxu0
      %v5576 = vadd.f32 0.0, %v5575
      %v5577 = vpop.f32.mrb[0].mxu0
      %v5578 = vpop.f32.mrb[0].mxu0
      %v5579 = vadd.f32 0.0, %v5578
      %v5580 = vpop.f32.mrb[0].mxu0
      %5581 = vmatprep.mubr.bf16.mxu0 0
      %5582 = vmatmul.mubr.bf16.gmra.mrb[0].mxu0 %v5482
      %v5583 = vpop.f32.mrb[0].mxu0
      %v5584 = vadd.f32 0.0, %v5583
      %v5585 = vpop.f32.mrb[0].mxu0
      %v5586 = vpop.f32.mrb[0].mxu0
      %v5587 = vadd.f32 0.0, %v5586
      %v5588 = vpop.f32.mrb[0].mxu0
      %5589 = vmatprep.mubr.bf16.mxu0 0
      %5590 = vmatmul.mubr.bf16.gmra.mrb[0].mxu0 %v5485
      %v5591 = vpop.f32.mrb[0].mxu0
      %v5592 = vadd.f32 0.0, %v5591
      %v5593 = vpop.f32.mrb[0].mxu0
      %v5594 = vpop.f32.mrb[0].mxu0
      %v5595 = vadd.f32 0.0, %v5594
      %v5596 = vpop.f32.mrb[0].mxu0
      %5597 = vmatprep.mubr.bf16.mxu0 0
      %5598 = vmatmul.mubr.bf16.gmra.mrb[0].mxu0 %v5488
      %v5599 = vpop.f32.mrb[0].mxu0
      %v5600 = vadd.f32 0.0, %v5599
      %v5601 = vpop.f32.mrb[0].mxu0
      %v5602 = vpop.f32.mrb[0].mxu0
      %v5603 = vadd.f32 0.0, %v5602
      %v5604 = vpop.f32.mrb[0].mxu0
      %5605 = vmatprep.mubr.bf16.mxu0 0
      %5606 = vmatmul.mubr.bf16.gmra.mrb[0].mxu0 %v5491
      %v5607 = vpop.f32.mrb[0].mxu0
      %v5608 = vadd.f32 0.0, %v5607
      %v5609 = vpop.f32.mrb[0].mxu0
      %v5610 = vpop.f32.mrb[0].mxu0
      %v5611 = vadd.f32 0.0, %v5610
      %v5612 = vpop.f32.mrb[0].mxu0
      %5613 = vmatprep.mubr.bf16.mxu0 0
      %5614 = vmatmul.mubr.bf16.gmra.mrb[0].mxu0 %v5494
      %v5615 = vpop.f32.mrb[0].mxu0
      %v5616 = vadd.f32 0.0, %v5615
      %v5617 = vpop.f32.mrb[0].mxu0
      %v5618 = vpop.f32.mrb[0].mxu0
      %v5619 = vadd.f32 0.0, %v5618
      %v5620 = vpop.f32.mrb[0].mxu0
      %5621 = vmatprep.mubr.bf16.mxu0 0
      %5622 = vmatmul.mubr.bf16.gmra.mrb[0].mxu0 %v5497
      %v5623 = vpop.f32.mrb[0].mxu0
      %v5624 = vadd.f32 0.0, %v5623
      %v5625 = vpop.f32.mrb[0].mxu0
      %v5626 = vpop.f32.mrb[0].mxu0
      %v5627 = vadd.f32 0.0, %v5626
      %v5628 = vpop.f32.mrb[0].mxu0
      %5629 = vmatprep.mubr.bf16.mxu0 0
      %5630 = vmatmul.mubr.bf16.gmra.mrb[0].mxu0 %v5500
      %v5631 = vpop.f32.mrb[0].mxu0
      %v5632 = vadd.f32 0.0, %v5631
      %v5633 = vpop.f32.mrb[0].mxu0
      %v5634 = vpop.f32.mrb[0].mxu0
      %v5635 = vadd.f32 0.0, %v5634
      %v5636 = vpop.f32.mrb[0].mxu0
      %5637 = vmatprep.mubr.bf16.mxu0 0
      %5638 = vmatmul.mubr.bf16.gmra.mrb[0].mxu0 %v5503
      %v5639 = vpop.f32.mrb[0].mxu0
      %v5640 = vadd.f32 0.0, %v5639
      %v5641 = vpop.f32.mrb[0].mxu0
      %v5642 = vpop.f32.mrb[0].mxu0
      %v5643 = vadd.f32 0.0, %v5642
      %v5644 = vpop.f32.mrb[0].mxu0
      %5645 = vmatprep.mubr.bf16.mxu0 0
      %5646 = vmatmul.mubr.bf16.gmra.mrb[0].mxu0 %v5506
      %v5647 = vpop.f32.mrb[0].mxu0
      %v5648 = vadd.f32 0.0, %v5647
      %v5649 = vpop.f32.mrb[0].mxu0
      %v5650 = vpop.f32.mrb[0].mxu0
      %v5651 = vadd.f32 0.0, %v5650
      %v5652 = vpop.f32.mrb[0].mxu0
      %5653 = vmatprep.mubr.bf16.mxu0 0
      %5654 = vmatmul.mubr.bf16.gmra.mrb[0].mxu0 %v5509
      %v5655 = vpop.f32.mrb[0].mxu0
      %v5656 = vadd.f32 0.0, %v5655
      %v5657 = vpop.f32.mrb[0].mxu0
      %v5658 = vpop.f32.mrb[0].mxu0
      %v5659 = vadd.f32 0.0, %v5658
      %v5660 = vpop.f32.mrb[0].mxu0
      %5661 = vmatprep.mubr.bf16.mxu0 0
      %5662 = vmatmul.mubr.bf16.gmra.mrb[0].mxu0 %v5512
      %v5663 = vpop.f32.mrb[0].mxu0
      %v5664 = vadd.f32 0.0, %v5663
      %v5665 = vpop.f32.mrb[0].mxu0
      %v5666 = vpop.f32.mrb[0].mxu0
      %v5667 = vadd.f32 0.0, %v5666
      %v5668 = vpop.f32.mrb[0].mxu0
      %5669 = vmatprep.mubr.bf16.mxu0 0
      %5670 = vmatmul.mubr.bf16.gmra.mrb[0].mxu0 %v5515
      %v5671 = vpop.f32.mrb[0].mxu0
      %v5672 = vadd.f32 0.0, %v5671
      %v5673 = vpop.f32.mrb[0].mxu0
      %v5674 = vpop.f32.mrb[0].mxu0
      %v5675 = vadd.f32 0.0, %v5674
      %v5676 = vpop.f32.mrb[0].mxu0
      %5677 = vdwg.mxu0
      %v5678 = vadd.f32 %v5356, %v5552
      %v5679 = vadd.f32 %v5357, %v5555
      %v5680 = vadd.f32 %v5358, %v5560
      %v5681 = vadd.f32 %v5359, %v5563
      %v5682 = vadd.f32 %v5360, %v5568
      %v5683 = vadd.f32 %v5361, %v5571
      %v5684 = vadd.f32 %v5362, %v5576
      %v5685 = vadd.f32 %v5363, %v5579
      %v5686 = vadd.f32 %v5364, %v5584
      %v5687 = vadd.f32 %v5365, %v5587
      %v5688 = vadd.f32 %v5366, %v5592
      %v5689 = vadd.f32 %v5367, %v5595
      %v5690 = vadd.f32 %v5368, %v5600
      %v5691 = vadd.f32 %v5369, %v5603
      %v5692 = vadd.f32 %v5370, %v5608
      %v5693 = vadd.f32 %v5371, %v5611
      %v5694 = vadd.f32 %v5372, %v5616
      %v5695 = vadd.f32 %v5373, %v5619
      %v5696 = vadd.f32 %v5374, %v5624
      %v5697 = vadd.f32 %v5375, %v5627
      %v5698 = vadd.f32 %v5376, %v5632
      %v5699 = vadd.f32 %v5377, %v5635
      %v5700 = vadd.f32 %v5378, %v5640
      %v5701 = vadd.f32 %v5379, %v5643
      %v5702 = vadd.f32 %v5380, %v5648
      %v5703 = vadd.f32 %v5381, %v5651
      %v5704 = vadd.f32 %v5382, %v5656
      %v5705 = vadd.f32 %v5383, %v5659
      %v5706 = vadd.f32 %v5384, %v5664
      %v5707 = vadd.f32 %v5385, %v5667
      %v5708 = vadd.f32 %v5386, %v5672
      %v5709 = vadd.f32 %v5387, %v5675
      %v5710 = vld [vmem:[%s2159 + $0x2] sm:$0xff]
      %v5711 = vld [vmem:[%s2159 + $0xa] sm:$0xff]
      %v5712 = vld [vmem:[%s2159 + $0x1a] sm:$0xff]
      %v5713 = vld [vmem:[%s2159 + $0x22] sm:$0xff]
      %v5714 = vld [vmem:[%s2159 + $0x32] sm:$0xff]
      %v5715 = vld [vmem:[%s2159 + $0x3a] sm:$0xff]
      %v5716 = vld [vmem:[%s2159 + $0x4a] sm:$0xff]
      %v5717 = vld [vmem:[%s2159 + $0x52] sm:$0xff]
      %v5718 = vld [vmem:[%s2159 + $0x62] sm:$0xff]
      %v5719 = vld [vmem:[%s2159 + $0x6a] sm:$0xff]
      %v5720 = vld [vmem:[%s2159 + $0x7a] sm:$0xff]
      %v5721 = vld [vmem:[%s2159 + $0x82] sm:$0xff]
      %v5722 = vld [vmem:[%s2159 + $0x92] sm:$0xff]
      %v5723 = vld [vmem:[%s2159 + $0x9a] sm:$0xff]
      %v5724 = vld [vmem:[%s2159 + $0xaa] sm:$0xff]
      %v5725 = vld [vmem:[%s2159 + $0xb2] sm:$0xff]
      %v5726 = vld [vmem:[%s2159 + $0xc2] sm:$0xff]
      %v5727 = vld [vmem:[%s2159 + $0xca] sm:$0xff]
      %v5728 = vld [vmem:[%s2159 + $0xda] sm:$0xff]
      %v5729 = vld [vmem:[%s2159 + $0xe2] sm:$0xff]
      %v5730 = vld [vmem:[%s2159 + $0xf2] sm:$0xff]
      %v5731 = vld [vmem:[%s2159 + $0xfa] sm:$0xff]
      %v5732 = vld [vmem:[%s2159 + $0x10a] sm:$0xff]
      %v5733 = vld [vmem:[%s2159 + $0x112] sm:$0xff]
      %v5734 = vld [vmem:[%s2159 + $0x122] sm:$0xff]
      %v5735 = vld [vmem:[%s2159 + $0x12a] sm:$0xff]
      %v5736 = vld [vmem:[%s2159 + $0x13a] sm:$0xff]
      %v5737 = vld [vmem:[%s2159 + $0x142] sm:$0xff]
      %v5738 = vld [vmem:[%s2159 + $0x152] sm:$0xff]
      %v5739 = vld [vmem:[%s2159 + $0x15a] sm:$0xff]
      %v5740 = vld [vmem:[%s2159 + $0x16a] sm:$0xff]
      %v5741 = vld [vmem:[%s2159 + $0x172] sm:$0xff]
      %v5742 = vpack.c.bf16 %v5711, %v5710
      %v5743 = vpack.c.bf16 %v5713, %v5712
      %v5744 = vpack.c.bf16 %v5715, %v5714
      %v5745 = vpack.c.bf16 %v5717, %v5716
      %v5746 = vpack.c.bf16 %v5719, %v5718
      %v5747 = vpack.c.bf16 %v5721, %v5720
      %v5748 = vpack.c.bf16 %v5723, %v5722
      %v5749 = vpack.c.bf16 %v5725, %v5724
      %v5750 = vpack.c.bf16 %v5727, %v5726
      %v5751 = vpack.c.bf16 %v5729, %v5728
      %v5752 = vpack.c.bf16 %v5731, %v5730
      %v5753 = vpack.c.bf16 %v5733, %v5732
      %v5754 = vpack.c.bf16 %v5735, %v5734
      %v5755 = vpack.c.bf16 %v5737, %v5736
      %v5756 = vpack.c.bf16 %v5739, %v5738
      %v5757 = vpack.c.bf16 %v5741, %v5740
      %s5758 = scalar_lea.vmem %s3, 256
      %v5759 = vld [vmem:[%s5758] sm:$0xf]
      %v5760 = vld [vmem:[%s5758 + $0x4] sm:$0xf]
      %v5761 = vld [vmem:[%s5758 + $0x8] sm:$0xf]
      %v5762 = vld [vmem:[%s5758 + $0xc] sm:$0xf]
      %v5763 = vld [vmem:[%s5758 + $0x10] sm:$0xf]
      %v5764 = vld [vmem:[%s5758 + $0x14] sm:$0xf]
      %v5765 = vld [vmem:[%s5758 + $0x18] sm:$0xf]
      %v5766 = vld [vmem:[%s5758 + $0x1c] sm:$0xf]
      %v5775 = vunpack.c.l.b16 %v5759
      %v5776 = vunpack.c.l.b16 %v5760
      %v5777 = vunpack.c.l.b16 %v5761
      %v5778 = vunpack.c.l.b16 %v5762
      %v5779 = vunpack.c.l.b16 %v5763
      %v5780 = vunpack.c.l.b16 %v5764
      %v5781 = vunpack.c.l.b16 %v5765
      %v5782 = vunpack.c.l.b16 %v5766
      %v5783 = vpack.c.b16 %v5776, %v5775
      %v5784 = vpack.c.b16 %v5778, %v5777
      %v5785 = vpack.c.b16 %v5780, %v5779
      %v5786 = vpack.c.b16 %v5782, %v5781
      %v5792 = vsel %vm366, %v5742, 0
      %v5795 = vsel %vm366, %v5743, 0
      %v5798 = vsel %vm366, %v5744, 0
      %v5801 = vsel %vm366, %v5745, 0
      %v5804 = vsel %vm366, %v5746, 0
      %v5807 = vsel %vm366, %v5747, 0
      %v5810 = vsel %vm366, %v5748, 0
      %v5813 = vsel %vm366, %v5749, 0
      %v5816 = vsel %vm366, %v5750, 0
      %v5819 = vsel %vm366, %v5751, 0
      %v5822 = vsel %vm366, %v5752, 0
      %v5825 = vsel %vm366, %v5753, 0
      %v5828 = vsel %vm366, %v5754, 0
      %v5831 = vsel %vm366, %v5755, 0
      %v5834 = vsel %vm366, %v5756, 0
      %v5837 = vsel %vm366, %v5757, 0
      %5839 = vmatprep.subr.bf16.mxu0 0
      %5840 = vmatpush1.bf16.msra.mxu0 %v5783
      %5841 = vmatprep.subr.bf16.mxu0 0
      %5842 = vmatpush1.bf16.msra.mxu0 %v5784
      %5843 = vmatprep.subr.bf16.mxu0 0
      %5844 = vmatpush1.bf16.msra.mxu0 %v5785
      %5845 = vmatprep.subr.bf16.mxu0 0
      %5846 = vmatpush1.bf16.msra.mxu0 %v5786
      %5847 = vmatprep.subr.bf16.mxu0 0
      %5848 = vmatpush1.bf16.msra.mxu0 0
      %5849 = vmatprep.subr.bf16.mxu0 0
      %5850 = vmatpush1.bf16.msra.mxu0 0
      %5851 = vmatprep.subr.bf16.mxu0 0
      %5852 = vmatpush1.bf16.msra.mxu0 0
      %5853 = vmatprep.subr.bf16.mxu0 0
      %5854 = vmatpush1.bf16.msra.mxu0 0
      %5855 = vmatprep.subr.bf16.mxu0 0
      %5856 = vmatpush1.bf16.msra.mxu0 0
      %5857 = vmatprep.subr.bf16.mxu0 0
      %5858 = vmatpush1.bf16.msra.mxu0 0
      %5859 = vmatprep.subr.bf16.mxu0 0
      %5860 = vmatpush1.bf16.msra.mxu0 0
      %5861 = vmatprep.subr.bf16.mxu0 0
      %5862 = vmatpush1.bf16.msra.mxu0 0
      %5863 = vmatprep.subr.bf16.mxu0 0
      %5864 = vmatpush1.bf16.msra.mxu0 0
      %5865 = vmatprep.subr.bf16.mxu0 0
      %5866 = vmatpush1.bf16.msra.mxu0 0
      %5867 = vmatprep.subr.bf16.mxu0 0
      %5868 = vmatpush1.bf16.msra.mxu0 0
      %5869 = vmatprep.subr.bf16.mxu0 0
      %5870 = vmatpush1.bf16.msra.mxu0 0
      %5871 = vmatprep.mubr.bf16.mxu0 0
      %5872 = vmatmul.mubr.bf16.gmra.mrb[0].mxu0 %v5792
      %v5873 = vpop.f32.mrb[0].mxu0
      %v5874 = vadd.f32 0.0, %v5873
      %v5875 = vpop.f32.mrb[0].mxu0
      %v5876 = vpop.f32.mrb[0].mxu0
      %v5877 = vadd.f32 0.0, %v5876
      %v5878 = vpop.f32.mrb[0].mxu0
      %5879 = vmatprep.mubr.bf16.mxu0 0
      %5880 = vmatmul.mubr.bf16.gmra.mrb[0].mxu0 %v5795
      %v5881 = vpop.f32.mrb[0].mxu0
      %v5882 = vadd.f32 0.0, %v5881
      %v5883 = vpop.f32.mrb[0].mxu0
      %v5884 = vpop.f32.mrb[0].mxu0
      %v5885 = vadd.f32 0.0, %v5884
      %v5886 = vpop.f32.mrb[0].mxu0
      %5887 = vmatprep.mubr.bf16.mxu0 0
      %5888 = vmatmul.mubr.bf16.gmra.mrb[0].mxu0 %v5798
      %v5889 = vpop.f32.mrb[0].mxu0
      %v5890 = vadd.f32 0.0, %v5889
      %v5891 = vpop.f32.mrb[0].mxu0
      %v5892 = vpop.f32.mrb[0].mxu0
      %v5893 = vadd.f32 0.0, %v5892
      %v5894 = vpop.f32.mrb[0].mxu0
      %5895 = vmatprep.mubr.bf16.mxu0 0
      %5896 = vmatmul.mubr.bf16.gmra.mrb[0].mxu0 %v5801
      %v5897 = vpop.f32.mrb[0].mxu0
      %v5898 = vadd.f32 0.0, %v5897
      %v5899 = vpop.f32.mrb[0].mxu0
      %v5900 = vpop.f32.mrb[0].mxu0
      %v5901 = vadd.f32 0.0, %v5900
      %v5902 = vpop.f32.mrb[0].mxu0
      %5903 = vmatprep.mubr.bf16.mxu0 0
      %5904 = vmatmul.mubr.bf16.gmra.mrb[0].mxu0 %v5804
      %v5905 = vpop.f32.mrb[0].mxu0
      %v5906 = vadd.f32 0.0, %v5905
      %v5907 = vpop.f32.mrb[0].mxu0
      %v5908 = vpop.f32.mrb[0].mxu0
      %v5909 = vadd.f32 0.0, %v5908
      %v5910 = vpop.f32.mrb[0].mxu0
      %5911 = vmatprep.mubr.bf16.mxu0 0
      %5912 = vmatmul.mubr.bf16.gmra.mrb[0].mxu0 %v5807
      %v5913 = vpop.f32.mrb[0].mxu0
      %v5914 = vadd.f32 0.0, %v5913
      %v5915 = vpop.f32.mrb[0].mxu0
      %v5916 = vpop.f32.mrb[0].mxu0
      %v5917 = vadd.f32 0.0, %v5916
      %v5918 = vpop.f32.mrb[0].mxu0
      %5919 = vmatprep.mubr.bf16.mxu0 0
      %5920 = vmatmul.mubr.bf16.gmra.mrb[0].mxu0 %v5810
      %v5921 = vpop.f32.mrb[0].mxu0
      %v5922 = vadd.f32 0.0, %v5921
      %v5923 = vpop.f32.mrb[0].mxu0
      %v5924 = vpop.f32.mrb[0].mxu0
      %v5925 = vadd.f32 0.0, %v5924
      %v5926 = vpop.f32.mrb[0].mxu0
      %5927 = vmatprep.mubr.bf16.mxu0 0
      %5928 = vmatmul.mubr.bf16.gmra.mrb[0].mxu0 %v5813
      %v5929 = vpop.f32.mrb[0].mxu0
      %v5930 = vadd.f32 0.0, %v5929
      %v5931 = vpop.f32.mrb[0].mxu0
      %v5932 = vpop.f32.mrb[0].mxu0
      %v5933 = vadd.f32 0.0, %v5932
      %v5934 = vpop.f32.mrb[0].mxu0
      %5935 = vmatprep.mubr.bf16.mxu0 0
      %5936 = vmatmul.mubr.bf16.gmra.mrb[0].mxu0 %v5816
      %v5937 = vpop.f32.mrb[0].mxu0
      %v5938 = vadd.f32 0.0, %v5937
      %v5939 = vpop.f32.mrb[0].mxu0
      %v5940 = vpop.f32.mrb[0].mxu0
      %v5941 = vadd.f32 0.0, %v5940
      %v5942 = vpop.f32.mrb[0].mxu0
      %5943 = vmatprep.mubr.bf16.mxu0 0
      %5944 = vmatmul.mubr.bf16.gmra.mrb[0].mxu0 %v5819
      %v5945 = vpop.f32.mrb[0].mxu0
      %v5946 = vadd.f32 0.0, %v5945
      %v5947 = vpop.f32.mrb[0].mxu0
      %v5948 = vpop.f32.mrb[0].mxu0
      %v5949 = vadd.f32 0.0, %v5948
      %v5950 = vpop.f32.mrb[0].mxu0
      %5951 = vmatprep.mubr.bf16.mxu0 0
      %5952 = vmatmul.mubr.bf16.gmra.mrb[0].mxu0 %v5822
      %v5953 = vpop.f32.mrb[0].mxu0
      %v5954 = vadd.f32 0.0, %v5953
      %v5955 = vpop.f32.mrb[0].mxu0
      %v5956 = vpop.f32.mrb[0].mxu0
      %v5957 = vadd.f32 0.0, %v5956
      %v5958 = vpop.f32.mrb[0].mxu0
      %5959 = vmatprep.mubr.bf16.mxu0 0
      %5960 = vmatmul.mubr.bf16.gmra.mrb[0].mxu0 %v5825
      %v5961 = vpop.f32.mrb[0].mxu0
      %v5962 = vadd.f32 0.0, %v5961
      %v5963 = vpop.f32.mrb[0].mxu0
      %v5964 = vpop.f32.mrb[0].mxu0
      %v5965 = vadd.f32 0.0, %v5964
      %v5966 = vpop.f32.mrb[0].mxu0
      %5967 = vmatprep.mubr.bf16.mxu0 0
      %5968 = vmatmul.mubr.bf16.gmra.mrb[0].mxu0 %v5828
      %v5969 = vpop.f32.mrb[0].mxu0
      %v5970 = vadd.f32 0.0, %v5969
      %v5971 = vpop.f32.mrb[0].mxu0
      %v5972 = vpop.f32.mrb[0].mxu0
      %v5973 = vadd.f32 0.0, %v5972
      %v5974 = vpop.f32.mrb[0].mxu0
      %5975 = vmatprep.mubr.bf16.mxu0 0
      %5976 = vmatmul.mubr.bf16.gmra.mrb[0].mxu0 %v5831
      %v5977 = vpop.f32.mrb[0].mxu0
      %v5978 = vadd.f32 0.0, %v5977
      %v5979 = vpop.f32.mrb[0].mxu0
      %v5980 = vpop.f32.mrb[0].mxu0
      %v5981 = vadd.f32 0.0, %v5980
      %v5982 = vpop.f32.mrb[0].mxu0
      %5983 = vmatprep.mubr.bf16.mxu0 0
      %5984 = vmatmul.mubr.bf16.gmra.mrb[0].mxu0 %v5834
      %v5985 = vpop.f32.mrb[0].mxu0
      %v5986 = vadd.f32 0.0, %v5985
      %v5987 = vpop.f32.mrb[0].mxu0
      %v5988 = vpop.f32.mrb[0].mxu0
      %v5989 = vadd.f32 0.0, %v5988
      %v5990 = vpop.f32.mrb[0].mxu0
      %5991 = vmatprep.mubr.bf16.mxu0 0
      %5992 = vmatmul.mubr.bf16.gmra.mrb[0].mxu0 %v5837
      %v5993 = vpop.f32.mrb[0].mxu0
      %v5994 = vadd.f32 0.0, %v5993
      %v5995 = vpop.f32.mrb[0].mxu0
      %v5996 = vpop.f32.mrb[0].mxu0
      %v5997 = vadd.f32 0.0, %v5996
      %v5998 = vpop.f32.mrb[0].mxu0
      %5999 = vdwg.mxu0
      %v6000 = vadd.f32 %v5678, %v5874
      %v6001 = vadd.f32 %v5679, %v5877
      %v6002 = vadd.f32 %v5680, %v5882
      %v6003 = vadd.f32 %v5681, %v5885
      %v6004 = vadd.f32 %v5682, %v5890
      %v6005 = vadd.f32 %v5683, %v5893
      %v6006 = vadd.f32 %v5684, %v5898
      %v6007 = vadd.f32 %v5685, %v5901
      %v6008 = vadd.f32 %v5686, %v5906
      %v6009 = vadd.f32 %v5687, %v5909
      %v6010 = vadd.f32 %v5688, %v5914
      %v6011 = vadd.f32 %v5689, %v5917
      %v6012 = vadd.f32 %v5690, %v5922
      %v6013 = vadd.f32 %v5691, %v5925
      %v6014 = vadd.f32 %v5692, %v5930
      %v6015 = vadd.f32 %v5693, %v5933
      %v6016 = vadd.f32 %v5694, %v5938
      %v6017 = vadd.f32 %v5695, %v5941
      %v6018 = vadd.f32 %v5696, %v5946
      %v6019 = vadd.f32 %v5697, %v5949
      %v6020 = vadd.f32 %v5698, %v5954
      %v6021 = vadd.f32 %v5699, %v5957
      %v6022 = vadd.f32 %v5700, %v5962
      %v6023 = vadd.f32 %v5701, %v5965
      %v6024 = vadd.f32 %v5702, %v5970
      %v6025 = vadd.f32 %v5703, %v5973
      %v6026 = vadd.f32 %v5704, %v5978
      %v6027 = vadd.f32 %v5705, %v5981
      %v6028 = vadd.f32 %v5706, %v5986
      %v6029 = vadd.f32 %v5707, %v5989
      %v6030 = vadd.f32 %v5708, %v5994
      %v6031 = vadd.f32 %v5709, %v5997
      %v6032 = vld [vmem:[%s4] sm:$0x1]
      %v6034 = vlaneseq
      %v6035 = vshrl.u32 %v6034, 7
      %v6036 = vsub.s32 0, %v6035
      %v6037 = vrot.slane %v6032, %v6036
      %v6039 = vadd.f32 %v6000, %v6037
      %v6040 = vadd.f32 %v6001, %v6037
      %v6041 = vadd.f32 %v6002, %v6037
      %v6042 = vadd.f32 %v6003, %v6037
      %v6043 = vadd.f32 %v6004, %v6037
      %v6044 = vadd.f32 %v6005, %v6037
      %v6045 = vadd.f32 %v6006, %v6037
      %v6046 = vadd.f32 %v6007, %v6037
      %v6047 = vadd.f32 %v6008, %v6037
      %v6048 = vadd.f32 %v6009, %v6037
      %v6049 = vadd.f32 %v6010, %v6037
      %v6050 = vadd.f32 %v6011, %v6037
      %v6051 = vadd.f32 %v6012, %v6037
      %v6052 = vadd.f32 %v6013, %v6037
      %v6053 = vadd.f32 %v6014, %v6037
      %v6054 = vadd.f32 %v6015, %v6037
      %v6055 = vadd.f32 %v6016, %v6037
      %v6056 = vadd.f32 %v6017, %v6037
      %v6057 = vadd.f32 %v6018, %v6037
      %v6058 = vadd.f32 %v6019, %v6037
      %v6059 = vadd.f32 %v6020, %v6037
      %v6060 = vadd.f32 %v6021, %v6037
      %v6061 = vadd.f32 %v6022, %v6037
      %v6062 = vadd.f32 %v6023, %v6037
      %v6063 = vadd.f32 %v6024, %v6037
      %v6064 = vadd.f32 %v6025, %v6037
      %v6065 = vadd.f32 %v6026, %v6037
      %v6066 = vadd.f32 %v6027, %v6037
      %v6067 = vadd.f32 %v6028, %v6037
      %v6068 = vadd.f32 %v6029, %v6037
      %v6069 = vadd.f32 %v6030, %v6037
      %v6070 = vadd.f32 %v6031, %v6037
      %v6071 = vmax.f32 %v6039, 0.0
      %v6072 = vmax.f32 %v6040, 0.0
      %v6073 = vmax.f32 %v6041, 0.0
      %v6074 = vmax.f32 %v6042, 0.0
      %v6075 = vmax.f32 %v6043, 0.0
      %v6076 = vmax.f32 %v6044, 0.0
      %v6077 = vmax.f32 %v6045, 0.0
      %v6078 = vmax.f32 %v6046, 0.0
      %v6079 = vmax.f32 %v6047, 0.0
      %v6080 = vmax.f32 %v6048, 0.0
      %v6081 = vmax.f32 %v6049, 0.0
      %v6082 = vmax.f32 %v6050, 0.0
      %v6083 = vmax.f32 %v6051, 0.0
      %v6084 = vmax.f32 %v6052, 0.0
      %v6085 = vmax.f32 %v6053, 0.0
      %v6086 = vmax.f32 %v6054, 0.0
      %v6087 = vmax.f32 %v6055, 0.0
      %v6088 = vmax.f32 %v6056, 0.0
      %v6089 = vmax.f32 %v6057, 0.0
      %v6090 = vmax.f32 %v6058, 0.0
      %v6091 = vmax.f32 %v6059, 0.0
      %v6092 = vmax.f32 %v6060, 0.0
      %v6093 = vmax.f32 %v6061, 0.0
      %v6094 = vmax.f32 %v6062, 0.0
      %v6095 = vmax.f32 %v6063, 0.0
      %v6096 = vmax.f32 %v6064, 0.0
      %v6097 = vmax.f32 %v6065, 0.0
      %v6098 = vmax.f32 %v6066, 0.0
      %v6099 = vmax.f32 %v6067, 0.0
      %v6100 = vmax.f32 %v6068, 0.0
      %v6101 = vmax.f32 %v6069, 0.0
      %v6102 = vmax.f32 %v6070, 0.0
      %v6103 = vpack.c.bf16 %v6072, %v6071
      %v6104 = vpack.c.bf16 %v6074, %v6073
      %v6105 = vpack.c.bf16 %v6076, %v6075
      %v6106 = vpack.c.bf16 %v6078, %v6077
      %v6107 = vpack.c.bf16 %v6080, %v6079
      %v6108 = vpack.c.bf16 %v6082, %v6081
      %v6109 = vpack.c.bf16 %v6084, %v6083
      %v6110 = vpack.c.bf16 %v6086, %v6085
      %v6111 = vpack.c.bf16 %v6088, %v6087
      %v6112 = vpack.c.bf16 %v6090, %v6089
      %v6113 = vpack.c.bf16 %v6092, %v6091
      %v6114 = vpack.c.bf16 %v6094, %v6093
      %v6115 = vpack.c.bf16 %v6096, %v6095
      %v6116 = vpack.c.bf16 %v6098, %v6097
      %v6117 = vpack.c.bf16 %v6100, %v6099
      %v6118 = vpack.c.bf16 %v6102, %v6101
      %v6119 = vld [vmem:[%s5] sm:$0xf]
      %v6120 = vld [vmem:[%s5 + $0x4] sm:$0xf]
      %v6121 = vld [vmem:[%s5 + $0x8] sm:$0xf]
      %v6122 = vld [vmem:[%s5 + $0xc] sm:$0xf]
      %v6123 = vld [vmem:[%s5 + $0x10] sm:$0xf]
      %v6124 = vld [vmem:[%s5 + $0x14] sm:$0xf]
      %v6125 = vld [vmem:[%s5 + $0x18] sm:$0xf]
      %v6126 = vld [vmem:[%s5 + $0x1c] sm:$0xf]
      %v6127 = vld [vmem:[%s6] sm:$0x1]
      %v6129 = vlaneseq
      %v6130 = vshrl.u32 %v6129, 7
      %v6131 = vsub.s32 0, %v6130
      %v6132 = vrot.slane %v6127, %v6131
      %v6142 = vunpack.c.l.b16 %v6119
      %v6143 = vunpack.c.l.b16 %v6120
      %v6144 = vunpack.c.l.b16 %v6121
      %v6145 = vunpack.c.l.b16 %v6122
      %v6146 = vunpack.c.l.b16 %v6123
      %v6147 = vunpack.c.l.b16 %v6124
      %v6148 = vunpack.c.l.b16 %v6125
      %v6149 = vunpack.c.l.b16 %v6126
      %v6150 = vpack.c.b16 %v6143, %v6142
      %v6151 = vpack.c.b16 %v6145, %v6144
      %v6152 = vpack.c.b16 %v6147, %v6146
      %v6153 = vpack.c.b16 %v6149, %v6148
      %v6159 = vsel %vm366, %v6103, 0
      %v6162 = vsel %vm366, %v6104, 0
      %v6165 = vsel %vm366, %v6105, 0
      %v6168 = vsel %vm366, %v6106, 0
      %v6171 = vsel %vm366, %v6107, 0
      %v6174 = vsel %vm366, %v6108, 0
      %v6177 = vsel %vm366, %v6109, 0
      %v6180 = vsel %vm366, %v6110, 0
      %v6183 = vsel %vm366, %v6111, 0
      %v6186 = vsel %vm366, %v6112, 0
      %v6189 = vsel %vm366, %v6113, 0
      %v6192 = vsel %vm366, %v6114, 0
      %v6195 = vsel %vm366, %v6115, 0
      %v6198 = vsel %vm366, %v6116, 0
      %v6201 = vsel %vm366, %v6117, 0
      %v6204 = vsel %vm366, %v6118, 0
      %6206 = vmatprep.subr.bf16.mxu0 0
      %6207 = vmatpush1.bf16.msra.mxu0 %v6150
      %6208 = vmatprep.subr.bf16.mxu0 0
      %6209 = vmatpush1.bf16.msra.mxu0 %v6151
      %6210 = vmatprep.subr.bf16.mxu0 0
      %6211 = vmatpush1.bf16.msra.mxu0 %v6152
      %6212 = vmatprep.subr.bf16.mxu0 0
      %6213 = vmatpush1.bf16.msra.mxu0 %v6153
      %6214 = vmatprep.subr.bf16.mxu0 0
      %6215 = vmatpush1.bf16.msra.mxu0 0
      %6216 = vmatprep.subr.bf16.mxu0 0
      %6217 = vmatpush1.bf16.msra.mxu0 0
      %6218 = vmatprep.subr.bf16.mxu0 0
      %6219 = vmatpush1.bf16.msra.mxu0 0
      %6220 = vmatprep.subr.bf16.mxu0 0
      %6221 = vmatpush1.bf16.msra.mxu0 0
      %6222 = vmatprep.subr.bf16.mxu0 0
      %6223 = vmatpush1.bf16.msra.mxu0 0
      %6224 = vmatprep.subr.bf16.mxu0 0
      %6225 = vmatpush1.bf16.msra.mxu0 0
      %6226 = vmatprep.subr.bf16.mxu0 0
      %6227 = vmatpush1.bf16.msra.mxu0 0
      %6228 = vmatprep.subr.bf16.mxu0 0
      %6229 = vmatpush1.bf16.msra.mxu0 0
      %6230 = vmatprep.subr.bf16.mxu0 0
      %6231 = vmatpush1.bf16.msra.mxu0 0
      %6232 = vmatprep.subr.bf16.mxu0 0
      %6233 = vmatpush1.bf16.msra.mxu0 0
      %6234 = vmatprep.subr.bf16.mxu0 0
      %6235 = vmatpush1.bf16.msra.mxu0 0
      %6236 = vmatprep.subr.bf16.mxu0 0
      %6237 = vmatpush1.bf16.msra.mxu0 0
      %6238 = vmatprep.mubr.bf16.mxu0 0
      %6239 = vmatmul.mubr.bf16.gmra.mrb[0].mxu0 %v6159
      %v6240 = vpop.f32.mrb[0].mxu0
      %v6241 = vadd.f32 %v6132, %v6240
      %v6242 = vpop.f32.mrb[0].mxu0
      %v6243 = vpop.f32.mrb[0].mxu0
      %v6244 = vadd.f32 %v6132, %v6243
      %v6245 = vpop.f32.mrb[0].mxu0
      %6246 = vmatprep.mubr.bf16.mxu0 0
      %6247 = vmatmul.mubr.bf16.gmra.mrb[0].mxu0 %v6162
      %v6248 = vpop.f32.mrb[0].mxu0
      %v6249 = vadd.f32 %v6132, %v6248
      %v6250 = vpop.f32.mrb[0].mxu0
      %v6251 = vpop.f32.mrb[0].mxu0
      %v6252 = vadd.f32 %v6132, %v6251
      %v6253 = vpop.f32.mrb[0].mxu0
      %6254 = vmatprep.mubr.bf16.mxu0 0
      %6255 = vmatmul.mubr.bf16.gmra.mrb[0].mxu0 %v6165
      %v6256 = vpop.f32.mrb[0].mxu0
      %v6257 = vadd.f32 %v6132, %v6256
      %v6258 = vpop.f32.mrb[0].mxu0
      %v6259 = vpop.f32.mrb[0].mxu0
      %v6260 = vadd.f32 %v6132, %v6259
      %v6261 = vpop.f32.mrb[0].mxu0
      %6262 = vmatprep.mubr.bf16.mxu0 0
      %6263 = vmatmul.mubr.bf16.gmra.mrb[0].mxu0 %v6168
      %v6264 = vpop.f32.mrb[0].mxu0
      %v6265 = vadd.f32 %v6132, %v6264
      %v6266 = vpop.f32.mrb[0].mxu0
      %v6267 = vpop.f32.mrb[0].mxu0
      %v6268 = vadd.f32 %v6132, %v6267
      %v6269 = vpop.f32.mrb[0].mxu0
      %6270 = vmatprep.mubr.bf16.mxu0 0
      %6271 = vmatmul.mubr.bf16.gmra.mrb[0].mxu0 %v6171
      %v6272 = vpop.f32.mrb[0].mxu0
      %v6273 = vadd.f32 %v6132, %v6272
      %v6274 = vpop.f32.mrb[0].mxu0
      %v6275 = vpop.f32.mrb[0].mxu0
      %v6276 = vadd.f32 %v6132, %v6275
      %v6277 = vpop.f32.mrb[0].mxu0
      %6278 = vmatprep.mubr.bf16.mxu0 0
      %6279 = vmatmul.mubr.bf16.gmra.mrb[0].mxu0 %v6174
      %v6280 = vpop.f32.mrb[0].mxu0
      %v6281 = vadd.f32 %v6132, %v6280
      %v6282 = vpop.f32.mrb[0].mxu0
      %v6283 = vpop.f32.mrb[0].mxu0
      %v6284 = vadd.f32 %v6132, %v6283
      %v6285 = vpop.f32.mrb[0].mxu0
      %6286 = vmatprep.mubr.bf16.mxu0 0
      %6287 = vmatmul.mubr.bf16.gmra.mrb[0].mxu0 %v6177
      %v6288 = vpop.f32.mrb[0].mxu0
      %v6289 = vadd.f32 %v6132, %v6288
      %v6290 = vpop.f32.mrb[0].mxu0
      %v6291 = vpop.f32.mrb[0].mxu0
      %v6292 = vadd.f32 %v6132, %v6291
      %v6293 = vpop.f32.mrb[0].mxu0
      %6294 = vmatprep.mubr.bf16.mxu0 0
      %6295 = vmatmul.mubr.bf16.gmra.mrb[0].mxu0 %v6180
      %v6296 = vpop.f32.mrb[0].mxu0
      %v6297 = vadd.f32 %v6132, %v6296
      %v6298 = vpop.f32.mrb[0].mxu0
      %v6299 = vpop.f32.mrb[0].mxu0
      %v6300 = vadd.f32 %v6132, %v6299
      %v6301 = vpop.f32.mrb[0].mxu0
      %6302 = vmatprep.mubr.bf16.mxu0 0
      %6303 = vmatmul.mubr.bf16.gmra.mrb[0].mxu0 %v6183
      %v6304 = vpop.f32.mrb[0].mxu0
      %v6305 = vadd.f32 %v6132, %v6304
      %v6306 = vpop.f32.mrb[0].mxu0
      %v6307 = vpop.f32.mrb[0].mxu0
      %v6308 = vadd.f32 %v6132, %v6307
      %v6309 = vpop.f32.mrb[0].mxu0
      %6310 = vmatprep.mubr.bf16.mxu0 0
      %6311 = vmatmul.mubr.bf16.gmra.mrb[0].mxu0 %v6186
      %v6312 = vpop.f32.mrb[0].mxu0
      %v6313 = vadd.f32 %v6132, %v6312
      %v6314 = vpop.f32.mrb[0].mxu0
      %v6315 = vpop.f32.mrb[0].mxu0
      %v6316 = vadd.f32 %v6132, %v6315
      %v6317 = vpop.f32.mrb[0].mxu0
      %6318 = vmatprep.mubr.bf16.mxu0 0
      %6319 = vmatmul.mubr.bf16.gmra.mrb[0].mxu0 %v6189
      %v6320 = vpop.f32.mrb[0].mxu0
      %v6321 = vadd.f32 %v6132, %v6320
      %v6322 = vpop.f32.mrb[0].mxu0
      %v6323 = vpop.f32.mrb[0].mxu0
      %v6324 = vadd.f32 %v6132, %v6323
      %v6325 = vpop.f32.mrb[0].mxu0
      %6326 = vmatprep.mubr.bf16.mxu0 0
      %6327 = vmatmul.mubr.bf16.gmra.mrb[0].mxu0 %v6192
      %v6328 = vpop.f32.mrb[0].mxu0
      %v6329 = vadd.f32 %v6132, %v6328
      %v6330 = vpop.f32.mrb[0].mxu0
      %v6331 = vpop.f32.mrb[0].mxu0
      %v6332 = vadd.f32 %v6132, %v6331
      %v6333 = vpop.f32.mrb[0].mxu0
      %6334 = vmatprep.mubr.bf16.mxu0 0
      %6335 = vmatmul.mubr.bf16.gmra.mrb[0].mxu0 %v6195
      %v6336 = vpop.f32.mrb[0].mxu0
      %v6337 = vadd.f32 %v6132, %v6336
      %v6338 = vpop.f32.mrb[0].mxu0
      %v6339 = vpop.f32.mrb[0].mxu0
      %v6340 = vadd.f32 %v6132, %v6339
      %v6341 = vpop.f32.mrb[0].mxu0
      %6342 = vmatprep.mubr.bf16.mxu0 0
      %6343 = vmatmul.mubr.bf16.gmra.mrb[0].mxu0 %v6198
      %v6344 = vpop.f32.mrb[0].mxu0
      %v6345 = vadd.f32 %v6132, %v6344
      %v6346 = vpop.f32.mrb[0].mxu0
      %v6347 = vpop.f32.mrb[0].mxu0
      %v6348 = vadd.f32 %v6132, %v6347
      %v6349 = vpop.f32.mrb[0].mxu0
      %6350 = vmatprep.mubr.bf16.mxu0 0
      %6351 = vmatmul.mubr.bf16.gmra.mrb[0].mxu0 %v6201
      %v6352 = vpop.f32.mrb[0].mxu0
      %v6353 = vadd.f32 %v6132, %v6352
      %v6354 = vpop.f32.mrb[0].mxu0
      %v6355 = vpop.f32.mrb[0].mxu0
      %v6356 = vadd.f32 %v6132, %v6355
      %v6357 = vpop.f32.mrb[0].mxu0
      %6358 = vmatprep.mubr.bf16.mxu0 0
      %6359 = vmatmul.mubr.bf16.gmra.mrb[0].mxu0 %v6204
      %v6360 = vpop.f32.mrb[0].mxu0
      %v6361 = vadd.f32 %v6132, %v6360
      %v6362 = vpop.f32.mrb[0].mxu0
      %v6363 = vpop.f32.mrb[0].mxu0
      %v6364 = vadd.f32 %v6132, %v6363
      %v6365 = vpop.f32.mrb[0].mxu0
      %6366 = vdwg.mxu0
      %v6367 = vmax.f32 %v6241, 0.0
      %v6368 = vmax.f32 %v6244, 0.0
      %v6369 = vmax.f32 %v6249, 0.0
      %v6370 = vmax.f32 %v6252, 0.0
      %v6371 = vmax.f32 %v6257, 0.0
      %v6372 = vmax.f32 %v6260, 0.0
      %v6373 = vmax.f32 %v6265, 0.0
      %v6374 = vmax.f32 %v6268, 0.0
      %v6375 = vmax.f32 %v6273, 0.0
      %v6376 = vmax.f32 %v6276, 0.0
      %v6377 = vmax.f32 %v6281, 0.0
      %v6378 = vmax.f32 %v6284, 0.0
      %v6379 = vmax.f32 %v6289, 0.0
      %v6380 = vmax.f32 %v6292, 0.0
      %v6381 = vmax.f32 %v6297, 0.0
      %v6382 = vmax.f32 %v6300, 0.0
      %v6383 = vmax.f32 %v6305, 0.0
      %v6384 = vmax.f32 %v6308, 0.0
      %v6385 = vmax.f32 %v6313, 0.0
      %v6386 = vmax.f32 %v6316, 0.0
      %v6387 = vmax.f32 %v6321, 0.0
      %v6388 = vmax.f32 %v6324, 0.0
      %v6389 = vmax.f32 %v6329, 0.0
      %v6390 = vmax.f32 %v6332, 0.0
      %v6391 = vmax.f32 %v6337, 0.0
      %v6392 = vmax.f32 %v6340, 0.0
      %v6393 = vmax.f32 %v6345, 0.0
      %v6394 = vmax.f32 %v6348, 0.0
      %v6395 = vmax.f32 %v6353, 0.0
      %v6396 = vmax.f32 %v6356, 0.0
      %v6397 = vmax.f32 %v6361, 0.0
      %v6398 = vmax.f32 %v6364, 0.0
      %v6399 = vpack.c.bf16 %v6368, %v6367
      %v6400 = vpack.c.bf16 %v6370, %v6369
      %v6401 = vpack.c.bf16 %v6372, %v6371
      %v6402 = vpack.c.bf16 %v6374, %v6373
      %v6403 = vpack.c.bf16 %v6376, %v6375
      %v6404 = vpack.c.bf16 %v6378, %v6377
      %v6405 = vpack.c.bf16 %v6380, %v6379
      %v6406 = vpack.c.bf16 %v6382, %v6381
      %v6407 = vpack.c.bf16 %v6384, %v6383
      %v6408 = vpack.c.bf16 %v6386, %v6385
      %v6409 = vpack.c.bf16 %v6388, %v6387
      %v6410 = vpack.c.bf16 %v6390, %v6389
      %v6411 = vpack.c.bf16 %v6392, %v6391
      %v6412 = vpack.c.bf16 %v6394, %v6393
      %v6413 = vpack.c.bf16 %v6396, %v6395
      %v6414 = vpack.c.bf16 %v6398, %v6397
      %v6415 = vld [vmem:[%s7] sm:$0xf]
      %v6416 = vld [vmem:[%s7 + $0x4] sm:$0xf]
      %v6417 = vld [vmem:[%s7 + $0x8] sm:$0xf]
      %v6418 = vld [vmem:[%s7 + $0xc] sm:$0xf]
      %v6419 = vld [vmem:[%s7 + $0x10] sm:$0xf]
      %v6420 = vld [vmem:[%s7 + $0x14] sm:$0xf]
      %v6421 = vld [vmem:[%s7 + $0x18] sm:$0xf]
      %v6422 = vld [vmem:[%s7 + $0x1c] sm:$0xf]
      %v6423 = vld [vmem:[%s8] sm:$0x1]
      %v6425 = vlaneseq
      %v6426 = vshrl.u32 %v6425, 7
      %v6427 = vsub.s32 0, %v6426
      %v6428 = vrot.slane %v6423, %v6427
      %v6438 = vunpack.c.l.b16 %v6415
      %v6439 = vunpack.c.l.b16 %v6416
      %v6440 = vunpack.c.l.b16 %v6417
      %v6441 = vunpack.c.l.b16 %v6418
      %v6442 = vunpack.c.l.b16 %v6419
      %v6443 = vunpack.c.l.b16 %v6420
      %v6444 = vunpack.c.l.b16 %v6421
      %v6445 = vunpack.c.l.b16 %v6422
      %v6446 = vpack.c.b16 %v6439, %v6438
      %v6447 = vpack.c.b16 %v6441, %v6440
      %v6448 = vpack.c.b16 %v6443, %v6442
      %v6449 = vpack.c.b16 %v6445, %v6444
      %v6455 = vsel %vm366, %v6399, 0
      %v6458 = vsel %vm366, %v6400, 0
      %v6461 = vsel %vm366, %v6401, 0
      %v6464 = vsel %vm366, %v6402, 0
      %v6467 = vsel %vm366, %v6403, 0
      %v6470 = vsel %vm366, %v6404, 0
      %v6473 = vsel %vm366, %v6405, 0
      %v6476 = vsel %vm366, %v6406, 0
      %v6479 = vsel %vm366, %v6407, 0
      %v6482 = vsel %vm366, %v6408, 0
      %v6485 = vsel %vm366, %v6409, 0
      %v6488 = vsel %vm366, %v6410, 0
      %v6491 = vsel %vm366, %v6411, 0
      %v6494 = vsel %vm366, %v6412, 0
      %v6497 = vsel %vm366, %v6413, 0
      %v6500 = vsel %vm366, %v6414, 0
      %6502 = vmatprep.subr.bf16.mxu0 0
      %6503 = vmatpush1.bf16.msra.mxu0 %v6446
      %6504 = vmatprep.subr.bf16.mxu0 0
      %6505 = vmatpush1.bf16.msra.mxu0 %v6447
      %6506 = vmatprep.subr.bf16.mxu0 0
      %6507 = vmatpush1.bf16.msra.mxu0 %v6448
      %6508 = vmatprep.subr.bf16.mxu0 0
      %6509 = vmatpush1.bf16.msra.mxu0 %v6449
      %6510 = vmatprep.subr.bf16.mxu0 0
      %6511 = vmatpush1.bf16.msra.mxu0 0
      %6512 = vmatprep.subr.bf16.mxu0 0
      %6513 = vmatpush1.bf16.msra.mxu0 0
      %6514 = vmatprep.subr.bf16.mxu0 0
      %6515 = vmatpush1.bf16.msra.mxu0 0
      %6516 = vmatprep.subr.bf16.mxu0 0
      %6517 = vmatpush1.bf16.msra.mxu0 0
      %6518 = vmatprep.subr.bf16.mxu0 0
      %6519 = vmatpush1.bf16.msra.mxu0 0
      %6520 = vmatprep.subr.bf16.mxu0 0
      %6521 = vmatpush1.bf16.msra.mxu0 0
      %6522 = vmatprep.subr.bf16.mxu0 0
      %6523 = vmatpush1.bf16.msra.mxu0 0
      %6524 = vmatprep.subr.bf16.mxu0 0
      %6525 = vmatpush1.bf16.msra.mxu0 0
      %6526 = vmatprep.subr.bf16.mxu0 0
      %6527 = vmatpush1.bf16.msra.mxu0 0
      %6528 = vmatprep.subr.bf16.mxu0 0
      %6529 = vmatpush1.bf16.msra.mxu0 0
      %6530 = vmatprep.subr.bf16.mxu0 0
      %6531 = vmatpush1.bf16.msra.mxu0 0
      %6532 = vmatprep.subr.bf16.mxu0 0
      %6533 = vmatpush1.bf16.msra.mxu0 0
      %6534 = vmatprep.mubr.bf16.mxu0 0
      %6535 = vmatmul.mubr.bf16.gmra.mrb[0].mxu0 %v6455
      %v6536 = vpop.f32.mrb[0].mxu0
      %v6537 = vadd.f32 %v6428, %v6536
      %v6538 = vpop.f32.mrb[0].mxu0
      %v6539 = vpop.f32.mrb[0].mxu0
      %v6540 = vadd.f32 %v6428, %v6539
      %v6541 = vpop.f32.mrb[0].mxu0
      %6542 = vmatprep.mubr.bf16.mxu0 0
      %6543 = vmatmul.mubr.bf16.gmra.mrb[0].mxu0 %v6458
      %v6544 = vpop.f32.mrb[0].mxu0
      %v6545 = vadd.f32 %v6428, %v6544
      %v6546 = vpop.f32.mrb[0].mxu0
      %v6547 = vpop.f32.mrb[0].mxu0
      %v6548 = vadd.f32 %v6428, %v6547
      %v6549 = vpop.f32.mrb[0].mxu0
      %6550 = vmatprep.mubr.bf16.mxu0 0
      %6551 = vmatmul.mubr.bf16.gmra.mrb[0].mxu0 %v6461
      %v6552 = vpop.f32.mrb[0].mxu0
      %v6553 = vadd.f32 %v6428, %v6552
      %v6554 = vpop.f32.mrb[0].mxu0
      %v6555 = vpop.f32.mrb[0].mxu0
      %v6556 = vadd.f32 %v6428, %v6555
      %v6557 = vpop.f32.mrb[0].mxu0
      %6558 = vmatprep.mubr.bf16.mxu0 0
      %6559 = vmatmul.mubr.bf16.gmra.mrb[0].mxu0 %v6464
      %v6560 = vpop.f32.mrb[0].mxu0
      %v6561 = vadd.f32 %v6428, %v6560
      %v6562 = vpop.f32.mrb[0].mxu0
      %v6563 = vpop.f32.mrb[0].mxu0
      %v6564 = vadd.f32 %v6428, %v6563
      %v6565 = vpop.f32.mrb[0].mxu0
      %6566 = vmatprep.mubr.bf16.mxu0 0
      %6567 = vmatmul.mubr.bf16.gmra.mrb[0].mxu0 %v6467
      %v6568 = vpop.f32.mrb[0].mxu0
      %v6569 = vadd.f32 %v6428, %v6568
      %v6570 = vpop.f32.mrb[0].mxu0
      %v6571 = vpop.f32.mrb[0].mxu0
      %v6572 = vadd.f32 %v6428, %v6571
      %v6573 = vpop.f32.mrb[0].mxu0
      %6574 = vmatprep.mubr.bf16.mxu0 0
      %6575 = vmatmul.mubr.bf16.gmra.mrb[0].mxu0 %v6470
      %v6576 = vpop.f32.mrb[0].mxu0
      %v6577 = vadd.f32 %v6428, %v6576
      %v6578 = vpop.f32.mrb[0].mxu0
      %v6579 = vpop.f32.mrb[0].mxu0
      %v6580 = vadd.f32 %v6428, %v6579
      %v6581 = vpop.f32.mrb[0].mxu0
      %6582 = vmatprep.mubr.bf16.mxu0 0
      %6583 = vmatmul.mubr.bf16.gmra.mrb[0].mxu0 %v6473
      %v6584 = vpop.f32.mrb[0].mxu0
      %v6585 = vadd.f32 %v6428, %v6584
      %v6586 = vpop.f32.mrb[0].mxu0
      %v6587 = vpop.f32.mrb[0].mxu0
      %v6588 = vadd.f32 %v6428, %v6587
      %v6589 = vpop.f32.mrb[0].mxu0
      %6590 = vmatprep.mubr.bf16.mxu0 0
      %6591 = vmatmul.mubr.bf16.gmra.mrb[0].mxu0 %v6476
      %v6592 = vpop.f32.mrb[0].mxu0
      %v6593 = vadd.f32 %v6428, %v6592
      %v6594 = vpop.f32.mrb[0].mxu0
      %v6595 = vpop.f32.mrb[0].mxu0
      %v6596 = vadd.f32 %v6428, %v6595
      %v6597 = vpop.f32.mrb[0].mxu0
      %6598 = vmatprep.mubr.bf16.mxu0 0
      %6599 = vmatmul.mubr.bf16.gmra.mrb[0].mxu0 %v6479
      %v6600 = vpop.f32.mrb[0].mxu0
      %v6601 = vadd.f32 %v6428, %v6600
      %v6602 = vpop.f32.mrb[0].mxu0
      %v6603 = vpop.f32.mrb[0].mxu0
      %v6604 = vadd.f32 %v6428, %v6603
      %v6605 = vpop.f32.mrb[0].mxu0
      %6606 = vmatprep.mubr.bf16.mxu0 0
      %6607 = vmatmul.mubr.bf16.gmra.mrb[0].mxu0 %v6482
      %v6608 = vpop.f32.mrb[0].mxu0
      %v6609 = vadd.f32 %v6428, %v6608
      %v6610 = vpop.f32.mrb[0].mxu0
      %v6611 = vpop.f32.mrb[0].mxu0
      %v6612 = vadd.f32 %v6428, %v6611
      %v6613 = vpop.f32.mrb[0].mxu0
      %6614 = vmatprep.mubr.bf16.mxu0 0
      %6615 = vmatmul.mubr.bf16.gmra.mrb[0].mxu0 %v6485
      %v6616 = vpop.f32.mrb[0].mxu0
      %v6617 = vadd.f32 %v6428, %v6616
      %v6618 = vpop.f32.mrb[0].mxu0
      %v6619 = vpop.f32.mrb[0].mxu0
      %v6620 = vadd.f32 %v6428, %v6619
      %v6621 = vpop.f32.mrb[0].mxu0
      %6622 = vmatprep.mubr.bf16.mxu0 0
      %6623 = vmatmul.mubr.bf16.gmra.mrb[0].mxu0 %v6488
      %v6624 = vpop.f32.mrb[0].mxu0
      %v6625 = vadd.f32 %v6428, %v6624
      %v6626 = vpop.f32.mrb[0].mxu0
      %v6627 = vpop.f32.mrb[0].mxu0
      %v6628 = vadd.f32 %v6428, %v6627
      %v6629 = vpop.f32.mrb[0].mxu0
      %6630 = vmatprep.mubr.bf16.mxu0 0
      %6631 = vmatmul.mubr.bf16.gmra.mrb[0].mxu0 %v6491
      %v6632 = vpop.f32.mrb[0].mxu0
      %v6633 = vadd.f32 %v6428, %v6632
      %v6634 = vpop.f32.mrb[0].mxu0
      %v6635 = vpop.f32.mrb[0].mxu0
      %v6636 = vadd.f32 %v6428, %v6635
      %v6637 = vpop.f32.mrb[0].mxu0
      %6638 = vmatprep.mubr.bf16.mxu0 0
      %6639 = vmatmul.mubr.bf16.gmra.mrb[0].mxu0 %v6494
      %v6640 = vpop.f32.mrb[0].mxu0
      %v6641 = vadd.f32 %v6428, %v6640
      %v6642 = vpop.f32.mrb[0].mxu0
      %v6643 = vpop.f32.mrb[0].mxu0
      %v6644 = vadd.f32 %v6428, %v6643
      %v6645 = vpop.f32.mrb[0].mxu0
      %6646 = vmatprep.mubr.bf16.mxu0 0
      %6647 = vmatmul.mubr.bf16.gmra.mrb[0].mxu0 %v6497
      %v6648 = vpop.f32.mrb[0].mxu0
      %v6649 = vadd.f32 %v6428, %v6648
      %v6650 = vpop.f32.mrb[0].mxu0
      %v6651 = vpop.f32.mrb[0].mxu0
      %v6652 = vadd.f32 %v6428, %v6651
      %v6653 = vpop.f32.mrb[0].mxu0
      %6654 = vmatprep.mubr.bf16.mxu0 0
      %6655 = vmatmul.mubr.bf16.gmra.mrb[0].mxu0 %v6500
      %v6656 = vpop.f32.mrb[0].mxu0
      %v6657 = vadd.f32 %v6428, %v6656
      %v6658 = vpop.f32.mrb[0].mxu0
      %v6659 = vpop.f32.mrb[0].mxu0
      %v6660 = vadd.f32 %v6428, %v6659
      %v6661 = vpop.f32.mrb[0].mxu0
      %6662 = vdwg.mxu0
      %6663 = vst.msk [vmem:[%s332] sm:$0xff] %vm423, %v6537
      %6664 = vst.msk [vmem:[%s332 + $0x8] sm:$0xff] %vm423, %v6540
      %6665 = vst.msk [vmem:[%s332 + $0x10] sm:$0xff] %vm423, %v6545
      %6666 = vst.msk [vmem:[%s332 + $0x18] sm:$0xff] %vm423, %v6548
      %6667 = vst.msk [vmem:[%s332 + $0x20] sm:$0xff] %vm423, %v6553
      %6668 = vst.msk [vmem:[%s332 + $0x28] sm:$0xff] %vm423, %v6556
      %6669 = vst.msk [vmem:[%s332 + $0x30] sm:$0xff] %vm423, %v6561
      %6670 = vst.msk [vmem:[%s332 + $0x38] sm:$0xff] %vm423, %v6564
      %6671 = vst.msk [vmem:[%s332 + $0x40] sm:$0xff] %vm423, %v6569
      %6672 = vst.msk [vmem:[%s332 + $0x48] sm:$0xff] %vm423, %v6572
      %6673 = vst.msk [vmem:[%s332 + $0x50] sm:$0xff] %vm423, %v6577
      %6674 = vst.msk [vmem:[%s332 + $0x58] sm:$0xff] %vm423, %v6580
      %6675 = vst.msk [vmem:[%s332 + $0x60] sm:$0xff] %vm423, %v6585
      %6676 = vst.msk [vmem:[%s332 + $0x68] sm:$0xff] %vm423, %v6588
      %6677 = vst.msk [vmem:[%s332 + $0x70] sm:$0xff] %vm423, %v6593
      %6678 = vst.msk [vmem:[%s332 + $0x78] sm:$0xff] %vm423, %v6596
      %6679 = vst.msk [vmem:[%s332 + $0x80] sm:$0xff] %vm423, %v6601
      %6680 = vst.msk [vmem:[%s332 + $0x88] sm:$0xff] %vm423, %v6604
      %6681 = vst.msk [vmem:[%s332 + $0x90] sm:$0xff] %vm423, %v6609
      %6682 = vst.msk [vmem:[%s332 + $0x98] sm:$0xff] %vm423, %v6612
      %6683 = vst.msk [vmem:[%s332 + $0xa0] sm:$0xff] %vm423, %v6617
      %6684 = vst.msk [vmem:[%s332 + $0xa8] sm:$0xff] %vm423, %v6620
      %6685 = vst.msk [vmem:[%s332 + $0xb0] sm:$0xff] %vm423, %v6625
      %6686 = vst.msk [vmem:[%s332 + $0xb8] sm:$0xff] %vm423, %v6628
      %6687 = vst.msk [vmem:[%s332 + $0xc0] sm:$0xff] %vm423, %v6633
      %6688 = vst.msk [vmem:[%s332 + $0xc8] sm:$0xff] %vm423, %v6636
      %6689 = vst.msk [vmem:[%s332 + $0xd0] sm:$0xff] %vm423, %v6641
      %6690 = vst.msk [vmem:[%s332 + $0xd8] sm:$0xff] %vm423, %v6644
      %6691 = vst.msk [vmem:[%s332 + $0xe0] sm:$0xff] %vm423, %v6649
      %6692 = vst.msk [vmem:[%s332 + $0xe8] sm:$0xff] %vm423, %v6652
      %6693 = vst.msk [vmem:[%s332 + $0xf0] sm:$0xff] %vm423, %v6657
      %6694 = vst.msk [vmem:[%s332 + $0xf8] sm:$0xff] %vm423, %v6660
      %p6695 = scmp.lt.s32.totalorder %s20, 1
      %s6696 = scalar_select %p6695, %s20, 1
      %s6697 = smul.addr %s6696, 32
      %s6698 = smul.addr %s6697, 8
      %s6699 = scalar_lea.vmem %s9, %s6698
      // Predicated region
      $region57: #{tpu_custom_call.1} parent=55 // pred_check
        %p6700 = pneg %p232
      $region58: #{tpu_custom_call.1} parent=55 // pred_check_branch
        %6702 = sbr.rel (%p6700) target = $region60
      $region59: #{tpu_custom_call.1} parent=55 // pred_region
        _
      $region60: #{tpu_custom_call.1} parent=55 // pred_fallthru
        _
    $region56: #{tpu_custom_call.1} parent=5 // pred_fallthru
      _
    %p6703 = scmp.le.s32.totalorder 2, %s15
    // Predicated region
    $region61: #{tpu_custom_call.1} parent=5 // pred_check
      %p6704 = pneg %p6703
    $region62: #{tpu_custom_call.1} parent=5 // pred_check_branch
      %6706 = sbr.rel (%p6704) target = $region64
    $region63: #{tpu_custom_call.1} parent=5 // pred_region
      %s6707 = ssub.s32 %s15, 2
      // Predicated region
      $region65: #{tpu_custom_call.1} parent=63 // pred_check
        %p6708 = pneg %p238
      $region66: #{tpu_custom_call.1} parent=63 // pred_check_branch
        %6710 = sbr.rel (%p6708) target = $region68
      $region67: #{tpu_custom_call.1} parent=63 // pred_region
        %p6711 = scmp.lt.s32.totalorder %s21, 1
        %s6712 = scalar_select %p6711, %s21, 1
        %s6713 = smul.addr %s6712, 32
        %s6714 = smul.addr %s6713, 8
        %s6715 = scalar_lea.vmem %s9, %s6714
      $region68: #{tpu_custom_call.1} parent=63 // pred_fallthru
        _
    $region64: #{tpu_custom_call.1} parent=5 // pred_fallthru
      _
  $region6: #{tpu_custom_call.1} parent=0 // loop_footer
    %s19 = sadd.s32 1, %s15
  $region7: #{tpu_custom_call.1} parent=0 // loop_footer_branch
    %14 = sbr.rel target = $region3
  $region8: #{tpu_custom_call.1} parent=0 // loop_exit
    _

</llo_original>
